<compile_context>
chip_gen: v7x
topology: tpu7x:2x2x1
jax: 0.10.0
libtpu: 0.0.40
codegen_flags: <defaults>
</compile_context>

<pallas_src>
import math

import jax
import jax.numpy as jnp
from jax.experimental import pallas as pl
from jax.experimental.pallas import tpu as pltpu

H, W = 8, 8                 # spatial size implied by out_shape = 64 * 8 * 8
IN_CH = 2
HID_CH = 128
HEAD_CH = 64                # each head conv's Cout / actor output size
PAD_C = 128                 # tiny channel counts padded up to one lane width
TAPS = 9                    # 3x3 kernel taps
NUM_LAYERS = 9              # c1..c8 + fused [c9_1 | c9_2]
LAYERS_PER_STEP = 3
NUM_STEPS = NUM_LAYERS // LAYERS_PER_STEP   # 3 grid steps
FLAT = HEAD_CH * H * W      # 4096


# ---------------------------------------------------------------------------
# Fused kernel: 9 conv layers (3 per grid step) + actor/critic heads at the end
# ---------------------------------------------------------------------------
def fused_forward_kernel(x_ref, w_ref, b_ref, wa_ref, ba_ref, wc_ref, bc_ref,
                         actor_ref, critic_ref, s_ref, row_ref):
    """grid=(3,).  Each step runs 3 conv layers (3x3, pad=1, bias, ReLU).

    x_ref  : (8, 8, 128)     channel-padded input image (read at step 0 only)
    w_ref  : (3, 1152, 128)  this step's 3 conv weights, rows = tap*128+cin, bf16
    b_ref  : (1, 3, 128)     this step's 3 conv biases, f32
    wa_ref : (4096, 64)      actor weight, rows ordered (hw, c), bf16
    ba_ref : (1, 64)         actor bias, f32
    wc_ref : (64, 64)        critic weight as a lane-dense (hw, c) tile, f32
    bc_ref : (1, 1)          critic bias, f32
    s_ref  : (10, 8, 128)    persistent activation; rows 0 and 9 are the halo
    row_ref: (8, 4096)       scratch; row 0 holds the flattened actor input
    """
    step = pl.program_id(0)

    @pl.when(step == 0)
    def _init():
        zero_row = jnp.zeros((1, W, PAD_C), jnp.float32)
        s_ref[0:1] = zero_row            # top halo
        s_ref[H + 1:H + 2] = zero_row    # bottom halo
        s_ref[1:H + 1] = x_ref[...]

    for j in range(LAYERS_PER_STEP):
        s = s_ref[...]                                         # (10, 8, 128) f32
        zcol = jnp.zeros((H + 2, 1, PAD_C), jnp.float32)
        left = jnp.concatenate([zcol, s[:, :W - 1, :]], axis=1).astype(jnp.bfloat16)
        mid = s.astype(jnp.bfloat16)
        right = jnp.concatenate([s[:, 1:, :], zcol], axis=1).astype(jnp.bfloat16)
        slabs = (left, mid, right)                             # kx = 0, 1, 2

        # Tap k = dy*3 + dx; each piece is a layout-free (64, 128) slab.
        pieces = [slabs[dx][dy:dy + H].reshape(H * W, PAD_C)
                  for dy in range(3) for dx in range(3)]
        patches = jnp.concatenate(pieces, axis=1)              # (64, 1152) bf16

        acc = jnp.dot(patches, w_ref[j],
                      preferred_element_type=jnp.float32)      # (64, 128) f32
        act = jnp.maximum(acc + b_ref[0, j], 0.0)

        if j < LAYERS_PER_STEP - 1:
            s_ref[1:H + 1] = act.reshape(H, W, PAD_C)
        else:
            @pl.when(step < NUM_STEPS - 1)
            def _store_next_input():
                s_ref[1:H + 1] = act.reshape(H, W, PAD_C)

            @pl.when(step == NUM_STEPS - 1)
            def _heads():
                x1 = act[:, :HEAD_CH]          # (64, 64) c9_1 output (hw, c)
                x2 = act[:, HEAD_CH:]          # (64, 64) c9_2 output (hw, c)

                # Critic: lane-dense elementwise product + full reduce.
                prod = x2 * wc_ref[...]
                csum = jnp.sum(jnp.sum(prod, axis=1, keepdims=True),
                               axis=0, keepdims=True)
                critic_ref[...] = csum + bc_ref[...]

                # Actor: flatten x1 (hw-major, c-minor) into row 0 of row_ref
                # with 64 masked lane-slice stores (no reshape needed).
                for h in range(H * W):
                    row_ref[0:1, h * HEAD_CH:(h + 1) * HEAD_CH] = x1[h:h + 1, :]
                logits = (jnp.dot(row_ref[...].astype(jnp.bfloat16), wa_ref[...],
                                  preferred_element_type=jnp.float32)[0:1, :]
                          + ba_ref[...])                       # (1, 64) f32
                m = jnp.max(logits, axis=1, keepdims=True)
                e = jnp.exp(logits - m)
                actor_ref[...] = e / jnp.sum(e, axis=1, keepdims=True)


def value_net_pallas(x_hwc, w_stack, b3, wa, ba, wc, bc):
    return pl.pallas_call(
        fused_forward_kernel,
        out_shape=(jax.ShapeDtypeStruct((1, HEAD_CH), jnp.float32),
                   jax.ShapeDtypeStruct((1, 1), jnp.float32)),
        grid=(NUM_STEPS,),
        in_specs=[
            pl.BlockSpec((H, W, PAD_C), lambda i: (0, 0, 0)),               # x
            pl.BlockSpec((LAYERS_PER_STEP, TAPS * HID_CH, HID_CH),
                         lambda i: (i, 0, 0)),                              # conv W
            pl.BlockSpec((1, LAYERS_PER_STEP, HID_CH), lambda i: (i, 0, 0)),# conv b
            pl.BlockSpec((FLAT, HEAD_CH), lambda i: (0, 0)),                # actor W
            pl.BlockSpec((1, HEAD_CH), lambda i: (0, 0)),                   # actor b
            pl.BlockSpec((H * W, HEAD_CH), lambda i: (0, 0)),               # critic W
            pl.BlockSpec((1, 1), lambda i: (0, 0)),                         # critic b
        ],
        out_specs=(pl.BlockSpec((1, HEAD_CH), lambda i: (0, 0)),
                   pl.BlockSpec((1, 1), lambda i: (0, 0))),
        scratch_shapes=[pltpu.VMEM((H + 2, W, PAD_C), jnp.float32),
                        pltpu.VMEM((8, FLAT), jnp.float32)],
        compiler_params=pltpu.CompilerParams(
            dimension_semantics=("arbitrary",)),
    )(x_hwc, w_stack, b3, wa, ba, wc, bc)


# ---------------------------------------------------------------------------
# Parameter init (PyTorch-layout uniform fan-in init, then packed for kernels)
# ---------------------------------------------------------------------------
def _conv_to_k_major(w_oihw):
    """(Cout, Cin, 3, 3) torch layout -> (9*Cin, Cout), row = (ky*3+kx)*Cin+cin."""
    cout, cin = w_oihw.shape[0], w_oihw.shape[1]
    return jnp.transpose(w_oihw, (2, 3, 1, 0)).reshape(TAPS * cin, cout)


def init_params(key):
    keys = jax.random.split(key, 24)
    ki = iter(keys)

    def conv_w(k, cout, cin):
        bound = 1.0 / math.sqrt(cin * 9)
        return jax.random.uniform(k, (cout, cin, 3, 3), jnp.float32, -bound, bound)

    def conv_b(k, cout, cin):
        bound = 1.0 / math.sqrt(cin * 9)
        return jax.random.uniform(k, (cout,), jnp.float32, -bound, bound)

    w_layers, b_layers = [], []

    # c1: Cin = 2, zero-padded to 128 (exact: input channels are padded too).
    w1 = conv_w(next(ki), HID_CH, IN_CH)
    b1 = conv_b(next(ki), HID_CH, IN_CH)
    w1p = jnp.pad(w1, ((0, 0), (0, PAD_C - IN_CH), (0, 0), (0, 0)))
    w_layers.append(_conv_to_k_major(w1p))
    b_layers.append(b1)

    # c2..c8
    for _ in range(7):
        w = conv_w(next(ki), HID_CH, HID_CH)
        b = conv_b(next(ki), HID_CH, HID_CH)
        w_layers.append(_conv_to_k_major(w))
        b_layers.append(b)

    # Fused head layer: [c9_1 | c9_2] concatenated along Cout.
    w91 = conv_w(next(ki), HEAD_CH, HID_CH)
    b91 = conv_b(next(ki), HEAD_CH, HID_CH)
    w92 = conv_w(next(ki), HEAD_CH, HID_CH)
    b92 = conv_b(next(ki), HEAD_CH, HID_CH)
    w9 = jnp.concatenate([w91, w92], axis=0)                  # (128, 128, 3, 3)
    b9 = jnp.concatenate([b91, b92], axis=0)
    w_layers.append(_conv_to_k_major(w9))
    b_layers.append(b9)

    w_stack = jnp.stack(w_layers).astype(jnp.bfloat16)        # (9, 1152, 128)
    b3 = jnp.stack(b_layers).reshape(NUM_STEPS, LAYERS_PER_STEP, HID_CH)

    # Actor: torch Linear(4096, 64); torch flat index = c*64 + hw.
    bound = 1.0 / math.sqrt(FLAT)
    wa_t = jax.random.uniform(next(ki), (HEAD_CH, FLAT), jnp.float32, -bound, bound)
    ba = jax.random.uniform(next(ki), (HEAD_CH,), jnp.float32, -bound, bound)
    # Fold torch's (c, hw) flatten into the weight: kernel feeds (hw, c) rows.
    wa = (wa_t.reshape(HEAD_CH, HEAD_CH, H * W)               # (o, c, hw)
              .transpose(2, 1, 0)                             # (hw, c, o)
              .reshape(FLAT, HEAD_CH)
              .astype(jnp.bfloat16))

    # Critic: torch Linear(4096, 1) -> lane-dense (hw, c) tile.
    wc_t = jax.random.uniform(next(ki), (1, FLAT), jnp.float32, -bound, bound)
    bc = jax.random.uniform(next(ki), (1,), jnp.float32, -bound, bound)
    wc = wc_t.reshape(HEAD_CH, H * W).transpose(1, 0)         # (64_hw, 64_c)

    return dict(w_stack=w_stack, b3=b3,
                wa=wa, ba=ba.reshape(1, HEAD_CH),
                wc=wc, bc=bc.reshape(1, 1))


# ---------------------------------------------------------------------------
# Full forward pass (matches ValueNetwork.forward, batch = 1)
# ---------------------------------------------------------------------------
@jax.jit
def value_network_forward(state_nchw, params):
    # (1, 2, 8, 8) NCHW -> (8, 8, 128) HWC with zero-padded channels.
    x = jnp.transpose(state_nchw[0], (1, 2, 0))
    x = jnp.pad(x, ((0, 0), (0, 0), (0, PAD_C - IN_CH)))
    return value_net_pallas(x, params["w_stack"], params["b3"], params["wa"],
                            params["ba"], params["wc"], params["bc"])


# ---------------------------------------------------------------------------
if __name__ == "__main__":
    key = jax.random.PRNGKey(0)
    k_param, k_in = jax.random.split(key)
    params = init_params(k_param)
    state = jax.random.normal(k_in, (1, IN_CH, H, W), jnp.float32)

    actor, critic = value_network_forward(state, params)
    actor = jax.block_until_ready(actor)
    critic = jax.block_until_ready(critic)

    assert actor.shape == (1, HEAD_CH)
    assert critic.shape == (1, 1)
    assert bool(jnp.isfinite(actor).all()) and bool(jnp.isfinite(critic).all())
    assert abs(float(jnp.sum(actor)) - 1.0) < 1e-4   # softmax row sums to 1

    print("KERNEL_OK")
</pallas_src>

<mosaic_0001>
module attributes {stable_mosaic.version = 11 : i64} {
  func.func @fused_forward_kernel(%arg0: i32, %arg1: memref<8x8x128xf32, #tpu.memory_space<vmem>>, %arg2: memref<3x1152x128xbf16, #tpu.memory_space<vmem>>, %arg3: memref<1x3x128xf32, #tpu.memory_space<vmem>>, %arg4: memref<4096x64xbf16, #tpu.memory_space<vmem>>, %arg5: memref<1x64xf32, #tpu.memory_space<vmem>>, %arg6: memref<64x64xf32, #tpu.memory_space<vmem>>, %arg7: memref<1x1xf32, #tpu.memory_space<vmem>>, %arg8: memref<1x64xf32, #tpu.memory_space<vmem>>, %arg9: memref<1x1xf32, #tpu.memory_space<vmem>>, %arg10: memref<10x8x128xf32, #tpu.memory_space<vmem>>, %arg11: memref<8x4096xf32, #tpu.memory_space<vmem>>) attributes {dimension_semantics = [#tpu.dimension_semantics<arbitrary>], iteration_bounds = array<i64: 3>, scalar_prefetch = 0 : i64, scratch_operands = 2 : i64, tpu.core_type = #tpu.core_type<tc>, window_params = [{pipeline_mode = #tpu.pipeline_mode<synchronous>, transform_indices = @transform_0, window_bounds = array<i64: 8, 8, 128>}, {transform_indices = @transform_1, window_bounds = array<i64: 3, 1152, 128>}, {transform_indices = @transform_2, window_bounds = array<i64: 1, 3, 128>}, {pipeline_mode = #tpu.pipeline_mode<synchronous>, transform_indices = @transform_3, window_bounds = array<i64: 4096, 64>}, {pipeline_mode = #tpu.pipeline_mode<synchronous>, transform_indices = @transform_4, window_bounds = array<i64: 1, 64>}, {pipeline_mode = #tpu.pipeline_mode<synchronous>, transform_indices = @transform_5, window_bounds = array<i64: 64, 64>}, {pipeline_mode = #tpu.pipeline_mode<synchronous>, transform_indices = @transform_6, window_bounds = array<i64: 1, 1>}, {pipeline_mode = #tpu.pipeline_mode<synchronous>, transform_indices = @transform_7, window_bounds = array<i64: 1, 64>}, {pipeline_mode = #tpu.pipeline_mode<synchronous>, transform_indices = @transform_8, window_bounds = array<i64: 1, 1>}]} {
    %c0_i32 = arith.constant 0 : i32
    %0 = arith.cmpi eq, %arg0, %c0_i32 : i32
    %1 = arith.extui %0 : i1 to i32
    %c0_i32_0 = arith.constant 0 : i32
    %2 = arith.cmpi ne, %1, %c0_i32_0 : i32
    scf.if %2 {
      %cst_42 = arith.constant 0.000000e+00 : f32
      %127 = vector.broadcast %cst_42 : f32 to vector<1x8x128xf32>
      %c0_43 = arith.constant 0 : index
      %c0_44 = arith.constant 0 : index
      %c0_45 = arith.constant 0 : index
      %128 = vector.load %arg10[%c0_43, %c0_44, %c0_45] : memref<10x8x128xf32, #tpu.memory_space<vmem>>, vector<1x8x128xf32>
      tpu.vector_store %arg10[%c0_43, %c0_44, %c0_45], %127 {strides = array<i32>} : memref<10x8x128xf32, #tpu.memory_space<vmem>>, vector<1x8x128xf32>,
      %c9 = arith.constant 9 : index
      %c0_46 = arith.constant 0 : index
      %c0_47 = arith.constant 0 : index
      %129 = vector.load %arg10[%c9, %c0_46, %c0_47] : memref<10x8x128xf32, #tpu.memory_space<vmem>>, vector<1x8x128xf32>
      tpu.vector_store %arg10[%c9, %c0_46, %c0_47], %127 {strides = array<i32>} : memref<10x8x128xf32, #tpu.memory_space<vmem>>, vector<1x8x128xf32>,
      %c0_48 = arith.constant 0 : index
      %c0_49 = arith.constant 0 : index
      %c0_50 = arith.constant 0 : index
      %130 = vector.load %arg1[%c0_48, %c0_49, %c0_50] : memref<8x8x128xf32, #tpu.memory_space<vmem>>, vector<8x8x128xf32>
      %c1_51 = arith.constant 1 : index
      %c0_52 = arith.constant 0 : index
      %c0_53 = arith.constant 0 : index
      %131 = vector.load %arg10[%c1_51, %c0_52, %c0_53] : memref<10x8x128xf32, #tpu.memory_space<vmem>>, vector<8x8x128xf32>
      tpu.vector_store %arg10[%c1_51, %c0_52, %c0_53], %130 {strides = array<i32>} : memref<10x8x128xf32, #tpu.memory_space<vmem>>, vector<8x8x128xf32>,
    } else {
    }
    %c0 = arith.constant 0 : index
    %c0_1 = arith.constant 0 : index
    %c0_2 = arith.constant 0 : index
    %3 = vector.load %arg10[%c0, %c0_1, %c0_2] : memref<10x8x128xf32, #tpu.memory_space<vmem>>, vector<10x8x128xf32>
    %cst = arith.constant 0.000000e+00 : f32
    %4 = vector.broadcast %cst : f32 to vector<10x1x128xf32>
    %5 = vector.extract_strided_slice %3 {offsets = [0, 0, 0], sizes = [10, 7, 128], strides = [1, 1, 1]} : vector<10x8x128xf32> to vector<10x7x128xf32>
    %6 = tpu.concatenate %4, %5 in 1 : vector<10x1x128xf32>, vector<10x7x128xf32> -> vector<10x8x128xf32>
    %7 = arith.truncf %6 : vector<10x8x128xf32> to vector<10x8x128xbf16>
    %8 = arith.truncf %3 : vector<10x8x128xf32> to vector<10x8x128xbf16>
    %9 = vector.extract_strided_slice %3 {offsets = [0, 1, 0], sizes = [10, 7, 128], strides = [1, 1, 1]} : vector<10x8x128xf32> to vector<10x7x128xf32>
    %10 = tpu.concatenate %9, %4 in 1 : vector<10x7x128xf32>, vector<10x1x128xf32> -> vector<10x8x128xf32>
    %11 = arith.truncf %10 : vector<10x8x128xf32> to vector<10x8x128xbf16>
    %12 = vector.extract_strided_slice %7 {offsets = [0, 0, 0], sizes = [8, 8, 128], strides = [1, 1, 1]} : vector<10x8x128xbf16> to vector<8x8x128xbf16>
    %13 = vector.shape_cast %12 : vector<8x8x128xbf16> to vector<64x128xbf16>
    %14 = vector.extract_strided_slice %8 {offsets = [0, 0, 0], sizes = [8, 8, 128], strides = [1, 1, 1]} : vector<10x8x128xbf16> to vector<8x8x128xbf16>
    %15 = vector.shape_cast %14 : vector<8x8x128xbf16> to vector<64x128xbf16>
    %16 = vector.extract_strided_slice %11 {offsets = [0, 0, 0], sizes = [8, 8, 128], strides = [1, 1, 1]} : vector<10x8x128xbf16> to vector<8x8x128xbf16>
    %17 = vector.shape_cast %16 : vector<8x8x128xbf16> to vector<64x128xbf16>
    %18 = vector.extract_strided_slice %7 {offsets = [1, 0, 0], sizes = [8, 8, 128], strides = [1, 1, 1]} : vector<10x8x128xbf16> to vector<8x8x128xbf16>
    %19 = vector.shape_cast %18 : vector<8x8x128xbf16> to vector<64x128xbf16>
    %20 = vector.extract_strided_slice %8 {offsets = [1, 0, 0], sizes = [8, 8, 128], strides = [1, 1, 1]} : vector<10x8x128xbf16> to vector<8x8x128xbf16>
    %21 = vector.shape_cast %20 : vector<8x8x128xbf16> to vector<64x128xbf16>
    %22 = vector.extract_strided_slice %11 {offsets = [1, 0, 0], sizes = [8, 8, 128], strides = [1, 1, 1]} : vector<10x8x128xbf16> to vector<8x8x128xbf16>
    %23 = vector.shape_cast %22 : vector<8x8x128xbf16> to vector<64x128xbf16>
    %24 = vector.extract_strided_slice %7 {offsets = [2, 0, 0], sizes = [8, 8, 128], strides = [1, 1, 1]} : vector<10x8x128xbf16> to vector<8x8x128xbf16>
    %25 = vector.shape_cast %24 : vector<8x8x128xbf16> to vector<64x128xbf16>
    %26 = vector.extract_strided_slice %8 {offsets = [2, 0, 0], sizes = [8, 8, 128], strides = [1, 1, 1]} : vector<10x8x128xbf16> to vector<8x8x128xbf16>
    %27 = vector.shape_cast %26 : vector<8x8x128xbf16> to vector<64x128xbf16>
    %28 = vector.extract_strided_slice %11 {offsets = [2, 0, 0], sizes = [8, 8, 128], strides = [1, 1, 1]} : vector<10x8x128xbf16> to vector<8x8x128xbf16>
    %29 = vector.shape_cast %28 : vector<8x8x128xbf16> to vector<64x128xbf16>
    %30 = tpu.concatenate %13, %15, %17, %19, %21, %23, %25, %27, %29 in 1 : vector<64x128xbf16>, vector<64x128xbf16>, vector<64x128xbf16>, vector<64x128xbf16>, vector<64x128xbf16>, vector<64x128xbf16>, vector<64x128xbf16>, vector<64x128xbf16>, vector<64x128xbf16> -> vector<64x1152xbf16>
    %c0_3 = arith.constant 0 : index
    %c0_4 = arith.constant 0 : index
    %c0_5 = arith.constant 0 : index
    %31 = vector.load %arg2[%c0_3, %c0_4, %c0_5] : memref<3x1152x128xbf16, #tpu.memory_space<vmem>>, vector<1x1152x128xbf16>
    %32 = vector.shape_cast %31 : vector<1x1152x128xbf16> to vector<1152x128xbf16>
    %cst_6 = arith.constant dense<0.000000e+00> : vector<64x128xf32>
    %33 = tpu.matmul %30, %32, %cst_6 {dimension_numbers = #tpu.dot_dimension_numbers<[1], [0], [0], [1], [0, 0, 1, 1], [], []>} : vector<64x1152xbf16>, vector<1152x128xbf16>, vector<64x128xf32> -> vector<64x128xf32>
    %c0_7 = arith.constant 0 : index
    %c0_8 = arith.constant 0 : index
    %c0_9 = arith.constant 0 : index
    %34 = vector.load %arg3[%c0_7, %c0_8, %c0_9] : memref<1x3x128xf32, #tpu.memory_space<vmem>>, vector<1x1x128xf32>
    %35 = vector.shape_cast %34 : vector<1x1x128xf32> to vector<128xf32>
    %36 = vector.shape_cast %35 : vector<128xf32> to vector<1x128xf32>
    %37 = vector.broadcast %36 : vector<1x128xf32> to vector<64x128xf32>
    %38 = arith.addf %33, %37 : vector<64x128xf32>
    %cst_10 = arith.constant 0.000000e+00 : f32
    %39 = vector.broadcast %cst_10 : f32 to vector<64x128xf32>
    %40 = arith.maximumf %38, %39 : vector<64x128xf32>
    %41 = vector.shape_cast %40 : vector<64x128xf32> to vector<8x8x128xf32>
    %c1 = arith.constant 1 : index
    %c0_11 = arith.constant 0 : index
    %c0_12 = arith.constant 0 : index
    %42 = vector.load %arg10[%c1, %c0_11, %c0_12] : memref<10x8x128xf32, #tpu.memory_space<vmem>>, vector<8x8x128xf32>
    tpu.vector_store %arg10[%c1, %c0_11, %c0_12], %41 {strides = array<i32>} : memref<10x8x128xf32, #tpu.memory_space<vmem>>, vector<8x8x128xf32>,
    %c0_13 = arith.constant 0 : index
    %c0_14 = arith.constant 0 : index
    %c0_15 = arith.constant 0 : index
    %43 = vector.load %arg10[%c0_13, %c0_14, %c0_15] : memref<10x8x128xf32, #tpu.memory_space<vmem>>, vector<10x8x128xf32>
    %cst_16 = arith.constant 0.000000e+00 : f32
    %44 = vector.broadcast %cst_16 : f32 to vector<10x1x128xf32>
    %45 = vector.extract_strided_slice %43 {offsets = [0, 0, 0], sizes = [10, 7, 128], strides = [1, 1, 1]} : vector<10x8x128xf32> to vector<10x7x128xf32>
    %46 = tpu.concatenate %44, %45 in 1 : vector<10x1x128xf32>, vector<10x7x128xf32> -> vector<10x8x128xf32>
    %47 = arith.truncf %46 : vector<10x8x128xf32> to vector<10x8x128xbf16>
    %48 = arith.truncf %43 : vector<10x8x128xf32> to vector<10x8x128xbf16>
    %49 = vector.extract_strided_slice %43 {offsets = [0, 1, 0], sizes = [10, 7, 128], strides = [1, 1, 1]} : vector<10x8x128xf32> to vector<10x7x128xf32>
    %50 = tpu.concatenate %49, %44 in 1 : vector<10x7x128xf32>, vector<10x1x128xf32> -> vector<10x8x128xf32>
    %51 = arith.truncf %50 : vector<10x8x128xf32> to vector<10x8x128xbf16>
    %52 = vector.extract_strided_slice %47 {offsets = [0, 0, 0], sizes = [8, 8, 128], strides = [1, 1, 1]} : vector<10x8x128xbf16> to vector<8x8x128xbf16>
    %53 = vector.shape_cast %52 : vector<8x8x128xbf16> to vector<64x128xbf16>
    %54 = vector.extract_strided_slice %48 {offsets = [0, 0, 0], sizes = [8, 8, 128], strides = [1, 1, 1]} : vector<10x8x128xbf16> to vector<8x8x128xbf16>
    %55 = vector.shape_cast %54 : vector<8x8x128xbf16> to vector<64x128xbf16>
    %56 = vector.extract_strided_slice %51 {offsets = [0, 0, 0], sizes = [8, 8, 128], strides = [1, 1, 1]} : vector<10x8x128xbf16> to vector<8x8x128xbf16>
    %57 = vector.shape_cast %56 : vector<8x8x128xbf16> to vector<64x128xbf16>
    %58 = vector.extract_strided_slice %47 {offsets = [1, 0, 0], sizes = [8, 8, 128], strides = [1, 1, 1]} : vector<10x8x128xbf16> to vector<8x8x128xbf16>
    %59 = vector.shape_cast %58 : vector<8x8x128xbf16> to vector<64x128xbf16>
    %60 = vector.extract_strided_slice %48 {offsets = [1, 0, 0], sizes = [8, 8, 128], strides = [1, 1, 1]} : vector<10x8x128xbf16> to vector<8x8x128xbf16>
    %61 = vector.shape_cast %60 : vector<8x8x128xbf16> to vector<64x128xbf16>
    %62 = vector.extract_strided_slice %51 {offsets = [1, 0, 0], sizes = [8, 8, 128], strides = [1, 1, 1]} : vector<10x8x128xbf16> to vector<8x8x128xbf16>
    %63 = vector.shape_cast %62 : vector<8x8x128xbf16> to vector<64x128xbf16>
    %64 = vector.extract_strided_slice %47 {offsets = [2, 0, 0], sizes = [8, 8, 128], strides = [1, 1, 1]} : vector<10x8x128xbf16> to vector<8x8x128xbf16>
    %65 = vector.shape_cast %64 : vector<8x8x128xbf16> to vector<64x128xbf16>
    %66 = vector.extract_strided_slice %48 {offsets = [2, 0, 0], sizes = [8, 8, 128], strides = [1, 1, 1]} : vector<10x8x128xbf16> to vector<8x8x128xbf16>
    %67 = vector.shape_cast %66 : vector<8x8x128xbf16> to vector<64x128xbf16>
    %68 = vector.extract_strided_slice %51 {offsets = [2, 0, 0], sizes = [8, 8, 128], strides = [1, 1, 1]} : vector<10x8x128xbf16> to vector<8x8x128xbf16>
    %69 = vector.shape_cast %68 : vector<8x8x128xbf16> to vector<64x128xbf16>
    %70 = tpu.concatenate %53, %55, %57, %59, %61, %63, %65, %67, %69 in 1 : vector<64x128xbf16>, vector<64x128xbf16>, vector<64x128xbf16>, vector<64x128xbf16>, vector<64x128xbf16>, vector<64x128xbf16>, vector<64x128xbf16>, vector<64x128xbf16>, vector<64x128xbf16> -> vector<64x1152xbf16>
    %c1_17 = arith.constant 1 : index
    %c0_18 = arith.constant 0 : index
    %c0_19 = arith.constant 0 : index
    %71 = vector.load %arg2[%c1_17, %c0_18, %c0_19] : memref<3x1152x128xbf16, #tpu.memory_space<vmem>>, vector<1x1152x128xbf16>
    %72 = vector.shape_cast %71 : vector<1x1152x128xbf16> to vector<1152x128xbf16>
    %cst_20 = arith.constant dense<0.000000e+00> : vector<64x128xf32>
    %73 = tpu.matmul %70, %72, %cst_20 {dimension_numbers = #tpu.dot_dimension_numbers<[1], [0], [0], [1], [0, 0, 1, 1], [], []>} : vector<64x1152xbf16>, vector<1152x128xbf16>, vector<64x128xf32> -> vector<64x128xf32>
    %c0_21 = arith.constant 0 : index
    %c1_22 = arith.constant 1 : index
    %c0_23 = arith.constant 0 : index
    %74 = vector.load %arg3[%c0_21, %c1_22, %c0_23] : memref<1x3x128xf32, #tpu.memory_space<vmem>>, vector<1x1x128xf32>
    %75 = vector.shape_cast %74 : vector<1x1x128xf32> to vector<128xf32>
    %76 = vector.shape_cast %75 : vector<128xf32> to vector<1x128xf32>
    %77 = vector.broadcast %76 : vector<1x128xf32> to vector<64x128xf32>
    %78 = arith.addf %73, %77 : vector<64x128xf32>
    %cst_24 = arith.constant 0.000000e+00 : f32
    %79 = vector.broadcast %cst_24 : f32 to vector<64x128xf32>
    %80 = arith.maximumf %78, %79 : vector<64x128xf32>
    %81 = vector.shape_cast %80 : vector<64x128xf32> to vector<8x8x128xf32>
    %c1_25 = arith.constant 1 : index
    %c0_26 = arith.constant 0 : index
    %c0_27 = arith.constant 0 : index
    %82 = vector.load %arg10[%c1_25, %c0_26, %c0_27] : memref<10x8x128xf32, #tpu.memory_space<vmem>>, vector<8x8x128xf32>
    tpu.vector_store %arg10[%c1_25, %c0_26, %c0_27], %81 {strides = array<i32>} : memref<10x8x128xf32, #tpu.memory_space<vmem>>, vector<8x8x128xf32>,
    %c0_28 = arith.constant 0 : index
    %c0_29 = arith.constant 0 : index
    %c0_30 = arith.constant 0 : index
    %83 = vector.load %arg10[%c0_28, %c0_29, %c0_30] : memref<10x8x128xf32, #tpu.memory_space<vmem>>, vector<10x8x128xf32>
    %cst_31 = arith.constant 0.000000e+00 : f32
    %84 = vector.broadcast %cst_31 : f32 to vector<10x1x128xf32>
    %85 = vector.extract_strided_slice %83 {offsets = [0, 0, 0], sizes = [10, 7, 128], strides = [1, 1, 1]} : vector<10x8x128xf32> to vector<10x7x128xf32>
    %86 = tpu.concatenate %84, %85 in 1 : vector<10x1x128xf32>, vector<10x7x128xf32> -> vector<10x8x128xf32>
    %87 = arith.truncf %86 : vector<10x8x128xf32> to vector<10x8x128xbf16>
    %88 = arith.truncf %83 : vector<10x8x128xf32> to vector<10x8x128xbf16>
    %89 = vector.extract_strided_slice %83 {offsets = [0, 1, 0], sizes = [10, 7, 128], strides = [1, 1, 1]} : vector<10x8x128xf32> to vector<10x7x128xf32>
    %90 = tpu.concatenate %89, %84 in 1 : vector<10x7x128xf32>, vector<10x1x128xf32> -> vector<10x8x128xf32>
    %91 = arith.truncf %90 : vector<10x8x128xf32> to vector<10x8x128xbf16>
    %92 = vector.extract_strided_slice %87 {offsets = [0, 0, 0], sizes = [8, 8, 128], strides = [1, 1, 1]} : vector<10x8x128xbf16> to vector<8x8x128xbf16>
    %93 = vector.shape_cast %92 : vector<8x8x128xbf16> to vector<64x128xbf16>
    %94 = vector.extract_strided_slice %88 {offsets = [0, 0, 0], sizes = [8, 8, 128], strides = [1, 1, 1]} : vector<10x8x128xbf16> to vector<8x8x128xbf16>
    %95 = vector.shape_cast %94 : vector<8x8x128xbf16> to vector<64x128xbf16>
    %96 = vector.extract_strided_slice %91 {offsets = [0, 0, 0], sizes = [8, 8, 128], strides = [1, 1, 1]} : vector<10x8x128xbf16> to vector<8x8x128xbf16>
    %97 = vector.shape_cast %96 : vector<8x8x128xbf16> to vector<64x128xbf16>
    %98 = vector.extract_strided_slice %87 {offsets = [1, 0, 0], sizes = [8, 8, 128], strides = [1, 1, 1]} : vector<10x8x128xbf16> to vector<8x8x128xbf16>
    %99 = vector.shape_cast %98 : vector<8x8x128xbf16> to vector<64x128xbf16>
    %100 = vector.extract_strided_slice %88 {offsets = [1, 0, 0], sizes = [8, 8, 128], strides = [1, 1, 1]} : vector<10x8x128xbf16> to vector<8x8x128xbf16>
    %101 = vector.shape_cast %100 : vector<8x8x128xbf16> to vector<64x128xbf16>
    %102 = vector.extract_strided_slice %91 {offsets = [1, 0, 0], sizes = [8, 8, 128], strides = [1, 1, 1]} : vector<10x8x128xbf16> to vector<8x8x128xbf16>
    %103 = vector.shape_cast %102 : vector<8x8x128xbf16> to vector<64x128xbf16>
    %104 = vector.extract_strided_slice %87 {offsets = [2, 0, 0], sizes = [8, 8, 128], strides = [1, 1, 1]} : vector<10x8x128xbf16> to vector<8x8x128xbf16>
    %105 = vector.shape_cast %104 : vector<8x8x128xbf16> to vector<64x128xbf16>
    %106 = vector.extract_strided_slice %88 {offsets = [2, 0, 0], sizes = [8, 8, 128], strides = [1, 1, 1]} : vector<10x8x128xbf16> to vector<8x8x128xbf16>
    %107 = vector.shape_cast %106 : vector<8x8x128xbf16> to vector<64x128xbf16>
    %108 = vector.extract_strided_slice %91 {offsets = [2, 0, 0], sizes = [8, 8, 128], strides = [1, 1, 1]} : vector<10x8x128xbf16> to vector<8x8x128xbf16>
    %109 = vector.shape_cast %108 : vector<8x8x128xbf16> to vector<64x128xbf16>
    %110 = tpu.concatenate %93, %95, %97, %99, %101, %103, %105, %107, %109 in 1 : vector<64x128xbf16>, vector<64x128xbf16>, vector<64x128xbf16>, vector<64x128xbf16>, vector<64x128xbf16>, vector<64x128xbf16>, vector<64x128xbf16>, vector<64x128xbf16>, vector<64x128xbf16> -> vector<64x1152xbf16>
    %c2 = arith.constant 2 : index
    %c0_32 = arith.constant 0 : index
    %c0_33 = arith.constant 0 : index
    %111 = vector.load %arg2[%c2, %c0_32, %c0_33] : memref<3x1152x128xbf16, #tpu.memory_space<vmem>>, vector<1x1152x128xbf16>
    %112 = vector.shape_cast %111 : vector<1x1152x128xbf16> to vector<1152x128xbf16>
    %cst_34 = arith.constant dense<0.000000e+00> : vector<64x128xf32>
    %113 = tpu.matmul %110, %112, %cst_34 {dimension_numbers = #tpu.dot_dimension_numbers<[1], [0], [0], [1], [0, 0, 1, 1], [], []>} : vector<64x1152xbf16>, vector<1152x128xbf16>, vector<64x128xf32> -> vector<64x128xf32>
    %c0_35 = arith.constant 0 : index
    %c2_36 = arith.constant 2 : index
    %c0_37 = arith.constant 0 : index
    %114 = vector.load %arg3[%c0_35, %c2_36, %c0_37] : memref<1x3x128xf32, #tpu.memory_space<vmem>>, vector<1x1x128xf32>
    %115 = vector.shape_cast %114 : vector<1x1x128xf32> to vector<128xf32>
    %116 = vector.shape_cast %115 : vector<128xf32> to vector<1x128xf32>
    %117 = vector.broadcast %116 : vector<1x128xf32> to vector<64x128xf32>
    %118 = arith.addf %113, %117 : vector<64x128xf32>
    %cst_38 = arith.constant 0.000000e+00 : f32
    %119 = vector.broadcast %cst_38 : f32 to vector<64x128xf32>
    %120 = arith.maximumf %118, %119 : vector<64x128xf32>
    %c2_i32 = arith.constant 2 : i32
    %121 = arith.cmpi slt, %arg0, %c2_i32 : i32
    %122 = arith.extui %121 : i1 to i32
    %c0_i32_39 = arith.constant 0 : i32
    %123 = arith.cmpi ne, %122, %c0_i32_39 : i32
    scf.if %123 {
      %127 = vector.shape_cast %120 : vector<64x128xf32> to vector<8x8x128xf32>
      %c1_42 = arith.constant 1 : index
      %c0_43 = arith.constant 0 : index
      %c0_44 = arith.constant 0 : index
      %128 = vector.load %arg10[%c1_42, %c0_43, %c0_44] : memref<10x8x128xf32, #tpu.memory_space<vmem>>, vector<8x8x128xf32>
      tpu.vector_store %arg10[%c1_42, %c0_43, %c0_44], %127 {strides = array<i32>} : memref<10x8x128xf32, #tpu.memory_space<vmem>>, vector<8x8x128xf32>,
    } else {
    }
    %c2_i32_40 = arith.constant 2 : i32
    %124 = arith.cmpi eq, %arg0, %c2_i32_40 : i32
    %125 = arith.extui %124 : i1 to i32
    %c0_i32_41 = arith.constant 0 : i32
    %126 = arith.cmpi ne, %125, %c0_i32_41 : i32
    scf.if %126 {
      %127 = vector.extract_strided_slice %120 {offsets = [0, 0], sizes = [64, 64], strides = [1, 1]} : vector<64x128xf32> to vector<64x64xf32>
      %128 = vector.extract_strided_slice %120 {offsets = [0, 64], sizes = [64, 64], strides = [1, 1]} : vector<64x128xf32> to vector<64x64xf32>
      %c0_42 = arith.constant 0 : index
      %c0_43 = arith.constant 0 : index
      %129 = vector.load %arg6[%c0_42, %c0_43] : memref<64x64xf32, #tpu.memory_space<vmem>>, vector<64x64xf32>
      %130 = arith.mulf %128, %129 : vector<64x64xf32>
      %cst_44 = arith.constant dense<0.000000e+00> : vector<64xf32>
      %131 = vector.multi_reduction <add>, %130, %cst_44 [1] : vector<64x64xf32> to vector<64xf32>
      %132 = vector.shape_cast %131 : vector<64xf32> to vector<64x1xf32>
      %cst_45 = arith.constant dense<0.000000e+00> : vector<1xf32>
      %133 = vector.multi_reduction <add>, %132, %cst_45 [0] : vector<64x1xf32> to vector<1xf32>
      %134 = vector.shape_cast %133 : vector<1xf32> to vector<1x1xf32>
      %c0_46 = arith.constant 0 : index
      %c0_47 = arith.constant 0 : index
      %135 = vector.load %arg7[%c0_46, %c0_47] : memref<1x1xf32, #tpu.memory_space<vmem>>, vector<1x1xf32>
      %136 = arith.addf %134, %135 : vector<1x1xf32>
      %c0_48 = arith.constant 0 : index
      %c0_49 = arith.constant 0 : index
      %137 = vector.load %arg9[%c0_48, %c0_49] : memref<1x1xf32, #tpu.memory_space<vmem>>, vector<1x1xf32>
      tpu.vector_store %arg9[%c0_48, %c0_49], %136 {strides = array<i32>} : memref<1x1xf32, #tpu.memory_space<vmem>>, vector<1x1xf32>,
      %138 = vector.extract_strided_slice %127 {offsets = [0, 0], sizes = [1, 64], strides = [1, 1]} : vector<64x64xf32> to vector<1x64xf32>
      %c0_50 = arith.constant 0 : index
      %c0_51 = arith.constant 0 : index
      %139 = vector.load %arg11[%c0_50, %c0_51] : memref<8x4096xf32, #tpu.memory_space<vmem>>, vector<1x64xf32>
      tpu.vector_store %arg11[%c0_50, %c0_51], %138 {strides = array<i32>} : memref<8x4096xf32, #tpu.memory_space<vmem>>, vector<1x64xf32>,
      %140 = vector.extract_strided_slice %127 {offsets = [1, 0], sizes = [1, 64], strides = [1, 1]} : vector<64x64xf32> to vector<1x64xf32>
      %c0_52 = arith.constant 0 : index
      %c64 = arith.constant 64 : index
      %141 = vector.load %arg11[%c0_52, %c64] : memref<8x4096xf32, #tpu.memory_space<vmem>>, vector<1x64xf32>
      tpu.vector_store %arg11[%c0_52, %c64], %140 {strides = array<i32>} : memref<8x4096xf32, #tpu.memory_space<vmem>>, vector<1x64xf32>,
      %142 = vector.extract_strided_slice %127 {offsets = [2, 0], sizes = [1, 64], strides = [1, 1]} : vector<64x64xf32> to vector<1x64xf32>
      %c0_53 = arith.constant 0 : index
      %c128 = arith.constant 128 : index
      %143 = vector.load %arg11[%c0_53, %c128] : memref<8x4096xf32, #tpu.memory_space<vmem>>, vector<1x64xf32>
      tpu.vector_store %arg11[%c0_53, %c128], %142 {strides = array<i32>} : memref<8x4096xf32, #tpu.memory_space<vmem>>, vector<1x64xf32>,
      %144 = vector.extract_strided_slice %127 {offsets = [3, 0], sizes = [1, 64], strides = [1, 1]} : vector<64x64xf32> to vector<1x64xf32>
      %c0_54 = arith.constant 0 : index
      %c192 = arith.constant 192 : index
      %145 = vector.load %arg11[%c0_54, %c192] : memref<8x4096xf32, #tpu.memory_space<vmem>>, vector<1x64xf32>
      tpu.vector_store %arg11[%c0_54, %c192], %144 {strides = array<i32>} : memref<8x4096xf32, #tpu.memory_space<vmem>>, vector<1x64xf32>,
      %146 = vector.extract_strided_slice %127 {offsets = [4, 0], sizes = [1, 64], strides = [1, 1]} : vector<64x64xf32> to vector<1x64xf32>
      %c0_55 = arith.constant 0 : index
      %c256 = arith.constant 256 : index
      %147 = vector.load %arg11[%c0_55, %c256] : memref<8x4096xf32, #tpu.memory_space<vmem>>, vector<1x64xf32>
      tpu.vector_store %arg11[%c0_55, %c256], %146 {strides = array<i32>} : memref<8x4096xf32, #tpu.memory_space<vmem>>, vector<1x64xf32>,
      %148 = vector.extract_strided_slice %127 {offsets = [5, 0], sizes = [1, 64], strides = [1, 1]} : vector<64x64xf32> to vector<1x64xf32>
      %c0_56 = arith.constant 0 : index
      %c320 = arith.constant 320 : index
      %149 = vector.load %arg11[%c0_56, %c320] : memref<8x4096xf32, #tpu.memory_space<vmem>>, vector<1x64xf32>
      tpu.vector_store %arg11[%c0_56, %c320], %148 {strides = array<i32>} : memref<8x4096xf32, #tpu.memory_space<vmem>>, vector<1x64xf32>,
      %150 = vector.extract_strided_slice %127 {offsets = [6, 0], sizes = [1, 64], strides = [1, 1]} : vector<64x64xf32> to vector<1x64xf32>
      %c0_57 = arith.constant 0 : index
      %c384 = arith.constant 384 : index
      %151 = vector.load %arg11[%c0_57, %c384] : memref<8x4096xf32, #tpu.memory_space<vmem>>, vector<1x64xf32>
      tpu.vector_store %arg11[%c0_57, %c384], %150 {strides = array<i32>} : memref<8x4096xf32, #tpu.memory_space<vmem>>, vector<1x64xf32>,
      %152 = vector.extract_strided_slice %127 {offsets = [7, 0], sizes = [1, 64], strides = [1, 1]} : vector<64x64xf32> to vector<1x64xf32>
      %c0_58 = arith.constant 0 : index
      %c448 = arith.constant 448 : index
      %153 = vector.load %arg11[%c0_58, %c448] : memref<8x4096xf32, #tpu.memory_space<vmem>>, vector<1x64xf32>
      tpu.vector_store %arg11[%c0_58, %c448], %152 {strides = array<i32>} : memref<8x4096xf32, #tpu.memory_space<vmem>>, vector<1x64xf32>,
      %154 = vector.extract_strided_slice %127 {offsets = [8, 0], sizes = [1, 64], strides = [1, 1]} : vector<64x64xf32> to vector<1x64xf32>
      %c0_59 = arith.constant 0 : index
      %c512 = arith.constant 512 : index
      %155 = vector.load %arg11[%c0_59, %c512] : memref<8x4096xf32, #tpu.memory_space<vmem>>, vector<1x64xf32>
      tpu.vector_store %arg11[%c0_59, %c512], %154 {strides = array<i32>} : memref<8x4096xf32, #tpu.memory_space<vmem>>, vector<1x64xf32>,
      %156 = vector.extract_strided_slice %127 {offsets = [9, 0], sizes = [1, 64], strides = [1, 1]} : vector<64x64xf32> to vector<1x64xf32>
      %c0_60 = arith.constant 0 : index
      %c576 = arith.constant 576 : index
      %157 = vector.load %arg11[%c0_60, %c576] : memref<8x4096xf32, #tpu.memory_space<vmem>>, vector<1x64xf32>
      tpu.vector_store %arg11[%c0_60, %c576], %156 {strides = array<i32>} : memref<8x4096xf32, #tpu.memory_space<vmem>>, vector<1x64xf32>,
      %158 = vector.extract_strided_slice %127 {offsets = [10, 0], sizes = [1, 64], strides = [1, 1]} : vector<64x64xf32> to vector<1x64xf32>
      %c0_61 = arith.constant 0 : index
      %c640 = arith.constant 640 : index
      %159 = vector.load %arg11[%c0_61, %c640] : memref<8x4096xf32, #tpu.memory_space<vmem>>, vector<1x64xf32>
      tpu.vector_store %arg11[%c0_61, %c640], %158 {strides = array<i32>} : memref<8x4096xf32, #tpu.memory_space<vmem>>, vector<1x64xf32>,
      %160 = vector.extract_strided_slice %127 {offsets = [11, 0], sizes = [1, 64], strides = [1, 1]} : vector<64x64xf32> to vector<1x64xf32>
      %c0_62 = arith.constant 0 : index
      %c704 = arith.constant 704 : index
      %161 = vector.load %arg11[%c0_62, %c704] : memref<8x4096xf32, #tpu.memory_space<vmem>>, vector<1x64xf32>
      tpu.vector_store %arg11[%c0_62, %c704], %160 {strides = array<i32>} : memref<8x4096xf32, #tpu.memory_space<vmem>>, vector<1x64xf32>,
      %162 = vector.extract_strided_slice %127 {offsets = [12, 0], sizes = [1, 64], strides = [1, 1]} : vector<64x64xf32> to vector<1x64xf32>
      %c0_63 = arith.constant 0 : index
      %c768 = arith.constant 768 : index
      %163 = vector.load %arg11[%c0_63, %c768] : memref<8x4096xf32, #tpu.memory_space<vmem>>, vector<1x64xf32>
      tpu.vector_store %arg11[%c0_63, %c768], %162 {strides = array<i32>} : memref<8x4096xf32, #tpu.memory_space<vmem>>, vector<1x64xf32>,
      %164 = vector.extract_strided_slice %127 {offsets = [13, 0], sizes = [1, 64], strides = [1, 1]} : vector<64x64xf32> to vector<1x64xf32>
      %c0_64 = arith.constant 0 : index
      %c832 = arith.constant 832 : index
      %165 = vector.load %arg11[%c0_64, %c832] : memref<8x4096xf32, #tpu.memory_space<vmem>>, vector<1x64xf32>
      tpu.vector_store %arg11[%c0_64, %c832], %164 {strides = array<i32>} : memref<8x4096xf32, #tpu.memory_space<vmem>>, vector<1x64xf32>,
      %166 = vector.extract_strided_slice %127 {offsets = [14, 0], sizes = [1, 64], strides = [1, 1]} : vector<64x64xf32> to vector<1x64xf32>
      %c0_65 = arith.constant 0 : index
      %c896 = arith.constant 896 : index
      %167 = vector.load %arg11[%c0_65, %c896] : memref<8x4096xf32, #tpu.memory_space<vmem>>, vector<1x64xf32>
      tpu.vector_store %arg11[%c0_65, %c896], %166 {strides = array<i32>} : memref<8x4096xf32, #tpu.memory_space<vmem>>, vector<1x64xf32>,
      %168 = vector.extract_strided_slice %127 {offsets = [15, 0], sizes = [1, 64], strides = [1, 1]} : vector<64x64xf32> to vector<1x64xf32>
      %c0_66 = arith.constant 0 : index
      %c960 = arith.constant 960 : index
      %169 = vector.load %arg11[%c0_66, %c960] : memref<8x4096xf32, #tpu.memory_space<vmem>>, vector<1x64xf32>
      tpu.vector_store %arg11[%c0_66, %c960], %168 {strides = array<i32>} : memref<8x4096xf32, #tpu.memory_space<vmem>>, vector<1x64xf32>,
      %170 = vector.extract_strided_slice %127 {offsets = [16, 0], sizes = [1, 64], strides = [1, 1]} : vector<64x64xf32> to vector<1x64xf32>
      %c0_67 = arith.constant 0 : index
      %c1024 = arith.constant 1024 : index
      %171 = vector.load %arg11[%c0_67, %c1024] : memref<8x4096xf32, #tpu.memory_space<vmem>>, vector<1x64xf32>
      tpu.vector_store %arg11[%c0_67, %c1024], %170 {strides = array<i32>} : memref<8x4096xf32, #tpu.memory_space<vmem>>, vector<1x64xf32>,
      %172 = vector.extract_strided_slice %127 {offsets = [17, 0], sizes = [1, 64], strides = [1, 1]} : vector<64x64xf32> to vector<1x64xf32>
      %c0_68 = arith.constant 0 : index
      %c1088 = arith.constant 1088 : index
      %173 = vector.load %arg11[%c0_68, %c1088] : memref<8x4096xf32, #tpu.memory_space<vmem>>, vector<1x64xf32>
      tpu.vector_store %arg11[%c0_68, %c1088], %172 {strides = array<i32>} : memref<8x4096xf32, #tpu.memory_space<vmem>>, vector<1x64xf32>,
      %174 = vector.extract_strided_slice %127 {offsets = [18, 0], sizes = [1, 64], strides = [1, 1]} : vector<64x64xf32> to vector<1x64xf32>
      %c0_69 = arith.constant 0 : index
      %c1152 = arith.constant 1152 : index
      %175 = vector.load %arg11[%c0_69, %c1152] : memref<8x4096xf32, #tpu.memory_space<vmem>>, vector<1x64xf32>
      tpu.vector_store %arg11[%c0_69, %c1152], %174 {strides = array<i32>} : memref<8x4096xf32, #tpu.memory_space<vmem>>, vector<1x64xf32>,
      %176 = vector.extract_strided_slice %127 {offsets = [19, 0], sizes = [1, 64], strides = [1, 1]} : vector<64x64xf32> to vector<1x64xf32>
      %c0_70 = arith.constant 0 : index
      %c1216 = arith.constant 1216 : index
      %177 = vector.load %arg11[%c0_70, %c1216] : memref<8x4096xf32, #tpu.memory_space<vmem>>, vector<1x64xf32>
      tpu.vector_store %arg11[%c0_70, %c1216], %176 {strides = array<i32>} : memref<8x4096xf32, #tpu.memory_space<vmem>>, vector<1x64xf32>,
      %178 = vector.extract_strided_slice %127 {offsets = [20, 0], sizes = [1, 64], strides = [1, 1]} : vector<64x64xf32> to vector<1x64xf32>
      %c0_71 = arith.constant 0 : index
      %c1280 = arith.constant 1280 : index
      %179 = vector.load %arg11[%c0_71, %c1280] : memref<8x4096xf32, #tpu.memory_space<vmem>>, vector<1x64xf32>
      tpu.vector_store %arg11[%c0_71, %c1280], %178 {strides = array<i32>} : memref<8x4096xf32, #tpu.memory_space<vmem>>, vector<1x64xf32>,
      %180 = vector.extract_strided_slice %127 {offsets = [21, 0], sizes = [1, 64], strides = [1, 1]} : vector<64x64xf32> to vector<1x64xf32>
      %c0_72 = arith.constant 0 : index
      %c1344 = arith.constant 1344 : index
      %181 = vector.load %arg11[%c0_72, %c1344] : memref<8x4096xf32, #tpu.memory_space<vmem>>, vector<1x64xf32>
      tpu.vector_store %arg11[%c0_72, %c1344], %180 {strides = array<i32>} : memref<8x4096xf32, #tpu.memory_space<vmem>>, vector<1x64xf32>,
      %182 = vector.extract_strided_slice %127 {offsets = [22, 0], sizes = [1, 64], strides = [1, 1]} : vector<64x64xf32> to vector<1x64xf32>
      %c0_73 = arith.constant 0 : index
      %c1408 = arith.constant 1408 : index
      %183 = vector.load %arg11[%c0_73, %c1408] : memref<8x4096xf32, #tpu.memory_space<vmem>>, vector<1x64xf32>
      tpu.vector_store %arg11[%c0_73, %c1408], %182 {strides = array<i32>} : memref<8x4096xf32, #tpu.memory_space<vmem>>, vector<1x64xf32>,
      %184 = vector.extract_strided_slice %127 {offsets = [23, 0], sizes = [1, 64], strides = [1, 1]} : vector<64x64xf32> to vector<1x64xf32>
      %c0_74 = arith.constant 0 : index
      %c1472 = arith.constant 1472 : index
      %185 = vector.load %arg11[%c0_74, %c1472] : memref<8x4096xf32, #tpu.memory_space<vmem>>, vector<1x64xf32>
      tpu.vector_store %arg11[%c0_74, %c1472], %184 {strides = array<i32>} : memref<8x4096xf32, #tpu.memory_space<vmem>>, vector<1x64xf32>,
      %186 = vector.extract_strided_slice %127 {offsets = [24, 0], sizes = [1, 64], strides = [1, 1]} : vector<64x64xf32> to vector<1x64xf32>
      %c0_75 = arith.constant 0 : index
      %c1536 = arith.constant 1536 : index
      %187 = vector.load %arg11[%c0_75, %c1536] : memref<8x4096xf32, #tpu.memory_space<vmem>>, vector<1x64xf32>
      tpu.vector_store %arg11[%c0_75, %c1536], %186 {strides = array<i32>} : memref<8x4096xf32, #tpu.memory_space<vmem>>, vector<1x64xf32>,
      %188 = vector.extract_strided_slice %127 {offsets = [25, 0], sizes = [1, 64], strides = [1, 1]} : vector<64x64xf32> to vector<1x64xf32>
      %c0_76 = arith.constant 0 : index
      %c1600 = arith.constant 1600 : index
      %189 = vector.load %arg11[%c0_76, %c1600] : memref<8x4096xf32, #tpu.memory_space<vmem>>, vector<1x64xf32>
      tpu.vector_store %arg11[%c0_76, %c1600], %188 {strides = array<i32>} : memref<8x4096xf32, #tpu.memory_space<vmem>>, vector<1x64xf32>,
      %190 = vector.extract_strided_slice %127 {offsets = [26, 0], sizes = [1, 64], strides = [1, 1]} : vector<64x64xf32> to vector<1x64xf32>
      %c0_77 = arith.constant 0 : index
      %c1664 = arith.constant 1664 : index
      %191 = vector.load %arg11[%c0_77, %c1664] : memref<8x4096xf32, #tpu.memory_space<vmem>>, vector<1x64xf32>
      tpu.vector_store %arg11[%c0_77, %c1664], %190 {strides = array<i32>} : memref<8x4096xf32, #tpu.memory_space<vmem>>, vector<1x64xf32>,
      %192 = vector.extract_strided_slice %127 {offsets = [27, 0], sizes = [1, 64], strides = [1, 1]} : vector<64x64xf32> to vector<1x64xf32>
      %c0_78 = arith.constant 0 : index
      %c1728 = arith.constant 1728 : index
      %193 = vector.load %arg11[%c0_78, %c1728] : memref<8x4096xf32, #tpu.memory_space<vmem>>, vector<1x64xf32>
      tpu.vector_store %arg11[%c0_78, %c1728], %192 {strides = array<i32>} : memref<8x4096xf32, #tpu.memory_space<vmem>>, vector<1x64xf32>,
      %194 = vector.extract_strided_slice %127 {offsets = [28, 0], sizes = [1, 64], strides = [1, 1]} : vector<64x64xf32> to vector<1x64xf32>
      %c0_79 = arith.constant 0 : index
      %c1792 = arith.constant 1792 : index
      %195 = vector.load %arg11[%c0_79, %c1792] : memref<8x4096xf32, #tpu.memory_space<vmem>>, vector<1x64xf32>
      tpu.vector_store %arg11[%c0_79, %c1792], %194 {strides = array<i32>} : memref<8x4096xf32, #tpu.memory_space<vmem>>, vector<1x64xf32>,
      %196 = vector.extract_strided_slice %127 {offsets = [29, 0], sizes = [1, 64], strides = [1, 1]} : vector<64x64xf32> to vector<1x64xf32>
      %c0_80 = arith.constant 0 : index
      %c1856 = arith.constant 1856 : index
      %197 = vector.load %arg11[%c0_80, %c1856] : memref<8x4096xf32, #tpu.memory_space<vmem>>, vector<1x64xf32>
      tpu.vector_store %arg11[%c0_80, %c1856], %196 {strides = array<i32>} : memref<8x4096xf32, #tpu.memory_space<vmem>>, vector<1x64xf32>,
      %198 = vector.extract_strided_slice %127 {offsets = [30, 0], sizes = [1, 64], strides = [1, 1]} : vector<64x64xf32> to vector<1x64xf32>
      %c0_81 = arith.constant 0 : index
      %c1920 = arith.constant 1920 : index
      %199 = vector.load %arg11[%c0_81, %c1920] : memref<8x4096xf32, #tpu.memory_space<vmem>>, vector<1x64xf32>
      tpu.vector_store %arg11[%c0_81, %c1920], %198 {strides = array<i32>} : memref<8x4096xf32, #tpu.memory_space<vmem>>, vector<1x64xf32>,
      %200 = vector.extract_strided_slice %127 {offsets = [31, 0], sizes = [1, 64], strides = [1, 1]} : vector<64x64xf32> to vector<1x64xf32>
      %c0_82 = arith.constant 0 : index
      %c1984 = arith.constant 1984 : index
      %201 = vector.load %arg11[%c0_82, %c1984] : memref<8x4096xf32, #tpu.memory_space<vmem>>, vector<1x64xf32>
      tpu.vector_store %arg11[%c0_82, %c1984], %200 {strides = array<i32>} : memref<8x4096xf32, #tpu.memory_space<vmem>>, vector<1x64xf32>,
      %202 = vector.extract_strided_slice %127 {offsets = [32, 0], sizes = [1, 64], strides = [1, 1]} : vector<64x64xf32> to vector<1x64xf32>
      %c0_83 = arith.constant 0 : index
      %c2048 = arith.constant 2048 : index
      %203 = vector.load %arg11[%c0_83, %c2048] : memref<8x4096xf32, #tpu.memory_space<vmem>>, vector<1x64xf32>
      tpu.vector_store %arg11[%c0_83, %c2048], %202 {strides = array<i32>} : memref<8x4096xf32, #tpu.memory_space<vmem>>, vector<1x64xf32>,
      %204 = vector.extract_strided_slice %127 {offsets = [33, 0], sizes = [1, 64], strides = [1, 1]} : vector<64x64xf32> to vector<1x64xf32>
      %c0_84 = arith.constant 0 : index
      %c2112 = arith.constant 2112 : index
      %205 = vector.load %arg11[%c0_84, %c2112] : memref<8x4096xf32, #tpu.memory_space<vmem>>, vector<1x64xf32>
      tpu.vector_store %arg11[%c0_84, %c2112], %204 {strides = array<i32>} : memref<8x4096xf32, #tpu.memory_space<vmem>>, vector<1x64xf32>,
      %206 = vector.extract_strided_slice %127 {offsets = [34, 0], sizes = [1, 64], strides = [1, 1]} : vector<64x64xf32> to vector<1x64xf32>
      %c0_85 = arith.constant 0 : index
      %c2176 = arith.constant 2176 : index
      %207 = vector.load %arg11[%c0_85, %c2176] : memref<8x4096xf32, #tpu.memory_space<vmem>>, vector<1x64xf32>
      tpu.vector_store %arg11[%c0_85, %c2176], %206 {strides = array<i32>} : memref<8x4096xf32, #tpu.memory_space<vmem>>, vector<1x64xf32>,
      %208 = vector.extract_strided_slice %127 {offsets = [35, 0], sizes = [1, 64], strides = [1, 1]} : vector<64x64xf32> to vector<1x64xf32>
      %c0_86 = arith.constant 0 : index
      %c2240 = arith.constant 2240 : index
      %209 = vector.load %arg11[%c0_86, %c2240] : memref<8x4096xf32, #tpu.memory_space<vmem>>, vector<1x64xf32>
      tpu.vector_store %arg11[%c0_86, %c2240], %208 {strides = array<i32>} : memref<8x4096xf32, #tpu.memory_space<vmem>>, vector<1x64xf32>,
      %210 = vector.extract_strided_slice %127 {offsets = [36, 0], sizes = [1, 64], strides = [1, 1]} : vector<64x64xf32> to vector<1x64xf32>
      %c0_87 = arith.constant 0 : index
      %c2304 = arith.constant 2304 : index
      %211 = vector.load %arg11[%c0_87, %c2304] : memref<8x4096xf32, #tpu.memory_space<vmem>>, vector<1x64xf32>
      tpu.vector_store %arg11[%c0_87, %c2304], %210 {strides = array<i32>} : memref<8x4096xf32, #tpu.memory_space<vmem>>, vector<1x64xf32>,
      %212 = vector.extract_strided_slice %127 {offsets = [37, 0], sizes = [1, 64], strides = [1, 1]} : vector<64x64xf32> to vector<1x64xf32>
      %c0_88 = arith.constant 0 : index
      %c2368 = arith.constant 2368 : index
      %213 = vector.load %arg11[%c0_88, %c2368] : memref<8x4096xf32, #tpu.memory_space<vmem>>, vector<1x64xf32>
      tpu.vector_store %arg11[%c0_88, %c2368], %212 {strides = array<i32>} : memref<8x4096xf32, #tpu.memory_space<vmem>>, vector<1x64xf32>,
      %214 = vector.extract_strided_slice %127 {offsets = [38, 0], sizes = [1, 64], strides = [1, 1]} : vector<64x64xf32> to vector<1x64xf32>
      %c0_89 = arith.constant 0 : index
      %c2432 = arith.constant 2432 : index
      %215 = vector.load %arg11[%c0_89, %c2432] : memref<8x4096xf32, #tpu.memory_space<vmem>>, vector<1x64xf32>
      tpu.vector_store %arg11[%c0_89, %c2432], %214 {strides = array<i32>} : memref<8x4096xf32, #tpu.memory_space<vmem>>, vector<1x64xf32>,
      %216 = vector.extract_strided_slice %127 {offsets = [39, 0], sizes = [1, 64], strides = [1, 1]} : vector<64x64xf32> to vector<1x64xf32>
      %c0_90 = arith.constant 0 : index
      %c2496 = arith.constant 2496 : index
      %217 = vector.load %arg11[%c0_90, %c2496] : memref<8x4096xf32, #tpu.memory_space<vmem>>, vector<1x64xf32>
      tpu.vector_store %arg11[%c0_90, %c2496], %216 {strides = array<i32>} : memref<8x4096xf32, #tpu.memory_space<vmem>>, vector<1x64xf32>,
      %218 = vector.extract_strided_slice %127 {offsets = [40, 0], sizes = [1, 64], strides = [1, 1]} : vector<64x64xf32> to vector<1x64xf32>
      %c0_91 = arith.constant 0 : index
      %c2560 = arith.constant 2560 : index
      %219 = vector.load %arg11[%c0_91, %c2560] : memref<8x4096xf32, #tpu.memory_space<vmem>>, vector<1x64xf32>
      tpu.vector_store %arg11[%c0_91, %c2560], %218 {strides = array<i32>} : memref<8x4096xf32, #tpu.memory_space<vmem>>, vector<1x64xf32>,
      %220 = vector.extract_strided_slice %127 {offsets = [41, 0], sizes = [1, 64], strides = [1, 1]} : vector<64x64xf32> to vector<1x64xf32>
      %c0_92 = arith.constant 0 : index
      %c2624 = arith.constant 2624 : index
      %221 = vector.load %arg11[%c0_92, %c2624] : memref<8x4096xf32, #tpu.memory_space<vmem>>, vector<1x64xf32>
      tpu.vector_store %arg11[%c0_92, %c2624], %220 {strides = array<i32>} : memref<8x4096xf32, #tpu.memory_space<vmem>>, vector<1x64xf32>,
      %222 = vector.extract_strided_slice %127 {offsets = [42, 0], sizes = [1, 64], strides = [1, 1]} : vector<64x64xf32> to vector<1x64xf32>
      %c0_93 = arith.constant 0 : index
      %c2688 = arith.constant 2688 : index
      %223 = vector.load %arg11[%c0_93, %c2688] : memref<8x4096xf32, #tpu.memory_space<vmem>>, vector<1x64xf32>
      tpu.vector_store %arg11[%c0_93, %c2688], %222 {strides = array<i32>} : memref<8x4096xf32, #tpu.memory_space<vmem>>, vector<1x64xf32>,
      %224 = vector.extract_strided_slice %127 {offsets = [43, 0], sizes = [1, 64], strides = [1, 1]} : vector<64x64xf32> to vector<1x64xf32>
      %c0_94 = arith.constant 0 : index
      %c2752 = arith.constant 2752 : index
      %225 = vector.load %arg11[%c0_94, %c2752] : memref<8x4096xf32, #tpu.memory_space<vmem>>, vector<1x64xf32>
      tpu.vector_store %arg11[%c0_94, %c2752], %224 {strides = array<i32>} : memref<8x4096xf32, #tpu.memory_space<vmem>>, vector<1x64xf32>,
      %226 = vector.extract_strided_slice %127 {offsets = [44, 0], sizes = [1, 64], strides = [1, 1]} : vector<64x64xf32> to vector<1x64xf32>
      %c0_95 = arith.constant 0 : index
      %c2816 = arith.constant 2816 : index
      %227 = vector.load %arg11[%c0_95, %c2816] : memref<8x4096xf32, #tpu.memory_space<vmem>>, vector<1x64xf32>
      tpu.vector_store %arg11[%c0_95, %c2816], %226 {strides = array<i32>} : memref<8x4096xf32, #tpu.memory_space<vmem>>, vector<1x64xf32>,
      %228 = vector.extract_strided_slice %127 {offsets = [45, 0], sizes = [1, 64], strides = [1, 1]} : vector<64x64xf32> to vector<1x64xf32>
      %c0_96 = arith.constant 0 : index
      %c2880 = arith.constant 2880 : index
      %229 = vector.load %arg11[%c0_96, %c2880] : memref<8x4096xf32, #tpu.memory_space<vmem>>, vector<1x64xf32>
      tpu.vector_store %arg11[%c0_96, %c2880], %228 {strides = array<i32>} : memref<8x4096xf32, #tpu.memory_space<vmem>>, vector<1x64xf32>,
      %230 = vector.extract_strided_slice %127 {offsets = [46, 0], sizes = [1, 64], strides = [1, 1]} : vector<64x64xf32> to vector<1x64xf32>
      %c0_97 = arith.constant 0 : index
      %c2944 = arith.constant 2944 : index
      %231 = vector.load %arg11[%c0_97, %c2944] : memref<8x4096xf32, #tpu.memory_space<vmem>>, vector<1x64xf32>
      tpu.vector_store %arg11[%c0_97, %c2944], %230 {strides = array<i32>} : memref<8x4096xf32, #tpu.memory_space<vmem>>, vector<1x64xf32>,
      %232 = vector.extract_strided_slice %127 {offsets = [47, 0], sizes = [1, 64], strides = [1, 1]} : vector<64x64xf32> to vector<1x64xf32>
      %c0_98 = arith.constant 0 : index
      %c3008 = arith.constant 3008 : index
      %233 = vector.load %arg11[%c0_98, %c3008] : memref<8x4096xf32, #tpu.memory_space<vmem>>, vector<1x64xf32>
      tpu.vector_store %arg11[%c0_98, %c3008], %232 {strides = array<i32>} : memref<8x4096xf32, #tpu.memory_space<vmem>>, vector<1x64xf32>,
      %234 = vector.extract_strided_slice %127 {offsets = [48, 0], sizes = [1, 64], strides = [1, 1]} : vector<64x64xf32> to vector<1x64xf32>
      %c0_99 = arith.constant 0 : index
      %c3072 = arith.constant 3072 : index
      %235 = vector.load %arg11[%c0_99, %c3072] : memref<8x4096xf32, #tpu.memory_space<vmem>>, vector<1x64xf32>
      tpu.vector_store %arg11[%c0_99, %c3072], %234 {strides = array<i32>} : memref<8x4096xf32, #tpu.memory_space<vmem>>, vector<1x64xf32>,
      %236 = vector.extract_strided_slice %127 {offsets = [49, 0], sizes = [1, 64], strides = [1, 1]} : vector<64x64xf32> to vector<1x64xf32>
      %c0_100 = arith.constant 0 : index
      %c3136 = arith.constant 3136 : index
      %237 = vector.load %arg11[%c0_100, %c3136] : memref<8x4096xf32, #tpu.memory_space<vmem>>, vector<1x64xf32>
      tpu.vector_store %arg11[%c0_100, %c3136], %236 {strides = array<i32>} : memref<8x4096xf32, #tpu.memory_space<vmem>>, vector<1x64xf32>,
      %238 = vector.extract_strided_slice %127 {offsets = [50, 0], sizes = [1, 64], strides = [1, 1]} : vector<64x64xf32> to vector<1x64xf32>
      %c0_101 = arith.constant 0 : index
      %c3200 = arith.constant 3200 : index
      %239 = vector.load %arg11[%c0_101, %c3200] : memref<8x4096xf32, #tpu.memory_space<vmem>>, vector<1x64xf32>
      tpu.vector_store %arg11[%c0_101, %c3200], %238 {strides = array<i32>} : memref<8x4096xf32, #tpu.memory_space<vmem>>, vector<1x64xf32>,
      %240 = vector.extract_strided_slice %127 {offsets = [51, 0], sizes = [1, 64], strides = [1, 1]} : vector<64x64xf32> to vector<1x64xf32>
      %c0_102 = arith.constant 0 : index
      %c3264 = arith.constant 3264 : index
      %241 = vector.load %arg11[%c0_102, %c3264] : memref<8x4096xf32, #tpu.memory_space<vmem>>, vector<1x64xf32>
      tpu.vector_store %arg11[%c0_102, %c3264], %240 {strides = array<i32>} : memref<8x4096xf32, #tpu.memory_space<vmem>>, vector<1x64xf32>,
      %242 = vector.extract_strided_slice %127 {offsets = [52, 0], sizes = [1, 64], strides = [1, 1]} : vector<64x64xf32> to vector<1x64xf32>
      %c0_103 = arith.constant 0 : index
      %c3328 = arith.constant 3328 : index
      %243 = vector.load %arg11[%c0_103, %c3328] : memref<8x4096xf32, #tpu.memory_space<vmem>>, vector<1x64xf32>
      tpu.vector_store %arg11[%c0_103, %c3328], %242 {strides = array<i32>} : memref<8x4096xf32, #tpu.memory_space<vmem>>, vector<1x64xf32>,
      %244 = vector.extract_strided_slice %127 {offsets = [53, 0], sizes = [1, 64], strides = [1, 1]} : vector<64x64xf32> to vector<1x64xf32>
      %c0_104 = arith.constant 0 : index
      %c3392 = arith.constant 3392 : index
      %245 = vector.load %arg11[%c0_104, %c3392] : memref<8x4096xf32, #tpu.memory_space<vmem>>, vector<1x64xf32>
      tpu.vector_store %arg11[%c0_104, %c3392], %244 {strides = array<i32>} : memref<8x4096xf32, #tpu.memory_space<vmem>>, vector<1x64xf32>,
      %246 = vector.extract_strided_slice %127 {offsets = [54, 0], sizes = [1, 64], strides = [1, 1]} : vector<64x64xf32> to vector<1x64xf32>
      %c0_105 = arith.constant 0 : index
      %c3456 = arith.constant 3456 : index
      %247 = vector.load %arg11[%c0_105, %c3456] : memref<8x4096xf32, #tpu.memory_space<vmem>>, vector<1x64xf32>
      tpu.vector_store %arg11[%c0_105, %c3456], %246 {strides = array<i32>} : memref<8x4096xf32, #tpu.memory_space<vmem>>, vector<1x64xf32>,
      %248 = vector.extract_strided_slice %127 {offsets = [55, 0], sizes = [1, 64], strides = [1, 1]} : vector<64x64xf32> to vector<1x64xf32>
      %c0_106 = arith.constant 0 : index
      %c3520 = arith.constant 3520 : index
      %249 = vector.load %arg11[%c0_106, %c3520] : memref<8x4096xf32, #tpu.memory_space<vmem>>, vector<1x64xf32>
      tpu.vector_store %arg11[%c0_106, %c3520], %248 {strides = array<i32>} : memref<8x4096xf32, #tpu.memory_space<vmem>>, vector<1x64xf32>,
      %250 = vector.extract_strided_slice %127 {offsets = [56, 0], sizes = [1, 64], strides = [1, 1]} : vector<64x64xf32> to vector<1x64xf32>
      %c0_107 = arith.constant 0 : index
      %c3584 = arith.constant 3584 : index
      %251 = vector.load %arg11[%c0_107, %c3584] : memref<8x4096xf32, #tpu.memory_space<vmem>>, vector<1x64xf32>
      tpu.vector_store %arg11[%c0_107, %c3584], %250 {strides = array<i32>} : memref<8x4096xf32, #tpu.memory_space<vmem>>, vector<1x64xf32>,
      %252 = vector.extract_strided_slice %127 {offsets = [57, 0], sizes = [1, 64], strides = [1, 1]} : vector<64x64xf32> to vector<1x64xf32>
      %c0_108 = arith.constant 0 : index
      %c3648 = arith.constant 3648 : index
      %253 = vector.load %arg11[%c0_108, %c3648] : memref<8x4096xf32, #tpu.memory_space<vmem>>, vector<1x64xf32>
      tpu.vector_store %arg11[%c0_108, %c3648], %252 {strides = array<i32>} : memref<8x4096xf32, #tpu.memory_space<vmem>>, vector<1x64xf32>,
      %254 = vector.extract_strided_slice %127 {offsets = [58, 0], sizes = [1, 64], strides = [1, 1]} : vector<64x64xf32> to vector<1x64xf32>
      %c0_109 = arith.constant 0 : index
      %c3712 = arith.constant 3712 : index
      %255 = vector.load %arg11[%c0_109, %c3712] : memref<8x4096xf32, #tpu.memory_space<vmem>>, vector<1x64xf32>
      tpu.vector_store %arg11[%c0_109, %c3712], %254 {strides = array<i32>} : memref<8x4096xf32, #tpu.memory_space<vmem>>, vector<1x64xf32>,
      %256 = vector.extract_strided_slice %127 {offsets = [59, 0], sizes = [1, 64], strides = [1, 1]} : vector<64x64xf32> to vector<1x64xf32>
      %c0_110 = arith.constant 0 : index
      %c3776 = arith.constant 3776 : index
      %257 = vector.load %arg11[%c0_110, %c3776] : memref<8x4096xf32, #tpu.memory_space<vmem>>, vector<1x64xf32>
      tpu.vector_store %arg11[%c0_110, %c3776], %256 {strides = array<i32>} : memref<8x4096xf32, #tpu.memory_space<vmem>>, vector<1x64xf32>,
      %258 = vector.extract_strided_slice %127 {offsets = [60, 0], sizes = [1, 64], strides = [1, 1]} : vector<64x64xf32> to vector<1x64xf32>
      %c0_111 = arith.constant 0 : index
      %c3840 = arith.constant 3840 : index
      %259 = vector.load %arg11[%c0_111, %c3840] : memref<8x4096xf32, #tpu.memory_space<vmem>>, vector<1x64xf32>
      tpu.vector_store %arg11[%c0_111, %c3840], %258 {strides = array<i32>} : memref<8x4096xf32, #tpu.memory_space<vmem>>, vector<1x64xf32>,
      %260 = vector.extract_strided_slice %127 {offsets = [61, 0], sizes = [1, 64], strides = [1, 1]} : vector<64x64xf32> to vector<1x64xf32>
      %c0_112 = arith.constant 0 : index
      %c3904 = arith.constant 3904 : index
      %261 = vector.load %arg11[%c0_112, %c3904] : memref<8x4096xf32, #tpu.memory_space<vmem>>, vector<1x64xf32>
      tpu.vector_store %arg11[%c0_112, %c3904], %260 {strides = array<i32>} : memref<8x4096xf32, #tpu.memory_space<vmem>>, vector<1x64xf32>,
      %262 = vector.extract_strided_slice %127 {offsets = [62, 0], sizes = [1, 64], strides = [1, 1]} : vector<64x64xf32> to vector<1x64xf32>
      %c0_113 = arith.constant 0 : index
      %c3968 = arith.constant 3968 : index
      %263 = vector.load %arg11[%c0_113, %c3968] : memref<8x4096xf32, #tpu.memory_space<vmem>>, vector<1x64xf32>
      tpu.vector_store %arg11[%c0_113, %c3968], %262 {strides = array<i32>} : memref<8x4096xf32, #tpu.memory_space<vmem>>, vector<1x64xf32>,
      %264 = vector.extract_strided_slice %127 {offsets = [63, 0], sizes = [1, 64], strides = [1, 1]} : vector<64x64xf32> to vector<1x64xf32>
      %c0_114 = arith.constant 0 : index
      %c4032 = arith.constant 4032 : index
      %265 = vector.load %arg11[%c0_114, %c4032] : memref<8x4096xf32, #tpu.memory_space<vmem>>, vector<1x64xf32>
      tpu.vector_store %arg11[%c0_114, %c4032], %264 {strides = array<i32>} : memref<8x4096xf32, #tpu.memory_space<vmem>>, vector<1x64xf32>,
      %c0_115 = arith.constant 0 : index
      %c0_116 = arith.constant 0 : index
      %266 = vector.load %arg11[%c0_115, %c0_116] : memref<8x4096xf32, #tpu.memory_space<vmem>>, vector<8x4096xf32>
      %267 = arith.truncf %266 : vector<8x4096xf32> to vector<8x4096xbf16>
      %c0_117 = arith.constant 0 : index
      %c0_118 = arith.constant 0 : index
      %268 = vector.load %arg4[%c0_117, %c0_118] : memref<4096x64xbf16, #tpu.memory_space<vmem>>, vector<4096x64xbf16>
      %cst_119 = arith.constant dense<0.000000e+00> : vector<8x64xf32>
      %269 = tpu.matmul %267, %268, %cst_119 {dimension_numbers = #tpu.dot_dimension_numbers<[1], [0], [0], [1], [0, 0, 1, 1], [], []>} : vector<8x4096xbf16>, vector<4096x64xbf16>, vector<8x64xf32> -> vector<8x64xf32>
      %270 = vector.extract_strided_slice %269 {offsets = [0, 0], sizes = [1, 64], strides = [1, 1]} : vector<8x64xf32> to vector<1x64xf32>
      %c0_120 = arith.constant 0 : index
      %c0_121 = arith.constant 0 : index
      %271 = vector.load %arg5[%c0_120, %c0_121] : memref<1x64xf32, #tpu.memory_space<vmem>>, vector<1x64xf32>
      %272 = arith.addf %270, %271 : vector<1x64xf32>
      %cst_122 = arith.constant dense<0xFF800000> : vector<1xf32>
      %273 = vector.multi_reduction <maximumf>, %272, %cst_122 [1] : vector<1x64xf32> to vector<1xf32>
      %274 = vector.shape_cast %273 : vector<1xf32> to vector<1x1xf32>
      %275 = vector.broadcast %274 : vector<1x1xf32> to vector<1x64xf32>
      %276 = arith.subf %272, %275 : vector<1x64xf32>
      %277 = math.exp %276 : vector<1x64xf32>
      %cst_123 = arith.constant dense<0.000000e+00> : vector<1xf32>
      %278 = vector.multi_reduction <add>, %277, %cst_123 [1] : vector<1x64xf32> to vector<1xf32>
      %279 = vector.shape_cast %278 : vector<1xf32> to vector<1x1xf32>
      %280 = vector.broadcast %279 : vector<1x1xf32> to vector<1x64xf32>
      %281 = arith.divf %277, %280 : vector<1x64xf32>
      %c0_124 = arith.constant 0 : index
      %c0_125 = arith.constant 0 : index
      %282 = vector.load %arg8[%c0_124, %c0_125] : memref<1x64xf32, #tpu.memory_space<vmem>>, vector<1x64xf32>
      tpu.vector_store %arg8[%c0_124, %c0_125], %281 {strides = array<i32>} : memref<1x64xf32, #tpu.memory_space<vmem>>, vector<1x64xf32>,
    } else {
    }
    return
  }
  func.func @transform_0(%arg0: i32) -> (i32, i32, i32) {
    %c0_i32 = arith.constant 0 : i32
    %c0_i32_0 = arith.constant 0 : i32
    %c0_i32_1 = arith.constant 0 : i32
    %c0_i32_2 = arith.constant 0 : i32
    return %c0_i32, %c0_i32_0, %c0_i32_1 : i32, i32, i32
  }
  func.func @transform_1(%arg0: i32) -> (i32, i32, i32) {
    %c0_i32 = arith.constant 0 : i32
    %c0_i32_0 = arith.constant 0 : i32
    %c0_i32_1 = arith.constant 0 : i32
    return %arg0, %c0_i32, %c0_i32_0 : i32, i32, i32
  }
  func.func @transform_2(%arg0: i32) -> (i32, i32, i32) {
    %c0_i32 = arith.constant 0 : i32
    %c0_i32_0 = arith.constant 0 : i32
    %c0_i32_1 = arith.constant 0 : i32
    return %arg0, %c0_i32, %c0_i32_0 : i32, i32, i32
  }
  func.func @transform_3(%arg0: i32) -> (i32, i32) {
    %c0_i32 = arith.constant 0 : i32
    %c0_i32_0 = arith.constant 0 : i32
    %c0_i32_1 = arith.constant 0 : i32
    return %c0_i32, %c0_i32_0 : i32, i32
  }
  func.func @transform_4(%arg0: i32) -> (i32, i32) {
    %c0_i32 = arith.constant 0 : i32
    %c0_i32_0 = arith.constant 0 : i32
    %c0_i32_1 = arith.constant 0 : i32
    return %c0_i32, %c0_i32_0 : i32, i32
  }
  func.func @transform_5(%arg0: i32) -> (i32, i32) {
    %c0_i32 = arith.constant 0 : i32
    %c0_i32_0 = arith.constant 0 : i32
    %c0_i32_1 = arith.constant 0 : i32
    return %c0_i32, %c0_i32_0 : i32, i32
  }
  func.func @transform_6(%arg0: i32) -> (i32, i32) {
    %c0_i32 = arith.constant 0 : i32
    %c0_i32_0 = arith.constant 0 : i32
    %c0_i32_1 = arith.constant 0 : i32
    return %c0_i32, %c0_i32_0 : i32, i32
  }
  func.func @transform_7(%arg0: i32) -> (i32, i32) {
    %c0_i32 = arith.constant 0 : i32
    %c0_i32_0 = arith.constant 0 : i32
    %c0_i32_1 = arith.constant 0 : i32
    return %c0_i32, %c0_i32_0 : i32, i32
  }
  func.func @transform_8(%arg0: i32) -> (i32, i32) {
    %c0_i32 = arith.constant 0 : i32
    %c0_i32_0 = arith.constant 0 : i32
    %c0_i32_1 = arith.constant 0 : i32
    return %c0_i32, %c0_i32_0 : i32, i32
  }
}

</mosaic_0001>

<llo_original>
// kernel: value_network_forward.1
$region0: #{value_network_forward.1}
  #allocation0 [shape = 'u32[]', space=smem, size = 0x4, offset = 0x4, fixed_abs, tag = 'smem constant byte address 0x4 - core index']
  #allocation1 [shape = 'u32[144,128]{1,0:T(1,128)}', space=vmem, size = 0x12000, scoped, tag = 'internal scratch']
  #allocation2 [shape = 'f32[10,8,128]{2,1,0:T(8,128)}', space=vmem, size = 0xa000, scoped, tag = 'scratch operand']
  #allocation3 [shape = 'f32[8,4096]{1,0:T(8,128)}', space=vmem, size = 0x20000, scoped, tag = 'scratch operand']
  #allocation4 [shape = 'f32[1,1]{1,0:T(1,128)S(1)}', space=vmem, size = 0x200, scoped, tag = 'scoped memory for value_network_forward.1']
  %s0 = inlined_call_operand.vmem [shape: f32[8,8,128], index: 0, kind: input, shape index: {}]
  %s1 = inlined_call_operand.hbm [shape: bf16[9,1152,128], index: 1, kind: input, shape index: {}]
  %s2 = inlined_call_operand.hbm [shape: f32[3,3,128], index: 2, kind: input, shape index: {}]
  %s3 = inlined_call_operand.vmem [shape: bf16[4096,64], index: 3, kind: input, shape index: {}]
  %s4 = inlined_call_operand.hbm [shape: f32[1,64], index: 4, kind: input, shape index: {}]
  %s5 = inlined_call_operand.hbm [shape: f32[64,64], index: 5, kind: input, shape index: {}]
  %s6 = inlined_call_operand.<no memory space> [shape: f32[1,1], index: 6, kind: input, shape index: {}]
  %s7 = inlined_call_operand.hbm [shape: f32[1,64], index: 7, kind: output, shape index: {0}]
  %s8 = inlined_call_operand.hbm [shape: f32[1,1], index: 8, kind: output, shape index: {1}]
  %9 = xla_tuple %s7, %s8
  %s10 = sld [smem:[#allocation0]]
  $region97: #{value_network_forward.1} parent=0
    _
  %s12 = ssub.s32 1, %s10
  %s13 = scalar_select 0, %s12, %s10
  %v14 = vstv %s6
  %15 = vst [vmem:[#allocation4] sm:$0x1] %v14
  $region1: #{value_network_forward.1} parent=0
    #allocation5 [shape = 'u8[1769472]{0}', space=vmem, size = 0x1b0000, scoped, tag = 'input window, operand 1']
    #allocation6 [shape = 's32[2]{0}', space=sflag, size = 0x8, scoped, tag = 'scoped memory for value_network_forward.1']
    #allocation7 [shape = 's32[2]{0}', space=sflag, size = 0x8, scoped, tag = 'scoped memory for value_network_forward.1']
    #allocation8 [shape = 'u8[4096]{0}', space=vmem, size = 0x1000, scoped, tag = 'input window, operand 2']
    #allocation9 [shape = 's32[2]{0}', space=sflag, size = 0x8, scoped, tag = 'scoped memory for value_network_forward.1']
    #allocation10 [shape = 'u8[512]{0}', space=vmem, size = 0x400, scoped, tag = 'input window, operand 4, single buffered']
    #allocation11 [shape = 'u8[32768]{0}', space=vmem, size = 0x8000, scoped, tag = 'input window, operand 5, single buffered']
    #allocation12 [shape = 's32[1]{0}', space=sflag, size = 0x4, scoped, tag = 'scoped memory for value_network_forward.1']
    #allocation13 [shape = 'u8[512]{0}', space=vmem, size = 0x400, scoped, tag = 'output window, operand 0, single buffered']
    #allocation14 [shape = 'u8[512]{0}', space=vmem, size = 0x400, scoped, tag = 'output window, operand 1, single buffered']
    #allocation15 [shape = 's32[1]{0}', space=sflag, size = 0x4, scoped, tag = 'scoped memory for value_network_forward.1']
    %16 = vsyncpa [#allocation6], 0
    %s17 = scalar_lea.sflag [#allocation6], 1
    %18 = vsyncpa %s17, 0
    %19 = vsyncpa [#allocation9], 0
    %s20 = scalar_lea.sflag [#allocation9], 1
    %21 = vsyncpa %s20, 0
    %22 = vsyncpa [#allocation12], 0
    %23 = vsyncpa [#allocation7], 0
    %24 = vsyncpa [#allocation15], 0
    loop: start=0, step=1, limit=5
    $region2: #{value_network_forward.1} parent=1 // loop_pre_header
      _
    $region3: #{value_network_forward.1} parent=1 // loop_header
      %s26 = sphi 0, %s30
      %p27 = scmp.ge.s32.totalorder %s26, 5
      %s34 = sphi 0, %s34
      %s36 = sphi 0, %s34
      %s37 = sphi 0, %s36
      %s51 = sphi 0, %s37
      %s57 = sphi 0, %s59
      %s60 = sphi 0, %s57
      %s61 = sphi 0, %s60
      %s77 = sphi 0, %s61
      %s83 = sphi 0, %s85
      %s86 = sphi 0, %s83
      %s87 = sphi 0, %s86
      %s103 = sphi 0, %s87
      %s107 = sphi 0, %s107
      %s109 = sphi 0, %s107
      %s110 = sphi 0, %s109
      %s124 = sphi 0, %s110
      %s128 = sphi 0, %s128
      %s130 = sphi 0, %s128
      %s131 = sphi 0, %s130
      %s145 = sphi 0, %s131
      %s149 = sphi 0, %s149
      %s151 = sphi 0, %s149
      %s152 = sphi 0, %s151
      %s166 = sphi 0, %s152
      %s170 = sphi 0, %s170
      %s172 = sphi 0, %s170
      %s173 = sphi 0, %s172
      %s187 = sphi 0, %s173
      %s191 = sphi 0, %s191
      %s193 = sphi 0, %s191
      %s194 = sphi 0, %s193
      %s208 = sphi 0, %s194
      %s212 = sphi 0, %s212
      %s214 = sphi 0, %s212
      %s215 = sphi 0, %s214
      %s229 = sphi 0, %s215
    $region4: #{value_network_forward.1} parent=1 // loop_header_branch
      %29 = sbr.rel (%p27) target = $region8
    $region5: #{value_network_forward.1} parent=1 // loop_body
      %s31 = ssub.s32 %s26, 1
      %s32 = ssub.s32 %s26, 2
      %s33 = sadd.s32 %s26, 1
      %s35 = sadd.s32 %s34, 1
      %p38 = scmp.eq.s32.totalorder %s26, 2
      %p39 = scmp.ne.s32.totalorder %s34, %s36
      %p40 = scmp.eq.s32.totalorder %s26, 0
      %p41 = por %p39, %p40
      %p42 = scmp.ne.s32.totalorder %s34, %s36
      %p43 = scmp.eq.s32.totalorder %s31, 2
      %p44 = por %p42, %p43
      %p45 = scmp.ne.s32.totalorder %s36, %s37
      %p46 = scmp.eq.s32.totalorder %s31, 0
      %p47 = por %p45, %p46
      %p48 = scmp.ne.s32.totalorder %s36, %s37
      %p49 = scmp.eq.s32.totalorder %s32, 2
      %p50 = por %p48, %p49
      %p52 = scmp.ne.s32.totalorder %s37, %s51
      %p53 = scmp.eq.s32.totalorder %s32, 0
      %p54 = por %p52, %p53
      %s55 = ssub.s32 %s26, %s33
      %p56 = scmp.eq.s32.totalorder %s55, 0
      %s58 = sadd.s32 %s57, 1
      %s59 = scalar_select %p56, %s57, %s58
      %p62 = pneg %p56
      %p63 = scmp.eq.s32.totalorder %s26, 2
      %p64 = por %p62, %p63
      %p65 = scmp.ne.s32.totalorder %s57, %s60
      %p66 = scmp.eq.s32.totalorder %s26, 0
      %p67 = por %p65, %p66
      %p68 = scmp.ne.s32.totalorder %s57, %s60
      %p69 = scmp.eq.s32.totalorder %s31, 2
      %p70 = por %p68, %p69
      %p71 = scmp.ne.s32.totalorder %s60, %s61
      %p72 = scmp.eq.s32.totalorder %s31, 0
      %p73 = por %p71, %p72
      %p74 = scmp.ne.s32.totalorder %s60, %s61
      %p75 = scmp.eq.s32.totalorder %s32, 2
      %p76 = por %p74, %p75
      %p78 = scmp.ne.s32.totalorder %s61, %s77
      %p79 = scmp.eq.s32.totalorder %s32, 0
      %p80 = por %p78, %p79
      %s81 = ssub.s32 %s26, %s33
      %p82 = scmp.eq.s32.totalorder %s81, 0
      %s84 = sadd.s32 %s83, 1
      %s85 = scalar_select %p82, %s83, %s84
      %p88 = pneg %p82
      %p89 = scmp.eq.s32.totalorder %s26, 2
      %p90 = por %p88, %p89
      %p91 = scmp.ne.s32.totalorder %s83, %s86
      %p92 = scmp.eq.s32.totalorder %s26, 0
      %p93 = por %p91, %p92
      %p94 = scmp.ne.s32.totalorder %s83, %s86
      %p95 = scmp.eq.s32.totalorder %s31, 2
      %p96 = por %p94, %p95
      %p97 = scmp.ne.s32.totalorder %s86, %s87
      %p98 = scmp.eq.s32.totalorder %s31, 0
      %p99 = por %p97, %p98
      %p100 = scmp.ne.s32.totalorder %s86, %s87
      %p101 = scmp.eq.s32.totalorder %s32, 2
      %p102 = por %p100, %p101
      %p104 = scmp.ne.s32.totalorder %s87, %s103
      %p105 = scmp.eq.s32.totalorder %s32, 0
      %p106 = por %p104, %p105
      %s108 = sadd.s32 %s107, 1
      %p111 = scmp.eq.s32.totalorder %s26, 2
      %p112 = scmp.ne.s32.totalorder %s107, %s109
      %p113 = scmp.eq.s32.totalorder %s26, 0
      %p114 = por %p112, %p113
      %p115 = scmp.ne.s32.totalorder %s107, %s109
      %p116 = scmp.eq.s32.totalorder %s31, 2
      %p117 = por %p115, %p116
      %p118 = scmp.ne.s32.totalorder %s109, %s110
      %p119 = scmp.eq.s32.totalorder %s31, 0
      %p120 = por %p118, %p119
      %p121 = scmp.ne.s32.totalorder %s109, %s110
      %p122 = scmp.eq.s32.totalorder %s32, 2
      %p123 = por %p121, %p122
      %p125 = scmp.ne.s32.totalorder %s110, %s124
      %p126 = scmp.eq.s32.totalorder %s32, 0
      %p127 = por %p125, %p126
      %s129 = sadd.s32 %s128, 1
      %p132 = scmp.eq.s32.totalorder %s26, 2
      %p133 = scmp.ne.s32.totalorder %s128, %s130
      %p134 = scmp.eq.s32.totalorder %s26, 0
      %p135 = por %p133, %p134
      %p136 = scmp.ne.s32.totalorder %s128, %s130
      %p137 = scmp.eq.s32.totalorder %s31, 2
      %p138 = por %p136, %p137
      %p139 = scmp.ne.s32.totalorder %s130, %s131
      %p140 = scmp.eq.s32.totalorder %s31, 0
      %p141 = por %p139, %p140
      %p142 = scmp.ne.s32.totalorder %s130, %s131
      %p143 = scmp.eq.s32.totalorder %s32, 2
      %p144 = por %p142, %p143
      %p146 = scmp.ne.s32.totalorder %s131, %s145
      %p147 = scmp.eq.s32.totalorder %s32, 0
      %p148 = por %p146, %p147
      %s150 = sadd.s32 %s149, 1
      %p153 = scmp.eq.s32.totalorder %s26, 2
      %p154 = scmp.ne.s32.totalorder %s149, %s151
      %p155 = scmp.eq.s32.totalorder %s26, 0
      %p156 = por %p154, %p155
      %p157 = scmp.ne.s32.totalorder %s149, %s151
      %p158 = scmp.eq.s32.totalorder %s31, 2
      %p159 = por %p157, %p158
      %p160 = scmp.ne.s32.totalorder %s151, %s152
      %p161 = scmp.eq.s32.totalorder %s31, 0
      %p162 = por %p160, %p161
      %p163 = scmp.ne.s32.totalorder %s151, %s152
      %p164 = scmp.eq.s32.totalorder %s32, 2
      %p165 = por %p163, %p164
      %p167 = scmp.ne.s32.totalorder %s152, %s166
      %p168 = scmp.eq.s32.totalorder %s32, 0
      %p169 = por %p167, %p168
      %s171 = sadd.s32 %s170, 1
      %p174 = scmp.eq.s32.totalorder %s26, 2
      %p175 = scmp.ne.s32.totalorder %s170, %s172
      %p176 = scmp.eq.s32.totalorder %s26, 0
      %p177 = por %p175, %p176
      %p178 = scmp.ne.s32.totalorder %s170, %s172
      %p179 = scmp.eq.s32.totalorder %s31, 2
      %p180 = por %p178, %p179
      %p181 = scmp.ne.s32.totalorder %s172, %s173
      %p182 = scmp.eq.s32.totalorder %s31, 0
      %p183 = por %p181, %p182
      %p184 = scmp.ne.s32.totalorder %s172, %s173
      %p185 = scmp.eq.s32.totalorder %s32, 2
      %p186 = por %p184, %p185
      %p188 = scmp.ne.s32.totalorder %s173, %s187
      %p189 = scmp.eq.s32.totalorder %s32, 0
      %p190 = por %p188, %p189
      %s192 = sadd.s32 %s191, 1
      %p195 = scmp.eq.s32.totalorder %s26, 2
      %p196 = scmp.ne.s32.totalorder %s191, %s193
      %p197 = scmp.eq.s32.totalorder %s26, 0
      %p198 = por %p196, %p197
      %p199 = scmp.ne.s32.totalorder %s191, %s193
      %p200 = scmp.eq.s32.totalorder %s31, 2
      %p201 = por %p199, %p200
      %p202 = scmp.ne.s32.totalorder %s193, %s194
      %p203 = scmp.eq.s32.totalorder %s31, 0
      %p204 = por %p202, %p203
      %p205 = scmp.ne.s32.totalorder %s193, %s194
      %p206 = scmp.eq.s32.totalorder %s32, 2
      %p207 = por %p205, %p206
      %p209 = scmp.ne.s32.totalorder %s194, %s208
      %p210 = scmp.eq.s32.totalorder %s32, 0
      %p211 = por %p209, %p210
      %s213 = sadd.s32 %s212, 1
      %p216 = scmp.eq.s32.totalorder %s26, 2
      %p217 = scmp.ne.s32.totalorder %s212, %s214
      %p218 = scmp.eq.s32.totalorder %s26, 0
      %p219 = por %p217, %p218
      %p220 = scmp.ne.s32.totalorder %s212, %s214
      %p221 = scmp.eq.s32.totalorder %s31, 2
      %p222 = por %p220, %p221
      %p223 = scmp.ne.s32.totalorder %s214, %s215
      %p224 = scmp.eq.s32.totalorder %s31, 0
      %p225 = por %p223, %p224
      %p226 = scmp.ne.s32.totalorder %s214, %s215
      %p227 = scmp.eq.s32.totalorder %s32, 2
      %p228 = por %p226, %p227
      %p230 = scmp.ne.s32.totalorder %s215, %s229
      %p231 = scmp.eq.s32.totalorder %s32, 0
      %p232 = por %p230, %p231
      %p233 = scmp.le.s32.totalorder 1, %s26
      %p234 = scmp.lt.s32.totalorder %s26, 4
      %p235 = pnand %p233, %p234
      %p236 = pneg %p235
      // Predicated region
      $region9: #{value_network_forward.1} parent=5 // pred_check
        _
      $region10: #{value_network_forward.1} parent=5 // pred_check_branch
        %238 = sbr.rel (%p235) target = $region12
      $region11: #{value_network_forward.1} parent=5 // pred_region
        %s239 = ssub.s32 %s26, 1
        // Predicated region
        $region13: #{value_network_forward.1} parent=11 // pred_check
          %p240 = pneg %p47
        $region14: #{value_network_forward.1} parent=11 // pred_check_branch
          %242 = sbr.rel (%p240) target = $region16
        $region15: #{value_network_forward.1} parent=11 // pred_region
          _
        $region16: #{value_network_forward.1} parent=11 // pred_fallthru
          _
        // Predicated region
        $region17: #{value_network_forward.1} parent=11 // pred_check
          %p243 = pneg %p120
        $region18: #{value_network_forward.1} parent=11 // pred_check_branch
          %245 = sbr.rel (%p243) target = $region20
        $region19: #{value_network_forward.1} parent=11 // pred_region
          _
        $region20: #{value_network_forward.1} parent=11 // pred_fallthru
          _
        // Predicated region
        $region21: #{value_network_forward.1} parent=11 // pred_check
          %p246 = pneg %p141
        $region22: #{value_network_forward.1} parent=11 // pred_check_branch
          %248 = sbr.rel (%p246) target = $region24
        $region23: #{value_network_forward.1} parent=11 // pred_region
          %s250 = ssub.s32 16, 16
          %251 = vsyncadd [#allocation9], %s250
          %s253 = sshll.u32 [#allocation10], 4
          %s254 = int_to_ptr.vmem [resolvable:$true] %s253
          %256 = dma.hbm_to_vmem [thread:$0]  %s4, 16, %s254, [#allocation9]
        $region24: #{value_network_forward.1} parent=11 // pred_fallthru
          _
        // Predicated region
        $region25: #{value_network_forward.1} parent=11 // pred_check
          %p257 = pneg %p162
        $region26: #{value_network_forward.1} parent=11 // pred_check_branch
          %259 = sbr.rel (%p257) target = $region28
        $region27: #{value_network_forward.1} parent=11 // pred_region
          %s261 = ssub.s32 1024, 1024
          %262 = vsyncadd [#allocation12], %s261
          %s263 = sshll.u32 [#allocation11], 4
          %s264 = int_to_ptr.vmem [resolvable:$true] %s263
          %269 = dma.hbm_to_vmem [thread:$0]  %s5, 1024, %s264, [#allocation12], 128, 128, 8
        $region28: #{value_network_forward.1} parent=11 // pred_fallthru
          _
        // Predicated region
        $region29: #{value_network_forward.1} parent=11 // pred_check
          %p270 = pneg %p183
        $region30: #{value_network_forward.1} parent=11 // pred_check_branch
          %272 = sbr.rel (%p270) target = $region32
        $region31: #{value_network_forward.1} parent=11 // pred_region
          _
        $region32: #{value_network_forward.1} parent=11 // pred_fallthru
          _
      $region12: #{value_network_forward.1} parent=5 // pred_fallthru
        _
      %p273 = scmp.lt.s32.totalorder %s26, 3
      // Predicated region
      $region33: #{value_network_forward.1} parent=5 // pred_check
        %p274 = pneg %p273
      $region34: #{value_network_forward.1} parent=5 // pred_check_branch
        %276 = sbr.rel (%p274) target = $region36
      $region35: #{value_network_forward.1} parent=5 // pred_region
        // Predicated region
        $region37: #{value_network_forward.1} parent=35 // pred_check
          %p277 = pneg %p67
        $region38: #{value_network_forward.1} parent=35 // pred_check_branch
          %279 = sbr.rel (%p277) target = $region40
        $region39: #{value_network_forward.1} parent=35 // pred_region
          %s280 = sand.u32 %s57, 1
          %s281 = scalar_lea.sflag [#allocation6], %s280
          %s282 = sand.u32 %s57, 1
          %s283 = smul.addr %s282, 1728
          %s284 = scalar_lea.vmem [#allocation5], %s283
          %s285 = smul.u32 3, %s26
          %s287 = ssub.s32 27648, 27648
          %288 = vsyncadd %s281, %s287
          %s289 = smul.addr %s285, 144
          %s290 = smul.addr %s289, 64
          %s291 = scalar_lea.hbm %s1, %s290
          %s292 = sshll.u32 %s284, 4
          %s293 = int_to_ptr.vmem [resolvable:$true] %s292
          %298 = dma.hbm_to_vmem [thread:$0]  %s291, 27648, %s293, %s281, 64, 64, 4
        $region40: #{value_network_forward.1} parent=35 // pred_fallthru
          _
        // Predicated region
        $region41: #{value_network_forward.1} parent=35 // pred_check
          %p299 = pneg %p93
        $region42: #{value_network_forward.1} parent=35 // pred_check_branch
          %301 = sbr.rel (%p299) target = $region44
        $region43: #{value_network_forward.1} parent=35 // pred_region
          %s302 = sand.u32 %s26, 1
          %s303 = scalar_lea.sflag [#allocation9], %s302
          %s304 = sand.u32 %s83, 1
          %s305 = smul.addr %s304, 4
          %s306 = scalar_lea.vmem [#allocation8], %s305
          %s308 = ssub.s32 64, 64
          %309 = vsyncadd %s303, %s308
          %s310 = smul.addr %s26, 64
          %s311 = scalar_lea.hbm %s2, %s310
          %s313 = sshll.u32 %s306, 4
          %s314 = int_to_ptr.vmem [resolvable:$true] %s313
          %316 = dma.hbm_to_vmem [thread:$0]  %s311, 64, %s314, %s303
        $region44: #{value_network_forward.1} parent=35 // pred_fallthru
          _
      $region36: #{value_network_forward.1} parent=5 // pred_fallthru
        _
      %p317 = scmp.le.s32.totalorder 1, %s26
      %p318 = scmp.lt.s32.totalorder %s26, 4
      %p319 = pnand %p317, %p318
      %p320 = pneg %p319
      // Predicated region
      $region45: #{value_network_forward.1} parent=5 // pred_check
        _
      $region46: #{value_network_forward.1} parent=5 // pred_check_branch
        %322 = sbr.rel (%p319) target = $region48
      $region47: #{value_network_forward.1} parent=5 // pred_region
        %s323 = ssub.s32 %s26, 1
        %s324 = sand.u32 %s60, 1
        %s325 = scalar_lea.sflag [#allocation6], %s324
        %s326 = sand.u32 %s60, 1
        %s327 = smul.addr %s326, 1728
        %s328 = scalar_lea.vmem [#allocation5], %s327
        // Predicated region
        $region49: #{value_network_forward.1} parent=47 // pred_check
          %p329 = pneg %p73
        $region50: #{value_network_forward.1} parent=47 // pred_check_branch
          %331 = sbr.rel (%p329) target = $region52
        $region51: #{value_network_forward.1} parent=47 // pred_region
          %332 = dma.done %s325, 27648
        $region52: #{value_network_forward.1} parent=47 // pred_fallthru
          _
        %s333 = sand.u32 %s31, 1
        %s334 = scalar_lea.sflag [#allocation9], %s333
        %s335 = sand.u32 %s86, 1
        %s336 = smul.addr %s335, 4
        %s337 = scalar_lea.vmem [#allocation8], %s336
        // Predicated region
        $region53: #{value_network_forward.1} parent=47 // pred_check
          %p338 = pneg %p99
        $region54: #{value_network_forward.1} parent=47 // pred_check_branch
          %340 = sbr.rel (%p338) target = $region56
        $region55: #{value_network_forward.1} parent=47 // pred_region
          %341 = dma.done %s334, 64
        $region56: #{value_network_forward.1} parent=47 // pred_fallthru
          _
        // Predicated region
        $region57: #{value_network_forward.1} parent=47 // pred_check
          %p342 = pneg %p141
        $region58: #{value_network_forward.1} parent=47 // pred_check_branch
          %344 = sbr.rel (%p342) target = $region60
        $region59: #{value_network_forward.1} parent=47 // pred_region
          %345 = dma.done [#allocation9], 16
        $region60: #{value_network_forward.1} parent=47 // pred_fallthru
          _
        // Predicated region
        $region61: #{value_network_forward.1} parent=47 // pred_check
          %p346 = pneg %p162
        $region62: #{value_network_forward.1} parent=47 // pred_check_branch
          %348 = sbr.rel (%p346) target = $region64
        $region63: #{value_network_forward.1} parent=47 // pred_region
          %349 = dma.done [#allocation12], 1024
        $region64: #{value_network_forward.1} parent=47 // pred_fallthru
          _
        %p350 = pneg %p47
        %p351 = pneg %p44
        %s352 = sand.u32 %s60, 1
        %s353 = scalar_lea.sflag [#allocation6], %s352
        %s354 = sand.u32 %s60, 1
        %s355 = smul.addr %s354, 1728
        %s356 = scalar_lea.vmem [#allocation5], %s355
        %p357 = pneg %p73
        %p358 = pneg %p70
        %s359 = sand.u32 %s31, 1
        %s360 = scalar_lea.sflag [#allocation9], %s359
        %s361 = sand.u32 %s86, 1
        %s362 = smul.addr %s361, 4
        %s363 = scalar_lea.vmem [#allocation8], %s362
        %p364 = pneg %p99
        %p365 = pneg %p96
        %p366 = pneg %p120
        %p367 = pneg %p117
        %p368 = pneg %p141
        %p369 = pneg %p138
        %p370 = pneg %p162
        %p371 = pneg %p159
        %p372 = pneg %p183
        %p373 = pneg %p180
        %p374 = pneg %p204
        %p375 = pneg %p201
        %p376 = pneg %p225
        %p377 = pneg %p222
        %s378 = smul.u32 3, %s31
        %p380 = scmp.eq.s32.totalorder %s31, 0
        // Predicated region
        $region65: #{value_network_forward.1} parent=47 // pred_check
          %p381 = pneg %p380
        $region66: #{value_network_forward.1} parent=47 // pred_check_branch
          %383 = sbr.rel (%p381) target = $region68
        $region67: #{value_network_forward.1} parent=47 // pred_region
          %384 = vst [vmem:[#allocation2] sm:$0xff] 0.0
          %s385 = scalar_lea.vmem [#allocation2], 72
          %386 = vst [vmem:[%s385] sm:$0xff] 0.0
          %v387 = vld [vmem:[%s0] sm:$0xff]
          %v388 = vld [vmem:[%s0 + $0x8] sm:$0xff]
          %v389 = vld [vmem:[%s0 + $0x10] sm:$0xff]
          %v390 = vld [vmem:[%s0 + $0x18] sm:$0xff]
          %v391 = vld [vmem:[%s0 + $0x20] sm:$0xff]
          %v392 = vld [vmem:[%s0 + $0x28] sm:$0xff]
          %v393 = vld [vmem:[%s0 + $0x30] sm:$0xff]
          %v394 = vld [vmem:[%s0 + $0x38] sm:$0xff]
          %s395 = scalar_lea.vmem [#allocation2], 8
          %396 = vst [vmem:[%s395] sm:$0xff] %v387
          %397 = vst [vmem:[%s395 + $0x8] sm:$0xff] %v388
          %398 = vst [vmem:[%s395 + $0x10] sm:$0xff] %v389
          %399 = vst [vmem:[%s395 + $0x18] sm:$0xff] %v390
          %400 = vst [vmem:[%s395 + $0x20] sm:$0xff] %v391
          %401 = vst [vmem:[%s395 + $0x28] sm:$0xff] %v392
          %402 = vst [vmem:[%s395 + $0x30] sm:$0xff] %v393
          %403 = vst [vmem:[%s395 + $0x38] sm:$0xff] %v394
        $region68: #{value_network_forward.1} parent=47 // pred_fallthru
          _
        %v404 = vld [vmem:[#allocation2] sm:$0xff]
        %v405 = vld [vmem:[#allocation2 + $0x8] sm:$0xff]
        %v406 = vld [vmem:[#allocation2 + $0x10] sm:$0xff]
        %v407 = vld [vmem:[#allocation2 + $0x18] sm:$0xff]
        %v408 = vld [vmem:[#allocation2 + $0x20] sm:$0xff]
        %v409 = vld [vmem:[#allocation2 + $0x28] sm:$0xff]
        %v410 = vld [vmem:[#allocation2 + $0x30] sm:$0xff]
        %v411 = vld [vmem:[#allocation2 + $0x38] sm:$0xff]
        %v412 = vld [vmem:[#allocation2 + $0x40] sm:$0xff]
        %v413 = vld [vmem:[#allocation2 + $0x48] sm:$0xff]
        %v424 = vrot.slane %v404, 7
        %v425 = vrot.slane %v405, 7
        %v426 = vrot.slane %v406, 7
        %v427 = vrot.slane %v407, 7
        %v428 = vrot.slane %v408, 7
        %v429 = vrot.slane %v409, 7
        %v430 = vrot.slane %v410, 7
        %v431 = vrot.slane %v411, 7
        %v432 = vrot.slane %v412, 7
        %v433 = vrot.slane %v413, 7
        %vm444 = vcmask 1040384
        %v445 = vsel %vm444, 0.0, %v424
        %v446 = vsel %vm444, 0.0, %v425
        %v447 = vsel %vm444, 0.0, %v426
        %v448 = vsel %vm444, 0.0, %v427
        %v449 = vsel %vm444, 0.0, %v428
        %v450 = vsel %vm444, 0.0, %v429
        %v451 = vsel %vm444, 0.0, %v430
        %v452 = vsel %vm444, 0.0, %v431
        %v453 = vsel %vm444, 0.0, %v432
        %v454 = vsel %vm444, 0.0, %v433
        %v455 = vpack.c.bf16 %v445, %v445
        %v456 = vpack.c.bf16 %v446, %v446
        %v457 = vpack.c.bf16 %v447, %v447
        %v458 = vpack.c.bf16 %v448, %v448
        %v459 = vpack.c.bf16 %v449, %v449
        %v460 = vpack.c.bf16 %v450, %v450
        %v461 = vpack.c.bf16 %v451, %v451
        %v462 = vpack.c.bf16 %v452, %v452
        %v463 = vpack.c.bf16 %v453, %v453
        %v464 = vpack.c.bf16 %v454, %v454
        %v465 = vpack.c.bf16 %v404, %v404
        %v466 = vpack.c.bf16 %v405, %v405
        %v467 = vpack.c.bf16 %v406, %v406
        %v468 = vpack.c.bf16 %v407, %v407
        %v469 = vpack.c.bf16 %v408, %v408
        %v470 = vpack.c.bf16 %v409, %v409
        %v471 = vpack.c.bf16 %v410, %v410
        %v472 = vpack.c.bf16 %v411, %v411
        %v473 = vpack.c.bf16 %v412, %v412
        %v474 = vpack.c.bf16 %v413, %v413
        %v475 = vrot.slane %v404, 1
        %v476 = vrot.slane %v405, 1
        %v477 = vrot.slane %v406, 1
        %v478 = vrot.slane %v407, 1
        %v479 = vrot.slane %v408, 1
        %v480 = vrot.slane %v409, 1
        %v481 = vrot.slane %v410, 1
        %v482 = vrot.slane %v411, 1
        %v483 = vrot.slane %v412, 1
        %v484 = vrot.slane %v413, 1
        %vm495 = vcmask 1046528
        %v496 = vsel %vm495, %v475, 0.0
        %v497 = vsel %vm495, %v476, 0.0
        %v498 = vsel %vm495, %v477, 0.0
        %v499 = vsel %vm495, %v478, 0.0
        %v500 = vsel %vm495, %v479, 0.0
        %v501 = vsel %vm495, %v480, 0.0
        %v502 = vsel %vm495, %v481, 0.0
        %v503 = vsel %vm495, %v482, 0.0
        %v504 = vsel %vm495, %v483, 0.0
        %v505 = vsel %vm495, %v484, 0.0
        %v506 = vpack.c.bf16 %v496, %v496
        %v507 = vpack.c.bf16 %v497, %v497
        %v508 = vpack.c.bf16 %v498, %v498
        %v509 = vpack.c.bf16 %v499, %v499
        %v510 = vpack.c.bf16 %v500, %v500
        %v511 = vpack.c.bf16 %v501, %v501
        %v512 = vpack.c.bf16 %v502, %v502
        %v513 = vpack.c.bf16 %v503, %v503
        %v514 = vpack.c.bf16 %v504, %v504
        %v515 = vpack.c.bf16 %v505, %v505
        %v524 = vunpack.c.l.b16 %v455
        %v525 = vunpack.c.l.b16 %v456
        %v526 = vunpack.c.l.b16 %v457
        %v527 = vunpack.c.l.b16 %v458
        %v528 = vunpack.c.l.b16 %v459
        %v529 = vunpack.c.l.b16 %v460
        %v530 = vunpack.c.l.b16 %v461
        %v531 = vunpack.c.l.b16 %v462
        %v532 = vpack.c.b16 %v525, %v524
        %v533 = vpack.c.b16 %v527, %v526
        %v534 = vpack.c.b16 %v529, %v528
        %v535 = vpack.c.b16 %v531, %v530
        %v548 = vunpack.c.l.b16 %v465
        %v549 = vunpack.c.l.b16 %v466
        %v550 = vunpack.c.l.b16 %v467
        %v551 = vunpack.c.l.b16 %v468
        %v552 = vunpack.c.l.b16 %v469
        %v553 = vunpack.c.l.b16 %v470
        %v554 = vunpack.c.l.b16 %v471
        %v555 = vunpack.c.l.b16 %v472
        %v556 = vpack.c.b16 %v549, %v548
        %v557 = vpack.c.b16 %v551, %v550
        %v558 = vpack.c.b16 %v553, %v552
        %v559 = vpack.c.b16 %v555, %v554
        %v572 = vunpack.c.l.b16 %v506
        %v573 = vunpack.c.l.b16 %v507
        %v574 = vunpack.c.l.b16 %v508
        %v575 = vunpack.c.l.b16 %v509
        %v576 = vunpack.c.l.b16 %v510
        %v577 = vunpack.c.l.b16 %v511
        %v578 = vunpack.c.l.b16 %v512
        %v579 = vunpack.c.l.b16 %v513
        %v580 = vpack.c.b16 %v573, %v572
        %v581 = vpack.c.b16 %v575, %v574
        %v582 = vpack.c.b16 %v577, %v576
        %v583 = vpack.c.b16 %v579, %v578
        %v589 = vunpack.c.l.b16 %v463
        %v590 = vpack.c.b16 %v526, %v525
        %v591 = vpack.c.b16 %v528, %v527
        %v592 = vpack.c.b16 %v530, %v529
        %v593 = vpack.c.b16 %v589, %v531
        %v599 = vunpack.c.l.b16 %v473
        %v600 = vpack.c.b16 %v550, %v549
        %v601 = vpack.c.b16 %v552, %v551
        %v602 = vpack.c.b16 %v554, %v553
        %v603 = vpack.c.b16 %v599, %v555
        %v609 = vunpack.c.l.b16 %v514
        %v610 = vpack.c.b16 %v574, %v573
        %v611 = vpack.c.b16 %v576, %v575
        %v612 = vpack.c.b16 %v578, %v577
        %v613 = vpack.c.b16 %v609, %v579
        %v619 = vunpack.c.l.b16 %v464
        %v620 = vpack.c.b16 %v619, %v589
        %v623 = vunpack.c.l.b16 %v474
        %v624 = vpack.c.b16 %v623, %v599
        %v627 = vunpack.c.l.b16 %v515
        %v628 = vpack.c.b16 %v627, %v609
        %v630 = vld [vmem:[%s328] sm:$0xf]
        %v631 = vld [vmem:[%s328 + $0x4] sm:$0xf]
        %v632 = vld [vmem:[%s328 + $0x8] sm:$0xf]
        %v633 = vld [vmem:[%s328 + $0xc] sm:$0xf]
        %v634 = vld [vmem:[%s328 + $0x10] sm:$0xf]
        %v635 = vld [vmem:[%s328 + $0x14] sm:$0xf]
        %v636 = vld [vmem:[%s328 + $0x18] sm:$0xf]
        %v637 = vld [vmem:[%s328 + $0x1c] sm:$0xf]
        %v638 = vld [vmem:[%s328 + $0x20] sm:$0xf]
        %v639 = vld [vmem:[%s328 + $0x24] sm:$0xf]
        %v640 = vld [vmem:[%s328 + $0x28] sm:$0xf]
        %v641 = vld [vmem:[%s328 + $0x2c] sm:$0xf]
        %v642 = vld [vmem:[%s328 + $0x30] sm:$0xf]
        %v643 = vld [vmem:[%s328 + $0x34] sm:$0xf]
        %v644 = vld [vmem:[%s328 + $0x38] sm:$0xf]
        %v645 = vld [vmem:[%s328 + $0x3c] sm:$0xf]
        %v646 = vld [vmem:[%s328 + $0x40] sm:$0xf]
        %v647 = vld [vmem:[%s328 + $0x44] sm:$0xf]
        %v648 = vld [vmem:[%s328 + $0x48] sm:$0xf]
        %v649 = vld [vmem:[%s328 + $0x4c] sm:$0xf]
        %v650 = vld [vmem:[%s328 + $0x50] sm:$0xf]
        %v651 = vld [vmem:[%s328 + $0x54] sm:$0xf]
        %v652 = vld [vmem:[%s328 + $0x58] sm:$0xf]
        %v653 = vld [vmem:[%s328 + $0x5c] sm:$0xf]
        %v654 = vld [vmem:[%s328 + $0x60] sm:$0xf]
        %v655 = vld [vmem:[%s328 + $0x64] sm:$0xf]
        %v656 = vld [vmem:[%s328 + $0x68] sm:$0xf]
        %v657 = vld [vmem:[%s328 + $0x6c] sm:$0xf]
        %v658 = vld [vmem:[%s328 + $0x70] sm:$0xf]
        %v659 = vld [vmem:[%s328 + $0x74] sm:$0xf]
        %v660 = vld [vmem:[%s328 + $0x78] sm:$0xf]
        %v661 = vld [vmem:[%s328 + $0x7c] sm:$0xf]
        %v662 = vld [vmem:[%s328 + $0x80] sm:$0xf]
        %v663 = vld [vmem:[%s328 + $0x84] sm:$0xf]
        %v664 = vld [vmem:[%s328 + $0x88] sm:$0xf]
        %v665 = vld [vmem:[%s328 + $0x8c] sm:$0xf]
        %v666 = vld [vmem:[%s328 + $0x90] sm:$0xf]
        %v667 = vld [vmem:[%s328 + $0x94] sm:$0xf]
        %v668 = vld [vmem:[%s328 + $0x98] sm:$0xf]
        %v669 = vld [vmem:[%s328 + $0x9c] sm:$0xf]
        %v670 = vld [vmem:[%s328 + $0xa0] sm:$0xf]
        %v671 = vld [vmem:[%s328 + $0xa4] sm:$0xf]
        %v672 = vld [vmem:[%s328 + $0xa8] sm:$0xf]
        %v673 = vld [vmem:[%s328 + $0xac] sm:$0xf]
        %v674 = vld [vmem:[%s328 + $0xb0] sm:$0xf]
        %v675 = vld [vmem:[%s328 + $0xb4] sm:$0xf]
        %v676 = vld [vmem:[%s328 + $0xb8] sm:$0xf]
        %v677 = vld [vmem:[%s328 + $0xbc] sm:$0xf]
        %v678 = vld [vmem:[%s328 + $0xc0] sm:$0xf]
        %v679 = vld [vmem:[%s328 + $0xc4] sm:$0xf]
        %v680 = vld [vmem:[%s328 + $0xc8] sm:$0xf]
        %v681 = vld [vmem:[%s328 + $0xcc] sm:$0xf]
        %v682 = vld [vmem:[%s328 + $0xd0] sm:$0xf]
        %v683 = vld [vmem:[%s328 + $0xd4] sm:$0xf]
        %v684 = vld [vmem:[%s328 + $0xd8] sm:$0xf]
        %v685 = vld [vmem:[%s328 + $0xdc] sm:$0xf]
        %v686 = vld [vmem:[%s328 + $0xe0] sm:$0xf]
        %v687 = vld [vmem:[%s328 + $0xe4] sm:$0xf]
        %v688 = vld [vmem:[%s328 + $0xe8] sm:$0xf]
        %v689 = vld [vmem:[%s328 + $0xec] sm:$0xf]
        %v690 = vld [vmem:[%s328 + $0xf0] sm:$0xf]
        %v691 = vld [vmem:[%s328 + $0xf4] sm:$0xf]
        %v692 = vld [vmem:[%s328 + $0xf8] sm:$0xf]
        %v693 = vld [vmem:[%s328 + $0xfc] sm:$0xf]
        %v694 = vld [vmem:[%s328 + $0x100] sm:$0xf]
        %v695 = vld [vmem:[%s328 + $0x104] sm:$0xf]
        %v696 = vld [vmem:[%s328 + $0x108] sm:$0xf]
        %v697 = vld [vmem:[%s328 + $0x10c] sm:$0xf]
        %v698 = vld [vmem:[%s328 + $0x110] sm:$0xf]
        %v699 = vld [vmem:[%s328 + $0x114] sm:$0xf]
        %v700 = vld [vmem:[%s328 + $0x118] sm:$0xf]
        %v701 = vld [vmem:[%s328 + $0x11c] sm:$0xf]
        %v702 = vld [vmem:[%s328 + $0x120] sm:$0xf]
        %v703 = vld [vmem:[%s328 + $0x124] sm:$0xf]
        %v704 = vld [vmem:[%s328 + $0x128] sm:$0xf]
        %v705 = vld [vmem:[%s328 + $0x12c] sm:$0xf]
        %v706 = vld [vmem:[%s328 + $0x130] sm:$0xf]
        %v707 = vld [vmem:[%s328 + $0x134] sm:$0xf]
        %v708 = vld [vmem:[%s328 + $0x138] sm:$0xf]
        %v709 = vld [vmem:[%s328 + $0x13c] sm:$0xf]
        %v710 = vld [vmem:[%s328 + $0x140] sm:$0xf]
        %v711 = vld [vmem:[%s328 + $0x144] sm:$0xf]
        %v712 = vld [vmem:[%s328 + $0x148] sm:$0xf]
        %v713 = vld [vmem:[%s328 + $0x14c] sm:$0xf]
        %v714 = vld [vmem:[%s328 + $0x150] sm:$0xf]
        %v715 = vld [vmem:[%s328 + $0x154] sm:$0xf]
        %v716 = vld [vmem:[%s328 + $0x158] sm:$0xf]
        %v717 = vld [vmem:[%s328 + $0x15c] sm:$0xf]
        %v718 = vld [vmem:[%s328 + $0x160] sm:$0xf]
        %v719 = vld [vmem:[%s328 + $0x164] sm:$0xf]
        %v720 = vld [vmem:[%s328 + $0x168] sm:$0xf]
        %v721 = vld [vmem:[%s328 + $0x16c] sm:$0xf]
        %v722 = vld [vmem:[%s328 + $0x170] sm:$0xf]
        %v723 = vld [vmem:[%s328 + $0x174] sm:$0xf]
        %v724 = vld [vmem:[%s328 + $0x178] sm:$0xf]
        %v725 = vld [vmem:[%s328 + $0x17c] sm:$0xf]
        %v726 = vld [vmem:[%s328 + $0x180] sm:$0xf]
        %v727 = vld [vmem:[%s328 + $0x184] sm:$0xf]
        %v728 = vld [vmem:[%s328 + $0x188] sm:$0xf]
        %v729 = vld [vmem:[%s328 + $0x18c] sm:$0xf]
        %v730 = vld [vmem:[%s328 + $0x190] sm:$0xf]
        %v731 = vld [vmem:[%s328 + $0x194] sm:$0xf]
        %v732 = vld [vmem:[%s328 + $0x198] sm:$0xf]
        %v733 = vld [vmem:[%s328 + $0x19c] sm:$0xf]
        %v734 = vld [vmem:[%s328 + $0x1a0] sm:$0xf]
        %v735 = vld [vmem:[%s328 + $0x1a4] sm:$0xf]
        %v736 = vld [vmem:[%s328 + $0x1a8] sm:$0xf]
        %v737 = vld [vmem:[%s328 + $0x1ac] sm:$0xf]
        %v738 = vld [vmem:[%s328 + $0x1b0] sm:$0xf]
        %v739 = vld [vmem:[%s328 + $0x1b4] sm:$0xf]
        %v740 = vld [vmem:[%s328 + $0x1b8] sm:$0xf]
        %v741 = vld [vmem:[%s328 + $0x1bc] sm:$0xf]
        %v742 = vld [vmem:[%s328 + $0x1c0] sm:$0xf]
        %v743 = vld [vmem:[%s328 + $0x1c4] sm:$0xf]
        %v744 = vld [vmem:[%s328 + $0x1c8] sm:$0xf]
        %v745 = vld [vmem:[%s328 + $0x1cc] sm:$0xf]
        %v746 = vld [vmem:[%s328 + $0x1d0] sm:$0xf]
        %v747 = vld [vmem:[%s328 + $0x1d4] sm:$0xf]
        %v748 = vld [vmem:[%s328 + $0x1d8] sm:$0xf]
        %v749 = vld [vmem:[%s328 + $0x1dc] sm:$0xf]
        %v750 = vld [vmem:[%s328 + $0x1e0] sm:$0xf]
        %v751 = vld [vmem:[%s328 + $0x1e4] sm:$0xf]
        %v752 = vld [vmem:[%s328 + $0x1e8] sm:$0xf]
        %v753 = vld [vmem:[%s328 + $0x1ec] sm:$0xf]
        %v754 = vld [vmem:[%s328 + $0x1f0] sm:$0xf]
        %v755 = vld [vmem:[%s328 + $0x1f4] sm:$0xf]
        %v756 = vld [vmem:[%s328 + $0x1f8] sm:$0xf]
        %v757 = vld [vmem:[%s328 + $0x1fc] sm:$0xf]
        %v758 = vld [vmem:[%s328 + $0x200] sm:$0xf]
        %v759 = vld [vmem:[%s328 + $0x204] sm:$0xf]
        %v760 = vld [vmem:[%s328 + $0x208] sm:$0xf]
        %v761 = vld [vmem:[%s328 + $0x20c] sm:$0xf]
        %v762 = vld [vmem:[%s328 + $0x210] sm:$0xf]
        %v763 = vld [vmem:[%s328 + $0x214] sm:$0xf]
        %v764 = vld [vmem:[%s328 + $0x218] sm:$0xf]
        %v765 = vld [vmem:[%s328 + $0x21c] sm:$0xf]
        %v766 = vld [vmem:[%s328 + $0x220] sm:$0xf]
        %v767 = vld [vmem:[%s328 + $0x224] sm:$0xf]
        %v768 = vld [vmem:[%s328 + $0x228] sm:$0xf]
        %v769 = vld [vmem:[%s328 + $0x22c] sm:$0xf]
        %v770 = vld [vmem:[%s328 + $0x230] sm:$0xf]
        %v771 = vld [vmem:[%s328 + $0x234] sm:$0xf]
        %v772 = vld [vmem:[%s328 + $0x238] sm:$0xf]
        %v773 = vld [vmem:[%s328 + $0x23c] sm:$0xf]
        %v774 = vld [vmem:[%s337] sm:$0x1]
        %v775 = vlaneseq
        %v776 = vshrl.u32 %v775, 7
        %v777 = vsub.s32 0, %v776
        %v778 = vrot.slane %v774, %v777
        %v923 = vunpack.c.l.b16 %v630
        %v924 = vunpack.c.l.b16 %v631
        %v925 = vunpack.c.l.b16 %v632
        %v926 = vunpack.c.l.b16 %v633
        %v927 = vunpack.c.l.b16 %v634
        %v928 = vunpack.c.l.b16 %v635
        %v929 = vunpack.c.l.b16 %v636
        %v930 = vunpack.c.l.b16 %v637
        %v931 = vunpack.c.l.b16 %v638
        %v932 = vunpack.c.l.b16 %v639
        %v933 = vunpack.c.l.b16 %v640
        %v934 = vunpack.c.l.b16 %v641
        %v935 = vunpack.c.l.b16 %v642
        %v936 = vunpack.c.l.b16 %v643
        %v937 = vunpack.c.l.b16 %v644
        %v938 = vunpack.c.l.b16 %v645
        %v939 = vunpack.c.l.b16 %v646
        %v940 = vunpack.c.l.b16 %v647
        %v941 = vunpack.c.l.b16 %v648
        %v942 = vunpack.c.l.b16 %v649
        %v943 = vunpack.c.l.b16 %v650
        %v944 = vunpack.c.l.b16 %v651
        %v945 = vunpack.c.l.b16 %v652
        %v946 = vunpack.c.l.b16 %v653
        %v947 = vunpack.c.l.b16 %v654
        %v948 = vunpack.c.l.b16 %v655
        %v949 = vunpack.c.l.b16 %v656
        %v950 = vunpack.c.l.b16 %v657
        %v951 = vunpack.c.l.b16 %v658
        %v952 = vunpack.c.l.b16 %v659
        %v953 = vunpack.c.l.b16 %v660
        %v954 = vunpack.c.l.b16 %v661
        %v955 = vunpack.c.l.b16 %v662
        %v956 = vunpack.c.l.b16 %v663
        %v957 = vunpack.c.l.b16 %v664
        %v958 = vunpack.c.l.b16 %v665
        %v959 = vunpack.c.l.b16 %v666
        %v960 = vunpack.c.l.b16 %v667
        %v961 = vunpack.c.l.b16 %v668
        %v962 = vunpack.c.l.b16 %v669
        %v963 = vunpack.c.l.b16 %v670
        %v964 = vunpack.c.l.b16 %v671
        %v965 = vunpack.c.l.b16 %v672
        %v966 = vunpack.c.l.b16 %v673
        %v967 = vunpack.c.l.b16 %v674
        %v968 = vunpack.c.l.b16 %v675
        %v969 = vunpack.c.l.b16 %v676
        %v970 = vunpack.c.l.b16 %v677
        %v971 = vunpack.c.l.b16 %v678
        %v972 = vunpack.c.l.b16 %v679
        %v973 = vunpack.c.l.b16 %v680
        %v974 = vunpack.c.l.b16 %v681
        %v975 = vunpack.c.l.b16 %v682
        %v976 = vunpack.c.l.b16 %v683
        %v977 = vunpack.c.l.b16 %v684
        %v978 = vunpack.c.l.b16 %v685
        %v979 = vunpack.c.l.b16 %v686
        %v980 = vunpack.c.l.b16 %v687
        %v981 = vunpack.c.l.b16 %v688
        %v982 = vunpack.c.l.b16 %v689
        %v983 = vunpack.c.l.b16 %v690
        %v984 = vunpack.c.l.b16 %v691
        %v985 = vunpack.c.l.b16 %v692
        %v986 = vunpack.c.l.b16 %v693
        %v987 = vunpack.c.l.b16 %v694
        %v988 = vunpack.c.l.b16 %v695
        %v989 = vunpack.c.l.b16 %v696
        %v990 = vunpack.c.l.b16 %v697
        %v991 = vunpack.c.l.b16 %v698
        %v992 = vunpack.c.l.b16 %v699
        %v993 = vunpack.c.l.b16 %v700
        %v994 = vunpack.c.l.b16 %v701
        %v995 = vunpack.c.l.b16 %v702
        %v996 = vunpack.c.l.b16 %v703
        %v997 = vunpack.c.l.b16 %v704
        %v998 = vunpack.c.l.b16 %v705
        %v999 = vunpack.c.l.b16 %v706
        %v1000 = vunpack.c.l.b16 %v707
        %v1001 = vunpack.c.l.b16 %v708
        %v1002 = vunpack.c.l.b16 %v709
        %v1003 = vunpack.c.l.b16 %v710
        %v1004 = vunpack.c.l.b16 %v711
        %v1005 = vunpack.c.l.b16 %v712
        %v1006 = vunpack.c.l.b16 %v713
        %v1007 = vunpack.c.l.b16 %v714
        %v1008 = vunpack.c.l.b16 %v715
        %v1009 = vunpack.c.l.b16 %v716
        %v1010 = vunpack.c.l.b16 %v717
        %v1011 = vunpack.c.l.b16 %v718
        %v1012 = vunpack.c.l.b16 %v719
        %v1013 = vunpack.c.l.b16 %v720
        %v1014 = vunpack.c.l.b16 %v721
        %v1015 = vunpack.c.l.b16 %v722
        %v1016 = vunpack.c.l.b16 %v723
        %v1017 = vunpack.c.l.b16 %v724
        %v1018 = vunpack.c.l.b16 %v725
        %v1019 = vunpack.c.l.b16 %v726
        %v1020 = vunpack.c.l.b16 %v727
        %v1021 = vunpack.c.l.b16 %v728
        %v1022 = vunpack.c.l.b16 %v729
        %v1023 = vunpack.c.l.b16 %v730
        %v1024 = vunpack.c.l.b16 %v731
        %v1025 = vunpack.c.l.b16 %v732
        %v1026 = vunpack.c.l.b16 %v733
        %v1027 = vunpack.c.l.b16 %v734
        %v1028 = vunpack.c.l.b16 %v735
        %v1029 = vunpack.c.l.b16 %v736
        %v1030 = vunpack.c.l.b16 %v737
        %v1031 = vunpack.c.l.b16 %v738
        %v1032 = vunpack.c.l.b16 %v739
        %v1033 = vunpack.c.l.b16 %v740
        %v1034 = vunpack.c.l.b16 %v741
        %v1035 = vunpack.c.l.b16 %v742
        %v1036 = vunpack.c.l.b16 %v743
        %v1037 = vunpack.c.l.b16 %v744
        %v1038 = vunpack.c.l.b16 %v745
        %v1039 = vunpack.c.l.b16 %v746
        %v1040 = vunpack.c.l.b16 %v747
        %v1041 = vunpack.c.l.b16 %v748
        %v1042 = vunpack.c.l.b16 %v749
        %v1043 = vunpack.c.l.b16 %v750
        %v1044 = vunpack.c.l.b16 %v751
        %v1045 = vunpack.c.l.b16 %v752
        %v1046 = vunpack.c.l.b16 %v753
        %v1047 = vunpack.c.l.b16 %v754
        %v1048 = vunpack.c.l.b16 %v755
        %v1049 = vunpack.c.l.b16 %v756
        %v1050 = vunpack.c.l.b16 %v757
        %v1051 = vunpack.c.l.b16 %v758
        %v1052 = vunpack.c.l.b16 %v759
        %v1053 = vunpack.c.l.b16 %v760
        %v1054 = vunpack.c.l.b16 %v761
        %v1055 = vunpack.c.l.b16 %v762
        %v1056 = vunpack.c.l.b16 %v763
        %v1057 = vunpack.c.l.b16 %v764
        %v1058 = vunpack.c.l.b16 %v765
        %v1059 = vunpack.c.l.b16 %v766
        %v1060 = vunpack.c.l.b16 %v767
        %v1061 = vunpack.c.l.b16 %v768
        %v1062 = vunpack.c.l.b16 %v769
        %v1063 = vunpack.c.l.b16 %v770
        %v1064 = vunpack.c.l.b16 %v771
        %v1065 = vunpack.c.l.b16 %v772
        %v1066 = vunpack.c.l.b16 %v773
        %v1067 = vpack.c.b16 %v924, %v923
        %v1068 = vpack.c.b16 %v926, %v925
        %v1069 = vpack.c.b16 %v928, %v927
        %v1070 = vpack.c.b16 %v930, %v929
        %v1071 = vpack.c.b16 %v932, %v931
        %v1072 = vpack.c.b16 %v934, %v933
        %v1073 = vpack.c.b16 %v936, %v935
        %v1074 = vpack.c.b16 %v938, %v937
        %v1075 = vpack.c.b16 %v940, %v939
        %v1076 = vpack.c.b16 %v942, %v941
        %v1077 = vpack.c.b16 %v944, %v943
        %v1078 = vpack.c.b16 %v946, %v945
        %v1079 = vpack.c.b16 %v948, %v947
        %v1080 = vpack.c.b16 %v950, %v949
        %v1081 = vpack.c.b16 %v952, %v951
        %v1082 = vpack.c.b16 %v954, %v953
        %v1083 = vpack.c.b16 %v956, %v955
        %v1084 = vpack.c.b16 %v958, %v957
        %v1085 = vpack.c.b16 %v960, %v959
        %v1086 = vpack.c.b16 %v962, %v961
        %v1087 = vpack.c.b16 %v964, %v963
        %v1088 = vpack.c.b16 %v966, %v965
        %v1089 = vpack.c.b16 %v968, %v967
        %v1090 = vpack.c.b16 %v970, %v969
        %v1091 = vpack.c.b16 %v972, %v971
        %v1092 = vpack.c.b16 %v974, %v973
        %v1093 = vpack.c.b16 %v976, %v975
        %v1094 = vpack.c.b16 %v978, %v977
        %v1095 = vpack.c.b16 %v980, %v979
        %v1096 = vpack.c.b16 %v982, %v981
        %v1097 = vpack.c.b16 %v984, %v983
        %v1098 = vpack.c.b16 %v986, %v985
        %v1099 = vpack.c.b16 %v988, %v987
        %v1100 = vpack.c.b16 %v990, %v989
        %v1101 = vpack.c.b16 %v992, %v991
        %v1102 = vpack.c.b16 %v994, %v993
        %v1103 = vpack.c.b16 %v996, %v995
        %v1104 = vpack.c.b16 %v998, %v997
        %v1105 = vpack.c.b16 %v1000, %v999
        %v1106 = vpack.c.b16 %v1002, %v1001
        %v1107 = vpack.c.b16 %v1004, %v1003
        %v1108 = vpack.c.b16 %v1006, %v1005
        %v1109 = vpack.c.b16 %v1008, %v1007
        %v1110 = vpack.c.b16 %v1010, %v1009
        %v1111 = vpack.c.b16 %v1012, %v1011
        %v1112 = vpack.c.b16 %v1014, %v1013
        %v1113 = vpack.c.b16 %v1016, %v1015
        %v1114 = vpack.c.b16 %v1018, %v1017
        %v1115 = vpack.c.b16 %v1020, %v1019
        %v1116 = vpack.c.b16 %v1022, %v1021
        %v1117 = vpack.c.b16 %v1024, %v1023
        %v1118 = vpack.c.b16 %v1026, %v1025
        %v1119 = vpack.c.b16 %v1028, %v1027
        %v1120 = vpack.c.b16 %v1030, %v1029
        %v1121 = vpack.c.b16 %v1032, %v1031
        %v1122 = vpack.c.b16 %v1034, %v1033
        %v1123 = vpack.c.b16 %v1036, %v1035
        %v1124 = vpack.c.b16 %v1038, %v1037
        %v1125 = vpack.c.b16 %v1040, %v1039
        %v1126 = vpack.c.b16 %v1042, %v1041
        %v1127 = vpack.c.b16 %v1044, %v1043
        %v1128 = vpack.c.b16 %v1046, %v1045
        %v1129 = vpack.c.b16 %v1048, %v1047
        %v1130 = vpack.c.b16 %v1050, %v1049
        %v1131 = vpack.c.b16 %v1052, %v1051
        %v1132 = vpack.c.b16 %v1054, %v1053
        %v1133 = vpack.c.b16 %v1056, %v1055
        %v1134 = vpack.c.b16 %v1058, %v1057
        %v1135 = vpack.c.b16 %v1060, %v1059
        %v1136 = vpack.c.b16 %v1062, %v1061
        %v1137 = vpack.c.b16 %v1064, %v1063
        %v1138 = vpack.c.b16 %v1066, %v1065
        %1211 = vmatprep.subr.bf16.mxu0 0
        %1212 = vmatpush1.bf16.msra.mxu0 %v1067
        %1213 = vmatprep.subr.bf16.mxu0 0
        %1214 = vmatpush1.bf16.msra.mxu0 %v1068
        %1215 = vmatprep.subr.bf16.mxu0 0
        %1216 = vmatpush1.bf16.msra.mxu0 %v1069
        %1217 = vmatprep.subr.bf16.mxu0 0
        %1218 = vmatpush1.bf16.msra.mxu0 %v1070
        %1219 = vmatprep.subr.bf16.mxu0 0
        %1220 = vmatpush1.bf16.msra.mxu0 %v1071
        %1221 = vmatprep.subr.bf16.mxu0 0
        %1222 = vmatpush1.bf16.msra.mxu0 %v1072
        %1223 = vmatprep.subr.bf16.mxu0 0
        %1224 = vmatpush1.bf16.msra.mxu0 %v1073
        %1225 = vmatprep.subr.bf16.mxu0 0
        %1226 = vmatpush1.bf16.msra.mxu0 %v1074
        %1227 = vmatprep.subr.bf16.mxu0 0
        %1228 = vmatpush1.bf16.msra.mxu0 %v1075
        %1229 = vmatprep.subr.bf16.mxu0 0
        %1230 = vmatpush1.bf16.msra.mxu0 %v1076
        %1231 = vmatprep.subr.bf16.mxu0 0
        %1232 = vmatpush1.bf16.msra.mxu0 %v1077
        %1233 = vmatprep.subr.bf16.mxu0 0
        %1234 = vmatpush1.bf16.msra.mxu0 %v1078
        %1235 = vmatprep.subr.bf16.mxu0 0
        %1236 = vmatpush1.bf16.msra.mxu0 %v1079
        %1237 = vmatprep.subr.bf16.mxu0 0
        %1238 = vmatpush1.bf16.msra.mxu0 %v1080
        %1239 = vmatprep.subr.bf16.mxu0 0
        %1240 = vmatpush1.bf16.msra.mxu0 %v1081
        %1241 = vmatprep.subr.bf16.mxu0 0
        %1242 = vmatpush1.bf16.msra.mxu0 %v1082
        %1243 = vmatprep.mubr.bf16.mxu0 %v556
        %1244 = vmatmul.mubr.bf16.gmra.mrb[0].mxu0 %v532
        %v1245 = vpop.f32.mrb[0].mxu0
        %v1246 = vadd.f32 %v778, %v1245
        %v1247 = vpop.f32.mrb[0].mxu0
        %v1248 = vpop.f32.mrb[0].mxu0
        %v1249 = vadd.f32 %v778, %v1248
        %v1250 = vpop.f32.mrb[0].mxu0
        %1251 = vmatprep.mubr.bf16.mxu0 %v557
        %1252 = vmatmul.mubr.bf16.gmra.mrb[0].mxu0 %v533
        %v1253 = vpop.f32.mrb[0].mxu0
        %v1254 = vadd.f32 %v778, %v1253
        %v1255 = vpop.f32.mrb[0].mxu0
        %v1256 = vpop.f32.mrb[0].mxu0
        %v1257 = vadd.f32 %v778, %v1256
        %v1258 = vpop.f32.mrb[0].mxu0
        %1259 = vmatprep.mubr.bf16.mxu0 %v558
        %1260 = vmatmul.mubr.bf16.gmra.mrb[0].mxu0 %v534
        %v1261 = vpop.f32.mrb[0].mxu0
        %v1262 = vadd.f32 %v778, %v1261
        %v1263 = vpop.f32.mrb[0].mxu0
        %v1264 = vpop.f32.mrb[0].mxu0
        %v1265 = vadd.f32 %v778, %v1264
        %v1266 = vpop.f32.mrb[0].mxu0
        %1267 = vmatprep.mubr.bf16.mxu0 %v559
        %1268 = vmatmul.mubr.bf16.gmra.mrb[0].mxu0 %v535
        %v1269 = vpop.f32.mrb[0].mxu0
        %v1270 = vadd.f32 %v778, %v1269
        %v1271 = vpop.f32.mrb[0].mxu0
        %v1272 = vpop.f32.mrb[0].mxu0
        %v1273 = vadd.f32 %v778, %v1272
        %v1274 = vpop.f32.mrb[0].mxu0
        %1275 = vdwg.mxu0
        %1276 = vmatprep.subr.bf16.mxu0 0
        %1277 = vmatpush1.bf16.msra.mxu0 %v1083
        %1278 = vmatprep.subr.bf16.mxu0 0
        %1279 = vmatpush1.bf16.msra.mxu0 %v1084
        %1280 = vmatprep.subr.bf16.mxu0 0
        %1281 = vmatpush1.bf16.msra.mxu0 %v1085
        %1282 = vmatprep.subr.bf16.mxu0 0
        %1283 = vmatpush1.bf16.msra.mxu0 %v1086
        %1284 = vmatprep.subr.bf16.mxu0 0
        %1285 = vmatpush1.bf16.msra.mxu0 %v1087
        %1286 = vmatprep.subr.bf16.mxu0 0
        %1287 = vmatpush1.bf16.msra.mxu0 %v1088
        %1288 = vmatprep.subr.bf16.mxu0 0
        %1289 = vmatpush1.bf16.msra.mxu0 %v1089
        %1290 = vmatprep.subr.bf16.mxu0 0
        %1291 = vmatpush1.bf16.msra.mxu0 %v1090
        %1292 = vmatprep.subr.bf16.mxu0 0
        %1293 = vmatpush1.bf16.msra.mxu0 %v1091
        %1294 = vmatprep.subr.bf16.mxu0 0
        %1295 = vmatpush1.bf16.msra.mxu0 %v1092
        %1296 = vmatprep.subr.bf16.mxu0 0
        %1297 = vmatpush1.bf16.msra.mxu0 %v1093
        %1298 = vmatprep.subr.bf16.mxu0 0
        %1299 = vmatpush1.bf16.msra.mxu0 %v1094
        %1300 = vmatprep.subr.bf16.mxu0 0
        %1301 = vmatpush1.bf16.msra.mxu0 %v1095
        %1302 = vmatprep.subr.bf16.mxu0 0
        %1303 = vmatpush1.bf16.msra.mxu0 %v1096
        %1304 = vmatprep.subr.bf16.mxu0 0
        %1305 = vmatpush1.bf16.msra.mxu0 %v1097
        %1306 = vmatprep.subr.bf16.mxu0 0
        %1307 = vmatpush1.bf16.msra.mxu0 %v1098
        %1308 = vmatprep.mubr.bf16.mxu0 %v590
        %1309 = vmatmul.mubr.bf16.gmra.mrb[0].mxu0 %v580
        %v1310 = vpop.f32.mrb[0].mxu0
        %v1311 = vadd.f32 %v1246, %v1310
        %v1312 = vpop.f32.mrb[0].mxu0
        %v1313 = vpop.f32.mrb[0].mxu0
        %v1314 = vadd.f32 %v1249, %v1313
        %v1315 = vpop.f32.mrb[0].mxu0
        %1316 = vmatprep.mubr.bf16.mxu0 %v591
        %1317 = vmatmul.mubr.bf16.gmra.mrb[0].mxu0 %v581
        %v1318 = vpop.f32.mrb[0].mxu0
        %v1319 = vadd.f32 %v1254, %v1318
        %v1320 = vpop.f32.mrb[0].mxu0
        %v1321 = vpop.f32.mrb[0].mxu0
        %v1322 = vadd.f32 %v1257, %v1321
        %v1323 = vpop.f32.mrb[0].mxu0
        %1324 = vmatprep.mubr.bf16.mxu0 %v592
        %1325 = vmatmul.mubr.bf16.gmra.mrb[0].mxu0 %v582
        %v1326 = vpop.f32.mrb[0].mxu0
        %v1327 = vadd.f32 %v1262, %v1326
        %v1328 = vpop.f32.mrb[0].mxu0
        %v1329 = vpop.f32.mrb[0].mxu0
        %v1330 = vadd.f32 %v1265, %v1329
        %v1331 = vpop.f32.mrb[0].mxu0
        %1332 = vmatprep.mubr.bf16.mxu0 %v593
        %1333 = vmatmul.mubr.bf16.gmra.mrb[0].mxu0 %v583
        %v1334 = vpop.f32.mrb[0].mxu0
        %v1335 = vadd.f32 %v1270, %v1334
        %v1336 = vpop.f32.mrb[0].mxu0
        %v1337 = vpop.f32.mrb[0].mxu0
        %v1338 = vadd.f32 %v1273, %v1337
        %v1339 = vpop.f32.mrb[0].mxu0
        %1340 = vdwg.mxu0
        %1341 = vmatprep.subr.bf16.mxu0 0
        %1342 = vmatpush1.bf16.msra.mxu0 %v1099
        %1343 = vmatprep.subr.bf16.mxu0 0
        %1344 = vmatpush1.bf16.msra.mxu0 %v1100
        %1345 = vmatprep.subr.bf16.mxu0 0
        %1346 = vmatpush1.bf16.msra.mxu0 %v1101
        %1347 = vmatprep.subr.bf16.mxu0 0
        %1348 = vmatpush1.bf16.msra.mxu0 %v1102
        %1349 = vmatprep.subr.bf16.mxu0 0
        %1350 = vmatpush1.bf16.msra.mxu0 %v1103
        %1351 = vmatprep.subr.bf16.mxu0 0
        %1352 = vmatpush1.bf16.msra.mxu0 %v1104
        %1353 = vmatprep.subr.bf16.mxu0 0
        %1354 = vmatpush1.bf16.msra.mxu0 %v1105
        %1355 = vmatprep.subr.bf16.mxu0 0
        %1356 = vmatpush1.bf16.msra.mxu0 %v1106
        %1357 = vmatprep.subr.bf16.mxu0 0
        %1358 = vmatpush1.bf16.msra.mxu0 %v1107
        %1359 = vmatprep.subr.bf16.mxu0 0
        %1360 = vmatpush1.bf16.msra.mxu0 %v1108
        %1361 = vmatprep.subr.bf16.mxu0 0
        %1362 = vmatpush1.bf16.msra.mxu0 %v1109
        %1363 = vmatprep.subr.bf16.mxu0 0
        %1364 = vmatpush1.bf16.msra.mxu0 %v1110
        %1365 = vmatprep.subr.bf16.mxu0 0
        %1366 = vmatpush1.bf16.msra.mxu0 %v1111
        %1367 = vmatprep.subr.bf16.mxu0 0
        %1368 = vmatpush1.bf16.msra.mxu0 %v1112
        %1369 = vmatprep.subr.bf16.mxu0 0
        %1370 = vmatpush1.bf16.msra.mxu0 %v1113
        %1371 = vmatprep.subr.bf16.mxu0 0
        %1372 = vmatpush1.bf16.msra.mxu0 %v1114
        %1373 = vmatprep.mubr.bf16.mxu0 %v610
        %1374 = vmatmul.mubr.bf16.gmra.mrb[0].mxu0 %v600
        %v1375 = vpop.f32.mrb[0].mxu0
        %v1376 = vadd.f32 %v1311, %v1375
        %v1377 = vpop.f32.mrb[0].mxu0
        %v1378 = vpop.f32.mrb[0].mxu0
        %v1379 = vadd.f32 %v1314, %v1378
        %v1380 = vpop.f32.mrb[0].mxu0
        %1381 = vmatprep.mubr.bf16.mxu0 %v611
        %1382 = vmatmul.mubr.bf16.gmra.mrb[0].mxu0 %v601
        %v1383 = vpop.f32.mrb[0].mxu0
        %v1384 = vadd.f32 %v1319, %v1383
        %v1385 = vpop.f32.mrb[0].mxu0
        %v1386 = vpop.f32.mrb[0].mxu0
        %v1387 = vadd.f32 %v1322, %v1386
        %v1388 = vpop.f32.mrb[0].mxu0
        %1389 = vmatprep.mubr.bf16.mxu0 %v612
        %1390 = vmatmul.mubr.bf16.gmra.mrb[0].mxu0 %v602
        %v1391 = vpop.f32.mrb[0].mxu0
        %v1392 = vadd.f32 %v1327, %v1391
        %v1393 = vpop.f32.mrb[0].mxu0
        %v1394 = vpop.f32.mrb[0].mxu0
        %v1395 = vadd.f32 %v1330, %v1394
        %v1396 = vpop.f32.mrb[0].mxu0
        %1397 = vmatprep.mubr.bf16.mxu0 %v613
        %1398 = vmatmul.mubr.bf16.gmra.mrb[0].mxu0 %v603
        %v1399 = vpop.f32.mrb[0].mxu0
        %v1400 = vadd.f32 %v1335, %v1399
        %v1401 = vpop.f32.mrb[0].mxu0
        %v1402 = vpop.f32.mrb[0].mxu0
        %v1403 = vadd.f32 %v1338, %v1402
        %v1404 = vpop.f32.mrb[0].mxu0
        %1405 = vdwg.mxu0
        %1406 = vmatprep.subr.bf16.mxu0 0
        %1407 = vmatpush1.bf16.msra.mxu0 %v1115
        %1408 = vmatprep.subr.bf16.mxu0 0
        %1409 = vmatpush1.bf16.msra.mxu0 %v1116
        %1410 = vmatprep.subr.bf16.mxu0 0
        %1411 = vmatpush1.bf16.msra.mxu0 %v1117
        %1412 = vmatprep.subr.bf16.mxu0 0
        %1413 = vmatpush1.bf16.msra.mxu0 %v1118
        %1414 = vmatprep.subr.bf16.mxu0 0
        %1415 = vmatpush1.bf16.msra.mxu0 %v1119
        %1416 = vmatprep.subr.bf16.mxu0 0
        %1417 = vmatpush1.bf16.msra.mxu0 %v1120
        %1418 = vmatprep.subr.bf16.mxu0 0
        %1419 = vmatpush1.bf16.msra.mxu0 %v1121
        %1420 = vmatprep.subr.bf16.mxu0 0
        %1421 = vmatpush1.bf16.msra.mxu0 %v1122
        %1422 = vmatprep.subr.bf16.mxu0 0
        %1423 = vmatpush1.bf16.msra.mxu0 %v1123
        %1424 = vmatprep.subr.bf16.mxu0 0
        %1425 = vmatpush1.bf16.msra.mxu0 %v1124
        %1426 = vmatprep.subr.bf16.mxu0 0
        %1427 = vmatpush1.bf16.msra.mxu0 %v1125
        %1428 = vmatprep.subr.bf16.mxu0 0
        %1429 = vmatpush1.bf16.msra.mxu0 %v1126
        %1430 = vmatprep.subr.bf16.mxu0 0
        %1431 = vmatpush1.bf16.msra.mxu0 %v1127
        %1432 = vmatprep.subr.bf16.mxu0 0
        %1433 = vmatpush1.bf16.msra.mxu0 %v1128
        %1434 = vmatprep.subr.bf16.mxu0 0
        %1435 = vmatpush1.bf16.msra.mxu0 %v1129
        %1436 = vmatprep.subr.bf16.mxu0 0
        %1437 = vmatpush1.bf16.msra.mxu0 %v1130
        %1438 = vmatprep.mubr.bf16.mxu0 %v557
        %1439 = vmatmul.mubr.bf16.gmra.mrb[0].mxu0 %v533
        %v1440 = vpop.f32.mrb[0].mxu0
        %v1441 = vadd.f32 %v1376, %v1440
        %v1442 = vpop.f32.mrb[0].mxu0
        %v1443 = vpop.f32.mrb[0].mxu0
        %v1444 = vadd.f32 %v1379, %v1443
        %v1445 = vpop.f32.mrb[0].mxu0
        %1446 = vmatprep.mubr.bf16.mxu0 %v558
        %1447 = vmatmul.mubr.bf16.gmra.mrb[0].mxu0 %v534
        %v1448 = vpop.f32.mrb[0].mxu0
        %v1449 = vadd.f32 %v1384, %v1448
        %v1450 = vpop.f32.mrb[0].mxu0
        %v1451 = vpop.f32.mrb[0].mxu0
        %v1452 = vadd.f32 %v1387, %v1451
        %v1453 = vpop.f32.mrb[0].mxu0
        %1454 = vmatprep.mubr.bf16.mxu0 %v559
        %1455 = vmatmul.mubr.bf16.gmra.mrb[0].mxu0 %v535
        %v1456 = vpop.f32.mrb[0].mxu0
        %v1457 = vadd.f32 %v1392, %v1456
        %v1458 = vpop.f32.mrb[0].mxu0
        %v1459 = vpop.f32.mrb[0].mxu0
        %v1460 = vadd.f32 %v1395, %v1459
        %v1461 = vpop.f32.mrb[0].mxu0
        %1462 = vmatprep.mubr.bf16.mxu0 %v624
        %1463 = vmatmul.mubr.bf16.gmra.mrb[0].mxu0 %v620
        %v1464 = vpop.f32.mrb[0].mxu0
        %v1465 = vadd.f32 %v1400, %v1464
        %v1466 = vpop.f32.mrb[0].mxu0
        %v1467 = vpop.f32.mrb[0].mxu0
        %v1468 = vadd.f32 %v1403, %v1467
        %v1469 = vpop.f32.mrb[0].mxu0
        %1470 = vdwg.mxu0
        %1471 = vmatprep.subr.bf16.mxu0 0
        %1472 = vmatpush1.bf16.msra.mxu0 %v1131
        %1473 = vmatprep.subr.bf16.mxu0 0
        %1474 = vmatpush1.bf16.msra.mxu0 %v1132
        %1475 = vmatprep.subr.bf16.mxu0 0
        %1476 = vmatpush1.bf16.msra.mxu0 %v1133
        %1477 = vmatprep.subr.bf16.mxu0 0
        %1478 = vmatpush1.bf16.msra.mxu0 %v1134
        %1479 = vmatprep.subr.bf16.mxu0 0
        %1480 = vmatpush1.bf16.msra.mxu0 %v1135
        %1481 = vmatprep.subr.bf16.mxu0 0
        %1482 = vmatpush1.bf16.msra.mxu0 %v1136
        %1483 = vmatprep.subr.bf16.mxu0 0
        %1484 = vmatpush1.bf16.msra.mxu0 %v1137
        %1485 = vmatprep.subr.bf16.mxu0 0
        %1486 = vmatpush1.bf16.msra.mxu0 %v1138
        %1487 = vmatprep.subr.bf16.mxu0 0
        %1488 = vmatpush1.bf16.msra.mxu0 0
        %1489 = vmatprep.subr.bf16.mxu0 0
        %1490 = vmatpush1.bf16.msra.mxu0 0
        %1491 = vmatprep.subr.bf16.mxu0 0
        %1492 = vmatpush1.bf16.msra.mxu0 0
        %1493 = vmatprep.subr.bf16.mxu0 0
        %1494 = vmatpush1.bf16.msra.mxu0 0
        %1495 = vmatprep.subr.bf16.mxu0 0
        %1496 = vmatpush1.bf16.msra.mxu0 0
        %1497 = vmatprep.subr.bf16.mxu0 0
        %1498 = vmatpush1.bf16.msra.mxu0 0
        %1499 = vmatprep.subr.bf16.mxu0 0
        %1500 = vmatpush1.bf16.msra.mxu0 0
        %1501 = vmatprep.subr.bf16.mxu0 0
        %1502 = vmatpush1.bf16.msra.mxu0 0
        %1503 = vmatprep.mubr.bf16.mxu0 0
        %1504 = vmatmul.mubr.bf16.gmra.mrb[0].mxu0 %v581
        %v1505 = vpop.f32.mrb[0].mxu0
        %v1506 = vadd.f32 %v1441, %v1505
        %v1507 = vpop.f32.mrb[0].mxu0
        %v1508 = vpop.f32.mrb[0].mxu0
        %v1509 = vadd.f32 %v1444, %v1508
        %v1510 = vpop.f32.mrb[0].mxu0
        %1511 = vmatprep.mubr.bf16.mxu0 0
        %1512 = vmatmul.mubr.bf16.gmra.mrb[0].mxu0 %v582
        %v1513 = vpop.f32.mrb[0].mxu0
        %v1514 = vadd.f32 %v1449, %v1513
        %v1515 = vpop.f32.mrb[0].mxu0
        %v1516 = vpop.f32.mrb[0].mxu0
        %v1517 = vadd.f32 %v1452, %v1516
        %v1518 = vpop.f32.mrb[0].mxu0
        %1519 = vmatprep.mubr.bf16.mxu0 0
        %1520 = vmatmul.mubr.bf16.gmra.mrb[0].mxu0 %v583
        %v1521 = vpop.f32.mrb[0].mxu0
        %v1522 = vadd.f32 %v1457, %v1521
        %v1523 = vpop.f32.mrb[0].mxu0
        %v1524 = vpop.f32.mrb[0].mxu0
        %v1525 = vadd.f32 %v1460, %v1524
        %v1526 = vpop.f32.mrb[0].mxu0
        %1527 = vmatprep.mubr.bf16.mxu0 0
        %1528 = vmatmul.mubr.bf16.gmra.mrb[0].mxu0 %v628
        %v1529 = vpop.f32.mrb[0].mxu0
        %v1530 = vadd.f32 %v1465, %v1529
        %v1531 = vpop.f32.mrb[0].mxu0
        %v1532 = vpop.f32.mrb[0].mxu0
        %v1533 = vadd.f32 %v1468, %v1532
        %v1534 = vpop.f32.mrb[0].mxu0
        %1535 = vdwg.mxu0
        %v1536 = vmax.f32 %v1506, 0.0
        %v1537 = vmax.f32 %v1509, 0.0
        %v1538 = vmax.f32 %v1514, 0.0
        %v1539 = vmax.f32 %v1517, 0.0
        %v1540 = vmax.f32 %v1522, 0.0
        %v1541 = vmax.f32 %v1525, 0.0
        %v1542 = vmax.f32 %v1530, 0.0
        %v1543 = vmax.f32 %v1533, 0.0
        %s1544 = scalar_lea.vmem [#allocation2], 8
        %1545 = vst [vmem:[%s1544] sm:$0xff] %v1536
        %1546 = vst [vmem:[%s1544 + $0x8] sm:$0xff] %v1537
        %1547 = vst [vmem:[%s1544 + $0x10] sm:$0xff] %v1538
        %1548 = vst [vmem:[%s1544 + $0x18] sm:$0xff] %v1539
        %1549 = vst [vmem:[%s1544 + $0x20] sm:$0xff] %v1540
        %1550 = vst [vmem:[%s1544 + $0x28] sm:$0xff] %v1541
        %1551 = vst [vmem:[%s1544 + $0x30] sm:$0xff] %v1542
        %1552 = vst [vmem:[%s1544 + $0x38] sm:$0xff] %v1543
        %v1553 = vld [vmem:[#allocation2] sm:$0xff]
        %v1554 = vld [vmem:[#allocation2 + $0x8] sm:$0xff]
        %v1555 = vld [vmem:[#allocation2 + $0x10] sm:$0xff]
        %v1556 = vld [vmem:[#allocation2 + $0x18] sm:$0xff]
        %v1557 = vld [vmem:[#allocation2 + $0x20] sm:$0xff]
        %v1558 = vld [vmem:[#allocation2 + $0x28] sm:$0xff]
        %v1559 = vld [vmem:[#allocation2 + $0x30] sm:$0xff]
        %v1560 = vld [vmem:[#allocation2 + $0x38] sm:$0xff]
        %v1561 = vld [vmem:[#allocation2 + $0x40] sm:$0xff]
        %v1562 = vld [vmem:[#allocation2 + $0x48] sm:$0xff]
        %v1573 = vrot.slane %v1553, 7
        %v1574 = vrot.slane %v1554, 7
        %v1575 = vrot.slane %v1555, 7
        %v1576 = vrot.slane %v1556, 7
        %v1577 = vrot.slane %v1557, 7
        %v1578 = vrot.slane %v1558, 7
        %v1579 = vrot.slane %v1559, 7
        %v1580 = vrot.slane %v1560, 7
        %v1581 = vrot.slane %v1561, 7
        %v1582 = vrot.slane %v1562, 7
        %v1593 = vsel %vm444, 0.0, %v1573
        %v1594 = vsel %vm444, 0.0, %v1574
        %v1595 = vsel %vm444, 0.0, %v1575
        %v1596 = vsel %vm444, 0.0, %v1576
        %v1597 = vsel %vm444, 0.0, %v1577
        %v1598 = vsel %vm444, 0.0, %v1578
        %v1599 = vsel %vm444, 0.0, %v1579
        %v1600 = vsel %vm444, 0.0, %v1580
        %v1601 = vsel %vm444, 0.0, %v1581
        %v1602 = vsel %vm444, 0.0, %v1582
        %v1603 = vpack.c.bf16 %v1593, %v1593
        %v1604 = vpack.c.bf16 %v1594, %v1594
        %v1605 = vpack.c.bf16 %v1595, %v1595
        %v1606 = vpack.c.bf16 %v1596, %v1596
        %v1607 = vpack.c.bf16 %v1597, %v1597
        %v1608 = vpack.c.bf16 %v1598, %v1598
        %v1609 = vpack.c.bf16 %v1599, %v1599
        %v1610 = vpack.c.bf16 %v1600, %v1600
        %v1611 = vpack.c.bf16 %v1601, %v1601
        %v1612 = vpack.c.bf16 %v1602, %v1602
        %v1613 = vpack.c.bf16 %v1553, %v1553
        %v1614 = vpack.c.bf16 %v1554, %v1554
        %v1615 = vpack.c.bf16 %v1555, %v1555
        %v1616 = vpack.c.bf16 %v1556, %v1556
        %v1617 = vpack.c.bf16 %v1557, %v1557
        %v1618 = vpack.c.bf16 %v1558, %v1558
        %v1619 = vpack.c.bf16 %v1559, %v1559
        %v1620 = vpack.c.bf16 %v1560, %v1560
        %v1621 = vpack.c.bf16 %v1561, %v1561
        %v1622 = vpack.c.bf16 %v1562, %v1562
        %v1623 = vrot.slane %v1553, 1
        %v1624 = vrot.slane %v1554, 1
        %v1625 = vrot.slane %v1555, 1
        %v1626 = vrot.slane %v1556, 1
        %v1627 = vrot.slane %v1557, 1
        %v1628 = vrot.slane %v1558, 1
        %v1629 = vrot.slane %v1559, 1
        %v1630 = vrot.slane %v1560, 1
        %v1631 = vrot.slane %v1561, 1
        %v1632 = vrot.slane %v1562, 1
        %v1643 = vsel %vm495, %v1623, 0.0
        %v1644 = vsel %vm495, %v1624, 0.0
        %v1645 = vsel %vm495, %v1625, 0.0
        %v1646 = vsel %vm495, %v1626, 0.0
        %v1647 = vsel %vm495, %v1627, 0.0
        %v1648 = vsel %vm495, %v1628, 0.0
        %v1649 = vsel %vm495, %v1629, 0.0
        %v1650 = vsel %vm495, %v1630, 0.0
        %v1651 = vsel %vm495, %v1631, 0.0
        %v1652 = vsel %vm495, %v1632, 0.0
        %v1653 = vpack.c.bf16 %v1643, %v1643
        %v1654 = vpack.c.bf16 %v1644, %v1644
        %v1655 = vpack.c.bf16 %v1645, %v1645
        %v1656 = vpack.c.bf16 %v1646, %v1646
        %v1657 = vpack.c.bf16 %v1647, %v1647
        %v1658 = vpack.c.bf16 %v1648, %v1648
        %v1659 = vpack.c.bf16 %v1649, %v1649
        %v1660 = vpack.c.bf16 %v1650, %v1650
        %v1661 = vpack.c.bf16 %v1651, %v1651
        %v1662 = vpack.c.bf16 %v1652, %v1652
        %v1671 = vunpack.c.l.b16 %v1603
        %v1672 = vunpack.c.l.b16 %v1604
        %v1673 = vunpack.c.l.b16 %v1605
        %v1674 = vunpack.c.l.b16 %v1606
        %v1675 = vunpack.c.l.b16 %v1607
        %v1676 = vunpack.c.l.b16 %v1608
        %v1677 = vunpack.c.l.b16 %v1609
        %v1678 = vunpack.c.l.b16 %v1610
        %v1679 = vpack.c.b16 %v1672, %v1671
        %v1680 = vpack.c.b16 %v1674, %v1673
        %v1681 = vpack.c.b16 %v1676, %v1675
        %v1682 = vpack.c.b16 %v1678, %v1677
        %v1695 = vunpack.c.l.b16 %v1613
        %v1696 = vunpack.c.l.b16 %v1614
        %v1697 = vunpack.c.l.b16 %v1615
        %v1698 = vunpack.c.l.b16 %v1616
        %v1699 = vunpack.c.l.b16 %v1617
        %v1700 = vunpack.c.l.b16 %v1618
        %v1701 = vunpack.c.l.b16 %v1619
        %v1702 = vunpack.c.l.b16 %v1620
        %v1703 = vpack.c.b16 %v1696, %v1695
        %v1704 = vpack.c.b16 %v1698, %v1697
        %v1705 = vpack.c.b16 %v1700, %v1699
        %v1706 = vpack.c.b16 %v1702, %v1701
        %v1719 = vunpack.c.l.b16 %v1653
        %v1720 = vunpack.c.l.b16 %v1654
        %v1721 = vunpack.c.l.b16 %v1655
        %v1722 = vunpack.c.l.b16 %v1656
        %v1723 = vunpack.c.l.b16 %v1657
        %v1724 = vunpack.c.l.b16 %v1658
        %v1725 = vunpack.c.l.b16 %v1659
        %v1726 = vunpack.c.l.b16 %v1660
        %v1727 = vpack.c.b16 %v1720, %v1719
        %v1728 = vpack.c.b16 %v1722, %v1721
        %v1729 = vpack.c.b16 %v1724, %v1723
        %v1730 = vpack.c.b16 %v1726, %v1725
        %v1736 = vunpack.c.l.b16 %v1611
        %v1737 = vpack.c.b16 %v1673, %v1672
        %v1738 = vpack.c.b16 %v1675, %v1674
        %v1739 = vpack.c.b16 %v1677, %v1676
        %v1740 = vpack.c.b16 %v1736, %v1678
        %v1746 = vunpack.c.l.b16 %v1621
        %v1747 = vpack.c.b16 %v1697, %v1696
        %v1748 = vpack.c.b16 %v1699, %v1698
        %v1749 = vpack.c.b16 %v1701, %v1700
        %v1750 = vpack.c.b16 %v1746, %v1702
        %v1756 = vunpack.c.l.b16 %v1661
        %v1757 = vpack.c.b16 %v1721, %v1720
        %v1758 = vpack.c.b16 %v1723, %v1722
        %v1759 = vpack.c.b16 %v1725, %v1724
        %v1760 = vpack.c.b16 %v1756, %v1726
        %v1766 = vunpack.c.l.b16 %v1612
        %v1767 = vpack.c.b16 %v1766, %v1736
        %v1770 = vunpack.c.l.b16 %v1622
        %v1771 = vpack.c.b16 %v1770, %v1746
        %v1774 = vunpack.c.l.b16 %v1662
        %v1775 = vpack.c.b16 %v1774, %v1756
        %s1777 = scalar_lea.vmem %s328, 576 [#allocation5]
        %v1778 = vld [vmem:[%s1777] sm:$0xf]
        %v1779 = vld [vmem:[%s1777 + $0x4] sm:$0xf]
        %v1780 = vld [vmem:[%s1777 + $0x8] sm:$0xf]
        %v1781 = vld [vmem:[%s1777 + $0xc] sm:$0xf]
        %v1782 = vld [vmem:[%s1777 + $0x10] sm:$0xf]
        %v1783 = vld [vmem:[%s1777 + $0x14] sm:$0xf]
        %v1784 = vld [vmem:[%s1777 + $0x18] sm:$0xf]
        %v1785 = vld [vmem:[%s1777 + $0x1c] sm:$0xf]
        %v1786 = vld [vmem:[%s1777 + $0x20] sm:$0xf]
        %v1787 = vld [vmem:[%s1777 + $0x24] sm:$0xf]
        %v1788 = vld [vmem:[%s1777 + $0x28] sm:$0xf]
        %v1789 = vld [vmem:[%s1777 + $0x2c] sm:$0xf]
        %v1790 = vld [vmem:[%s1777 + $0x30] sm:$0xf]
        %v1791 = vld [vmem:[%s1777 + $0x34] sm:$0xf]
        %v1792 = vld [vmem:[%s1777 + $0x38] sm:$0xf]
        %v1793 = vld [vmem:[%s1777 + $0x3c] sm:$0xf]
        %v1794 = vld [vmem:[%s1777 + $0x40] sm:$0xf]
        %v1795 = vld [vmem:[%s1777 + $0x44] sm:$0xf]
        %v1796 = vld [vmem:[%s1777 + $0x48] sm:$0xf]
        %v1797 = vld [vmem:[%s1777 + $0x4c] sm:$0xf]
        %v1798 = vld [vmem:[%s1777 + $0x50] sm:$0xf]
        %v1799 = vld [vmem:[%s1777 + $0x54] sm:$0xf]
        %v1800 = vld [vmem:[%s1777 + $0x58] sm:$0xf]
        %v1801 = vld [vmem:[%s1777 + $0x5c] sm:$0xf]
        %v1802 = vld [vmem:[%s1777 + $0x60] sm:$0xf]
        %v1803 = vld [vmem:[%s1777 + $0x64] sm:$0xf]
        %v1804 = vld [vmem:[%s1777 + $0x68] sm:$0xf]
        %v1805 = vld [vmem:[%s1777 + $0x6c] sm:$0xf]
        %v1806 = vld [vmem:[%s1777 + $0x70] sm:$0xf]
        %v1807 = vld [vmem:[%s1777 + $0x74] sm:$0xf]
        %v1808 = vld [vmem:[%s1777 + $0x78] sm:$0xf]
        %v1809 = vld [vmem:[%s1777 + $0x7c] sm:$0xf]
        %v1810 = vld [vmem:[%s1777 + $0x80] sm:$0xf]
        %v1811 = vld [vmem:[%s1777 + $0x84] sm:$0xf]
        %v1812 = vld [vmem:[%s1777 + $0x88] sm:$0xf]
        %v1813 = vld [vmem:[%s1777 + $0x8c] sm:$0xf]
        %v1814 = vld [vmem:[%s1777 + $0x90] sm:$0xf]
        %v1815 = vld [vmem:[%s1777 + $0x94] sm:$0xf]
        %v1816 = vld [vmem:[%s1777 + $0x98] sm:$0xf]
        %v1817 = vld [vmem:[%s1777 + $0x9c] sm:$0xf]
        %v1818 = vld [vmem:[%s1777 + $0xa0] sm:$0xf]
        %v1819 = vld [vmem:[%s1777 + $0xa4] sm:$0xf]
        %v1820 = vld [vmem:[%s1777 + $0xa8] sm:$0xf]
        %v1821 = vld [vmem:[%s1777 + $0xac] sm:$0xf]
        %v1822 = vld [vmem:[%s1777 + $0xb0] sm:$0xf]
        %v1823 = vld [vmem:[%s1777 + $0xb4] sm:$0xf]
        %v1824 = vld [vmem:[%s1777 + $0xb8] sm:$0xf]
        %v1825 = vld [vmem:[%s1777 + $0xbc] sm:$0xf]
        %v1826 = vld [vmem:[%s1777 + $0xc0] sm:$0xf]
        %v1827 = vld [vmem:[%s1777 + $0xc4] sm:$0xf]
        %v1828 = vld [vmem:[%s1777 + $0xc8] sm:$0xf]
        %v1829 = vld [vmem:[%s1777 + $0xcc] sm:$0xf]
        %v1830 = vld [vmem:[%s1777 + $0xd0] sm:$0xf]
        %v1831 = vld [vmem:[%s1777 + $0xd4] sm:$0xf]
        %v1832 = vld [vmem:[%s1777 + $0xd8] sm:$0xf]
        %v1833 = vld [vmem:[%s1777 + $0xdc] sm:$0xf]
        %v1834 = vld [vmem:[%s1777 + $0xe0] sm:$0xf]
        %v1835 = vld [vmem:[%s1777 + $0xe4] sm:$0xf]
        %v1836 = vld [vmem:[%s1777 + $0xe8] sm:$0xf]
        %v1837 = vld [vmem:[%s1777 + $0xec] sm:$0xf]
        %v1838 = vld [vmem:[%s1777 + $0xf0] sm:$0xf]
        %v1839 = vld [vmem:[%s1777 + $0xf4] sm:$0xf]
        %v1840 = vld [vmem:[%s1777 + $0xf8] sm:$0xf]
        %v1841 = vld [vmem:[%s1777 + $0xfc] sm:$0xf]
        %v1842 = vld [vmem:[%s1777 + $0x100] sm:$0xf]
        %v1843 = vld [vmem:[%s1777 + $0x104] sm:$0xf]
        %v1844 = vld [vmem:[%s1777 + $0x108] sm:$0xf]
        %v1845 = vld [vmem:[%s1777 + $0x10c] sm:$0xf]
        %v1846 = vld [vmem:[%s1777 + $0x110] sm:$0xf]
        %v1847 = vld [vmem:[%s1777 + $0x114] sm:$0xf]
        %v1848 = vld [vmem:[%s1777 + $0x118] sm:$0xf]
        %v1849 = vld [vmem:[%s1777 + $0x11c] sm:$0xf]
        %v1850 = vld [vmem:[%s1777 + $0x120] sm:$0xf]
        %v1851 = vld [vmem:[%s1777 + $0x124] sm:$0xf]
        %v1852 = vld [vmem:[%s1777 + $0x128] sm:$0xf]
        %v1853 = vld [vmem:[%s1777 + $0x12c] sm:$0xf]
        %v1854 = vld [vmem:[%s1777 + $0x130] sm:$0xf]
        %v1855 = vld [vmem:[%s1777 + $0x134] sm:$0xf]
        %v1856 = vld [vmem:[%s1777 + $0x138] sm:$0xf]
        %v1857 = vld [vmem:[%s1777 + $0x13c] sm:$0xf]
        %v1858 = vld [vmem:[%s1777 + $0x140] sm:$0xf]
        %v1859 = vld [vmem:[%s1777 + $0x144] sm:$0xf]
        %v1860 = vld [vmem:[%s1777 + $0x148] sm:$0xf]
        %v1861 = vld [vmem:[%s1777 + $0x14c] sm:$0xf]
        %v1862 = vld [vmem:[%s1777 + $0x150] sm:$0xf]
        %v1863 = vld [vmem:[%s1777 + $0x154] sm:$0xf]
        %v1864 = vld [vmem:[%s1777 + $0x158] sm:$0xf]
        %v1865 = vld [vmem:[%s1777 + $0x15c] sm:$0xf]
        %v1866 = vld [vmem:[%s1777 + $0x160] sm:$0xf]
        %v1867 = vld [vmem:[%s1777 + $0x164] sm:$0xf]
        %v1868 = vld [vmem:[%s1777 + $0x168] sm:$0xf]
        %v1869 = vld [vmem:[%s1777 + $0x16c] sm:$0xf]
        %v1870 = vld [vmem:[%s1777 + $0x170] sm:$0xf]
        %v1871 = vld [vmem:[%s1777 + $0x174] sm:$0xf]
        %v1872 = vld [vmem:[%s1777 + $0x178] sm:$0xf]
        %v1873 = vld [vmem:[%s1777 + $0x17c] sm:$0xf]
        %v1874 = vld [vmem:[%s1777 + $0x180] sm:$0xf]
        %v1875 = vld [vmem:[%s1777 + $0x184] sm:$0xf]
        %v1876 = vld [vmem:[%s1777 + $0x188] sm:$0xf]
        %v1877 = vld [vmem:[%s1777 + $0x18c] sm:$0xf]
        %v1878 = vld [vmem:[%s1777 + $0x190] sm:$0xf]
        %v1879 = vld [vmem:[%s1777 + $0x194] sm:$0xf]
        %v1880 = vld [vmem:[%s1777 + $0x198] sm:$0xf]
        %v1881 = vld [vmem:[%s1777 + $0x19c] sm:$0xf]
        %v1882 = vld [vmem:[%s1777 + $0x1a0] sm:$0xf]
        %v1883 = vld [vmem:[%s1777 + $0x1a4] sm:$0xf]
        %v1884 = vld [vmem:[%s1777 + $0x1a8] sm:$0xf]
        %v1885 = vld [vmem:[%s1777 + $0x1ac] sm:$0xf]
        %v1886 = vld [vmem:[%s1777 + $0x1b0] sm:$0xf]
        %v1887 = vld [vmem:[%s1777 + $0x1b4] sm:$0xf]
        %v1888 = vld [vmem:[%s1777 + $0x1b8] sm:$0xf]
        %v1889 = vld [vmem:[%s1777 + $0x1bc] sm:$0xf]
        %v1890 = vld [vmem:[%s1777 + $0x1c0] sm:$0xf]
        %v1891 = vld [vmem:[%s1777 + $0x1c4] sm:$0xf]
        %v1892 = vld [vmem:[%s1777 + $0x1c8] sm:$0xf]
        %v1893 = vld [vmem:[%s1777 + $0x1cc] sm:$0xf]
        %v1894 = vld [vmem:[%s1777 + $0x1d0] sm:$0xf]
        %v1895 = vld [vmem:[%s1777 + $0x1d4] sm:$0xf]
        %v1896 = vld [vmem:[%s1777 + $0x1d8] sm:$0xf]
        %v1897 = vld [vmem:[%s1777 + $0x1dc] sm:$0xf]
        %v1898 = vld [vmem:[%s1777 + $0x1e0] sm:$0xf]
        %v1899 = vld [vmem:[%s1777 + $0x1e4] sm:$0xf]
        %v1900 = vld [vmem:[%s1777 + $0x1e8] sm:$0xf]
        %v1901 = vld [vmem:[%s1777 + $0x1ec] sm:$0xf]
        %v1902 = vld [vmem:[%s1777 + $0x1f0] sm:$0xf]
        %v1903 = vld [vmem:[%s1777 + $0x1f4] sm:$0xf]
        %v1904 = vld [vmem:[%s1777 + $0x1f8] sm:$0xf]
        %v1905 = vld [vmem:[%s1777 + $0x1fc] sm:$0xf]
        %v1906 = vld [vmem:[%s1777 + $0x200] sm:$0xf]
        %v1907 = vld [vmem:[%s1777 + $0x204] sm:$0xf]
        %v1908 = vld [vmem:[%s1777 + $0x208] sm:$0xf]
        %v1909 = vld [vmem:[%s1777 + $0x20c] sm:$0xf]
        %v1910 = vld [vmem:[%s1777 + $0x210] sm:$0xf]
        %v1911 = vld [vmem:[%s1777 + $0x214] sm:$0xf]
        %v1912 = vld [vmem:[%s1777 + $0x218] sm:$0xf]
        %v1913 = vld [vmem:[%s1777 + $0x21c] sm:$0xf]
        %v1914 = vld [vmem:[%s1777 + $0x220] sm:$0xf]
        %v1915 = vld [vmem:[%s1777 + $0x224] sm:$0xf]
        %v1916 = vld [vmem:[%s1777 + $0x228] sm:$0xf]
        %v1917 = vld [vmem:[%s1777 + $0x22c] sm:$0xf]
        %v1918 = vld [vmem:[%s1777 + $0x230] sm:$0xf]
        %v1919 = vld [vmem:[%s1777 + $0x234] sm:$0xf]
        %v1920 = vld [vmem:[%s1777 + $0x238] sm:$0xf]
        %v1921 = vld [vmem:[%s1777 + $0x23c] sm:$0xf]
        %v1922 = vld [vmem:[%s337 + $0x1] sm:$0x1]
        %v1923 = vlaneseq
        %v1924 = vshrl.u32 %v1923, 7
        %v1925 = vsub.s32 0, %v1924
        %v1926 = vrot.slane %v1922, %v1925
        %v2071 = vunpack.c.l.b16 %v1778
        %v2072 = vunpack.c.l.b16 %v1779
        %v2073 = vunpack.c.l.b16 %v1780
        %v2074 = vunpack.c.l.b16 %v1781
        %v2075 = vunpack.c.l.b16 %v1782
        %v2076 = vunpack.c.l.b16 %v1783
        %v2077 = vunpack.c.l.b16 %v1784
        %v2078 = vunpack.c.l.b16 %v1785
        %v2079 = vunpack.c.l.b16 %v1786
        %v2080 = vunpack.c.l.b16 %v1787
        %v2081 = vunpack.c.l.b16 %v1788
        %v2082 = vunpack.c.l.b16 %v1789
        %v2083 = vunpack.c.l.b16 %v1790
        %v2084 = vunpack.c.l.b16 %v1791
        %v2085 = vunpack.c.l.b16 %v1792
        %v2086 = vunpack.c.l.b16 %v1793
        %v2087 = vunpack.c.l.b16 %v1794
        %v2088 = vunpack.c.l.b16 %v1795
        %v2089 = vunpack.c.l.b16 %v1796
        %v2090 = vunpack.c.l.b16 %v1797
        %v2091 = vunpack.c.l.b16 %v1798
        %v2092 = vunpack.c.l.b16 %v1799
        %v2093 = vunpack.c.l.b16 %v1800
        %v2094 = vunpack.c.l.b16 %v1801
        %v2095 = vunpack.c.l.b16 %v1802
        %v2096 = vunpack.c.l.b16 %v1803
        %v2097 = vunpack.c.l.b16 %v1804
        %v2098 = vunpack.c.l.b16 %v1805
        %v2099 = vunpack.c.l.b16 %v1806
        %v2100 = vunpack.c.l.b16 %v1807
        %v2101 = vunpack.c.l.b16 %v1808
        %v2102 = vunpack.c.l.b16 %v1809
        %v2103 = vunpack.c.l.b16 %v1810
        %v2104 = vunpack.c.l.b16 %v1811
        %v2105 = vunpack.c.l.b16 %v1812
        %v2106 = vunpack.c.l.b16 %v1813
        %v2107 = vunpack.c.l.b16 %v1814
        %v2108 = vunpack.c.l.b16 %v1815
        %v2109 = vunpack.c.l.b16 %v1816
        %v2110 = vunpack.c.l.b16 %v1817
        %v2111 = vunpack.c.l.b16 %v1818
        %v2112 = vunpack.c.l.b16 %v1819
        %v2113 = vunpack.c.l.b16 %v1820
        %v2114 = vunpack.c.l.b16 %v1821
        %v2115 = vunpack.c.l.b16 %v1822
        %v2116 = vunpack.c.l.b16 %v1823
        %v2117 = vunpack.c.l.b16 %v1824
        %v2118 = vunpack.c.l.b16 %v1825
        %v2119 = vunpack.c.l.b16 %v1826
        %v2120 = vunpack.c.l.b16 %v1827
        %v2121 = vunpack.c.l.b16 %v1828
        %v2122 = vunpack.c.l.b16 %v1829
        %v2123 = vunpack.c.l.b16 %v1830
        %v2124 = vunpack.c.l.b16 %v1831
        %v2125 = vunpack.c.l.b16 %v1832
        %v2126 = vunpack.c.l.b16 %v1833
        %v2127 = vunpack.c.l.b16 %v1834
        %v2128 = vunpack.c.l.b16 %v1835
        %v2129 = vunpack.c.l.b16 %v1836
        %v2130 = vunpack.c.l.b16 %v1837
        %v2131 = vunpack.c.l.b16 %v1838
        %v2132 = vunpack.c.l.b16 %v1839
        %v2133 = vunpack.c.l.b16 %v1840
        %v2134 = vunpack.c.l.b16 %v1841
        %v2135 = vunpack.c.l.b16 %v1842
        %v2136 = vunpack.c.l.b16 %v1843
        %v2137 = vunpack.c.l.b16 %v1844
        %v2138 = vunpack.c.l.b16 %v1845
        %v2139 = vunpack.c.l.b16 %v1846
        %v2140 = vunpack.c.l.b16 %v1847
        %v2141 = vunpack.c.l.b16 %v1848
        %v2142 = vunpack.c.l.b16 %v1849
        %v2143 = vunpack.c.l.b16 %v1850
        %v2144 = vunpack.c.l.b16 %v1851
        %v2145 = vunpack.c.l.b16 %v1852
        %v2146 = vunpack.c.l.b16 %v1853
        %v2147 = vunpack.c.l.b16 %v1854
        %v2148 = vunpack.c.l.b16 %v1855
        %v2149 = vunpack.c.l.b16 %v1856
        %v2150 = vunpack.c.l.b16 %v1857
        %v2151 = vunpack.c.l.b16 %v1858
        %v2152 = vunpack.c.l.b16 %v1859
        %v2153 = vunpack.c.l.b16 %v1860
        %v2154 = vunpack.c.l.b16 %v1861
        %v2155 = vunpack.c.l.b16 %v1862
        %v2156 = vunpack.c.l.b16 %v1863
        %v2157 = vunpack.c.l.b16 %v1864
        %v2158 = vunpack.c.l.b16 %v1865
        %v2159 = vunpack.c.l.b16 %v1866
        %v2160 = vunpack.c.l.b16 %v1867
        %v2161 = vunpack.c.l.b16 %v1868
        %v2162 = vunpack.c.l.b16 %v1869
        %v2163 = vunpack.c.l.b16 %v1870
        %v2164 = vunpack.c.l.b16 %v1871
        %v2165 = vunpack.c.l.b16 %v1872
        %v2166 = vunpack.c.l.b16 %v1873
        %v2167 = vunpack.c.l.b16 %v1874
        %v2168 = vunpack.c.l.b16 %v1875
        %v2169 = vunpack.c.l.b16 %v1876
        %v2170 = vunpack.c.l.b16 %v1877
        %v2171 = vunpack.c.l.b16 %v1878
        %v2172 = vunpack.c.l.b16 %v1879
        %v2173 = vunpack.c.l.b16 %v1880
        %v2174 = vunpack.c.l.b16 %v1881
        %v2175 = vunpack.c.l.b16 %v1882
        %v2176 = vunpack.c.l.b16 %v1883
        %v2177 = vunpack.c.l.b16 %v1884
        %v2178 = vunpack.c.l.b16 %v1885
        %v2179 = vunpack.c.l.b16 %v1886
        %v2180 = vunpack.c.l.b16 %v1887
        %v2181 = vunpack.c.l.b16 %v1888
        %v2182 = vunpack.c.l.b16 %v1889
        %v2183 = vunpack.c.l.b16 %v1890
        %v2184 = vunpack.c.l.b16 %v1891
        %v2185 = vunpack.c.l.b16 %v1892
        %v2186 = vunpack.c.l.b16 %v1893
        %v2187 = vunpack.c.l.b16 %v1894
        %v2188 = vunpack.c.l.b16 %v1895
        %v2189 = vunpack.c.l.b16 %v1896
        %v2190 = vunpack.c.l.b16 %v1897
        %v2191 = vunpack.c.l.b16 %v1898
        %v2192 = vunpack.c.l.b16 %v1899
        %v2193 = vunpack.c.l.b16 %v1900
        %v2194 = vunpack.c.l.b16 %v1901
        %v2195 = vunpack.c.l.b16 %v1902
        %v2196 = vunpack.c.l.b16 %v1903
        %v2197 = vunpack.c.l.b16 %v1904
        %v2198 = vunpack.c.l.b16 %v1905
        %v2199 = vunpack.c.l.b16 %v1906
        %v2200 = vunpack.c.l.b16 %v1907
        %v2201 = vunpack.c.l.b16 %v1908
        %v2202 = vunpack.c.l.b16 %v1909
        %v2203 = vunpack.c.l.b16 %v1910
        %v2204 = vunpack.c.l.b16 %v1911
        %v2205 = vunpack.c.l.b16 %v1912
        %v2206 = vunpack.c.l.b16 %v1913
        %v2207 = vunpack.c.l.b16 %v1914
        %v2208 = vunpack.c.l.b16 %v1915
        %v2209 = vunpack.c.l.b16 %v1916
        %v2210 = vunpack.c.l.b16 %v1917
        %v2211 = vunpack.c.l.b16 %v1918
        %v2212 = vunpack.c.l.b16 %v1919
        %v2213 = vunpack.c.l.b16 %v1920
        %v2214 = vunpack.c.l.b16 %v1921
        %v2215 = vpack.c.b16 %v2072, %v2071
        %v2216 = vpack.c.b16 %v2074, %v2073
        %v2217 = vpack.c.b16 %v2076, %v2075
        %v2218 = vpack.c.b16 %v2078, %v2077
        %v2219 = vpack.c.b16 %v2080, %v2079
        %v2220 = vpack.c.b16 %v2082, %v2081
        %v2221 = vpack.c.b16 %v2084, %v2083
        %v2222 = vpack.c.b16 %v2086, %v2085
        %v2223 = vpack.c.b16 %v2088, %v2087
        %v2224 = vpack.c.b16 %v2090, %v2089
        %v2225 = vpack.c.b16 %v2092, %v2091
        %v2226 = vpack.c.b16 %v2094, %v2093
        %v2227 = vpack.c.b16 %v2096, %v2095
        %v2228 = vpack.c.b16 %v2098, %v2097
        %v2229 = vpack.c.b16 %v2100, %v2099
        %v2230 = vpack.c.b16 %v2102, %v2101
        %v2231 = vpack.c.b16 %v2104, %v2103
        %v2232 = vpack.c.b16 %v2106, %v2105
        %v2233 = vpack.c.b16 %v2108, %v2107
        %v2234 = vpack.c.b16 %v2110, %v2109
        %v2235 = vpack.c.b16 %v2112, %v2111
        %v2236 = vpack.c.b16 %v2114, %v2113
        %v2237 = vpack.c.b16 %v2116, %v2115
        %v2238 = vpack.c.b16 %v2118, %v2117
        %v2239 = vpack.c.b16 %v2120, %v2119
        %v2240 = vpack.c.b16 %v2122, %v2121
        %v2241 = vpack.c.b16 %v2124, %v2123
        %v2242 = vpack.c.b16 %v2126, %v2125
        %v2243 = vpack.c.b16 %v2128, %v2127
        %v2244 = vpack.c.b16 %v2130, %v2129
        %v2245 = vpack.c.b16 %v2132, %v2131
        %v2246 = vpack.c.b16 %v2134, %v2133
        %v2247 = vpack.c.b16 %v2136, %v2135
        %v2248 = vpack.c.b16 %v2138, %v2137
        %v2249 = vpack.c.b16 %v2140, %v2139
        %v2250 = vpack.c.b16 %v2142, %v2141
        %v2251 = vpack.c.b16 %v2144, %v2143
        %v2252 = vpack.c.b16 %v2146, %v2145
        %v2253 = vpack.c.b16 %v2148, %v2147
        %v2254 = vpack.c.b16 %v2150, %v2149
        %v2255 = vpack.c.b16 %v2152, %v2151
        %v2256 = vpack.c.b16 %v2154, %v2153
        %v2257 = vpack.c.b16 %v2156, %v2155
        %v2258 = vpack.c.b16 %v2158, %v2157
        %v2259 = vpack.c.b16 %v2160, %v2159
        %v2260 = vpack.c.b16 %v2162, %v2161
        %v2261 = vpack.c.b16 %v2164, %v2163
        %v2262 = vpack.c.b16 %v2166, %v2165
        %v2263 = vpack.c.b16 %v2168, %v2167
        %v2264 = vpack.c.b16 %v2170, %v2169
        %v2265 = vpack.c.b16 %v2172, %v2171
        %v2266 = vpack.c.b16 %v2174, %v2173
        %v2267 = vpack.c.b16 %v2176, %v2175
        %v2268 = vpack.c.b16 %v2178, %v2177
        %v2269 = vpack.c.b16 %v2180, %v2179
        %v2270 = vpack.c.b16 %v2182, %v2181
        %v2271 = vpack.c.b16 %v2184, %v2183
        %v2272 = vpack.c.b16 %v2186, %v2185
        %v2273 = vpack.c.b16 %v2188, %v2187
        %v2274 = vpack.c.b16 %v2190, %v2189
        %v2275 = vpack.c.b16 %v2192, %v2191
        %v2276 = vpack.c.b16 %v2194, %v2193
        %v2277 = vpack.c.b16 %v2196, %v2195
        %v2278 = vpack.c.b16 %v2198, %v2197
        %v2279 = vpack.c.b16 %v2200, %v2199
        %v2280 = vpack.c.b16 %v2202, %v2201
        %v2281 = vpack.c.b16 %v2204, %v2203
        %v2282 = vpack.c.b16 %v2206, %v2205
        %v2283 = vpack.c.b16 %v2208, %v2207
        %v2284 = vpack.c.b16 %v2210, %v2209
        %v2285 = vpack.c.b16 %v2212, %v2211
        %v2286 = vpack.c.b16 %v2214, %v2213
        %2359 = vmatprep.subr.bf16.mxu0 0
        %2360 = vmatpush1.bf16.msra.mxu0 %v2215
        %2361 = vmatprep.subr.bf16.mxu0 0
        %2362 = vmatpush1.bf16.msra.mxu0 %v2216
        %2363 = vmatprep.subr.bf16.mxu0 0
        %2364 = vmatpush1.bf16.msra.mxu0 %v2217
        %2365 = vmatprep.subr.bf16.mxu0 0
        %2366 = vmatpush1.bf16.msra.mxu0 %v2218
        %2367 = vmatprep.subr.bf16.mxu0 0
        %2368 = vmatpush1.bf16.msra.mxu0 %v2219
        %2369 = vmatprep.subr.bf16.mxu0 0
        %2370 = vmatpush1.bf16.msra.mxu0 %v2220
        %2371 = vmatprep.subr.bf16.mxu0 0
        %2372 = vmatpush1.bf16.msra.mxu0 %v2221
        %2373 = vmatprep.subr.bf16.mxu0 0
        %2374 = vmatpush1.bf16.msra.mxu0 %v2222
        %2375 = vmatprep.subr.bf16.mxu0 0
        %2376 = vmatpush1.bf16.msra.mxu0 %v2223
        %2377 = vmatprep.subr.bf16.mxu0 0
        %2378 = vmatpush1.bf16.msra.mxu0 %v2224
        %2379 = vmatprep.subr.bf16.mxu0 0
        %2380 = vmatpush1.bf16.msra.mxu0 %v2225
        %2381 = vmatprep.subr.bf16.mxu0 0
        %2382 = vmatpush1.bf16.msra.mxu0 %v2226
        %2383 = vmatprep.subr.bf16.mxu0 0
        %2384 = vmatpush1.bf16.msra.mxu0 %v2227
        %2385 = vmatprep.subr.bf16.mxu0 0
        %2386 = vmatpush1.bf16.msra.mxu0 %v2228
        %2387 = vmatprep.subr.bf16.mxu0 0
        %2388 = vmatpush1.bf16.msra.mxu0 %v2229
        %2389 = vmatprep.subr.bf16.mxu0 0
        %2390 = vmatpush1.bf16.msra.mxu0 %v2230
        %2391 = vmatprep.mubr.bf16.mxu0 %v1703
        %2392 = vmatmul.mubr.bf16.gmra.mrb[0].mxu0 %v1679
        %v2393 = vpop.f32.mrb[0].mxu0
        %v2394 = vadd.f32 %v1926, %v2393
        %v2395 = vpop.f32.mrb[0].mxu0
        %v2396 = vpop.f32.mrb[0].mxu0
        %v2397 = vadd.f32 %v1926, %v2396
        %v2398 = vpop.f32.mrb[0].mxu0
        %2399 = vmatprep.mubr.bf16.mxu0 %v1704
        %2400 = vmatmul.mubr.bf16.gmra.mrb[0].mxu0 %v1680
        %v2401 = vpop.f32.mrb[0].mxu0
        %v2402 = vadd.f32 %v1926, %v2401
        %v2403 = vpop.f32.mrb[0].mxu0
        %v2404 = vpop.f32.mrb[0].mxu0
        %v2405 = vadd.f32 %v1926, %v2404
        %v2406 = vpop.f32.mrb[0].mxu0
        %2407 = vmatprep.mubr.bf16.mxu0 %v1705
        %2408 = vmatmul.mubr.bf16.gmra.mrb[0].mxu0 %v1681
        %v2409 = vpop.f32.mrb[0].mxu0
        %v2410 = vadd.f32 %v1926, %v2409
        %v2411 = vpop.f32.mrb[0].mxu0
        %v2412 = vpop.f32.mrb[0].mxu0
        %v2413 = vadd.f32 %v1926, %v2412
        %v2414 = vpop.f32.mrb[0].mxu0
        %2415 = vmatprep.mubr.bf16.mxu0 %v1706
        %2416 = vmatmul.mubr.bf16.gmra.mrb[0].mxu0 %v1682
        %v2417 = vpop.f32.mrb[0].mxu0
        %v2418 = vadd.f32 %v1926, %v2417
        %v2419 = vpop.f32.mrb[0].mxu0
        %v2420 = vpop.f32.mrb[0].mxu0
        %v2421 = vadd.f32 %v1926, %v2420
        %v2422 = vpop.f32.mrb[0].mxu0
        %2423 = vdwg.mxu0
        %2424 = vmatprep.subr.bf16.mxu0 0
        %2425 = vmatpush1.bf16.msra.mxu0 %v2231
        %2426 = vmatprep.subr.bf16.mxu0 0
        %2427 = vmatpush1.bf16.msra.mxu0 %v2232
        %2428 = vmatprep.subr.bf16.mxu0 0
        %2429 = vmatpush1.bf16.msra.mxu0 %v2233
        %2430 = vmatprep.subr.bf16.mxu0 0
        %2431 = vmatpush1.bf16.msra.mxu0 %v2234
        %2432 = vmatprep.subr.bf16.mxu0 0
        %2433 = vmatpush1.bf16.msra.mxu0 %v2235
        %2434 = vmatprep.subr.bf16.mxu0 0
        %2435 = vmatpush1.bf16.msra.mxu0 %v2236
        %2436 = vmatprep.subr.bf16.mxu0 0
        %2437 = vmatpush1.bf16.msra.mxu0 %v2237
        %2438 = vmatprep.subr.bf16.mxu0 0
        %2439 = vmatpush1.bf16.msra.mxu0 %v2238
        %2440 = vmatprep.subr.bf16.mxu0 0
        %2441 = vmatpush1.bf16.msra.mxu0 %v2239
        %2442 = vmatprep.subr.bf16.mxu0 0
        %2443 = vmatpush1.bf16.msra.mxu0 %v2240
        %2444 = vmatprep.subr.bf16.mxu0 0
        %2445 = vmatpush1.bf16.msra.mxu0 %v2241
        %2446 = vmatprep.subr.bf16.mxu0 0
        %2447 = vmatpush1.bf16.msra.mxu0 %v2242
        %2448 = vmatprep.subr.bf16.mxu0 0
        %2449 = vmatpush1.bf16.msra.mxu0 %v2243
        %2450 = vmatprep.subr.bf16.mxu0 0
        %2451 = vmatpush1.bf16.msra.mxu0 %v2244
        %2452 = vmatprep.subr.bf16.mxu0 0
        %2453 = vmatpush1.bf16.msra.mxu0 %v2245
        %2454 = vmatprep.subr.bf16.mxu0 0
        %2455 = vmatpush1.bf16.msra.mxu0 %v2246
        %2456 = vmatprep.mubr.bf16.mxu0 %v1737
        %2457 = vmatmul.mubr.bf16.gmra.mrb[0].mxu0 %v1727
        %v2458 = vpop.f32.mrb[0].mxu0
        %v2459 = vadd.f32 %v2394, %v2458
        %v2460 = vpop.f32.mrb[0].mxu0
        %v2461 = vpop.f32.mrb[0].mxu0
        %v2462 = vadd.f32 %v2397, %v2461
        %v2463 = vpop.f32.mrb[0].mxu0
        %2464 = vmatprep.mubr.bf16.mxu0 %v1738
        %2465 = vmatmul.mubr.bf16.gmra.mrb[0].mxu0 %v1728
        %v2466 = vpop.f32.mrb[0].mxu0
        %v2467 = vadd.f32 %v2402, %v2466
        %v2468 = vpop.f32.mrb[0].mxu0
        %v2469 = vpop.f32.mrb[0].mxu0
        %v2470 = vadd.f32 %v2405, %v2469
        %v2471 = vpop.f32.mrb[0].mxu0
        %2472 = vmatprep.mubr.bf16.mxu0 %v1739
        %2473 = vmatmul.mubr.bf16.gmra.mrb[0].mxu0 %v1729
        %v2474 = vpop.f32.mrb[0].mxu0
        %v2475 = vadd.f32 %v2410, %v2474
        %v2476 = vpop.f32.mrb[0].mxu0
        %v2477 = vpop.f32.mrb[0].mxu0
        %v2478 = vadd.f32 %v2413, %v2477
        %v2479 = vpop.f32.mrb[0].mxu0
        %2480 = vmatprep.mubr.bf16.mxu0 %v1740
        %2481 = vmatmul.mubr.bf16.gmra.mrb[0].mxu0 %v1730
        %v2482 = vpop.f32.mrb[0].mxu0
        %v2483 = vadd.f32 %v2418, %v2482
        %v2484 = vpop.f32.mrb[0].mxu0
        %v2485 = vpop.f32.mrb[0].mxu0
        %v2486 = vadd.f32 %v2421, %v2485
        %v2487 = vpop.f32.mrb[0].mxu0
        %2488 = vdwg.mxu0
        %2489 = vmatprep.subr.bf16.mxu0 0
        %2490 = vmatpush1.bf16.msra.mxu0 %v2247
        %2491 = vmatprep.subr.bf16.mxu0 0
        %2492 = vmatpush1.bf16.msra.mxu0 %v2248
        %2493 = vmatprep.subr.bf16.mxu0 0
        %2494 = vmatpush1.bf16.msra.mxu0 %v2249
        %2495 = vmatprep.subr.bf16.mxu0 0
        %2496 = vmatpush1.bf16.msra.mxu0 %v2250
        %2497 = vmatprep.subr.bf16.mxu0 0
        %2498 = vmatpush1.bf16.msra.mxu0 %v2251
        %2499 = vmatprep.subr.bf16.mxu0 0
        %2500 = vmatpush1.bf16.msra.mxu0 %v2252
        %2501 = vmatprep.subr.bf16.mxu0 0
        %2502 = vmatpush1.bf16.msra.mxu0 %v2253
        %2503 = vmatprep.subr.bf16.mxu0 0
        %2504 = vmatpush1.bf16.msra.mxu0 %v2254
        %2505 = vmatprep.subr.bf16.mxu0 0
        %2506 = vmatpush1.bf16.msra.mxu0 %v2255
        %2507 = vmatprep.subr.bf16.mxu0 0
        %2508 = vmatpush1.bf16.msra.mxu0 %v2256
        %2509 = vmatprep.subr.bf16.mxu0 0
        %2510 = vmatpush1.bf16.msra.mxu0 %v2257
        %2511 = vmatprep.subr.bf16.mxu0 0
        %2512 = vmatpush1.bf16.msra.mxu0 %v2258
        %2513 = vmatprep.subr.bf16.mxu0 0
        %2514 = vmatpush1.bf16.msra.mxu0 %v2259
        %2515 = vmatprep.subr.bf16.mxu0 0
        %2516 = vmatpush1.bf16.msra.mxu0 %v2260
        %2517 = vmatprep.subr.bf16.mxu0 0
        %2518 = vmatpush1.bf16.msra.mxu0 %v2261
        %2519 = vmatprep.subr.bf16.mxu0 0
        %2520 = vmatpush1.bf16.msra.mxu0 %v2262
        %2521 = vmatprep.mubr.bf16.mxu0 %v1757
        %2522 = vmatmul.mubr.bf16.gmra.mrb[0].mxu0 %v1747
        %v2523 = vpop.f32.mrb[0].mxu0
        %v2524 = vadd.f32 %v2459, %v2523
        %v2525 = vpop.f32.mrb[0].mxu0
        %v2526 = vpop.f32.mrb[0].mxu0
        %v2527 = vadd.f32 %v2462, %v2526
        %v2528 = vpop.f32.mrb[0].mxu0
        %2529 = vmatprep.mubr.bf16.mxu0 %v1758
        %2530 = vmatmul.mubr.bf16.gmra.mrb[0].mxu0 %v1748
        %v2531 = vpop.f32.mrb[0].mxu0
        %v2532 = vadd.f32 %v2467, %v2531
        %v2533 = vpop.f32.mrb[0].mxu0
        %v2534 = vpop.f32.mrb[0].mxu0
        %v2535 = vadd.f32 %v2470, %v2534
        %v2536 = vpop.f32.mrb[0].mxu0
        %2537 = vmatprep.mubr.bf16.mxu0 %v1759
        %2538 = vmatmul.mubr.bf16.gmra.mrb[0].mxu0 %v1749
        %v2539 = vpop.f32.mrb[0].mxu0
        %v2540 = vadd.f32 %v2475, %v2539
        %v2541 = vpop.f32.mrb[0].mxu0
        %v2542 = vpop.f32.mrb[0].mxu0
        %v2543 = vadd.f32 %v2478, %v2542
        %v2544 = vpop.f32.mrb[0].mxu0
        %2545 = vmatprep.mubr.bf16.mxu0 %v1760
        %2546 = vmatmul.mubr.bf16.gmra.mrb[0].mxu0 %v1750
        %v2547 = vpop.f32.mrb[0].mxu0
        %v2548 = vadd.f32 %v2483, %v2547
        %v2549 = vpop.f32.mrb[0].mxu0
        %v2550 = vpop.f32.mrb[0].mxu0
        %v2551 = vadd.f32 %v2486, %v2550
        %v2552 = vpop.f32.mrb[0].mxu0
        %2553 = vdwg.mxu0
        %2554 = vmatprep.subr.bf16.mxu0 0
        %2555 = vmatpush1.bf16.msra.mxu0 %v2263
        %2556 = vmatprep.subr.bf16.mxu0 0
        %2557 = vmatpush1.bf16.msra.mxu0 %v2264
        %2558 = vmatprep.subr.bf16.mxu0 0
        %2559 = vmatpush1.bf16.msra.mxu0 %v2265
        %2560 = vmatprep.subr.bf16.mxu0 0
        %2561 = vmatpush1.bf16.msra.mxu0 %v2266
        %2562 = vmatprep.subr.bf16.mxu0 0
        %2563 = vmatpush1.bf16.msra.mxu0 %v2267
        %2564 = vmatprep.subr.bf16.mxu0 0
        %2565 = vmatpush1.bf16.msra.mxu0 %v2268
        %2566 = vmatprep.subr.bf16.mxu0 0
        %2567 = vmatpush1.bf16.msra.mxu0 %v2269
        %2568 = vmatprep.subr.bf16.mxu0 0
        %2569 = vmatpush1.bf16.msra.mxu0 %v2270
        %2570 = vmatprep.subr.bf16.mxu0 0
        %2571 = vmatpush1.bf16.msra.mxu0 %v2271
        %2572 = vmatprep.subr.bf16.mxu0 0
        %2573 = vmatpush1.bf16.msra.mxu0 %v2272
        %2574 = vmatprep.subr.bf16.mxu0 0
        %2575 = vmatpush1.bf16.msra.mxu0 %v2273
        %2576 = vmatprep.subr.bf16.mxu0 0
        %2577 = vmatpush1.bf16.msra.mxu0 %v2274
        %2578 = vmatprep.subr.bf16.mxu0 0
        %2579 = vmatpush1.bf16.msra.mxu0 %v2275
        %2580 = vmatprep.subr.bf16.mxu0 0
        %2581 = vmatpush1.bf16.msra.mxu0 %v2276
        %2582 = vmatprep.subr.bf16.mxu0 0
        %2583 = vmatpush1.bf16.msra.mxu0 %v2277
        %2584 = vmatprep.subr.bf16.mxu0 0
        %2585 = vmatpush1.bf16.msra.mxu0 %v2278
        %2586 = vmatprep.mubr.bf16.mxu0 %v1704
        %2587 = vmatmul.mubr.bf16.gmra.mrb[0].mxu0 %v1680
        %v2588 = vpop.f32.mrb[0].mxu0
        %v2589 = vadd.f32 %v2524, %v2588
        %v2590 = vpop.f32.mrb[0].mxu0
        %v2591 = vpop.f32.mrb[0].mxu0
        %v2592 = vadd.f32 %v2527, %v2591
        %v2593 = vpop.f32.mrb[0].mxu0
        %2594 = vmatprep.mubr.bf16.mxu0 %v1705
        %2595 = vmatmul.mubr.bf16.gmra.mrb[0].mxu0 %v1681
        %v2596 = vpop.f32.mrb[0].mxu0
        %v2597 = vadd.f32 %v2532, %v2596
        %v2598 = vpop.f32.mrb[0].mxu0
        %v2599 = vpop.f32.mrb[0].mxu0
        %v2600 = vadd.f32 %v2535, %v2599
        %v2601 = vpop.f32.mrb[0].mxu0
        %2602 = vmatprep.mubr.bf16.mxu0 %v1706
        %2603 = vmatmul.mubr.bf16.gmra.mrb[0].mxu0 %v1682
        %v2604 = vpop.f32.mrb[0].mxu0
        %v2605 = vadd.f32 %v2540, %v2604
        %v2606 = vpop.f32.mrb[0].mxu0
        %v2607 = vpop.f32.mrb[0].mxu0
        %v2608 = vadd.f32 %v2543, %v2607
        %v2609 = vpop.f32.mrb[0].mxu0
        %2610 = vmatprep.mubr.bf16.mxu0 %v1771
        %2611 = vmatmul.mubr.bf16.gmra.mrb[0].mxu0 %v1767
        %v2612 = vpop.f32.mrb[0].mxu0
        %v2613 = vadd.f32 %v2548, %v2612
        %v2614 = vpop.f32.mrb[0].mxu0
        %v2615 = vpop.f32.mrb[0].mxu0
        %v2616 = vadd.f32 %v2551, %v2615
        %v2617 = vpop.f32.mrb[0].mxu0
        %2618 = vdwg.mxu0
        %2619 = vmatprep.subr.bf16.mxu0 0
        %2620 = vmatpush1.bf16.msra.mxu0 %v2279
        %2621 = vmatprep.subr.bf16.mxu0 0
        %2622 = vmatpush1.bf16.msra.mxu0 %v2280
        %2623 = vmatprep.subr.bf16.mxu0 0
        %2624 = vmatpush1.bf16.msra.mxu0 %v2281
        %2625 = vmatprep.subr.bf16.mxu0 0
        %2626 = vmatpush1.bf16.msra.mxu0 %v2282
        %2627 = vmatprep.subr.bf16.mxu0 0
        %2628 = vmatpush1.bf16.msra.mxu0 %v2283
        %2629 = vmatprep.subr.bf16.mxu0 0
        %2630 = vmatpush1.bf16.msra.mxu0 %v2284
        %2631 = vmatprep.subr.bf16.mxu0 0
        %2632 = vmatpush1.bf16.msra.mxu0 %v2285
        %2633 = vmatprep.subr.bf16.mxu0 0
        %2634 = vmatpush1.bf16.msra.mxu0 %v2286
        %2635 = vmatprep.subr.bf16.mxu0 0
        %2636 = vmatpush1.bf16.msra.mxu0 0
        %2637 = vmatprep.subr.bf16.mxu0 0
        %2638 = vmatpush1.bf16.msra.mxu0 0
        %2639 = vmatprep.subr.bf16.mxu0 0
        %2640 = vmatpush1.bf16.msra.mxu0 0
        %2641 = vmatprep.subr.bf16.mxu0 0
        %2642 = vmatpush1.bf16.msra.mxu0 0
        %2643 = vmatprep.subr.bf16.mxu0 0
        %2644 = vmatpush1.bf16.msra.mxu0 0
        %2645 = vmatprep.subr.bf16.mxu0 0
        %2646 = vmatpush1.bf16.msra.mxu0 0
        %2647 = vmatprep.subr.bf16.mxu0 0
        %2648 = vmatpush1.bf16.msra.mxu0 0
        %2649 = vmatprep.subr.bf16.mxu0 0
        %2650 = vmatpush1.bf16.msra.mxu0 0
        %2651 = vmatprep.mubr.bf16.mxu0 0
        %2652 = vmatmul.mubr.bf16.gmra.mrb[0].mxu0 %v1728
        %v2653 = vpop.f32.mrb[0].mxu0
        %v2654 = vadd.f32 %v2589, %v2653
        %v2655 = vpop.f32.mrb[0].mxu0
        %v2656 = vpop.f32.mrb[0].mxu0
        %v2657 = vadd.f32 %v2592, %v2656
        %v2658 = vpop.f32.mrb[0].mxu0
        %2659 = vmatprep.mubr.bf16.mxu0 0
        %2660 = vmatmul.mubr.bf16.gmra.mrb[0].mxu0 %v1729
        %v2661 = vpop.f32.mrb[0].mxu0
        %v2662 = vadd.f32 %v2597, %v2661
        %v2663 = vpop.f32.mrb[0].mxu0
        %v2664 = vpop.f32.mrb[0].mxu0
        %v2665 = vadd.f32 %v2600, %v2664
        %v2666 = vpop.f32.mrb[0].mxu0
        %2667 = vmatprep.mubr.bf16.mxu0 0
        %2668 = vmatmul.mubr.bf16.gmra.mrb[0].mxu0 %v1730
        %v2669 = vpop.f32.mrb[0].mxu0
        %v2670 = vadd.f32 %v2605, %v2669
        %v2671 = vpop.f32.mrb[0].mxu0
        %v2672 = vpop.f32.mrb[0].mxu0
        %v2673 = vadd.f32 %v2608, %v2672
        %v2674 = vpop.f32.mrb[0].mxu0
        %2675 = vmatprep.mubr.bf16.mxu0 0
        %2676 = vmatmul.mubr.bf16.gmra.mrb[0].mxu0 %v1775
        %v2677 = vpop.f32.mrb[0].mxu0
        %v2678 = vadd.f32 %v2613, %v2677
        %v2679 = vpop.f32.mrb[0].mxu0
        %v2680 = vpop.f32.mrb[0].mxu0
        %v2681 = vadd.f32 %v2616, %v2680
        %v2682 = vpop.f32.mrb[0].mxu0
        %2683 = vdwg.mxu0
        %v2684 = vmax.f32 %v2654, 0.0
        %v2685 = vmax.f32 %v2657, 0.0
        %v2686 = vmax.f32 %v2662, 0.0
        %v2687 = vmax.f32 %v2665, 0.0
        %v2688 = vmax.f32 %v2670, 0.0
        %v2689 = vmax.f32 %v2673, 0.0
        %v2690 = vmax.f32 %v2678, 0.0
        %v2691 = vmax.f32 %v2681, 0.0
        %2692 = vst [vmem:[%s1544] sm:$0xff] %v2684
        %2693 = vst [vmem:[%s1544 + $0x8] sm:$0xff] %v2685
        %2694 = vst [vmem:[%s1544 + $0x10] sm:$0xff] %v2686
        %2695 = vst [vmem:[%s1544 + $0x18] sm:$0xff] %v2687
        %2696 = vst [vmem:[%s1544 + $0x20] sm:$0xff] %v2688
        %2697 = vst [vmem:[%s1544 + $0x28] sm:$0xff] %v2689
        %2698 = vst [vmem:[%s1544 + $0x30] sm:$0xff] %v2690
        %2699 = vst [vmem:[%s1544 + $0x38] sm:$0xff] %v2691
        %v2700 = vld [vmem:[#allocation2] sm:$0xff]
        %v2701 = vld [vmem:[#allocation2 + $0x8] sm:$0xff]
        %v2702 = vld [vmem:[#allocation2 + $0x10] sm:$0xff]
        %v2703 = vld [vmem:[#allocation2 + $0x18] sm:$0xff]
        %v2704 = vld [vmem:[#allocation2 + $0x20] sm:$0xff]
        %v2705 = vld [vmem:[#allocation2 + $0x28] sm:$0xff]
        %v2706 = vld [vmem:[#allocation2 + $0x30] sm:$0xff]
        %v2707 = vld [vmem:[#allocation2 + $0x38] sm:$0xff]
        %v2708 = vld [vmem:[#allocation2 + $0x40] sm:$0xff]
        %v2709 = vld [vmem:[#allocation2 + $0x48] sm:$0xff]
        %v2720 = vrot.slane %v2700, 7
        %v2721 = vrot.slane %v2701, 7
        %v2722 = vrot.slane %v2702, 7
        %v2723 = vrot.slane %v2703, 7
        %v2724 = vrot.slane %v2704, 7
        %v2725 = vrot.slane %v2705, 7
        %v2726 = vrot.slane %v2706, 7
        %v2727 = vrot.slane %v2707, 7
        %v2728 = vrot.slane %v2708, 7
        %v2729 = vrot.slane %v2709, 7
        %v2740 = vsel %vm444, 0.0, %v2720
        %v2741 = vsel %vm444, 0.0, %v2721
        %v2742 = vsel %vm444, 0.0, %v2722
        %v2743 = vsel %vm444, 0.0, %v2723
        %v2744 = vsel %vm444, 0.0, %v2724
        %v2745 = vsel %vm444, 0.0, %v2725
        %v2746 = vsel %vm444, 0.0, %v2726
        %v2747 = vsel %vm444, 0.0, %v2727
        %v2748 = vsel %vm444, 0.0, %v2728
        %v2749 = vsel %vm444, 0.0, %v2729
        %v2750 = vpack.c.bf16 %v2740, %v2740
        %v2751 = vpack.c.bf16 %v2741, %v2741
        %v2752 = vpack.c.bf16 %v2742, %v2742
        %v2753 = vpack.c.bf16 %v2743, %v2743
        %v2754 = vpack.c.bf16 %v2744, %v2744
        %v2755 = vpack.c.bf16 %v2745, %v2745
        %v2756 = vpack.c.bf16 %v2746, %v2746
        %v2757 = vpack.c.bf16 %v2747, %v2747
        %v2758 = vpack.c.bf16 %v2748, %v2748
        %v2759 = vpack.c.bf16 %v2749, %v2749
        %v2760 = vpack.c.bf16 %v2700, %v2700
        %v2761 = vpack.c.bf16 %v2701, %v2701
        %v2762 = vpack.c.bf16 %v2702, %v2702
        %v2763 = vpack.c.bf16 %v2703, %v2703
        %v2764 = vpack.c.bf16 %v2704, %v2704
        %v2765 = vpack.c.bf16 %v2705, %v2705
        %v2766 = vpack.c.bf16 %v2706, %v2706
        %v2767 = vpack.c.bf16 %v2707, %v2707
        %v2768 = vpack.c.bf16 %v2708, %v2708
        %v2769 = vpack.c.bf16 %v2709, %v2709
        %v2770 = vrot.slane %v2700, 1
        %v2771 = vrot.slane %v2701, 1
        %v2772 = vrot.slane %v2702, 1
        %v2773 = vrot.slane %v2703, 1
        %v2774 = vrot.slane %v2704, 1
        %v2775 = vrot.slane %v2705, 1
        %v2776 = vrot.slane %v2706, 1
        %v2777 = vrot.slane %v2707, 1
        %v2778 = vrot.slane %v2708, 1
        %v2779 = vrot.slane %v2709, 1
        %v2790 = vsel %vm495, %v2770, 0.0
        %v2791 = vsel %vm495, %v2771, 0.0
        %v2792 = vsel %vm495, %v2772, 0.0
        %v2793 = vsel %vm495, %v2773, 0.0
        %v2794 = vsel %vm495, %v2774, 0.0
        %v2795 = vsel %vm495, %v2775, 0.0
        %v2796 = vsel %vm495, %v2776, 0.0
        %v2797 = vsel %vm495, %v2777, 0.0
        %v2798 = vsel %vm495, %v2778, 0.0
        %v2799 = vsel %vm495, %v2779, 0.0
        %v2800 = vpack.c.bf16 %v2790, %v2790
        %v2801 = vpack.c.bf16 %v2791, %v2791
        %v2802 = vpack.c.bf16 %v2792, %v2792
        %v2803 = vpack.c.bf16 %v2793, %v2793
        %v2804 = vpack.c.bf16 %v2794, %v2794
        %v2805 = vpack.c.bf16 %v2795, %v2795
        %v2806 = vpack.c.bf16 %v2796, %v2796
        %v2807 = vpack.c.bf16 %v2797, %v2797
        %v2808 = vpack.c.bf16 %v2798, %v2798
        %v2809 = vpack.c.bf16 %v2799, %v2799
        %v2818 = vunpack.c.l.b16 %v2750
        %v2819 = vunpack.c.l.b16 %v2751
        %v2820 = vunpack.c.l.b16 %v2752
        %v2821 = vunpack.c.l.b16 %v2753
        %v2822 = vunpack.c.l.b16 %v2754
        %v2823 = vunpack.c.l.b16 %v2755
        %v2824 = vunpack.c.l.b16 %v2756
        %v2825 = vunpack.c.l.b16 %v2757
        %v2826 = vpack.c.b16 %v2819, %v2818
        %v2827 = vpack.c.b16 %v2821, %v2820
        %v2828 = vpack.c.b16 %v2823, %v2822
        %v2829 = vpack.c.b16 %v2825, %v2824
        %v2842 = vunpack.c.l.b16 %v2760
        %v2843 = vunpack.c.l.b16 %v2761
        %v2844 = vunpack.c.l.b16 %v2762
        %v2845 = vunpack.c.l.b16 %v2763
        %v2846 = vunpack.c.l.b16 %v2764
        %v2847 = vunpack.c.l.b16 %v2765
        %v2848 = vunpack.c.l.b16 %v2766
        %v2849 = vunpack.c.l.b16 %v2767
        %v2850 = vpack.c.b16 %v2843, %v2842
        %v2851 = vpack.c.b16 %v2845, %v2844
        %v2852 = vpack.c.b16 %v2847, %v2846
        %v2853 = vpack.c.b16 %v2849, %v2848
        %v2866 = vunpack.c.l.b16 %v2800
        %v2867 = vunpack.c.l.b16 %v2801
        %v2868 = vunpack.c.l.b16 %v2802
        %v2869 = vunpack.c.l.b16 %v2803
        %v2870 = vunpack.c.l.b16 %v2804
        %v2871 = vunpack.c.l.b16 %v2805
        %v2872 = vunpack.c.l.b16 %v2806
        %v2873 = vunpack.c.l.b16 %v2807
        %v2874 = vpack.c.b16 %v2867, %v2866
        %v2875 = vpack.c.b16 %v2869, %v2868
        %v2876 = vpack.c.b16 %v2871, %v2870
        %v2877 = vpack.c.b16 %v2873, %v2872
        %v2883 = vunpack.c.l.b16 %v2758
        %v2884 = vpack.c.b16 %v2820, %v2819
        %v2885 = vpack.c.b16 %v2822, %v2821
        %v2886 = vpack.c.b16 %v2824, %v2823
        %v2887 = vpack.c.b16 %v2883, %v2825
        %v2893 = vunpack.c.l.b16 %v2768
        %v2894 = vpack.c.b16 %v2844, %v2843
        %v2895 = vpack.c.b16 %v2846, %v2845
        %v2896 = vpack.c.b16 %v2848, %v2847
        %v2897 = vpack.c.b16 %v2893, %v2849
        %v2903 = vunpack.c.l.b16 %v2808
        %v2904 = vpack.c.b16 %v2868, %v2867
        %v2905 = vpack.c.b16 %v2870, %v2869
        %v2906 = vpack.c.b16 %v2872, %v2871
        %v2907 = vpack.c.b16 %v2903, %v2873
        %v2913 = vunpack.c.l.b16 %v2759
        %v2914 = vpack.c.b16 %v2913, %v2883
        %v2917 = vunpack.c.l.b16 %v2769
        %v2918 = vpack.c.b16 %v2917, %v2893
        %v2921 = vunpack.c.l.b16 %v2809
        %v2922 = vpack.c.b16 %v2921, %v2903
        %s2924 = scalar_lea.vmem %s328, 1152 [#allocation5]
        %v2925 = vld [vmem:[%s2924] sm:$0xf]
        %v2926 = vld [vmem:[%s2924 + $0x4] sm:$0xf]
        %v2927 = vld [vmem:[%s2924 + $0x8] sm:$0xf]
        %v2928 = vld [vmem:[%s2924 + $0xc] sm:$0xf]
        %v2929 = vld [vmem:[%s2924 + $0x10] sm:$0xf]
        %v2930 = vld [vmem:[%s2924 + $0x14] sm:$0xf]
        %v2931 = vld [vmem:[%s2924 + $0x18] sm:$0xf]
        %v2932 = vld [vmem:[%s2924 + $0x1c] sm:$0xf]
        %v2933 = vld [vmem:[%s2924 + $0x20] sm:$0xf]
        %v2934 = vld [vmem:[%s2924 + $0x24] sm:$0xf]
        %v2935 = vld [vmem:[%s2924 + $0x28] sm:$0xf]
        %v2936 = vld [vmem:[%s2924 + $0x2c] sm:$0xf]
        %v2937 = vld [vmem:[%s2924 + $0x30] sm:$0xf]
        %v2938 = vld [vmem:[%s2924 + $0x34] sm:$0xf]
        %v2939 = vld [vmem:[%s2924 + $0x38] sm:$0xf]
        %v2940 = vld [vmem:[%s2924 + $0x3c] sm:$0xf]
        %v2941 = vld [vmem:[%s2924 + $0x40] sm:$0xf]
        %v2942 = vld [vmem:[%s2924 + $0x44] sm:$0xf]
        %v2943 = vld [vmem:[%s2924 + $0x48] sm:$0xf]
        %v2944 = vld [vmem:[%s2924 + $0x4c] sm:$0xf]
        %v2945 = vld [vmem:[%s2924 + $0x50] sm:$0xf]
        %v2946 = vld [vmem:[%s2924 + $0x54] sm:$0xf]
        %v2947 = vld [vmem:[%s2924 + $0x58] sm:$0xf]
        %v2948 = vld [vmem:[%s2924 + $0x5c] sm:$0xf]
        %v2949 = vld [vmem:[%s2924 + $0x60] sm:$0xf]
        %v2950 = vld [vmem:[%s2924 + $0x64] sm:$0xf]
        %v2951 = vld [vmem:[%s2924 + $0x68] sm:$0xf]
        %v2952 = vld [vmem:[%s2924 + $0x6c] sm:$0xf]
        %v2953 = vld [vmem:[%s2924 + $0x70] sm:$0xf]
        %v2954 = vld [vmem:[%s2924 + $0x74] sm:$0xf]
        %v2955 = vld [vmem:[%s2924 + $0x78] sm:$0xf]
        %v2956 = vld [vmem:[%s2924 + $0x7c] sm:$0xf]
        %v2957 = vld [vmem:[%s2924 + $0x80] sm:$0xf]
        %v2958 = vld [vmem:[%s2924 + $0x84] sm:$0xf]
        %v2959 = vld [vmem:[%s2924 + $0x88] sm:$0xf]
        %v2960 = vld [vmem:[%s2924 + $0x8c] sm:$0xf]
        %v2961 = vld [vmem:[%s2924 + $0x90] sm:$0xf]
        %v2962 = vld [vmem:[%s2924 + $0x94] sm:$0xf]
        %v2963 = vld [vmem:[%s2924 + $0x98] sm:$0xf]
        %v2964 = vld [vmem:[%s2924 + $0x9c] sm:$0xf]
        %v2965 = vld [vmem:[%s2924 + $0xa0] sm:$0xf]
        %v2966 = vld [vmem:[%s2924 + $0xa4] sm:$0xf]
        %v2967 = vld [vmem:[%s2924 + $0xa8] sm:$0xf]
        %v2968 = vld [vmem:[%s2924 + $0xac] sm:$0xf]
        %v2969 = vld [vmem:[%s2924 + $0xb0] sm:$0xf]
        %v2970 = vld [vmem:[%s2924 + $0xb4] sm:$0xf]
        %v2971 = vld [vmem:[%s2924 + $0xb8] sm:$0xf]
        %v2972 = vld [vmem:[%s2924 + $0xbc] sm:$0xf]
        %v2973 = vld [vmem:[%s2924 + $0xc0] sm:$0xf]
        %v2974 = vld [vmem:[%s2924 + $0xc4] sm:$0xf]
        %v2975 = vld [vmem:[%s2924 + $0xc8] sm:$0xf]
        %v2976 = vld [vmem:[%s2924 + $0xcc] sm:$0xf]
        %v2977 = vld [vmem:[%s2924 + $0xd0] sm:$0xf]
        %v2978 = vld [vmem:[%s2924 + $0xd4] sm:$0xf]
        %v2979 = vld [vmem:[%s2924 + $0xd8] sm:$0xf]
        %v2980 = vld [vmem:[%s2924 + $0xdc] sm:$0xf]
        %v2981 = vld [vmem:[%s2924 + $0xe0] sm:$0xf]
        %v2982 = vld [vmem:[%s2924 + $0xe4] sm:$0xf]
        %v2983 = vld [vmem:[%s2924 + $0xe8] sm:$0xf]
        %v2984 = vld [vmem:[%s2924 + $0xec] sm:$0xf]
        %v2985 = vld [vmem:[%s2924 + $0xf0] sm:$0xf]
        %v2986 = vld [vmem:[%s2924 + $0xf4] sm:$0xf]
        %v2987 = vld [vmem:[%s2924 + $0xf8] sm:$0xf]
        %v2988 = vld [vmem:[%s2924 + $0xfc] sm:$0xf]
        %v2989 = vld [vmem:[%s2924 + $0x100] sm:$0xf]
        %v2990 = vld [vmem:[%s2924 + $0x104] sm:$0xf]
        %v2991 = vld [vmem:[%s2924 + $0x108] sm:$0xf]
        %v2992 = vld [vmem:[%s2924 + $0x10c] sm:$0xf]
        %v2993 = vld [vmem:[%s2924 + $0x110] sm:$0xf]
        %v2994 = vld [vmem:[%s2924 + $0x114] sm:$0xf]
        %v2995 = vld [vmem:[%s2924 + $0x118] sm:$0xf]
        %v2996 = vld [vmem:[%s2924 + $0x11c] sm:$0xf]
        %v2997 = vld [vmem:[%s2924 + $0x120] sm:$0xf]
        %v2998 = vld [vmem:[%s2924 + $0x124] sm:$0xf]
        %v2999 = vld [vmem:[%s2924 + $0x128] sm:$0xf]
        %v3000 = vld [vmem:[%s2924 + $0x12c] sm:$0xf]
        %v3001 = vld [vmem:[%s2924 + $0x130] sm:$0xf]
        %v3002 = vld [vmem:[%s2924 + $0x134] sm:$0xf]
        %v3003 = vld [vmem:[%s2924 + $0x138] sm:$0xf]
        %v3004 = vld [vmem:[%s2924 + $0x13c] sm:$0xf]
        %v3005 = vld [vmem:[%s2924 + $0x140] sm:$0xf]
        %v3006 = vld [vmem:[%s2924 + $0x144] sm:$0xf]
        %v3007 = vld [vmem:[%s2924 + $0x148] sm:$0xf]
        %v3008 = vld [vmem:[%s2924 + $0x14c] sm:$0xf]
        %v3009 = vld [vmem:[%s2924 + $0x150] sm:$0xf]
        %v3010 = vld [vmem:[%s2924 + $0x154] sm:$0xf]
        %v3011 = vld [vmem:[%s2924 + $0x158] sm:$0xf]
        %v3012 = vld [vmem:[%s2924 + $0x15c] sm:$0xf]
        %v3013 = vld [vmem:[%s2924 + $0x160] sm:$0xf]
        %v3014 = vld [vmem:[%s2924 + $0x164] sm:$0xf]
        %v3015 = vld [vmem:[%s2924 + $0x168] sm:$0xf]
        %v3016 = vld [vmem:[%s2924 + $0x16c] sm:$0xf]
        %v3017 = vld [vmem:[%s2924 + $0x170] sm:$0xf]
        %v3018 = vld [vmem:[%s2924 + $0x174] sm:$0xf]
        %v3019 = vld [vmem:[%s2924 + $0x178] sm:$0xf]
        %v3020 = vld [vmem:[%s2924 + $0x17c] sm:$0xf]
        %v3021 = vld [vmem:[%s2924 + $0x180] sm:$0xf]
        %v3022 = vld [vmem:[%s2924 + $0x184] sm:$0xf]
        %v3023 = vld [vmem:[%s2924 + $0x188] sm:$0xf]
        %v3024 = vld [vmem:[%s2924 + $0x18c] sm:$0xf]
        %v3025 = vld [vmem:[%s2924 + $0x190] sm:$0xf]
        %v3026 = vld [vmem:[%s2924 + $0x194] sm:$0xf]
        %v3027 = vld [vmem:[%s2924 + $0x198] sm:$0xf]
        %v3028 = vld [vmem:[%s2924 + $0x19c] sm:$0xf]
        %v3029 = vld [vmem:[%s2924 + $0x1a0] sm:$0xf]
        %v3030 = vld [vmem:[%s2924 + $0x1a4] sm:$0xf]
        %v3031 = vld [vmem:[%s2924 + $0x1a8] sm:$0xf]
        %v3032 = vld [vmem:[%s2924 + $0x1ac] sm:$0xf]
        %v3033 = vld [vmem:[%s2924 + $0x1b0] sm:$0xf]
        %v3034 = vld [vmem:[%s2924 + $0x1b4] sm:$0xf]
        %v3035 = vld [vmem:[%s2924 + $0x1b8] sm:$0xf]
        %v3036 = vld [vmem:[%s2924 + $0x1bc] sm:$0xf]
        %v3037 = vld [vmem:[%s2924 + $0x1c0] sm:$0xf]
        %v3038 = vld [vmem:[%s2924 + $0x1c4] sm:$0xf]
        %v3039 = vld [vmem:[%s2924 + $0x1c8] sm:$0xf]
        %v3040 = vld [vmem:[%s2924 + $0x1cc] sm:$0xf]
        %v3041 = vld [vmem:[%s2924 + $0x1d0] sm:$0xf]
        %v3042 = vld [vmem:[%s2924 + $0x1d4] sm:$0xf]
        %v3043 = vld [vmem:[%s2924 + $0x1d8] sm:$0xf]
        %v3044 = vld [vmem:[%s2924 + $0x1dc] sm:$0xf]
        %v3045 = vld [vmem:[%s2924 + $0x1e0] sm:$0xf]
        %v3046 = vld [vmem:[%s2924 + $0x1e4] sm:$0xf]
        %v3047 = vld [vmem:[%s2924 + $0x1e8] sm:$0xf]
        %v3048 = vld [vmem:[%s2924 + $0x1ec] sm:$0xf]
        %v3049 = vld [vmem:[%s2924 + $0x1f0] sm:$0xf]
        %v3050 = vld [vmem:[%s2924 + $0x1f4] sm:$0xf]
        %v3051 = vld [vmem:[%s2924 + $0x1f8] sm:$0xf]
        %v3052 = vld [vmem:[%s2924 + $0x1fc] sm:$0xf]
        %v3053 = vld [vmem:[%s2924 + $0x200] sm:$0xf]
        %v3054 = vld [vmem:[%s2924 + $0x204] sm:$0xf]
        %v3055 = vld [vmem:[%s2924 + $0x208] sm:$0xf]
        %v3056 = vld [vmem:[%s2924 + $0x20c] sm:$0xf]
        %v3057 = vld [vmem:[%s2924 + $0x210] sm:$0xf]
        %v3058 = vld [vmem:[%s2924 + $0x214] sm:$0xf]
        %v3059 = vld [vmem:[%s2924 + $0x218] sm:$0xf]
        %v3060 = vld [vmem:[%s2924 + $0x21c] sm:$0xf]
        %v3061 = vld [vmem:[%s2924 + $0x220] sm:$0xf]
        %v3062 = vld [vmem:[%s2924 + $0x224] sm:$0xf]
        %v3063 = vld [vmem:[%s2924 + $0x228] sm:$0xf]
        %v3064 = vld [vmem:[%s2924 + $0x22c] sm:$0xf]
        %v3065 = vld [vmem:[%s2924 + $0x230] sm:$0xf]
        %v3066 = vld [vmem:[%s2924 + $0x234] sm:$0xf]
        %v3067 = vld [vmem:[%s2924 + $0x238] sm:$0xf]
        %v3068 = vld [vmem:[%s2924 + $0x23c] sm:$0xf]
        %v3069 = vld [vmem:[%s337 + $0x2] sm:$0x1]
        %v3070 = vlaneseq
        %v3071 = vshrl.u32 %v3070, 7
        %v3072 = vsub.s32 0, %v3071
        %v3073 = vrot.slane %v3069, %v3072
        %v3218 = vunpack.c.l.b16 %v2925
        %v3219 = vunpack.c.l.b16 %v2926
        %v3220 = vunpack.c.l.b16 %v2927
        %v3221 = vunpack.c.l.b16 %v2928
        %v3222 = vunpack.c.l.b16 %v2929
        %v3223 = vunpack.c.l.b16 %v2930
        %v3224 = vunpack.c.l.b16 %v2931
        %v3225 = vunpack.c.l.b16 %v2932
        %v3226 = vunpack.c.l.b16 %v2933
        %v3227 = vunpack.c.l.b16 %v2934
        %v3228 = vunpack.c.l.b16 %v2935
        %v3229 = vunpack.c.l.b16 %v2936
        %v3230 = vunpack.c.l.b16 %v2937
        %v3231 = vunpack.c.l.b16 %v2938
        %v3232 = vunpack.c.l.b16 %v2939
        %v3233 = vunpack.c.l.b16 %v2940
        %v3234 = vunpack.c.l.b16 %v2941
        %v3235 = vunpack.c.l.b16 %v2942
        %v3236 = vunpack.c.l.b16 %v2943
        %v3237 = vunpack.c.l.b16 %v2944
        %v3238 = vunpack.c.l.b16 %v2945
        %v3239 = vunpack.c.l.b16 %v2946
        %v3240 = vunpack.c.l.b16 %v2947
        %v3241 = vunpack.c.l.b16 %v2948
        %v3242 = vunpack.c.l.b16 %v2949
        %v3243 = vunpack.c.l.b16 %v2950
        %v3244 = vunpack.c.l.b16 %v2951
        %v3245 = vunpack.c.l.b16 %v2952
        %v3246 = vunpack.c.l.b16 %v2953
        %v3247 = vunpack.c.l.b16 %v2954
        %v3248 = vunpack.c.l.b16 %v2955
        %v3249 = vunpack.c.l.b16 %v2956
        %v3250 = vunpack.c.l.b16 %v2957
        %v3251 = vunpack.c.l.b16 %v2958
        %v3252 = vunpack.c.l.b16 %v2959
        %v3253 = vunpack.c.l.b16 %v2960
        %v3254 = vunpack.c.l.b16 %v2961
        %v3255 = vunpack.c.l.b16 %v2962
        %v3256 = vunpack.c.l.b16 %v2963
        %v3257 = vunpack.c.l.b16 %v2964
        %v3258 = vunpack.c.l.b16 %v2965
        %v3259 = vunpack.c.l.b16 %v2966
        %v3260 = vunpack.c.l.b16 %v2967
        %v3261 = vunpack.c.l.b16 %v2968
        %v3262 = vunpack.c.l.b16 %v2969
        %v3263 = vunpack.c.l.b16 %v2970
        %v3264 = vunpack.c.l.b16 %v2971
        %v3265 = vunpack.c.l.b16 %v2972
        %v3266 = vunpack.c.l.b16 %v2973
        %v3267 = vunpack.c.l.b16 %v2974
        %v3268 = vunpack.c.l.b16 %v2975
        %v3269 = vunpack.c.l.b16 %v2976
        %v3270 = vunpack.c.l.b16 %v2977
        %v3271 = vunpack.c.l.b16 %v2978
        %v3272 = vunpack.c.l.b16 %v2979
        %v3273 = vunpack.c.l.b16 %v2980
        %v3274 = vunpack.c.l.b16 %v2981
        %v3275 = vunpack.c.l.b16 %v2982
        %v3276 = vunpack.c.l.b16 %v2983
        %v3277 = vunpack.c.l.b16 %v2984
        %v3278 = vunpack.c.l.b16 %v2985
        %v3279 = vunpack.c.l.b16 %v2986
        %v3280 = vunpack.c.l.b16 %v2987
        %v3281 = vunpack.c.l.b16 %v2988
        %v3282 = vunpack.c.l.b16 %v2989
        %v3283 = vunpack.c.l.b16 %v2990
        %v3284 = vunpack.c.l.b16 %v2991
        %v3285 = vunpack.c.l.b16 %v2992
        %v3286 = vunpack.c.l.b16 %v2993
        %v3287 = vunpack.c.l.b16 %v2994
        %v3288 = vunpack.c.l.b16 %v2995
        %v3289 = vunpack.c.l.b16 %v2996
        %v3290 = vunpack.c.l.b16 %v2997
        %v3291 = vunpack.c.l.b16 %v2998
        %v3292 = vunpack.c.l.b16 %v2999
        %v3293 = vunpack.c.l.b16 %v3000
        %v3294 = vunpack.c.l.b16 %v3001
        %v3295 = vunpack.c.l.b16 %v3002
        %v3296 = vunpack.c.l.b16 %v3003
        %v3297 = vunpack.c.l.b16 %v3004
        %v3298 = vunpack.c.l.b16 %v3005
        %v3299 = vunpack.c.l.b16 %v3006
        %v3300 = vunpack.c.l.b16 %v3007
        %v3301 = vunpack.c.l.b16 %v3008
        %v3302 = vunpack.c.l.b16 %v3009
        %v3303 = vunpack.c.l.b16 %v3010
        %v3304 = vunpack.c.l.b16 %v3011
        %v3305 = vunpack.c.l.b16 %v3012
        %v3306 = vunpack.c.l.b16 %v3013
        %v3307 = vunpack.c.l.b16 %v3014
        %v3308 = vunpack.c.l.b16 %v3015
        %v3309 = vunpack.c.l.b16 %v3016
        %v3310 = vunpack.c.l.b16 %v3017
        %v3311 = vunpack.c.l.b16 %v3018
        %v3312 = vunpack.c.l.b16 %v3019
        %v3313 = vunpack.c.l.b16 %v3020
        %v3314 = vunpack.c.l.b16 %v3021
        %v3315 = vunpack.c.l.b16 %v3022
        %v3316 = vunpack.c.l.b16 %v3023
        %v3317 = vunpack.c.l.b16 %v3024
        %v3318 = vunpack.c.l.b16 %v3025
        %v3319 = vunpack.c.l.b16 %v3026
        %v3320 = vunpack.c.l.b16 %v3027
        %v3321 = vunpack.c.l.b16 %v3028
        %v3322 = vunpack.c.l.b16 %v3029
        %v3323 = vunpack.c.l.b16 %v3030
        %v3324 = vunpack.c.l.b16 %v3031
        %v3325 = vunpack.c.l.b16 %v3032
        %v3326 = vunpack.c.l.b16 %v3033
        %v3327 = vunpack.c.l.b16 %v3034
        %v3328 = vunpack.c.l.b16 %v3035
        %v3329 = vunpack.c.l.b16 %v3036
        %v3330 = vunpack.c.l.b16 %v3037
        %v3331 = vunpack.c.l.b16 %v3038
        %v3332 = vunpack.c.l.b16 %v3039
        %v3333 = vunpack.c.l.b16 %v3040
        %v3334 = vunpack.c.l.b16 %v3041
        %v3335 = vunpack.c.l.b16 %v3042
        %v3336 = vunpack.c.l.b16 %v3043
        %v3337 = vunpack.c.l.b16 %v3044
        %v3338 = vunpack.c.l.b16 %v3045
        %v3339 = vunpack.c.l.b16 %v3046
        %v3340 = vunpack.c.l.b16 %v3047
        %v3341 = vunpack.c.l.b16 %v3048
        %v3342 = vunpack.c.l.b16 %v3049
        %v3343 = vunpack.c.l.b16 %v3050
        %v3344 = vunpack.c.l.b16 %v3051
        %v3345 = vunpack.c.l.b16 %v3052
        %v3346 = vunpack.c.l.b16 %v3053
        %v3347 = vunpack.c.l.b16 %v3054
        %v3348 = vunpack.c.l.b16 %v3055
        %v3349 = vunpack.c.l.b16 %v3056
        %v3350 = vunpack.c.l.b16 %v3057
        %v3351 = vunpack.c.l.b16 %v3058
        %v3352 = vunpack.c.l.b16 %v3059
        %v3353 = vunpack.c.l.b16 %v3060
        %v3354 = vunpack.c.l.b16 %v3061
        %v3355 = vunpack.c.l.b16 %v3062
        %v3356 = vunpack.c.l.b16 %v3063
        %v3357 = vunpack.c.l.b16 %v3064
        %v3358 = vunpack.c.l.b16 %v3065
        %v3359 = vunpack.c.l.b16 %v3066
        %v3360 = vunpack.c.l.b16 %v3067
        %v3361 = vunpack.c.l.b16 %v3068
        %v3362 = vpack.c.b16 %v3219, %v3218
        %v3363 = vpack.c.b16 %v3221, %v3220
        %v3364 = vpack.c.b16 %v3223, %v3222
        %v3365 = vpack.c.b16 %v3225, %v3224
        %v3366 = vpack.c.b16 %v3227, %v3226
        %v3367 = vpack.c.b16 %v3229, %v3228
        %v3368 = vpack.c.b16 %v3231, %v3230
        %v3369 = vpack.c.b16 %v3233, %v3232
        %v3370 = vpack.c.b16 %v3235, %v3234
        %v3371 = vpack.c.b16 %v3237, %v3236
        %v3372 = vpack.c.b16 %v3239, %v3238
        %v3373 = vpack.c.b16 %v3241, %v3240
        %v3374 = vpack.c.b16 %v3243, %v3242
        %v3375 = vpack.c.b16 %v3245, %v3244
        %v3376 = vpack.c.b16 %v3247, %v3246
        %v3377 = vpack.c.b16 %v3249, %v3248
        %v3378 = vpack.c.b16 %v3251, %v3250
        %v3379 = vpack.c.b16 %v3253, %v3252
        %v3380 = vpack.c.b16 %v3255, %v3254
        %v3381 = vpack.c.b16 %v3257, %v3256
        %v3382 = vpack.c.b16 %v3259, %v3258
        %v3383 = vpack.c.b16 %v3261, %v3260
        %v3384 = vpack.c.b16 %v3263, %v3262
        %v3385 = vpack.c.b16 %v3265, %v3264
        %v3386 = vpack.c.b16 %v3267, %v3266
        %v3387 = vpack.c.b16 %v3269, %v3268
        %v3388 = vpack.c.b16 %v3271, %v3270
        %v3389 = vpack.c.b16 %v3273, %v3272
        %v3390 = vpack.c.b16 %v3275, %v3274
        %v3391 = vpack.c.b16 %v3277, %v3276
        %v3392 = vpack.c.b16 %v3279, %v3278
        %v3393 = vpack.c.b16 %v3281, %v3280
        %v3394 = vpack.c.b16 %v3283, %v3282
        %v3395 = vpack.c.b16 %v3285, %v3284
        %v3396 = vpack.c.b16 %v3287, %v3286
        %v3397 = vpack.c.b16 %v3289, %v3288
        %v3398 = vpack.c.b16 %v3291, %v3290
        %v3399 = vpack.c.b16 %v3293, %v3292
        %v3400 = vpack.c.b16 %v3295, %v3294
        %v3401 = vpack.c.b16 %v3297, %v3296
        %v3402 = vpack.c.b16 %v3299, %v3298
        %v3403 = vpack.c.b16 %v3301, %v3300
        %v3404 = vpack.c.b16 %v3303, %v3302
        %v3405 = vpack.c.b16 %v3305, %v3304
        %v3406 = vpack.c.b16 %v3307, %v3306
        %v3407 = vpack.c.b16 %v3309, %v3308
        %v3408 = vpack.c.b16 %v3311, %v3310
        %v3409 = vpack.c.b16 %v3313, %v3312
        %v3410 = vpack.c.b16 %v3315, %v3314
        %v3411 = vpack.c.b16 %v3317, %v3316
        %v3412 = vpack.c.b16 %v3319, %v3318
        %v3413 = vpack.c.b16 %v3321, %v3320
        %v3414 = vpack.c.b16 %v3323, %v3322
        %v3415 = vpack.c.b16 %v3325, %v3324
        %v3416 = vpack.c.b16 %v3327, %v3326
        %v3417 = vpack.c.b16 %v3329, %v3328
        %v3418 = vpack.c.b16 %v3331, %v3330
        %v3419 = vpack.c.b16 %v3333, %v3332
        %v3420 = vpack.c.b16 %v3335, %v3334
        %v3421 = vpack.c.b16 %v3337, %v3336
        %v3422 = vpack.c.b16 %v3339, %v3338
        %v3423 = vpack.c.b16 %v3341, %v3340
        %v3424 = vpack.c.b16 %v3343, %v3342
        %v3425 = vpack.c.b16 %v3345, %v3344
        %v3426 = vpack.c.b16 %v3347, %v3346
        %v3427 = vpack.c.b16 %v3349, %v3348
        %v3428 = vpack.c.b16 %v3351, %v3350
        %v3429 = vpack.c.b16 %v3353, %v3352
        %v3430 = vpack.c.b16 %v3355, %v3354
        %v3431 = vpack.c.b16 %v3357, %v3356
        %v3432 = vpack.c.b16 %v3359, %v3358
        %v3433 = vpack.c.b16 %v3361, %v3360
        %3506 = vmatprep.subr.bf16.mxu0 0
        %3507 = vmatpush1.bf16.msra.mxu0 %v3362
        %3508 = vmatprep.subr.bf16.mxu0 0
        %3509 = vmatpush1.bf16.msra.mxu0 %v3363
        %3510 = vmatprep.subr.bf16.mxu0 0
        %3511 = vmatpush1.bf16.msra.mxu0 %v3364
        %3512 = vmatprep.subr.bf16.mxu0 0
        %3513 = vmatpush1.bf16.msra.mxu0 %v3365
        %3514 = vmatprep.subr.bf16.mxu0 0
        %3515 = vmatpush1.bf16.msra.mxu0 %v3366
        %3516 = vmatprep.subr.bf16.mxu0 0
        %3517 = vmatpush1.bf16.msra.mxu0 %v3367
        %3518 = vmatprep.subr.bf16.mxu0 0
        %3519 = vmatpush1.bf16.msra.mxu0 %v3368
        %3520 = vmatprep.subr.bf16.mxu0 0
        %3521 = vmatpush1.bf16.msra.mxu0 %v3369
        %3522 = vmatprep.subr.bf16.mxu0 0
        %3523 = vmatpush1.bf16.msra.mxu0 %v3370
        %3524 = vmatprep.subr.bf16.mxu0 0
        %3525 = vmatpush1.bf16.msra.mxu0 %v3371
        %3526 = vmatprep.subr.bf16.mxu0 0
        %3527 = vmatpush1.bf16.msra.mxu0 %v3372
        %3528 = vmatprep.subr.bf16.mxu0 0
        %3529 = vmatpush1.bf16.msra.mxu0 %v3373
        %3530 = vmatprep.subr.bf16.mxu0 0
        %3531 = vmatpush1.bf16.msra.mxu0 %v3374
        %3532 = vmatprep.subr.bf16.mxu0 0
        %3533 = vmatpush1.bf16.msra.mxu0 %v3375
        %3534 = vmatprep.subr.bf16.mxu0 0
        %3535 = vmatpush1.bf16.msra.mxu0 %v3376
        %3536 = vmatprep.subr.bf16.mxu0 0
        %3537 = vmatpush1.bf16.msra.mxu0 %v3377
        %3538 = vmatprep.mubr.bf16.mxu0 %v2850
        %3539 = vmatmul.mubr.bf16.gmra.mrb[0].mxu0 %v2826
        %v3540 = vpop.f32.mrb[0].mxu0
        %v3541 = vadd.f32 %v3073, %v3540
        %v3542 = vpop.f32.mrb[0].mxu0
        %v3543 = vpop.f32.mrb[0].mxu0
        %v3544 = vadd.f32 %v3073, %v3543
        %v3545 = vpop.f32.mrb[0].mxu0
        %3546 = vmatprep.mubr.bf16.mxu0 %v2851
        %3547 = vmatmul.mubr.bf16.gmra.mrb[0].mxu0 %v2827
        %v3548 = vpop.f32.mrb[0].mxu0
        %v3549 = vadd.f32 %v3073, %v3548
        %v3550 = vpop.f32.mrb[0].mxu0
        %v3551 = vpop.f32.mrb[0].mxu0
        %v3552 = vadd.f32 %v3073, %v3551
        %v3553 = vpop.f32.mrb[0].mxu0
        %3554 = vmatprep.mubr.bf16.mxu0 %v2852
        %3555 = vmatmul.mubr.bf16.gmra.mrb[0].mxu0 %v2828
        %v3556 = vpop.f32.mrb[0].mxu0
        %v3557 = vadd.f32 %v3073, %v3556
        %v3558 = vpop.f32.mrb[0].mxu0
        %v3559 = vpop.f32.mrb[0].mxu0
        %v3560 = vadd.f32 %v3073, %v3559
        %v3561 = vpop.f32.mrb[0].mxu0
        %3562 = vmatprep.mubr.bf16.mxu0 %v2853
        %3563 = vmatmul.mubr.bf16.gmra.mrb[0].mxu0 %v2829
        %v3564 = vpop.f32.mrb[0].mxu0
        %v3565 = vadd.f32 %v3073, %v3564
        %v3566 = vpop.f32.mrb[0].mxu0
        %v3567 = vpop.f32.mrb[0].mxu0
        %v3568 = vadd.f32 %v3073, %v3567
        %v3569 = vpop.f32.mrb[0].mxu0
        %3570 = vdwg.mxu0
        %3571 = vmatprep.subr.bf16.mxu0 0
        %3572 = vmatpush1.bf16.msra.mxu0 %v3378
        %3573 = vmatprep.subr.bf16.mxu0 0
        %3574 = vmatpush1.bf16.msra.mxu0 %v3379
        %3575 = vmatprep.subr.bf16.mxu0 0
        %3576 = vmatpush1.bf16.msra.mxu0 %v3380
        %3577 = vmatprep.subr.bf16.mxu0 0
        %3578 = vmatpush1.bf16.msra.mxu0 %v3381
        %3579 = vmatprep.subr.bf16.mxu0 0
        %3580 = vmatpush1.bf16.msra.mxu0 %v3382
        %3581 = vmatprep.subr.bf16.mxu0 0
        %3582 = vmatpush1.bf16.msra.mxu0 %v3383
        %3583 = vmatprep.subr.bf16.mxu0 0
        %3584 = vmatpush1.bf16.msra.mxu0 %v3384
        %3585 = vmatprep.subr.bf16.mxu0 0
        %3586 = vmatpush1.bf16.msra.mxu0 %v3385
        %3587 = vmatprep.subr.bf16.mxu0 0
        %3588 = vmatpush1.bf16.msra.mxu0 %v3386
        %3589 = vmatprep.subr.bf16.mxu0 0
        %3590 = vmatpush1.bf16.msra.mxu0 %v3387
        %3591 = vmatprep.subr.bf16.mxu0 0
        %3592 = vmatpush1.bf16.msra.mxu0 %v3388
        %3593 = vmatprep.subr.bf16.mxu0 0
        %3594 = vmatpush1.bf16.msra.mxu0 %v3389
        %3595 = vmatprep.subr.bf16.mxu0 0
        %3596 = vmatpush1.bf16.msra.mxu0 %v3390
        %3597 = vmatprep.subr.bf16.mxu0 0
        %3598 = vmatpush1.bf16.msra.mxu0 %v3391
        %3599 = vmatprep.subr.bf16.mxu0 0
        %3600 = vmatpush1.bf16.msra.mxu0 %v3392
        %3601 = vmatprep.subr.bf16.mxu0 0
        %3602 = vmatpush1.bf16.msra.mxu0 %v3393
        %3603 = vmatprep.mubr.bf16.mxu0 %v2884
        %3604 = vmatmul.mubr.bf16.gmra.mrb[0].mxu0 %v2874
        %v3605 = vpop.f32.mrb[0].mxu0
        %v3606 = vadd.f32 %v3541, %v3605
        %v3607 = vpop.f32.mrb[0].mxu0
        %v3608 = vpop.f32.mrb[0].mxu0
        %v3609 = vadd.f32 %v3544, %v3608
        %v3610 = vpop.f32.mrb[0].mxu0
        %3611 = vmatprep.mubr.bf16.mxu0 %v2885
        %3612 = vmatmul.mubr.bf16.gmra.mrb[0].mxu0 %v2875
        %v3613 = vpop.f32.mrb[0].mxu0
        %v3614 = vadd.f32 %v3549, %v3613
        %v3615 = vpop.f32.mrb[0].mxu0
        %v3616 = vpop.f32.mrb[0].mxu0
        %v3617 = vadd.f32 %v3552, %v3616
        %v3618 = vpop.f32.mrb[0].mxu0
        %3619 = vmatprep.mubr.bf16.mxu0 %v2886
        %3620 = vmatmul.mubr.bf16.gmra.mrb[0].mxu0 %v2876
        %v3621 = vpop.f32.mrb[0].mxu0
        %v3622 = vadd.f32 %v3557, %v3621
        %v3623 = vpop.f32.mrb[0].mxu0
        %v3624 = vpop.f32.mrb[0].mxu0
        %v3625 = vadd.f32 %v3560, %v3624
        %v3626 = vpop.f32.mrb[0].mxu0
        %3627 = vmatprep.mubr.bf16.mxu0 %v2887
        %3628 = vmatmul.mubr.bf16.gmra.mrb[0].mxu0 %v2877
        %v3629 = vpop.f32.mrb[0].mxu0
        %v3630 = vadd.f32 %v3565, %v3629
        %v3631 = vpop.f32.mrb[0].mxu0
        %v3632 = vpop.f32.mrb[0].mxu0
        %v3633 = vadd.f32 %v3568, %v3632
        %v3634 = vpop.f32.mrb[0].mxu0
        %3635 = vdwg.mxu0
        %3636 = vmatprep.subr.bf16.mxu0 0
        %3637 = vmatpush1.bf16.msra.mxu0 %v3394
        %3638 = vmatprep.subr.bf16.mxu0 0
        %3639 = vmatpush1.bf16.msra.mxu0 %v3395
        %3640 = vmatprep.subr.bf16.mxu0 0
        %3641 = vmatpush1.bf16.msra.mxu0 %v3396
        %3642 = vmatprep.subr.bf16.mxu0 0
        %3643 = vmatpush1.bf16.msra.mxu0 %v3397
        %3644 = vmatprep.subr.bf16.mxu0 0
        %3645 = vmatpush1.bf16.msra.mxu0 %v3398
        %3646 = vmatprep.subr.bf16.mxu0 0
        %3647 = vmatpush1.bf16.msra.mxu0 %v3399
        %3648 = vmatprep.subr.bf16.mxu0 0
        %3649 = vmatpush1.bf16.msra.mxu0 %v3400
        %3650 = vmatprep.subr.bf16.mxu0 0
        %3651 = vmatpush1.bf16.msra.mxu0 %v3401
        %3652 = vmatprep.subr.bf16.mxu0 0
        %3653 = vmatpush1.bf16.msra.mxu0 %v3402
        %3654 = vmatprep.subr.bf16.mxu0 0
        %3655 = vmatpush1.bf16.msra.mxu0 %v3403
        %3656 = vmatprep.subr.bf16.mxu0 0
        %3657 = vmatpush1.bf16.msra.mxu0 %v3404
        %3658 = vmatprep.subr.bf16.mxu0 0
        %3659 = vmatpush1.bf16.msra.mxu0 %v3405
        %3660 = vmatprep.subr.bf16.mxu0 0
        %3661 = vmatpush1.bf16.msra.mxu0 %v3406
        %3662 = vmatprep.subr.bf16.mxu0 0
        %3663 = vmatpush1.bf16.msra.mxu0 %v3407
        %3664 = vmatprep.subr.bf16.mxu0 0
        %3665 = vmatpush1.bf16.msra.mxu0 %v3408
        %3666 = vmatprep.subr.bf16.mxu0 0
        %3667 = vmatpush1.bf16.msra.mxu0 %v3409
        %3668 = vmatprep.mubr.bf16.mxu0 %v2904
        %3669 = vmatmul.mubr.bf16.gmra.mrb[0].mxu0 %v2894
        %v3670 = vpop.f32.mrb[0].mxu0
        %v3671 = vadd.f32 %v3606, %v3670
        %v3672 = vpop.f32.mrb[0].mxu0
        %v3673 = vpop.f32.mrb[0].mxu0
        %v3674 = vadd.f32 %v3609, %v3673
        %v3675 = vpop.f32.mrb[0].mxu0
        %3676 = vmatprep.mubr.bf16.mxu0 %v2905
        %3677 = vmatmul.mubr.bf16.gmra.mrb[0].mxu0 %v2895
        %v3678 = vpop.f32.mrb[0].mxu0
        %v3679 = vadd.f32 %v3614, %v3678
        %v3680 = vpop.f32.mrb[0].mxu0
        %v3681 = vpop.f32.mrb[0].mxu0
        %v3682 = vadd.f32 %v3617, %v3681
        %v3683 = vpop.f32.mrb[0].mxu0
        %3684 = vmatprep.mubr.bf16.mxu0 %v2906
        %3685 = vmatmul.mubr.bf16.gmra.mrb[0].mxu0 %v2896
        %v3686 = vpop.f32.mrb[0].mxu0
        %v3687 = vadd.f32 %v3622, %v3686
        %v3688 = vpop.f32.mrb[0].mxu0
        %v3689 = vpop.f32.mrb[0].mxu0
        %v3690 = vadd.f32 %v3625, %v3689
        %v3691 = vpop.f32.mrb[0].mxu0
        %3692 = vmatprep.mubr.bf16.mxu0 %v2907
        %3693 = vmatmul.mubr.bf16.gmra.mrb[0].mxu0 %v2897
        %v3694 = vpop.f32.mrb[0].mxu0
        %v3695 = vadd.f32 %v3630, %v3694
        %v3696 = vpop.f32.mrb[0].mxu0
        %v3697 = vpop.f32.mrb[0].mxu0
        %v3698 = vadd.f32 %v3633, %v3697
        %v3699 = vpop.f32.mrb[0].mxu0
        %3700 = vdwg.mxu0
        %3701 = vmatprep.subr.bf16.mxu0 0
        %3702 = vmatpush1.bf16.msra.mxu0 %v3410
        %3703 = vmatprep.subr.bf16.mxu0 0
        %3704 = vmatpush1.bf16.msra.mxu0 %v3411
        %3705 = vmatprep.subr.bf16.mxu0 0
        %3706 = vmatpush1.bf16.msra.mxu0 %v3412
        %3707 = vmatprep.subr.bf16.mxu0 0
        %3708 = vmatpush1.bf16.msra.mxu0 %v3413
        %3709 = vmatprep.subr.bf16.mxu0 0
        %3710 = vmatpush1.bf16.msra.mxu0 %v3414
        %3711 = vmatprep.subr.bf16.mxu0 0
        %3712 = vmatpush1.bf16.msra.mxu0 %v3415
        %3713 = vmatprep.subr.bf16.mxu0 0
        %3714 = vmatpush1.bf16.msra.mxu0 %v3416
        %3715 = vmatprep.subr.bf16.mxu0 0
        %3716 = vmatpush1.bf16.msra.mxu0 %v3417
        %3717 = vmatprep.subr.bf16.mxu0 0
        %3718 = vmatpush1.bf16.msra.mxu0 %v3418
        %3719 = vmatprep.subr.bf16.mxu0 0
        %3720 = vmatpush1.bf16.msra.mxu0 %v3419
        %3721 = vmatprep.subr.bf16.mxu0 0
        %3722 = vmatpush1.bf16.msra.mxu0 %v3420
        %3723 = vmatprep.subr.bf16.mxu0 0
        %3724 = vmatpush1.bf16.msra.mxu0 %v3421
        %3725 = vmatprep.subr.bf16.mxu0 0
        %3726 = vmatpush1.bf16.msra.mxu0 %v3422
        %3727 = vmatprep.subr.bf16.mxu0 0
        %3728 = vmatpush1.bf16.msra.mxu0 %v3423
        %3729 = vmatprep.subr.bf16.mxu0 0
        %3730 = vmatpush1.bf16.msra.mxu0 %v3424
        %3731 = vmatprep.subr.bf16.mxu0 0
        %3732 = vmatpush1.bf16.msra.mxu0 %v3425
        %3733 = vmatprep.mubr.bf16.mxu0 %v2851
        %3734 = vmatmul.mubr.bf16.gmra.mrb[0].mxu0 %v2827
        %v3735 = vpop.f32.mrb[0].mxu0
        %v3736 = vadd.f32 %v3671, %v3735
        %v3737 = vpop.f32.mrb[0].mxu0
        %v3738 = vpop.f32.mrb[0].mxu0
        %v3739 = vadd.f32 %v3674, %v3738
        %v3740 = vpop.f32.mrb[0].mxu0
        %3741 = vmatprep.mubr.bf16.mxu0 %v2852
        %3742 = vmatmul.mubr.bf16.gmra.mrb[0].mxu0 %v2828
        %v3743 = vpop.f32.mrb[0].mxu0
        %v3744 = vadd.f32 %v3679, %v3743
        %v3745 = vpop.f32.mrb[0].mxu0
        %v3746 = vpop.f32.mrb[0].mxu0
        %v3747 = vadd.f32 %v3682, %v3746
        %v3748 = vpop.f32.mrb[0].mxu0
        %3749 = vmatprep.mubr.bf16.mxu0 %v2853
        %3750 = vmatmul.mubr.bf16.gmra.mrb[0].mxu0 %v2829
        %v3751 = vpop.f32.mrb[0].mxu0
        %v3752 = vadd.f32 %v3687, %v3751
        %v3753 = vpop.f32.mrb[0].mxu0
        %v3754 = vpop.f32.mrb[0].mxu0
        %v3755 = vadd.f32 %v3690, %v3754
        %v3756 = vpop.f32.mrb[0].mxu0
        %3757 = vmatprep.mubr.bf16.mxu0 %v2918
        %3758 = vmatmul.mubr.bf16.gmra.mrb[0].mxu0 %v2914
        %v3759 = vpop.f32.mrb[0].mxu0
        %v3760 = vadd.f32 %v3695, %v3759
        %v3761 = vpop.f32.mrb[0].mxu0
        %v3762 = vpop.f32.mrb[0].mxu0
        %v3763 = vadd.f32 %v3698, %v3762
        %v3764 = vpop.f32.mrb[0].mxu0
        %3765 = vdwg.mxu0
        %3766 = vmatprep.subr.bf16.mxu0 0
        %3767 = vmatpush1.bf16.msra.mxu0 %v3426
        %3768 = vmatprep.subr.bf16.mxu0 0
        %3769 = vmatpush1.bf16.msra.mxu0 %v3427
        %3770 = vmatprep.subr.bf16.mxu0 0
        %3771 = vmatpush1.bf16.msra.mxu0 %v3428
        %3772 = vmatprep.subr.bf16.mxu0 0
        %3773 = vmatpush1.bf16.msra.mxu0 %v3429
        %3774 = vmatprep.subr.bf16.mxu0 0
        %3775 = vmatpush1.bf16.msra.mxu0 %v3430
        %3776 = vmatprep.subr.bf16.mxu0 0
        %3777 = vmatpush1.bf16.msra.mxu0 %v3431
        %3778 = vmatprep.subr.bf16.mxu0 0
        %3779 = vmatpush1.bf16.msra.mxu0 %v3432
        %3780 = vmatprep.subr.bf16.mxu0 0
        %3781 = vmatpush1.bf16.msra.mxu0 %v3433
        %3782 = vmatprep.subr.bf16.mxu0 0
        %3783 = vmatpush1.bf16.msra.mxu0 0
        %3784 = vmatprep.subr.bf16.mxu0 0
        %3785 = vmatpush1.bf16.msra.mxu0 0
        %3786 = vmatprep.subr.bf16.mxu0 0
        %3787 = vmatpush1.bf16.msra.mxu0 0
        %3788 = vmatprep.subr.bf16.mxu0 0
        %3789 = vmatpush1.bf16.msra.mxu0 0
        %3790 = vmatprep.subr.bf16.mxu0 0
        %3791 = vmatpush1.bf16.msra.mxu0 0
        %3792 = vmatprep.subr.bf16.mxu0 0
        %3793 = vmatpush1.bf16.msra.mxu0 0
        %3794 = vmatprep.subr.bf16.mxu0 0
        %3795 = vmatpush1.bf16.msra.mxu0 0
        %3796 = vmatprep.subr.bf16.mxu0 0
        %3797 = vmatpush1.bf16.msra.mxu0 0
        %3798 = vmatprep.mubr.bf16.mxu0 0
        %3799 = vmatmul.mubr.bf16.gmra.mrb[0].mxu0 %v2875
        %v3800 = vpop.f32.mrb[0].mxu0
        %v3801 = vadd.f32 %v3736, %v3800
        %v3802 = vpop.f32.mrb[0].mxu0
        %v3803 = vpop.f32.mrb[0].mxu0
        %v3804 = vadd.f32 %v3739, %v3803
        %v3805 = vpop.f32.mrb[0].mxu0
        %3806 = vmatprep.mubr.bf16.mxu0 0
        %3807 = vmatmul.mubr.bf16.gmra.mrb[0].mxu0 %v2876
        %v3808 = vpop.f32.mrb[0].mxu0
        %v3809 = vadd.f32 %v3744, %v3808
        %v3810 = vpop.f32.mrb[0].mxu0
        %v3811 = vpop.f32.mrb[0].mxu0
        %v3812 = vadd.f32 %v3747, %v3811
        %v3813 = vpop.f32.mrb[0].mxu0
        %3814 = vmatprep.mubr.bf16.mxu0 0
        %3815 = vmatmul.mubr.bf16.gmra.mrb[0].mxu0 %v2877
        %v3816 = vpop.f32.mrb[0].mxu0
        %v3817 = vadd.f32 %v3752, %v3816
        %v3818 = vpop.f32.mrb[0].mxu0
        %v3819 = vpop.f32.mrb[0].mxu0
        %v3820 = vadd.f32 %v3755, %v3819
        %v3821 = vpop.f32.mrb[0].mxu0
        %3822 = vmatprep.mubr.bf16.mxu0 0
        %3823 = vmatmul.mubr.bf16.gmra.mrb[0].mxu0 %v2922
        %v3824 = vpop.f32.mrb[0].mxu0
        %v3825 = vadd.f32 %v3760, %v3824
        %v3826 = vpop.f32.mrb[0].mxu0
        %v3827 = vpop.f32.mrb[0].mxu0
        %v3828 = vadd.f32 %v3763, %v3827
        %v3829 = vpop.f32.mrb[0].mxu0
        %3830 = vdwg.mxu0
        %v3831 = vmax.f32 %v3801, 0.0
        %v3832 = vmax.f32 %v3804, 0.0
        %v3833 = vmax.f32 %v3809, 0.0
        %v3834 = vmax.f32 %v3812, 0.0
        %v3835 = vmax.f32 %v3817, 0.0
        %v3836 = vmax.f32 %v3820, 0.0
        %v3837 = vmax.f32 %v3825, 0.0
        %v3838 = vmax.f32 %v3828, 0.0
        %p3839 = scmp.lt.s32.totalorder %s31, 2
        // Predicated region
        $region69: #{value_network_forward.1} parent=47 // pred_check
          %p3840 = pneg %p3839
        $region70: #{value_network_forward.1} parent=47 // pred_check_branch
          %3842 = sbr.rel (%p3840) target = $region72
        $region71: #{value_network_forward.1} parent=47 // pred_region
          %3843 = vst [vmem:[%s1544] sm:$0xff] %v3831
          %3844 = vst [vmem:[%s1544 + $0x8] sm:$0xff] %v3832
          %3845 = vst [vmem:[%s1544 + $0x10] sm:$0xff] %v3833
          %3846 = vst [vmem:[%s1544 + $0x18] sm:$0xff] %v3834
          %3847 = vst [vmem:[%s1544 + $0x20] sm:$0xff] %v3835
          %3848 = vst [vmem:[%s1544 + $0x28] sm:$0xff] %v3836
          %3849 = vst [vmem:[%s1544 + $0x30] sm:$0xff] %v3837
          %3850 = vst [vmem:[%s1544 + $0x38] sm:$0xff] %v3838
        $region72: #{value_network_forward.1} parent=47 // pred_fallthru
          _
        %p3851 = scmp.eq.s32.totalorder %s31, 2
        // Predicated region
        $region73: #{value_network_forward.1} parent=47 // pred_check
          %p3852 = pneg %p3851
        $region74: #{value_network_forward.1} parent=47 // pred_check_branch
          %3854 = sbr.rel (%p3852) target = $region76
        $region75: #{value_network_forward.1} parent=47 // pred_region
          %v3855 = vld [vmem:[#allocation11] sm:$0xff]
          %v3856 = vld [vmem:[#allocation11 + $0x8] sm:$0xff]
          %v3857 = vld [vmem:[#allocation11 + $0x10] sm:$0xff]
          %v3858 = vld [vmem:[#allocation11 + $0x18] sm:$0xff]
          %v3859 = vld [vmem:[#allocation11 + $0x20] sm:$0xff]
          %v3860 = vld [vmem:[#allocation11 + $0x28] sm:$0xff]
          %v3861 = vld [vmem:[#allocation11 + $0x30] sm:$0xff]
          %v3862 = vld [vmem:[#allocation11 + $0x38] sm:$0xff]
          %3871 = vrot.lane.b32.xlu0 %v3855, 64
          %v3872 = vpop.permute.xlu0 %3871
          %3873 = vrot.lane.b32.xlu0 %v3856, 64
          %v3874 = vpop.permute.xlu0 %3873
          %3875 = vrot.lane.b32.xlu0 %v3857, 64
          %v3876 = vpop.permute.xlu0 %3875
          %3877 = vrot.lane.b32.xlu0 %v3858, 64
          %v3878 = vpop.permute.xlu0 %3877
          %3879 = vrot.lane.b32.xlu0 %v3859, 64
          %v3880 = vpop.permute.xlu0 %3879
          %3881 = vrot.lane.b32.xlu0 %v3860, 64
          %v3882 = vpop.permute.xlu0 %3881
          %3883 = vrot.lane.b32.xlu0 %v3861, 64
          %v3884 = vpop.permute.xlu0 %3883
          %3885 = vrot.lane.b32.xlu0 %v3862, 64
          %v3886 = vpop.permute.xlu0 %3885
          %v3895 = vmul.f32 %v3831, %v3872
          %v3896 = vmul.f32 %v3832, %v3874
          %v3897 = vmul.f32 %v3833, %v3876
          %v3898 = vmul.f32 %v3834, %v3878
          %v3899 = vmul.f32 %v3835, %v3880
          %v3900 = vmul.f32 %v3836, %v3882
          %v3901 = vmul.f32 %v3837, %v3884
          %v3902 = vmul.f32 %v3838, %v3886
          %3911 = vrot.lane.b32.xlu0 %v3895, 64
          %v3912 = vpop.permute.xlu0 %3911
          %3913 = vrot.lane.b32.xlu0 %v3896, 64
          %v3914 = vpop.permute.xlu0 %3913
          %3915 = vrot.lane.b32.xlu0 %v3897, 64
          %v3916 = vpop.permute.xlu0 %3915
          %3917 = vrot.lane.b32.xlu0 %v3898, 64
          %v3918 = vpop.permute.xlu0 %3917
          %3919 = vrot.lane.b32.xlu0 %v3899, 64
          %v3920 = vpop.permute.xlu0 %3919
          %3921 = vrot.lane.b32.xlu0 %v3900, 64
          %v3922 = vpop.permute.xlu0 %3921
          %3923 = vrot.lane.b32.xlu0 %v3901, 64
          %v3924 = vpop.permute.xlu0 %3923
          %3925 = vrot.lane.b32.xlu0 %v3902, 64
          %v3926 = vpop.permute.xlu0 %3925
          %vm3935 = vcmask 523264
          %v3936 = vsel %vm3935, %v3912, 0.0
          %3937 = vadd.xlane.f32.xlu0 %v3936
          %v3938 = vpop.xlane.xlu0 %3937
          %v3939 = vsel %vm3935, %v3914, 0.0
          %3940 = vadd.xlane.f32.xlu0 %v3939
          %v3941 = vpop.xlane.xlu0 %3940
          %v3942 = vsel %vm3935, %v3916, 0.0
          %3943 = vadd.xlane.f32.xlu0 %v3942
          %v3944 = vpop.xlane.xlu0 %3943
          %v3945 = vsel %vm3935, %v3918, 0.0
          %3946 = vadd.xlane.f32.xlu0 %v3945
          %v3947 = vpop.xlane.xlu0 %3946
          %v3948 = vsel %vm3935, %v3920, 0.0
          %3949 = vadd.xlane.f32.xlu0 %v3948
          %v3950 = vpop.xlane.xlu0 %3949
          %v3951 = vsel %vm3935, %v3922, 0.0
          %3952 = vadd.xlane.f32.xlu0 %v3951
          %v3953 = vpop.xlane.xlu0 %3952
          %v3954 = vsel %vm3935, %v3924, 0.0
          %3955 = vadd.xlane.f32.xlu0 %v3954
          %v3956 = vpop.xlane.xlu0 %3955
          %v3957 = vsel %vm3935, %v3926, 0.0
          %3958 = vadd.xlane.f32.xlu0 %v3957
          %v3959 = vpop.xlane.xlu0 %3958
          %v3960 = vadd.f32 %v3938, %v3941
          %v3961 = vadd.f32 %v3960, %v3944
          %v3962 = vadd.f32 %v3961, %v3947
          %v3963 = vadd.f32 %v3962, %v3950
          %v3964 = vadd.f32 %v3963, %v3953
          %v3965 = vadd.f32 %v3964, %v3956
          %v3966 = vadd.f32 %v3965, %v3959
          %v3967 = vrot.slane %v3966, 4
          %v3968 = vadd.f32 %v3966, %v3967
          %v3969 = vrot.slane %v3968, 2
          %v3970 = vadd.f32 %v3968, %v3969
          %v3971 = vrot.slane %v3970, 1
          %v3972 = vadd.f32 %v3970, %v3971
          %v3973 = vld [vmem:[#allocation4] sm:$0x1]
          %v3974 = vadd.f32 %v3972, %v3973
          %vm3975 = vcmask 0
          %3976 = vst.msk [vmem:[#allocation14] sm:$0x1] %vm3975, %v3974
          %vm3977 = vcmask 516096
          %3978 = vst.msk [vmem:[#allocation3] sm:$0x1] %vm3977, %v3831
          %v3980 = vrot.slane %v3831, 1
          %3981 = vrot.lane.b32.xlu0 %v3980, 64
          %v3982 = vpop.permute.xlu0 %3981
          %vm3984 = vcmask 1040896
          %3985 = vst.msk [vmem:[#allocation3] sm:$0x1] %vm3984, %v3982
          %v3986 = vrot.slane %v3831, 2
          %3988 = vst.msk [vmem:[#allocation3 + $0x8] sm:$0x1] %vm3977, %v3986
          %v3989 = vrot.slane %v3831, 3
          %3990 = vrot.lane.b32.xlu0 %v3989, 64
          %v3991 = vpop.permute.xlu0 %3990
          %3993 = vst.msk [vmem:[#allocation3 + $0x8] sm:$0x1] %vm3984, %v3991
          %v3994 = vrot.slane %v3831, 4
          %3996 = vst.msk [vmem:[#allocation3 + $0x10] sm:$0x1] %vm3977, %v3994
          %v3997 = vrot.slane %v3831, 5
          %3998 = vrot.lane.b32.xlu0 %v3997, 64
          %v3999 = vpop.permute.xlu0 %3998
          %4001 = vst.msk [vmem:[#allocation3 + $0x10] sm:$0x1] %vm3984, %v3999
          %v4002 = vrot.slane %v3831, 6
          %4004 = vst.msk [vmem:[#allocation3 + $0x18] sm:$0x1] %vm3977, %v4002
          %v4005 = vrot.slane %v3831, 7
          %4006 = vrot.lane.b32.xlu0 %v4005, 64
          %v4007 = vpop.permute.xlu0 %4006
          %4009 = vst.msk [vmem:[#allocation3 + $0x18] sm:$0x1] %vm3984, %v4007
          %4010 = vst.msk [vmem:[#allocation3 + $0x20] sm:$0x1] %vm3977, %v3832
          %v4012 = vrot.slane %v3832, 1
          %4013 = vrot.lane.b32.xlu0 %v4012, 64
          %v4014 = vpop.permute.xlu0 %4013
          %4016 = vst.msk [vmem:[#allocation3 + $0x20] sm:$0x1] %vm3984, %v4014
          %v4017 = vrot.slane %v3832, 2
          %4019 = vst.msk [vmem:[#allocation3 + $0x28] sm:$0x1] %vm3977, %v4017
          %v4020 = vrot.slane %v3832, 3
          %4021 = vrot.lane.b32.xlu0 %v4020, 64
          %v4022 = vpop.permute.xlu0 %4021
          %4024 = vst.msk [vmem:[#allocation3 + $0x28] sm:$0x1] %vm3984, %v4022
          %v4025 = vrot.slane %v3832, 4
          %4027 = vst.msk [vmem:[#allocation3 + $0x30] sm:$0x1] %vm3977, %v4025
          %v4028 = vrot.slane %v3832, 5
          %4029 = vrot.lane.b32.xlu0 %v4028, 64
          %v4030 = vpop.permute.xlu0 %4029
          %4032 = vst.msk [vmem:[#allocation3 + $0x30] sm:$0x1] %vm3984, %v4030
          %v4033 = vrot.slane %v3832, 6
          %4035 = vst.msk [vmem:[#allocation3 + $0x38] sm:$0x1] %vm3977, %v4033
          %v4036 = vrot.slane %v3832, 7
          %4037 = vrot.lane.b32.xlu0 %v4036, 64
          %v4038 = vpop.permute.xlu0 %4037
          %4040 = vst.msk [vmem:[#allocation3 + $0x38] sm:$0x1] %vm3984, %v4038
          %4041 = vst.msk [vmem:[#allocation3 + $0x40] sm:$0x1] %vm3977, %v3833
          %v4043 = vrot.slane %v3833, 1
          %4044 = vrot.lane.b32.xlu0 %v4043, 64
          %v4045 = vpop.permute.xlu0 %4044
          %4047 = vst.msk [vmem:[#allocation3 + $0x40] sm:$0x1] %vm3984, %v4045
          %v4048 = vrot.slane %v3833, 2
          %4050 = vst.msk [vmem:[#allocation3 + $0x48] sm:$0x1] %vm3977, %v4048
          %v4051 = vrot.slane %v3833, 3
          %4052 = vrot.lane.b32.xlu0 %v4051, 64
          %v4053 = vpop.permute.xlu0 %4052
          %4055 = vst.msk [vmem:[#allocation3 + $0x48] sm:$0x1] %vm3984, %v4053
          %v4056 = vrot.slane %v3833, 4
          %4058 = vst.msk [vmem:[#allocation3 + $0x50] sm:$0x1] %vm3977, %v4056
          %v4059 = vrot.slane %v3833, 5
          %4060 = vrot.lane.b32.xlu0 %v4059, 64
          %v4061 = vpop.permute.xlu0 %4060
          %4063 = vst.msk [vmem:[#allocation3 + $0x50] sm:$0x1] %vm3984, %v4061
          %v4064 = vrot.slane %v3833, 6
          %4066 = vst.msk [vmem:[#allocation3 + $0x58] sm:$0x1] %vm3977, %v4064
          %v4067 = vrot.slane %v3833, 7
          %4068 = vrot.lane.b32.xlu0 %v4067, 64
          %v4069 = vpop.permute.xlu0 %4068
          %4071 = vst.msk [vmem:[#allocation3 + $0x58] sm:$0x1] %vm3984, %v4069
          %4072 = vst.msk [vmem:[#allocation3 + $0x60] sm:$0x1] %vm3977, %v3834
          %v4074 = vrot.slane %v3834, 1
          %4075 = vrot.lane.b32.xlu0 %v4074, 64
          %v4076 = vpop.permute.xlu0 %4075
          %4078 = vst.msk [vmem:[#allocation3 + $0x60] sm:$0x1] %vm3984, %v4076
          %v4079 = vrot.slane %v3834, 2
          %4081 = vst.msk [vmem:[#allocation3 + $0x68] sm:$0x1] %vm3977, %v4079
          %v4082 = vrot.slane %v3834, 3
          %4083 = vrot.lane.b32.xlu0 %v4082, 64
          %v4084 = vpop.permute.xlu0 %4083
          %4086 = vst.msk [vmem:[#allocation3 + $0x68] sm:$0x1] %vm3984, %v4084
          %v4087 = vrot.slane %v3834, 4
          %4089 = vst.msk [vmem:[#allocation3 + $0x70] sm:$0x1] %vm3977, %v4087
          %v4090 = vrot.slane %v3834, 5
          %4091 = vrot.lane.b32.xlu0 %v4090, 64
          %v4092 = vpop.permute.xlu0 %4091
          %4094 = vst.msk [vmem:[#allocation3 + $0x70] sm:$0x1] %vm3984, %v4092
          %v4095 = vrot.slane %v3834, 6
          %4097 = vst.msk [vmem:[#allocation3 + $0x78] sm:$0x1] %vm3977, %v4095
          %v4098 = vrot.slane %v3834, 7
          %4099 = vrot.lane.b32.xlu0 %v4098, 64
          %v4100 = vpop.permute.xlu0 %4099
          %4102 = vst.msk [vmem:[#allocation3 + $0x78] sm:$0x1] %vm3984, %v4100
          %4103 = vst.msk [vmem:[#allocation3 + $0x80] sm:$0x1] %vm3977, %v3835
          %v4105 = vrot.slane %v3835, 1
          %4106 = vrot.lane.b32.xlu0 %v4105, 64
          %v4107 = vpop.permute.xlu0 %4106
          %4109 = vst.msk [vmem:[#allocation3 + $0x80] sm:$0x1] %vm3984, %v4107
          %v4110 = vrot.slane %v3835, 2
          %4112 = vst.msk [vmem:[#allocation3 + $0x88] sm:$0x1] %vm3977, %v4110
          %v4113 = vrot.slane %v3835, 3
          %4114 = vrot.lane.b32.xlu0 %v4113, 64
          %v4115 = vpop.permute.xlu0 %4114
          %4117 = vst.msk [vmem:[#allocation3 + $0x88] sm:$0x1] %vm3984, %v4115
          %v4118 = vrot.slane %v3835, 4
          %4120 = vst.msk [vmem:[#allocation3 + $0x90] sm:$0x1] %vm3977, %v4118
          %v4121 = vrot.slane %v3835, 5
          %4122 = vrot.lane.b32.xlu0 %v4121, 64
          %v4123 = vpop.permute.xlu0 %4122
          %4125 = vst.msk [vmem:[#allocation3 + $0x90] sm:$0x1] %vm3984, %v4123
          %v4126 = vrot.slane %v3835, 6
          %4128 = vst.msk [vmem:[#allocation3 + $0x98] sm:$0x1] %vm3977, %v4126
          %v4129 = vrot.slane %v3835, 7
          %4130 = vrot.lane.b32.xlu0 %v4129, 64
          %v4131 = vpop.permute.xlu0 %4130
          %4133 = vst.msk [vmem:[#allocation3 + $0x98] sm:$0x1] %vm3984, %v4131
          %4134 = vst.msk [vmem:[#allocation3 + $0xa0] sm:$0x1] %vm3977, %v3836
          %v4136 = vrot.slane %v3836, 1
          %4137 = vrot.lane.b32.xlu0 %v4136, 64
          %v4138 = vpop.permute.xlu0 %4137
          %4140 = vst.msk [vmem:[#allocation3 + $0xa0] sm:$0x1] %vm3984, %v4138
          %v4141 = vrot.slane %v3836, 2
          %4143 = vst.msk [vmem:[#allocation3 + $0xa8] sm:$0x1] %vm3977, %v4141
          %v4144 = vrot.slane %v3836, 3
          %4145 = vrot.lane.b32.xlu0 %v4144, 64
          %v4146 = vpop.permute.xlu0 %4145
          %4148 = vst.msk [vmem:[#allocation3 + $0xa8] sm:$0x1] %vm3984, %v4146
          %v4149 = vrot.slane %v3836, 4
          %4151 = vst.msk [vmem:[#allocation3 + $0xb0] sm:$0x1] %vm3977, %v4149
          %v4152 = vrot.slane %v3836, 5
          %4153 = vrot.lane.b32.xlu0 %v4152, 64
          %v4154 = vpop.permute.xlu0 %4153
          %4156 = vst.msk [vmem:[#allocation3 + $0xb0] sm:$0x1] %vm3984, %v4154
          %v4157 = vrot.slane %v3836, 6
          %4159 = vst.msk [vmem:[#allocation3 + $0xb8] sm:$0x1] %vm3977, %v4157
          %v4160 = vrot.slane %v3836, 7
          %4161 = vrot.lane.b32.xlu0 %v4160, 64
          %v4162 = vpop.permute.xlu0 %4161
          %4164 = vst.msk [vmem:[#allocation3 + $0xb8] sm:$0x1] %vm3984, %v4162
          %4165 = vst.msk [vmem:[#allocation3 + $0xc0] sm:$0x1] %vm3977, %v3837
          %v4167 = vrot.slane %v3837, 1
          %4168 = vrot.lane.b32.xlu0 %v4167, 64
          %v4169 = vpop.permute.xlu0 %4168
          %4171 = vst.msk [vmem:[#allocation3 + $0xc0] sm:$0x1] %vm3984, %v4169
          %v4172 = vrot.slane %v3837, 2
          %4174 = vst.msk [vmem:[#allocation3 + $0xc8] sm:$0x1] %vm3977, %v4172
          %v4175 = vrot.slane %v3837, 3
          %4176 = vrot.lane.b32.xlu0 %v4175, 64
          %v4177 = vpop.permute.xlu0 %4176
          %4179 = vst.msk [vmem:[#allocation3 + $0xc8] sm:$0x1] %vm3984, %v4177
          %v4180 = vrot.slane %v3837, 4
          %4182 = vst.msk [vmem:[#allocation3 + $0xd0] sm:$0x1] %vm3977, %v4180
          %v4183 = vrot.slane %v3837, 5
          %4184 = vrot.lane.b32.xlu0 %v4183, 64
          %v4185 = vpop.permute.xlu0 %4184
          %4187 = vst.msk [vmem:[#allocation3 + $0xd0] sm:$0x1] %vm3984, %v4185
          %v4188 = vrot.slane %v3837, 6
          %4190 = vst.msk [vmem:[#allocation3 + $0xd8] sm:$0x1] %vm3977, %v4188
          %v4191 = vrot.slane %v3837, 7
          %4192 = vrot.lane.b32.xlu0 %v4191, 64
          %v4193 = vpop.permute.xlu0 %4192
          %4195 = vst.msk [vmem:[#allocation3 + $0xd8] sm:$0x1] %vm3984, %v4193
          %4196 = vst.msk [vmem:[#allocation3 + $0xe0] sm:$0x1] %vm3977, %v3838
          %v4198 = vrot.slane %v3838, 1
          %4199 = vrot.lane.b32.xlu0 %v4198, 64
          %v4200 = vpop.permute.xlu0 %4199
          %4202 = vst.msk [vmem:[#allocation3 + $0xe0] sm:$0x1] %vm3984, %v4200
          %v4203 = vrot.slane %v3838, 2
          %4205 = vst.msk [vmem:[#allocation3 + $0xe8] sm:$0x1] %vm3977, %v4203
          %v4206 = vrot.slane %v3838, 3
          %4207 = vrot.lane.b32.xlu0 %v4206, 64
          %v4208 = vpop.permute.xlu0 %4207
          %4210 = vst.msk [vmem:[#allocation3 + $0xe8] sm:$0x1] %vm3984, %v4208
          %v4211 = vrot.slane %v3838, 4
          %4213 = vst.msk [vmem:[#allocation3 + $0xf0] sm:$0x1] %vm3977, %v4211
          %v4214 = vrot.slane %v3838, 5
          %4215 = vrot.lane.b32.xlu0 %v4214, 64
          %v4216 = vpop.permute.xlu0 %4215
          %4218 = vst.msk [vmem:[#allocation3 + $0xf0] sm:$0x1] %vm3984, %v4216
          %v4219 = vrot.slane %v3838, 6
          %4221 = vst.msk [vmem:[#allocation3 + $0xf8] sm:$0x1] %vm3977, %v4219
          %v4222 = vrot.slane %v3838, 7
          %4223 = vrot.lane.b32.xlu0 %v4222, 64
          %v4224 = vpop.permute.xlu0 %4223
          %4226 = vst.msk [vmem:[#allocation3 + $0xf8] sm:$0x1] %vm3984, %v4224
          %v4227 = vld [vmem:[#allocation3] sm:$0xff]
          %v4228 = vld [vmem:[#allocation3 + $0x8] sm:$0xff]
          %v4229 = vld [vmem:[#allocation3 + $0x10] sm:$0xff]
          %v4230 = vld [vmem:[#allocation3 + $0x18] sm:$0xff]
          %v4231 = vld [vmem:[#allocation3 + $0x20] sm:$0xff]
          %v4232 = vld [vmem:[#allocation3 + $0x28] sm:$0xff]
          %v4233 = vld [vmem:[#allocation3 + $0x30] sm:$0xff]
          %v4234 = vld [vmem:[#allocation3 + $0x38] sm:$0xff]
          %v4235 = vld [vmem:[#allocation3 + $0x40] sm:$0xff]
          %v4236 = vld [vmem:[#allocation3 + $0x48] sm:$0xff]
          %v4237 = vld [vmem:[#allocation3 + $0x50] sm:$0xff]
          %v4238 = vld [vmem:[#allocation3 + $0x58] sm:$0xff]
          %v4239 = vld [vmem:[#allocation3 + $0x60] sm:$0xff]
          %v4240 = vld [vmem:[#allocation3 + $0x68] sm:$0xff]
          %v4241 = vld [vmem:[#allocation3 + $0x70] sm:$0xff]
          %v4242 = vld [vmem:[#allocation3 + $0x78] sm:$0xff]
          %v4243 = vld [vmem:[#allocation3 + $0x80] sm:$0xff]
          %v4244 = vld [vmem:[#allocation3 + $0x88] sm:$0xff]
          %v4245 = vld [vmem:[#allocation3 + $0x90] sm:$0xff]
          %v4246 = vld [vmem:[#allocation3 + $0x98] sm:$0xff]
          %v4247 = vld [vmem:[#allocation3 + $0xa0] sm:$0xff]
          %v4248 = vld [vmem:[#allocation3 + $0xa8] sm:$0xff]
          %v4249 = vld [vmem:[#allocation3 + $0xb0] sm:$0xff]
          %v4250 = vld [vmem:[#allocation3 + $0xb8] sm:$0xff]
          %v4251 = vld [vmem:[#allocation3 + $0xc0] sm:$0xff]
          %v4252 = vld [vmem:[#allocation3 + $0xc8] sm:$0xff]
          %v4253 = vld [vmem:[#allocation3 + $0xd0] sm:$0xff]
          %v4254 = vld [vmem:[#allocation3 + $0xd8] sm:$0xff]
          %v4255 = vld [vmem:[#allocation3 + $0xe0] sm:$0xff]
          %v4256 = vld [vmem:[#allocation3 + $0xe8] sm:$0xff]
          %v4257 = vld [vmem:[#allocation3 + $0xf0] sm:$0xff]
          %v4258 = vld [vmem:[#allocation3 + $0xf8] sm:$0xff]
          %v4259 = vpack.c.bf16 %v4227, %v4227
          %v4260 = vpack.c.bf16 %v4228, %v4228
          %v4261 = vpack.c.bf16 %v4229, %v4229
          %v4262 = vpack.c.bf16 %v4230, %v4230
          %v4263 = vpack.c.bf16 %v4231, %v4231
          %v4264 = vpack.c.bf16 %v4232, %v4232
          %v4265 = vpack.c.bf16 %v4233, %v4233
          %v4266 = vpack.c.bf16 %v4234, %v4234
          %v4267 = vpack.c.bf16 %v4235, %v4235
          %v4268 = vpack.c.bf16 %v4236, %v4236
          %v4269 = vpack.c.bf16 %v4237, %v4237
          %v4270 = vpack.c.bf16 %v4238, %v4238
          %v4271 = vpack.c.bf16 %v4239, %v4239
          %v4272 = vpack.c.bf16 %v4240, %v4240
          %v4273 = vpack.c.bf16 %v4241, %v4241
          %v4274 = vpack.c.bf16 %v4242, %v4242
          %v4275 = vpack.c.bf16 %v4243, %v4243
          %v4276 = vpack.c.bf16 %v4244, %v4244
          %v4277 = vpack.c.bf16 %v4245, %v4245
          %v4278 = vpack.c.bf16 %v4246, %v4246
          %v4279 = vpack.c.bf16 %v4247, %v4247
          %v4280 = vpack.c.bf16 %v4248, %v4248
          %v4281 = vpack.c.bf16 %v4249, %v4249
          %v4282 = vpack.c.bf16 %v4250, %v4250
          %v4283 = vpack.c.bf16 %v4251, %v4251
          %v4284 = vpack.c.bf16 %v4252, %v4252
          %v4285 = vpack.c.bf16 %v4253, %v4253
          %v4286 = vpack.c.bf16 %v4254, %v4254
          %v4287 = vpack.c.bf16 %v4255, %v4255
          %v4288 = vpack.c.bf16 %v4256, %v4256
          %v4289 = vpack.c.bf16 %v4257, %v4257
          %v4290 = vpack.c.bf16 %v4258, %v4258
          %v4291 = vld [vmem:[%s3] sm:$0xf]
          %v4292 = vld [vmem:[%s3 + $0x4] sm:$0xf]
          %v4293 = vld [vmem:[%s3 + $0x8] sm:$0xf]
          %v4294 = vld [vmem:[%s3 + $0xc] sm:$0xf]
          %v4295 = vld [vmem:[%s3 + $0x10] sm:$0xf]
          %v4296 = vld [vmem:[%s3 + $0x14] sm:$0xf]
          %v4297 = vld [vmem:[%s3 + $0x18] sm:$0xf]
          %v4298 = vld [vmem:[%s3 + $0x1c] sm:$0xf]
          %v4299 = vld [vmem:[%s3 + $0x20] sm:$0xf]
          %v4300 = vld [vmem:[%s3 + $0x24] sm:$0xf]
          %v4301 = vld [vmem:[%s3 + $0x28] sm:$0xf]
          %v4302 = vld [vmem:[%s3 + $0x2c] sm:$0xf]
          %v4303 = vld [vmem:[%s3 + $0x30] sm:$0xf]
          %v4304 = vld [vmem:[%s3 + $0x34] sm:$0xf]
          %v4305 = vld [vmem:[%s3 + $0x38] sm:$0xf]
          %v4306 = vld [vmem:[%s3 + $0x3c] sm:$0xf]
          %v4307 = vld [vmem:[%s3 + $0x40] sm:$0xf]
          %v4308 = vld [vmem:[%s3 + $0x44] sm:$0xf]
          %v4309 = vld [vmem:[%s3 + $0x48] sm:$0xf]
          %v4310 = vld [vmem:[%s3 + $0x4c] sm:$0xf]
          %v4311 = vld [vmem:[%s3 + $0x50] sm:$0xf]
          %v4312 = vld [vmem:[%s3 + $0x54] sm:$0xf]
          %v4313 = vld [vmem:[%s3 + $0x58] sm:$0xf]
          %v4314 = vld [vmem:[%s3 + $0x5c] sm:$0xf]
          %v4315 = vld [vmem:[%s3 + $0x60] sm:$0xf]
          %v4316 = vld [vmem:[%s3 + $0x64] sm:$0xf]
          %v4317 = vld [vmem:[%s3 + $0x68] sm:$0xf]
          %v4318 = vld [vmem:[%s3 + $0x6c] sm:$0xf]
          %v4319 = vld [vmem:[%s3 + $0x70] sm:$0xf]
          %v4320 = vld [vmem:[%s3 + $0x74] sm:$0xf]
          %v4321 = vld [vmem:[%s3 + $0x78] sm:$0xf]
          %v4322 = vld [vmem:[%s3 + $0x7c] sm:$0xf]
          %v4323 = vld [vmem:[%s3 + $0x80] sm:$0xf]
          %v4324 = vld [vmem:[%s3 + $0x84] sm:$0xf]
          %v4325 = vld [vmem:[%s3 + $0x88] sm:$0xf]
          %v4326 = vld [vmem:[%s3 + $0x8c] sm:$0xf]
          %v4327 = vld [vmem:[%s3 + $0x90] sm:$0xf]
          %v4328 = vld [vmem:[%s3 + $0x94] sm:$0xf]
          %v4329 = vld [vmem:[%s3 + $0x98] sm:$0xf]
          %v4330 = vld [vmem:[%s3 + $0x9c] sm:$0xf]
          %v4331 = vld [vmem:[%s3 + $0xa0] sm:$0xf]
          %v4332 = vld [vmem:[%s3 + $0xa4] sm:$0xf]
          %v4333 = vld [vmem:[%s3 + $0xa8] sm:$0xf]
          %v4334 = vld [vmem:[%s3 + $0xac] sm:$0xf]
          %v4335 = vld [vmem:[%s3 + $0xb0] sm:$0xf]
          %v4336 = vld [vmem:[%s3 + $0xb4] sm:$0xf]
          %v4337 = vld [vmem:[%s3 + $0xb8] sm:$0xf]
          %v4338 = vld [vmem:[%s3 + $0xbc] sm:$0xf]
          %v4339 = vld [vmem:[%s3 + $0xc0] sm:$0xf]
          %v4340 = vld [vmem:[%s3 + $0xc4] sm:$0xf]
          %v4341 = vld [vmem:[%s3 + $0xc8] sm:$0xf]
          %v4342 = vld [vmem:[%s3 + $0xcc] sm:$0xf]
          %v4343 = vld [vmem:[%s3 + $0xd0] sm:$0xf]
          %v4344 = vld [vmem:[%s3 + $0xd4] sm:$0xf]
          %v4345 = vld [vmem:[%s3 + $0xd8] sm:$0xf]
          %v4346 = vld [vmem:[%s3 + $0xdc] sm:$0xf]
          %v4347 = vld [vmem:[%s3 + $0xe0] sm:$0xf]
          %v4348 = vld [vmem:[%s3 + $0xe4] sm:$0xf]
          %v4349 = vld [vmem:[%s3 + $0xe8] sm:$0xf]
          %v4350 = vld [vmem:[%s3 + $0xec] sm:$0xf]
          %v4351 = vld [vmem:[%s3 + $0xf0] sm:$0xf]
          %v4352 = vld [vmem:[%s3 + $0xf4] sm:$0xf]
          %v4353 = vld [vmem:[%s3 + $0xf8] sm:$0xf]
          %v4354 = vld [vmem:[%s3 + $0xfc] sm:$0xf]
          %v4355 = vld [vmem:[%s3 + $0x100] sm:$0xf]
          %v4356 = vld [vmem:[%s3 + $0x104] sm:$0xf]
          %v4357 = vld [vmem:[%s3 + $0x108] sm:$0xf]
          %v4358 = vld [vmem:[%s3 + $0x10c] sm:$0xf]
          %v4359 = vld [vmem:[%s3 + $0x110] sm:$0xf]
          %v4360 = vld [vmem:[%s3 + $0x114] sm:$0xf]
          %v4361 = vld [vmem:[%s3 + $0x118] sm:$0xf]
          %v4362 = vld [vmem:[%s3 + $0x11c] sm:$0xf]
          %v4363 = vld [vmem:[%s3 + $0x120] sm:$0xf]
          %v4364 = vld [vmem:[%s3 + $0x124] sm:$0xf]
          %v4365 = vld [vmem:[%s3 + $0x128] sm:$0xf]
          %v4366 = vld [vmem:[%s3 + $0x12c] sm:$0xf]
          %v4367 = vld [vmem:[%s3 + $0x130] sm:$0xf]
          %v4368 = vld [vmem:[%s3 + $0x134] sm:$0xf]
          %v4369 = vld [vmem:[%s3 + $0x138] sm:$0xf]
          %v4370 = vld [vmem:[%s3 + $0x13c] sm:$0xf]
          %v4371 = vld [vmem:[%s3 + $0x140] sm:$0xf]
          %v4372 = vld [vmem:[%s3 + $0x144] sm:$0xf]
          %v4373 = vld [vmem:[%s3 + $0x148] sm:$0xf]
          %v4374 = vld [vmem:[%s3 + $0x14c] sm:$0xf]
          %v4375 = vld [vmem:[%s3 + $0x150] sm:$0xf]
          %v4376 = vld [vmem:[%s3 + $0x154] sm:$0xf]
          %v4377 = vld [vmem:[%s3 + $0x158] sm:$0xf]
          %v4378 = vld [vmem:[%s3 + $0x15c] sm:$0xf]
          %v4379 = vld [vmem:[%s3 + $0x160] sm:$0xf]
          %v4380 = vld [vmem:[%s3 + $0x164] sm:$0xf]
          %v4381 = vld [vmem:[%s3 + $0x168] sm:$0xf]
          %v4382 = vld [vmem:[%s3 + $0x16c] sm:$0xf]
          %v4383 = vld [vmem:[%s3 + $0x170] sm:$0xf]
          %v4384 = vld [vmem:[%s3 + $0x174] sm:$0xf]
          %v4385 = vld [vmem:[%s3 + $0x178] sm:$0xf]
          %v4386 = vld [vmem:[%s3 + $0x17c] sm:$0xf]
          %v4387 = vld [vmem:[%s3 + $0x180] sm:$0xf]
          %v4388 = vld [vmem:[%s3 + $0x184] sm:$0xf]
          %v4389 = vld [vmem:[%s3 + $0x188] sm:$0xf]
          %v4390 = vld [vmem:[%s3 + $0x18c] sm:$0xf]
          %v4391 = vld [vmem:[%s3 + $0x190] sm:$0xf]
          %v4392 = vld [vmem:[%s3 + $0x194] sm:$0xf]
          %v4393 = vld [vmem:[%s3 + $0x198] sm:$0xf]
          %v4394 = vld [vmem:[%s3 + $0x19c] sm:$0xf]
          %v4395 = vld [vmem:[%s3 + $0x1a0] sm:$0xf]
          %v4396 = vld [vmem:[%s3 + $0x1a4] sm:$0xf]
          %v4397 = vld [vmem:[%s3 + $0x1a8] sm:$0xf]
          %v4398 = vld [vmem:[%s3 + $0x1ac] sm:$0xf]
          %v4399 = vld [vmem:[%s3 + $0x1b0] sm:$0xf]
          %v4400 = vld [vmem:[%s3 + $0x1b4] sm:$0xf]
          %v4401 = vld [vmem:[%s3 + $0x1b8] sm:$0xf]
          %v4402 = vld [vmem:[%s3 + $0x1bc] sm:$0xf]
          %v4403 = vld [vmem:[%s3 + $0x1c0] sm:$0xf]
          %v4404 = vld [vmem:[%s3 + $0x1c4] sm:$0xf]
          %v4405 = vld [vmem:[%s3 + $0x1c8] sm:$0xf]
          %v4406 = vld [vmem:[%s3 + $0x1cc] sm:$0xf]
          %v4407 = vld [vmem:[%s3 + $0x1d0] sm:$0xf]
          %v4408 = vld [vmem:[%s3 + $0x1d4] sm:$0xf]
          %v4409 = vld [vmem:[%s3 + $0x1d8] sm:$0xf]
          %v4410 = vld [vmem:[%s3 + $0x1dc] sm:$0xf]
          %v4411 = vld [vmem:[%s3 + $0x1e0] sm:$0xf]
          %v4412 = vld [vmem:[%s3 + $0x1e4] sm:$0xf]
          %v4413 = vld [vmem:[%s3 + $0x1e8] sm:$0xf]
          %v4414 = vld [vmem:[%s3 + $0x1ec] sm:$0xf]
          %v4415 = vld [vmem:[%s3 + $0x1f0] sm:$0xf]
          %v4416 = vld [vmem:[%s3 + $0x1f4] sm:$0xf]
          %v4417 = vld [vmem:[%s3 + $0x1f8] sm:$0xf]
          %v4418 = vld [vmem:[%s3 + $0x1fc] sm:$0xf]
          %v4419 = vld [vmem:[%s3 + $0x200] sm:$0xf]
          %v4420 = vld [vmem:[%s3 + $0x204] sm:$0xf]
          %v4421 = vld [vmem:[%s3 + $0x208] sm:$0xf]
          %v4422 = vld [vmem:[%s3 + $0x20c] sm:$0xf]
          %v4423 = vld [vmem:[%s3 + $0x210] sm:$0xf]
          %v4424 = vld [vmem:[%s3 + $0x214] sm:$0xf]
          %v4425 = vld [vmem:[%s3 + $0x218] sm:$0xf]
          %v4426 = vld [vmem:[%s3 + $0x21c] sm:$0xf]
          %v4427 = vld [vmem:[%s3 + $0x220] sm:$0xf]
          %v4428 = vld [vmem:[%s3 + $0x224] sm:$0xf]
          %v4429 = vld [vmem:[%s3 + $0x228] sm:$0xf]
          %v4430 = vld [vmem:[%s3 + $0x22c] sm:$0xf]
          %v4431 = vld [vmem:[%s3 + $0x230] sm:$0xf]
          %v4432 = vld [vmem:[%s3 + $0x234] sm:$0xf]
          %v4433 = vld [vmem:[%s3 + $0x238] sm:$0xf]
          %v4434 = vld [vmem:[%s3 + $0x23c] sm:$0xf]
          %v4435 = vld [vmem:[%s3 + $0x240] sm:$0xf]
          %v4436 = vld [vmem:[%s3 + $0x244] sm:$0xf]
          %v4437 = vld [vmem:[%s3 + $0x248] sm:$0xf]
          %v4438 = vld [vmem:[%s3 + $0x24c] sm:$0xf]
          %v4439 = vld [vmem:[%s3 + $0x250] sm:$0xf]
          %v4440 = vld [vmem:[%s3 + $0x254] sm:$0xf]
          %v4441 = vld [vmem:[%s3 + $0x258] sm:$0xf]
          %v4442 = vld [vmem:[%s3 + $0x25c] sm:$0xf]
          %v4443 = vld [vmem:[%s3 + $0x260] sm:$0xf]
          %v4444 = vld [vmem:[%s3 + $0x264] sm:$0xf]
          %v4445 = vld [vmem:[%s3 + $0x268] sm:$0xf]
          %v4446 = vld [vmem:[%s3 + $0x26c] sm:$0xf]
          %v4447 = vld [vmem:[%s3 + $0x270] sm:$0xf]
          %v4448 = vld [vmem:[%s3 + $0x274] sm:$0xf]
          %v4449 = vld [vmem:[%s3 + $0x278] sm:$0xf]
          %v4450 = vld [vmem:[%s3 + $0x27c] sm:$0xf]
          %v4451 = vld [vmem:[%s3 + $0x280] sm:$0xf]
          %v4452 = vld [vmem:[%s3 + $0x284] sm:$0xf]
          %v4453 = vld [vmem:[%s3 + $0x288] sm:$0xf]
          %v4454 = vld [vmem:[%s3 + $0x28c] sm:$0xf]
          %v4455 = vld [vmem:[%s3 + $0x290] sm:$0xf]
          %v4456 = vld [vmem:[%s3 + $0x294] sm:$0xf]
          %v4457 = vld [vmem:[%s3 + $0x298] sm:$0xf]
          %v4458 = vld [vmem:[%s3 + $0x29c] sm:$0xf]
          %v4459 = vld [vmem:[%s3 + $0x2a0] sm:$0xf]
          %v4460 = vld [vmem:[%s3 + $0x2a4] sm:$0xf]
          %v4461 = vld [vmem:[%s3 + $0x2a8] sm:$0xf]
          %v4462 = vld [vmem:[%s3 + $0x2ac] sm:$0xf]
          %v4463 = vld [vmem:[%s3 + $0x2b0] sm:$0xf]
          %v4464 = vld [vmem:[%s3 + $0x2b4] sm:$0xf]
          %v4465 = vld [vmem:[%s3 + $0x2b8] sm:$0xf]
          %v4466 = vld [vmem:[%s3 + $0x2bc] sm:$0xf]
          %v4467 = vld [vmem:[%s3 + $0x2c0] sm:$0xf]
          %v4468 = vld [vmem:[%s3 + $0x2c4] sm:$0xf]
          %v4469 = vld [vmem:[%s3 + $0x2c8] sm:$0xf]
          %v4470 = vld [vmem:[%s3 + $0x2cc] sm:$0xf]
          %v4471 = vld [vmem:[%s3 + $0x2d0] sm:$0xf]
          %v4472 = vld [vmem:[%s3 + $0x2d4] sm:$0xf]
          %v4473 = vld [vmem:[%s3 + $0x2d8] sm:$0xf]
          %v4474 = vld [vmem:[%s3 + $0x2dc] sm:$0xf]
          %v4475 = vld [vmem:[%s3 + $0x2e0] sm:$0xf]
          %v4476 = vld [vmem:[%s3 + $0x2e4] sm:$0xf]
          %v4477 = vld [vmem:[%s3 + $0x2e8] sm:$0xf]
          %v4478 = vld [vmem:[%s3 + $0x2ec] sm:$0xf]
          %v4479 = vld [vmem:[%s3 + $0x2f0] sm:$0xf]
          %v4480 = vld [vmem:[%s3 + $0x2f4] sm:$0xf]
          %v4481 = vld [vmem:[%s3 + $0x2f8] sm:$0xf]
          %v4482 = vld [vmem:[%s3 + $0x2fc] sm:$0xf]
          %v4483 = vld [vmem:[%s3 + $0x300] sm:$0xf]
          %v4484 = vld [vmem:[%s3 + $0x304] sm:$0xf]
          %v4485 = vld [vmem:[%s3 + $0x308] sm:$0xf]
          %v4486 = vld [vmem:[%s3 + $0x30c] sm:$0xf]
          %v4487 = vld [vmem:[%s3 + $0x310] sm:$0xf]
          %v4488 = vld [vmem:[%s3 + $0x314] sm:$0xf]
          %v4489 = vld [vmem:[%s3 + $0x318] sm:$0xf]
          %v4490 = vld [vmem:[%s3 + $0x31c] sm:$0xf]
          %v4491 = vld [vmem:[%s3 + $0x320] sm:$0xf]
          %v4492 = vld [vmem:[%s3 + $0x324] sm:$0xf]
          %v4493 = vld [vmem:[%s3 + $0x328] sm:$0xf]
          %v4494 = vld [vmem:[%s3 + $0x32c] sm:$0xf]
          %v4495 = vld [vmem:[%s3 + $0x330] sm:$0xf]
          %v4496 = vld [vmem:[%s3 + $0x334] sm:$0xf]
          %v4497 = vld [vmem:[%s3 + $0x338] sm:$0xf]
          %v4498 = vld [vmem:[%s3 + $0x33c] sm:$0xf]
          %v4499 = vld [vmem:[%s3 + $0x340] sm:$0xf]
          %v4500 = vld [vmem:[%s3 + $0x344] sm:$0xf]
          %v4501 = vld [vmem:[%s3 + $0x348] sm:$0xf]
          %v4502 = vld [vmem:[%s3 + $0x34c] sm:$0xf]
          %v4503 = vld [vmem:[%s3 + $0x350] sm:$0xf]
          %v4504 = vld [vmem:[%s3 + $0x354] sm:$0xf]
          %v4505 = vld [vmem:[%s3 + $0x358] sm:$0xf]
          %v4506 = vld [vmem:[%s3 + $0x35c] sm:$0xf]
          %v4507 = vld [vmem:[%s3 + $0x360] sm:$0xf]
          %v4508 = vld [vmem:[%s3 + $0x364] sm:$0xf]
          %v4509 = vld [vmem:[%s3 + $0x368] sm:$0xf]
          %v4510 = vld [vmem:[%s3 + $0x36c] sm:$0xf]
          %v4511 = vld [vmem:[%s3 + $0x370] sm:$0xf]
          %v4512 = vld [vmem:[%s3 + $0x374] sm:$0xf]
          %v4513 = vld [vmem:[%s3 + $0x378] sm:$0xf]
          %v4514 = vld [vmem:[%s3 + $0x37c] sm:$0xf]
          %v4515 = vld [vmem:[%s3 + $0x380] sm:$0xf]
          %v4516 = vld [vmem:[%s3 + $0x384] sm:$0xf]
          %v4517 = vld [vmem:[%s3 + $0x388] sm:$0xf]
          %v4518 = vld [vmem:[%s3 + $0x38c] sm:$0xf]
          %v4519 = vld [vmem:[%s3 + $0x390] sm:$0xf]
          %v4520 = vld [vmem:[%s3 + $0x394] sm:$0xf]
          %v4521 = vld [vmem:[%s3 + $0x398] sm:$0xf]
          %v4522 = vld [vmem:[%s3 + $0x39c] sm:$0xf]
          %v4523 = vld [vmem:[%s3 + $0x3a0] sm:$0xf]
          %v4524 = vld [vmem:[%s3 + $0x3a4] sm:$0xf]
          %v4525 = vld [vmem:[%s3 + $0x3a8] sm:$0xf]
          %v4526 = vld [vmem:[%s3 + $0x3ac] sm:$0xf]
          %v4527 = vld [vmem:[%s3 + $0x3b0] sm:$0xf]
          %v4528 = vld [vmem:[%s3 + $0x3b4] sm:$0xf]
          %v4529 = vld [vmem:[%s3 + $0x3b8] sm:$0xf]
          %v4530 = vld [vmem:[%s3 + $0x3bc] sm:$0xf]
          %v4531 = vld [vmem:[%s3 + $0x3c0] sm:$0xf]
          %v4532 = vld [vmem:[%s3 + $0x3c4] sm:$0xf]
          %v4533 = vld [vmem:[%s3 + $0x3c8] sm:$0xf]
          %v4534 = vld [vmem:[%s3 + $0x3cc] sm:$0xf]
          %v4535 = vld [vmem:[%s3 + $0x3d0] sm:$0xf]
          %v4536 = vld [vmem:[%s3 + $0x3d4] sm:$0xf]
          %v4537 = vld [vmem:[%s3 + $0x3d8] sm:$0xf]
          %v4538 = vld [vmem:[%s3 + $0x3dc] sm:$0xf]
          %v4539 = vld [vmem:[%s3 + $0x3e0] sm:$0xf]
          %v4540 = vld [vmem:[%s3 + $0x3e4] sm:$0xf]
          %v4541 = vld [vmem:[%s3 + $0x3e8] sm:$0xf]
          %v4542 = vld [vmem:[%s3 + $0x3ec] sm:$0xf]
          %v4543 = vld [vmem:[%s3 + $0x3f0] sm:$0xf]
          %v4544 = vld [vmem:[%s3 + $0x3f4] sm:$0xf]
          %v4545 = vld [vmem:[%s3 + $0x3f8] sm:$0xf]
          %v4546 = vld [vmem:[%s3 + $0x3fc] sm:$0xf]
          %v4547 = vld [vmem:[%s3 + $0x400] sm:$0xf]
          %v4548 = vld [vmem:[%s3 + $0x404] sm:$0xf]
          %v4549 = vld [vmem:[%s3 + $0x408] sm:$0xf]
          %v4550 = vld [vmem:[%s3 + $0x40c] sm:$0xf]
          %v4551 = vld [vmem:[%s3 + $0x410] sm:$0xf]
          %v4552 = vld [vmem:[%s3 + $0x414] sm:$0xf]
          %v4553 = vld [vmem:[%s3 + $0x418] sm:$0xf]
          %v4554 = vld [vmem:[%s3 + $0x41c] sm:$0xf]
          %v4555 = vld [vmem:[%s3 + $0x420] sm:$0xf]
          %v4556 = vld [vmem:[%s3 + $0x424] sm:$0xf]
          %v4557 = vld [vmem:[%s3 + $0x428] sm:$0xf]
          %v4558 = vld [vmem:[%s3 + $0x42c] sm:$0xf]
          %v4559 = vld [vmem:[%s3 + $0x430] sm:$0xf]
          %v4560 = vld [vmem:[%s3 + $0x434] sm:$0xf]
          %v4561 = vld [vmem:[%s3 + $0x438] sm:$0xf]
          %v4562 = vld [vmem:[%s3 + $0x43c] sm:$0xf]
          %v4563 = vld [vmem:[%s3 + $0x440] sm:$0xf]
          %v4564 = vld [vmem:[%s3 + $0x444] sm:$0xf]
          %v4565 = vld [vmem:[%s3 + $0x448] sm:$0xf]
          %v4566 = vld [vmem:[%s3 + $0x44c] sm:$0xf]
          %v4567 = vld [vmem:[%s3 + $0x450] sm:$0xf]
          %v4568 = vld [vmem:[%s3 + $0x454] sm:$0xf]
          %v4569 = vld [vmem:[%s3 + $0x458] sm:$0xf]
          %v4570 = vld [vmem:[%s3 + $0x45c] sm:$0xf]
          %v4571 = vld [vmem:[%s3 + $0x460] sm:$0xf]
          %v4572 = vld [vmem:[%s3 + $0x464] sm:$0xf]
          %v4573 = vld [vmem:[%s3 + $0x468] sm:$0xf]
          %v4574 = vld [vmem:[%s3 + $0x46c] sm:$0xf]
          %v4575 = vld [vmem:[%s3 + $0x470] sm:$0xf]
          %v4576 = vld [vmem:[%s3 + $0x474] sm:$0xf]
          %v4577 = vld [vmem:[%s3 + $0x478] sm:$0xf]
          %v4578 = vld [vmem:[%s3 + $0x47c] sm:$0xf]
          %v4579 = vld [vmem:[%s3 + $0x480] sm:$0xf]
          %v4580 = vld [vmem:[%s3 + $0x484] sm:$0xf]
          %v4581 = vld [vmem:[%s3 + $0x488] sm:$0xf]
          %v4582 = vld [vmem:[%s3 + $0x48c] sm:$0xf]
          %v4583 = vld [vmem:[%s3 + $0x490] sm:$0xf]
          %v4584 = vld [vmem:[%s3 + $0x494] sm:$0xf]
          %v4585 = vld [vmem:[%s3 + $0x498] sm:$0xf]
          %v4586 = vld [vmem:[%s3 + $0x49c] sm:$0xf]
          %v4587 = vld [vmem:[%s3 + $0x4a0] sm:$0xf]
          %v4588 = vld [vmem:[%s3 + $0x4a4] sm:$0xf]
          %v4589 = vld [vmem:[%s3 + $0x4a8] sm:$0xf]
          %v4590 = vld [vmem:[%s3 + $0x4ac] sm:$0xf]
          %v4591 = vld [vmem:[%s3 + $0x4b0] sm:$0xf]
          %v4592 = vld [vmem:[%s3 + $0x4b4] sm:$0xf]
          %v4593 = vld [vmem:[%s3 + $0x4b8] sm:$0xf]
          %v4594 = vld [vmem:[%s3 + $0x4bc] sm:$0xf]
          %v4595 = vld [vmem:[%s3 + $0x4c0] sm:$0xf]
          %v4596 = vld [vmem:[%s3 + $0x4c4] sm:$0xf]
          %v4597 = vld [vmem:[%s3 + $0x4c8] sm:$0xf]
          %v4598 = vld [vmem:[%s3 + $0x4cc] sm:$0xf]
          %v4599 = vld [vmem:[%s3 + $0x4d0] sm:$0xf]
          %v4600 = vld [vmem:[%s3 + $0x4d4] sm:$0xf]
          %v4601 = vld [vmem:[%s3 + $0x4d8] sm:$0xf]
          %v4602 = vld [vmem:[%s3 + $0x4dc] sm:$0xf]
          %v4603 = vld [vmem:[%s3 + $0x4e0] sm:$0xf]
          %v4604 = vld [vmem:[%s3 + $0x4e4] sm:$0xf]
          %v4605 = vld [vmem:[%s3 + $0x4e8] sm:$0xf]
          %v4606 = vld [vmem:[%s3 + $0x4ec] sm:$0xf]
          %v4607 = vld [vmem:[%s3 + $0x4f0] sm:$0xf]
          %v4608 = vld [vmem:[%s3 + $0x4f4] sm:$0xf]
          %v4609 = vld [vmem:[%s3 + $0x4f8] sm:$0xf]
          %v4610 = vld [vmem:[%s3 + $0x4fc] sm:$0xf]
          %v4611 = vld [vmem:[%s3 + $0x500] sm:$0xf]
          %v4612 = vld [vmem:[%s3 + $0x504] sm:$0xf]
          %v4613 = vld [vmem:[%s3 + $0x508] sm:$0xf]
          %v4614 = vld [vmem:[%s3 + $0x50c] sm:$0xf]
          %v4615 = vld [vmem:[%s3 + $0x510] sm:$0xf]
          %v4616 = vld [vmem:[%s3 + $0x514] sm:$0xf]
          %v4617 = vld [vmem:[%s3 + $0x518] sm:$0xf]
          %v4618 = vld [vmem:[%s3 + $0x51c] sm:$0xf]
          %v4619 = vld [vmem:[%s3 + $0x520] sm:$0xf]
          %v4620 = vld [vmem:[%s3 + $0x524] sm:$0xf]
          %v4621 = vld [vmem:[%s3 + $0x528] sm:$0xf]
          %v4622 = vld [vmem:[%s3 + $0x52c] sm:$0xf]
          %v4623 = vld [vmem:[%s3 + $0x530] sm:$0xf]
          %v4624 = vld [vmem:[%s3 + $0x534] sm:$0xf]
          %v4625 = vld [vmem:[%s3 + $0x538] sm:$0xf]
          %v4626 = vld [vmem:[%s3 + $0x53c] sm:$0xf]
          %v4627 = vld [vmem:[%s3 + $0x540] sm:$0xf]
          %v4628 = vld [vmem:[%s3 + $0x544] sm:$0xf]
          %v4629 = vld [vmem:[%s3 + $0x548] sm:$0xf]
          %v4630 = vld [vmem:[%s3 + $0x54c] sm:$0xf]
          %v4631 = vld [vmem:[%s3 + $0x550] sm:$0xf]
          %v4632 = vld [vmem:[%s3 + $0x554] sm:$0xf]
          %v4633 = vld [vmem:[%s3 + $0x558] sm:$0xf]
          %v4634 = vld [vmem:[%s3 + $0x55c] sm:$0xf]
          %v4635 = vld [vmem:[%s3 + $0x560] sm:$0xf]
          %v4636 = vld [vmem:[%s3 + $0x564] sm:$0xf]
          %v4637 = vld [vmem:[%s3 + $0x568] sm:$0xf]
          %v4638 = vld [vmem:[%s3 + $0x56c] sm:$0xf]
          %v4639 = vld [vmem:[%s3 + $0x570] sm:$0xf]
          %v4640 = vld [vmem:[%s3 + $0x574] sm:$0xf]
          %v4641 = vld [vmem:[%s3 + $0x578] sm:$0xf]
          %v4642 = vld [vmem:[%s3 + $0x57c] sm:$0xf]
          %v4643 = vld [vmem:[%s3 + $0x580] sm:$0xf]
          %v4644 = vld [vmem:[%s3 + $0x584] sm:$0xf]
          %v4645 = vld [vmem:[%s3 + $0x588] sm:$0xf]
          %v4646 = vld [vmem:[%s3 + $0x58c] sm:$0xf]
          %v4647 = vld [vmem:[%s3 + $0x590] sm:$0xf]
          %v4648 = vld [vmem:[%s3 + $0x594] sm:$0xf]
          %v4649 = vld [vmem:[%s3 + $0x598] sm:$0xf]
          %v4650 = vld [vmem:[%s3 + $0x59c] sm:$0xf]
          %v4651 = vld [vmem:[%s3 + $0x5a0] sm:$0xf]
          %v4652 = vld [vmem:[%s3 + $0x5a4] sm:$0xf]
          %v4653 = vld [vmem:[%s3 + $0x5a8] sm:$0xf]
          %v4654 = vld [vmem:[%s3 + $0x5ac] sm:$0xf]
          %v4655 = vld [vmem:[%s3 + $0x5b0] sm:$0xf]
          %v4656 = vld [vmem:[%s3 + $0x5b4] sm:$0xf]
          %v4657 = vld [vmem:[%s3 + $0x5b8] sm:$0xf]
          %v4658 = vld [vmem:[%s3 + $0x5bc] sm:$0xf]
          %v4659 = vld [vmem:[%s3 + $0x5c0] sm:$0xf]
          %v4660 = vld [vmem:[%s3 + $0x5c4] sm:$0xf]
          %v4661 = vld [vmem:[%s3 + $0x5c8] sm:$0xf]
          %v4662 = vld [vmem:[%s3 + $0x5cc] sm:$0xf]
          %v4663 = vld [vmem:[%s3 + $0x5d0] sm:$0xf]
          %v4664 = vld [vmem:[%s3 + $0x5d4] sm:$0xf]
          %v4665 = vld [vmem:[%s3 + $0x5d8] sm:$0xf]
          %v4666 = vld [vmem:[%s3 + $0x5dc] sm:$0xf]
          %v4667 = vld [vmem:[%s3 + $0x5e0] sm:$0xf]
          %v4668 = vld [vmem:[%s3 + $0x5e4] sm:$0xf]
          %v4669 = vld [vmem:[%s3 + $0x5e8] sm:$0xf]
          %v4670 = vld [vmem:[%s3 + $0x5ec] sm:$0xf]
          %v4671 = vld [vmem:[%s3 + $0x5f0] sm:$0xf]
          %v4672 = vld [vmem:[%s3 + $0x5f4] sm:$0xf]
          %v4673 = vld [vmem:[%s3 + $0x5f8] sm:$0xf]
          %v4674 = vld [vmem:[%s3 + $0x5fc] sm:$0xf]
          %v4675 = vld [vmem:[%s3 + $0x600] sm:$0xf]
          %v4676 = vld [vmem:[%s3 + $0x604] sm:$0xf]
          %v4677 = vld [vmem:[%s3 + $0x608] sm:$0xf]
          %v4678 = vld [vmem:[%s3 + $0x60c] sm:$0xf]
          %v4679 = vld [vmem:[%s3 + $0x610] sm:$0xf]
          %v4680 = vld [vmem:[%s3 + $0x614] sm:$0xf]
          %v4681 = vld [vmem:[%s3 + $0x618] sm:$0xf]
          %v4682 = vld [vmem:[%s3 + $0x61c] sm:$0xf]
          %v4683 = vld [vmem:[%s3 + $0x620] sm:$0xf]
          %v4684 = vld [vmem:[%s3 + $0x624] sm:$0xf]
          %v4685 = vld [vmem:[%s3 + $0x628] sm:$0xf]
          %v4686 = vld [vmem:[%s3 + $0x62c] sm:$0xf]
          %v4687 = vld [vmem:[%s3 + $0x630] sm:$0xf]
          %v4688 = vld [vmem:[%s3 + $0x634] sm:$0xf]
          %v4689 = vld [vmem:[%s3 + $0x638] sm:$0xf]
          %v4690 = vld [vmem:[%s3 + $0x63c] sm:$0xf]
          %v4691 = vld [vmem:[%s3 + $0x640] sm:$0xf]
          %v4692 = vld [vmem:[%s3 + $0x644] sm:$0xf]
          %v4693 = vld [vmem:[%s3 + $0x648] sm:$0xf]
          %v4694 = vld [vmem:[%s3 + $0x64c] sm:$0xf]
          %v4695 = vld [vmem:[%s3 + $0x650] sm:$0xf]
          %v4696 = vld [vmem:[%s3 + $0x654] sm:$0xf]
          %v4697 = vld [vmem:[%s3 + $0x658] sm:$0xf]
          %v4698 = vld [vmem:[%s3 + $0x65c] sm:$0xf]
          %v4699 = vld [vmem:[%s3 + $0x660] sm:$0xf]
          %v4700 = vld [vmem:[%s3 + $0x664] sm:$0xf]
          %v4701 = vld [vmem:[%s3 + $0x668] sm:$0xf]
          %v4702 = vld [vmem:[%s3 + $0x66c] sm:$0xf]
          %v4703 = vld [vmem:[%s3 + $0x670] sm:$0xf]
          %v4704 = vld [vmem:[%s3 + $0x674] sm:$0xf]
          %v4705 = vld [vmem:[%s3 + $0x678] sm:$0xf]
          %v4706 = vld [vmem:[%s3 + $0x67c] sm:$0xf]
          %v4707 = vld [vmem:[%s3 + $0x680] sm:$0xf]
          %v4708 = vld [vmem:[%s3 + $0x684] sm:$0xf]
          %v4709 = vld [vmem:[%s3 + $0x688] sm:$0xf]
          %v4710 = vld [vmem:[%s3 + $0x68c] sm:$0xf]
          %v4711 = vld [vmem:[%s3 + $0x690] sm:$0xf]
          %v4712 = vld [vmem:[%s3 + $0x694] sm:$0xf]
          %v4713 = vld [vmem:[%s3 + $0x698] sm:$0xf]
          %v4714 = vld [vmem:[%s3 + $0x69c] sm:$0xf]
          %v4715 = vld [vmem:[%s3 + $0x6a0] sm:$0xf]
          %v4716 = vld [vmem:[%s3 + $0x6a4] sm:$0xf]
          %v4717 = vld [vmem:[%s3 + $0x6a8] sm:$0xf]
          %v4718 = vld [vmem:[%s3 + $0x6ac] sm:$0xf]
          %v4719 = vld [vmem:[%s3 + $0x6b0] sm:$0xf]
          %v4720 = vld [vmem:[%s3 + $0x6b4] sm:$0xf]
          %v4721 = vld [vmem:[%s3 + $0x6b8] sm:$0xf]
          %v4722 = vld [vmem:[%s3 + $0x6bc] sm:$0xf]
          %v4723 = vld [vmem:[%s3 + $0x6c0] sm:$0xf]
          %v4724 = vld [vmem:[%s3 + $0x6c4] sm:$0xf]
          %v4725 = vld [vmem:[%s3 + $0x6c8] sm:$0xf]
          %v4726 = vld [vmem:[%s3 + $0x6cc] sm:$0xf]
          %v4727 = vld [vmem:[%s3 + $0x6d0] sm:$0xf]
          %v4728 = vld [vmem:[%s3 + $0x6d4] sm:$0xf]
          %v4729 = vld [vmem:[%s3 + $0x6d8] sm:$0xf]
          %v4730 = vld [vmem:[%s3 + $0x6dc] sm:$0xf]
          %v4731 = vld [vmem:[%s3 + $0x6e0] sm:$0xf]
          %v4732 = vld [vmem:[%s3 + $0x6e4] sm:$0xf]
          %v4733 = vld [vmem:[%s3 + $0x6e8] sm:$0xf]
          %v4734 = vld [vmem:[%s3 + $0x6ec] sm:$0xf]
          %v4735 = vld [vmem:[%s3 + $0x6f0] sm:$0xf]
          %v4736 = vld [vmem:[%s3 + $0x6f4] sm:$0xf]
          %v4737 = vld [vmem:[%s3 + $0x6f8] sm:$0xf]
          %v4738 = vld [vmem:[%s3 + $0x6fc] sm:$0xf]
          %v4739 = vld [vmem:[%s3 + $0x700] sm:$0xf]
          %v4740 = vld [vmem:[%s3 + $0x704] sm:$0xf]
          %v4741 = vld [vmem:[%s3 + $0x708] sm:$0xf]
          %v4742 = vld [vmem:[%s3 + $0x70c] sm:$0xf]
          %v4743 = vld [vmem:[%s3 + $0x710] sm:$0xf]
          %v4744 = vld [vmem:[%s3 + $0x714] sm:$0xf]
          %v4745 = vld [vmem:[%s3 + $0x718] sm:$0xf]
          %v4746 = vld [vmem:[%s3 + $0x71c] sm:$0xf]
          %v4747 = vld [vmem:[%s3 + $0x720] sm:$0xf]
          %v4748 = vld [vmem:[%s3 + $0x724] sm:$0xf]
          %v4749 = vld [vmem:[%s3 + $0x728] sm:$0xf]
          %v4750 = vld [vmem:[%s3 + $0x72c] sm:$0xf]
          %v4751 = vld [vmem:[%s3 + $0x730] sm:$0xf]
          %v4752 = vld [vmem:[%s3 + $0x734] sm:$0xf]
          %v4753 = vld [vmem:[%s3 + $0x738] sm:$0xf]
          %v4754 = vld [vmem:[%s3 + $0x73c] sm:$0xf]
          %v4755 = vld [vmem:[%s3 + $0x740] sm:$0xf]
          %v4756 = vld [vmem:[%s3 + $0x744] sm:$0xf]
          %v4757 = vld [vmem:[%s3 + $0x748] sm:$0xf]
          %v4758 = vld [vmem:[%s3 + $0x74c] sm:$0xf]
          %v4759 = vld [vmem:[%s3 + $0x750] sm:$0xf]
          %v4760 = vld [vmem:[%s3 + $0x754] sm:$0xf]
          %v4761 = vld [vmem:[%s3 + $0x758] sm:$0xf]
          %v4762 = vld [vmem:[%s3 + $0x75c] sm:$0xf]
          %v4763 = vld [vmem:[%s3 + $0x760] sm:$0xf]
          %v4764 = vld [vmem:[%s3 + $0x764] sm:$0xf]
          %v4765 = vld [vmem:[%s3 + $0x768] sm:$0xf]
          %v4766 = vld [vmem:[%s3 + $0x76c] sm:$0xf]
          %v4767 = vld [vmem:[%s3 + $0x770] sm:$0xf]
          %v4768 = vld [vmem:[%s3 + $0x774] sm:$0xf]
          %v4769 = vld [vmem:[%s3 + $0x778] sm:$0xf]
          %v4770 = vld [vmem:[%s3 + $0x77c] sm:$0xf]
          %v4771 = vld [vmem:[%s3 + $0x780] sm:$0xf]
          %v4772 = vld [vmem:[%s3 + $0x784] sm:$0xf]
          %v4773 = vld [vmem:[%s3 + $0x788] sm:$0xf]
          %v4774 = vld [vmem:[%s3 + $0x78c] sm:$0xf]
          %v4775 = vld [vmem:[%s3 + $0x790] sm:$0xf]
          %v4776 = vld [vmem:[%s3 + $0x794] sm:$0xf]
          %v4777 = vld [vmem:[%s3 + $0x798] sm:$0xf]
          %v4778 = vld [vmem:[%s3 + $0x79c] sm:$0xf]
          %v4779 = vld [vmem:[%s3 + $0x7a0] sm:$0xf]
          %v4780 = vld [vmem:[%s3 + $0x7a4] sm:$0xf]
          %v4781 = vld [vmem:[%s3 + $0x7a8] sm:$0xf]
          %v4782 = vld [vmem:[%s3 + $0x7ac] sm:$0xf]
          %v4783 = vld [vmem:[%s3 + $0x7b0] sm:$0xf]
          %v4784 = vld [vmem:[%s3 + $0x7b4] sm:$0xf]
          %v4785 = vld [vmem:[%s3 + $0x7b8] sm:$0xf]
          %v4786 = vld [vmem:[%s3 + $0x7bc] sm:$0xf]
          %v4787 = vld [vmem:[%s3 + $0x7c0] sm:$0xf]
          %v4788 = vld [vmem:[%s3 + $0x7c4] sm:$0xf]
          %v4789 = vld [vmem:[%s3 + $0x7c8] sm:$0xf]
          %v4790 = vld [vmem:[%s3 + $0x7cc] sm:$0xf]
          %v4791 = vld [vmem:[%s3 + $0x7d0] sm:$0xf]
          %v4792 = vld [vmem:[%s3 + $0x7d4] sm:$0xf]
          %v4793 = vld [vmem:[%s3 + $0x7d8] sm:$0xf]
          %v4794 = vld [vmem:[%s3 + $0x7dc] sm:$0xf]
          %v4795 = vld [vmem:[%s3 + $0x7e0] sm:$0xf]
          %v4796 = vld [vmem:[%s3 + $0x7e4] sm:$0xf]
          %v4797 = vld [vmem:[%s3 + $0x7e8] sm:$0xf]
          %v4798 = vld [vmem:[%s3 + $0x7ec] sm:$0xf]
          %v4799 = vld [vmem:[%s3 + $0x7f0] sm:$0xf]
          %v4800 = vld [vmem:[%s3 + $0x7f4] sm:$0xf]
          %v4801 = vld [vmem:[%s3 + $0x7f8] sm:$0xf]
          %v4802 = vld [vmem:[%s3 + $0x7fc] sm:$0xf]
          %v5315 = vunpack.c.l.b16 %v4291
          %v5316 = vunpack.c.l.b16 %v4292
          %v5317 = vunpack.c.l.b16 %v4293
          %v5318 = vunpack.c.l.b16 %v4294
          %v5319 = vunpack.c.l.b16 %v4295
          %v5320 = vunpack.c.l.b16 %v4296
          %v5321 = vunpack.c.l.b16 %v4297
          %v5322 = vunpack.c.l.b16 %v4298
          %v5323 = vunpack.c.l.b16 %v4299
          %v5324 = vunpack.c.l.b16 %v4300
          %v5325 = vunpack.c.l.b16 %v4301
          %v5326 = vunpack.c.l.b16 %v4302
          %v5327 = vunpack.c.l.b16 %v4303
          %v5328 = vunpack.c.l.b16 %v4304
          %v5329 = vunpack.c.l.b16 %v4305
          %v5330 = vunpack.c.l.b16 %v4306
          %v5331 = vunpack.c.l.b16 %v4307
          %v5332 = vunpack.c.l.b16 %v4308
          %v5333 = vunpack.c.l.b16 %v4309
          %v5334 = vunpack.c.l.b16 %v4310
          %v5335 = vunpack.c.l.b16 %v4311
          %v5336 = vunpack.c.l.b16 %v4312
          %v5337 = vunpack.c.l.b16 %v4313
          %v5338 = vunpack.c.l.b16 %v4314
          %v5339 = vunpack.c.l.b16 %v4315
          %v5340 = vunpack.c.l.b16 %v4316
          %v5341 = vunpack.c.l.b16 %v4317
          %v5342 = vunpack.c.l.b16 %v4318
          %v5343 = vunpack.c.l.b16 %v4319
          %v5344 = vunpack.c.l.b16 %v4320
          %v5345 = vunpack.c.l.b16 %v4321
          %v5346 = vunpack.c.l.b16 %v4322
          %v5347 = vunpack.c.l.b16 %v4323
          %v5348 = vunpack.c.l.b16 %v4324
          %v5349 = vunpack.c.l.b16 %v4325
          %v5350 = vunpack.c.l.b16 %v4326
          %v5351 = vunpack.c.l.b16 %v4327
          %v5352 = vunpack.c.l.b16 %v4328
          %v5353 = vunpack.c.l.b16 %v4329
          %v5354 = vunpack.c.l.b16 %v4330
          %v5355 = vunpack.c.l.b16 %v4331
          %v5356 = vunpack.c.l.b16 %v4332
          %v5357 = vunpack.c.l.b16 %v4333
          %v5358 = vunpack.c.l.b16 %v4334
          %v5359 = vunpack.c.l.b16 %v4335
          %v5360 = vunpack.c.l.b16 %v4336
          %v5361 = vunpack.c.l.b16 %v4337
          %v5362 = vunpack.c.l.b16 %v4338
          %v5363 = vunpack.c.l.b16 %v4339
          %v5364 = vunpack.c.l.b16 %v4340
          %v5365 = vunpack.c.l.b16 %v4341
          %v5366 = vunpack.c.l.b16 %v4342
          %v5367 = vunpack.c.l.b16 %v4343
          %v5368 = vunpack.c.l.b16 %v4344
          %v5369 = vunpack.c.l.b16 %v4345
          %v5370 = vunpack.c.l.b16 %v4346
          %v5371 = vunpack.c.l.b16 %v4347
          %v5372 = vunpack.c.l.b16 %v4348
          %v5373 = vunpack.c.l.b16 %v4349
          %v5374 = vunpack.c.l.b16 %v4350
          %v5375 = vunpack.c.l.b16 %v4351
          %v5376 = vunpack.c.l.b16 %v4352
          %v5377 = vunpack.c.l.b16 %v4353
          %v5378 = vunpack.c.l.b16 %v4354
          %v5379 = vunpack.c.l.b16 %v4355
          %v5380 = vunpack.c.l.b16 %v4356
          %v5381 = vunpack.c.l.b16 %v4357
          %v5382 = vunpack.c.l.b16 %v4358
          %v5383 = vunpack.c.l.b16 %v4359
          %v5384 = vunpack.c.l.b16 %v4360
          %v5385 = vunpack.c.l.b16 %v4361
          %v5386 = vunpack.c.l.b16 %v4362
          %v5387 = vunpack.c.l.b16 %v4363
          %v5388 = vunpack.c.l.b16 %v4364
          %v5389 = vunpack.c.l.b16 %v4365
          %v5390 = vunpack.c.l.b16 %v4366
          %v5391 = vunpack.c.l.b16 %v4367
          %v5392 = vunpack.c.l.b16 %v4368
          %v5393 = vunpack.c.l.b16 %v4369
          %v5394 = vunpack.c.l.b16 %v4370
          %v5395 = vunpack.c.l.b16 %v4371
          %v5396 = vunpack.c.l.b16 %v4372
          %v5397 = vunpack.c.l.b16 %v4373
          %v5398 = vunpack.c.l.b16 %v4374
          %v5399 = vunpack.c.l.b16 %v4375
          %v5400 = vunpack.c.l.b16 %v4376
          %v5401 = vunpack.c.l.b16 %v4377
          %v5402 = vunpack.c.l.b16 %v4378
          %v5403 = vunpack.c.l.b16 %v4379
          %v5404 = vunpack.c.l.b16 %v4380
          %v5405 = vunpack.c.l.b16 %v4381
          %v5406 = vunpack.c.l.b16 %v4382
          %v5407 = vunpack.c.l.b16 %v4383
          %v5408 = vunpack.c.l.b16 %v4384
          %v5409 = vunpack.c.l.b16 %v4385
          %v5410 = vunpack.c.l.b16 %v4386
          %v5411 = vunpack.c.l.b16 %v4387
          %v5412 = vunpack.c.l.b16 %v4388
          %v5413 = vunpack.c.l.b16 %v4389
          %v5414 = vunpack.c.l.b16 %v4390
          %v5415 = vunpack.c.l.b16 %v4391
          %v5416 = vunpack.c.l.b16 %v4392
          %v5417 = vunpack.c.l.b16 %v4393
          %v5418 = vunpack.c.l.b16 %v4394
          %v5419 = vunpack.c.l.b16 %v4395
          %v5420 = vunpack.c.l.b16 %v4396
          %v5421 = vunpack.c.l.b16 %v4397
          %v5422 = vunpack.c.l.b16 %v4398
          %v5423 = vunpack.c.l.b16 %v4399
          %v5424 = vunpack.c.l.b16 %v4400
          %v5425 = vunpack.c.l.b16 %v4401
          %v5426 = vunpack.c.l.b16 %v4402
          %v5427 = vunpack.c.l.b16 %v4403
          %v5428 = vunpack.c.l.b16 %v4404
          %v5429 = vunpack.c.l.b16 %v4405
          %v5430 = vunpack.c.l.b16 %v4406
          %v5431 = vunpack.c.l.b16 %v4407
          %v5432 = vunpack.c.l.b16 %v4408
          %v5433 = vunpack.c.l.b16 %v4409
          %v5434 = vunpack.c.l.b16 %v4410
          %v5435 = vunpack.c.l.b16 %v4411
          %v5436 = vunpack.c.l.b16 %v4412
          %v5437 = vunpack.c.l.b16 %v4413
          %v5438 = vunpack.c.l.b16 %v4414
          %v5439 = vunpack.c.l.b16 %v4415
          %v5440 = vunpack.c.l.b16 %v4416
          %v5441 = vunpack.c.l.b16 %v4417
          %v5442 = vunpack.c.l.b16 %v4418
          %v5443 = vunpack.c.l.b16 %v4419
          %v5444 = vunpack.c.l.b16 %v4420
          %v5445 = vunpack.c.l.b16 %v4421
          %v5446 = vunpack.c.l.b16 %v4422
          %v5447 = vunpack.c.l.b16 %v4423
          %v5448 = vunpack.c.l.b16 %v4424
          %v5449 = vunpack.c.l.b16 %v4425
          %v5450 = vunpack.c.l.b16 %v4426
          %v5451 = vunpack.c.l.b16 %v4427
          %v5452 = vunpack.c.l.b16 %v4428
          %v5453 = vunpack.c.l.b16 %v4429
          %v5454 = vunpack.c.l.b16 %v4430
          %v5455 = vunpack.c.l.b16 %v4431
          %v5456 = vunpack.c.l.b16 %v4432
          %v5457 = vunpack.c.l.b16 %v4433
          %v5458 = vunpack.c.l.b16 %v4434
          %v5459 = vunpack.c.l.b16 %v4435
          %v5460 = vunpack.c.l.b16 %v4436
          %v5461 = vunpack.c.l.b16 %v4437
          %v5462 = vunpack.c.l.b16 %v4438
          %v5463 = vunpack.c.l.b16 %v4439
          %v5464 = vunpack.c.l.b16 %v4440
          %v5465 = vunpack.c.l.b16 %v4441
          %v5466 = vunpack.c.l.b16 %v4442
          %v5467 = vunpack.c.l.b16 %v4443
          %v5468 = vunpack.c.l.b16 %v4444
          %v5469 = vunpack.c.l.b16 %v4445
          %v5470 = vunpack.c.l.b16 %v4446
          %v5471 = vunpack.c.l.b16 %v4447
          %v5472 = vunpack.c.l.b16 %v4448
          %v5473 = vunpack.c.l.b16 %v4449
          %v5474 = vunpack.c.l.b16 %v4450
          %v5475 = vunpack.c.l.b16 %v4451
          %v5476 = vunpack.c.l.b16 %v4452
          %v5477 = vunpack.c.l.b16 %v4453
          %v5478 = vunpack.c.l.b16 %v4454
          %v5479 = vunpack.c.l.b16 %v4455
          %v5480 = vunpack.c.l.b16 %v4456
          %v5481 = vunpack.c.l.b16 %v4457
          %v5482 = vunpack.c.l.b16 %v4458
          %v5483 = vunpack.c.l.b16 %v4459
          %v5484 = vunpack.c.l.b16 %v4460
          %v5485 = vunpack.c.l.b16 %v4461
          %v5486 = vunpack.c.l.b16 %v4462
          %v5487 = vunpack.c.l.b16 %v4463
          %v5488 = vunpack.c.l.b16 %v4464
          %v5489 = vunpack.c.l.b16 %v4465
          %v5490 = vunpack.c.l.b16 %v4466
          %v5491 = vunpack.c.l.b16 %v4467
          %v5492 = vunpack.c.l.b16 %v4468
          %v5493 = vunpack.c.l.b16 %v4469
          %v5494 = vunpack.c.l.b16 %v4470
          %v5495 = vunpack.c.l.b16 %v4471
          %v5496 = vunpack.c.l.b16 %v4472
          %v5497 = vunpack.c.l.b16 %v4473
          %v5498 = vunpack.c.l.b16 %v4474
          %v5499 = vunpack.c.l.b16 %v4475
          %v5500 = vunpack.c.l.b16 %v4476
          %v5501 = vunpack.c.l.b16 %v4477
          %v5502 = vunpack.c.l.b16 %v4478
          %v5503 = vunpack.c.l.b16 %v4479
          %v5504 = vunpack.c.l.b16 %v4480
          %v5505 = vunpack.c.l.b16 %v4481
          %v5506 = vunpack.c.l.b16 %v4482
          %v5507 = vunpack.c.l.b16 %v4483
          %v5508 = vunpack.c.l.b16 %v4484
          %v5509 = vunpack.c.l.b16 %v4485
          %v5510 = vunpack.c.l.b16 %v4486
          %v5511 = vunpack.c.l.b16 %v4487
          %v5512 = vunpack.c.l.b16 %v4488
          %v5513 = vunpack.c.l.b16 %v4489
          %v5514 = vunpack.c.l.b16 %v4490
          %v5515 = vunpack.c.l.b16 %v4491
          %v5516 = vunpack.c.l.b16 %v4492
          %v5517 = vunpack.c.l.b16 %v4493
          %v5518 = vunpack.c.l.b16 %v4494
          %v5519 = vunpack.c.l.b16 %v4495
          %v5520 = vunpack.c.l.b16 %v4496
          %v5521 = vunpack.c.l.b16 %v4497
          %v5522 = vunpack.c.l.b16 %v4498
          %v5523 = vunpack.c.l.b16 %v4499
          %v5524 = vunpack.c.l.b16 %v4500
          %v5525 = vunpack.c.l.b16 %v4501
          %v5526 = vunpack.c.l.b16 %v4502
          %v5527 = vunpack.c.l.b16 %v4503
          %v5528 = vunpack.c.l.b16 %v4504
          %v5529 = vunpack.c.l.b16 %v4505
          %v5530 = vunpack.c.l.b16 %v4506
          %v5531 = vunpack.c.l.b16 %v4507
          %v5532 = vunpack.c.l.b16 %v4508
          %v5533 = vunpack.c.l.b16 %v4509
          %v5534 = vunpack.c.l.b16 %v4510
          %v5535 = vunpack.c.l.b16 %v4511
          %v5536 = vunpack.c.l.b16 %v4512
          %v5537 = vunpack.c.l.b16 %v4513
          %v5538 = vunpack.c.l.b16 %v4514
          %v5539 = vunpack.c.l.b16 %v4515
          %v5540 = vunpack.c.l.b16 %v4516
          %v5541 = vunpack.c.l.b16 %v4517
          %v5542 = vunpack.c.l.b16 %v4518
          %v5543 = vunpack.c.l.b16 %v4519
          %v5544 = vunpack.c.l.b16 %v4520
          %v5545 = vunpack.c.l.b16 %v4521
          %v5546 = vunpack.c.l.b16 %v4522
          %v5547 = vunpack.c.l.b16 %v4523
          %v5548 = vunpack.c.l.b16 %v4524
          %v5549 = vunpack.c.l.b16 %v4525
          %v5550 = vunpack.c.l.b16 %v4526
          %v5551 = vunpack.c.l.b16 %v4527
          %v5552 = vunpack.c.l.b16 %v4528
          %v5553 = vunpack.c.l.b16 %v4529
          %v5554 = vunpack.c.l.b16 %v4530
          %v5555 = vunpack.c.l.b16 %v4531
          %v5556 = vunpack.c.l.b16 %v4532
          %v5557 = vunpack.c.l.b16 %v4533
          %v5558 = vunpack.c.l.b16 %v4534
          %v5559 = vunpack.c.l.b16 %v4535
          %v5560 = vunpack.c.l.b16 %v4536
          %v5561 = vunpack.c.l.b16 %v4537
          %v5562 = vunpack.c.l.b16 %v4538
          %v5563 = vunpack.c.l.b16 %v4539
          %v5564 = vunpack.c.l.b16 %v4540
          %v5565 = vunpack.c.l.b16 %v4541
          %v5566 = vunpack.c.l.b16 %v4542
          %v5567 = vunpack.c.l.b16 %v4543
          %v5568 = vunpack.c.l.b16 %v4544
          %v5569 = vunpack.c.l.b16 %v4545
          %v5570 = vunpack.c.l.b16 %v4546
          %v5571 = vunpack.c.l.b16 %v4547
          %v5572 = vunpack.c.l.b16 %v4548
          %v5573 = vunpack.c.l.b16 %v4549
          %v5574 = vunpack.c.l.b16 %v4550
          %v5575 = vunpack.c.l.b16 %v4551
          %v5576 = vunpack.c.l.b16 %v4552
          %v5577 = vunpack.c.l.b16 %v4553
          %v5578 = vunpack.c.l.b16 %v4554
          %v5579 = vunpack.c.l.b16 %v4555
          %v5580 = vunpack.c.l.b16 %v4556
          %v5581 = vunpack.c.l.b16 %v4557
          %v5582 = vunpack.c.l.b16 %v4558
          %v5583 = vunpack.c.l.b16 %v4559
          %v5584 = vunpack.c.l.b16 %v4560
          %v5585 = vunpack.c.l.b16 %v4561
          %v5586 = vunpack.c.l.b16 %v4562
          %v5587 = vunpack.c.l.b16 %v4563
          %v5588 = vunpack.c.l.b16 %v4564
          %v5589 = vunpack.c.l.b16 %v4565
          %v5590 = vunpack.c.l.b16 %v4566
          %v5591 = vunpack.c.l.b16 %v4567
          %v5592 = vunpack.c.l.b16 %v4568
          %v5593 = vunpack.c.l.b16 %v4569
          %v5594 = vunpack.c.l.b16 %v4570
          %v5595 = vunpack.c.l.b16 %v4571
          %v5596 = vunpack.c.l.b16 %v4572
          %v5597 = vunpack.c.l.b16 %v4573
          %v5598 = vunpack.c.l.b16 %v4574
          %v5599 = vunpack.c.l.b16 %v4575
          %v5600 = vunpack.c.l.b16 %v4576
          %v5601 = vunpack.c.l.b16 %v4577
          %v5602 = vunpack.c.l.b16 %v4578
          %v5603 = vunpack.c.l.b16 %v4579
          %v5604 = vunpack.c.l.b16 %v4580
          %v5605 = vunpack.c.l.b16 %v4581
          %v5606 = vunpack.c.l.b16 %v4582
          %v5607 = vunpack.c.l.b16 %v4583
          %v5608 = vunpack.c.l.b16 %v4584
          %v5609 = vunpack.c.l.b16 %v4585
          %v5610 = vunpack.c.l.b16 %v4586
          %v5611 = vunpack.c.l.b16 %v4587
          %v5612 = vunpack.c.l.b16 %v4588
          %v5613 = vunpack.c.l.b16 %v4589
          %v5614 = vunpack.c.l.b16 %v4590
          %v5615 = vunpack.c.l.b16 %v4591
          %v5616 = vunpack.c.l.b16 %v4592
          %v5617 = vunpack.c.l.b16 %v4593
          %v5618 = vunpack.c.l.b16 %v4594
          %v5619 = vunpack.c.l.b16 %v4595
          %v5620 = vunpack.c.l.b16 %v4596
          %v5621 = vunpack.c.l.b16 %v4597
          %v5622 = vunpack.c.l.b16 %v4598
          %v5623 = vunpack.c.l.b16 %v4599
          %v5624 = vunpack.c.l.b16 %v4600
          %v5625 = vunpack.c.l.b16 %v4601
          %v5626 = vunpack.c.l.b16 %v4602
          %v5627 = vunpack.c.l.b16 %v4603
          %v5628 = vunpack.c.l.b16 %v4604
          %v5629 = vunpack.c.l.b16 %v4605
          %v5630 = vunpack.c.l.b16 %v4606
          %v5631 = vunpack.c.l.b16 %v4607
          %v5632 = vunpack.c.l.b16 %v4608
          %v5633 = vunpack.c.l.b16 %v4609
          %v5634 = vunpack.c.l.b16 %v4610
          %v5635 = vunpack.c.l.b16 %v4611
          %v5636 = vunpack.c.l.b16 %v4612
          %v5637 = vunpack.c.l.b16 %v4613
          %v5638 = vunpack.c.l.b16 %v4614
          %v5639 = vunpack.c.l.b16 %v4615
          %v5640 = vunpack.c.l.b16 %v4616
          %v5641 = vunpack.c.l.b16 %v4617
          %v5642 = vunpack.c.l.b16 %v4618
          %v5643 = vunpack.c.l.b16 %v4619
          %v5644 = vunpack.c.l.b16 %v4620
          %v5645 = vunpack.c.l.b16 %v4621
          %v5646 = vunpack.c.l.b16 %v4622
          %v5647 = vunpack.c.l.b16 %v4623
          %v5648 = vunpack.c.l.b16 %v4624
          %v5649 = vunpack.c.l.b16 %v4625
          %v5650 = vunpack.c.l.b16 %v4626
          %v5651 = vunpack.c.l.b16 %v4627
          %v5652 = vunpack.c.l.b16 %v4628
          %v5653 = vunpack.c.l.b16 %v4629
          %v5654 = vunpack.c.l.b16 %v4630
          %v5655 = vunpack.c.l.b16 %v4631
          %v5656 = vunpack.c.l.b16 %v4632
          %v5657 = vunpack.c.l.b16 %v4633
          %v5658 = vunpack.c.l.b16 %v4634
          %v5659 = vunpack.c.l.b16 %v4635
          %v5660 = vunpack.c.l.b16 %v4636
          %v5661 = vunpack.c.l.b16 %v4637
          %v5662 = vunpack.c.l.b16 %v4638
          %v5663 = vunpack.c.l.b16 %v4639
          %v5664 = vunpack.c.l.b16 %v4640
          %v5665 = vunpack.c.l.b16 %v4641
          %v5666 = vunpack.c.l.b16 %v4642
          %v5667 = vunpack.c.l.b16 %v4643
          %v5668 = vunpack.c.l.b16 %v4644
          %v5669 = vunpack.c.l.b16 %v4645
          %v5670 = vunpack.c.l.b16 %v4646
          %v5671 = vunpack.c.l.b16 %v4647
          %v5672 = vunpack.c.l.b16 %v4648
          %v5673 = vunpack.c.l.b16 %v4649
          %v5674 = vunpack.c.l.b16 %v4650
          %v5675 = vunpack.c.l.b16 %v4651
          %v5676 = vunpack.c.l.b16 %v4652
          %v5677 = vunpack.c.l.b16 %v4653
          %v5678 = vunpack.c.l.b16 %v4654
          %v5679 = vunpack.c.l.b16 %v4655
          %v5680 = vunpack.c.l.b16 %v4656
          %v5681 = vunpack.c.l.b16 %v4657
          %v5682 = vunpack.c.l.b16 %v4658
          %v5683 = vunpack.c.l.b16 %v4659
          %v5684 = vunpack.c.l.b16 %v4660
          %v5685 = vunpack.c.l.b16 %v4661
          %v5686 = vunpack.c.l.b16 %v4662
          %v5687 = vunpack.c.l.b16 %v4663
          %v5688 = vunpack.c.l.b16 %v4664
          %v5689 = vunpack.c.l.b16 %v4665
          %v5690 = vunpack.c.l.b16 %v4666
          %v5691 = vunpack.c.l.b16 %v4667
          %v5692 = vunpack.c.l.b16 %v4668
          %v5693 = vunpack.c.l.b16 %v4669
          %v5694 = vunpack.c.l.b16 %v4670
          %v5695 = vunpack.c.l.b16 %v4671
          %v5696 = vunpack.c.l.b16 %v4672
          %v5697 = vunpack.c.l.b16 %v4673
          %v5698 = vunpack.c.l.b16 %v4674
          %v5699 = vunpack.c.l.b16 %v4675
          %v5700 = vunpack.c.l.b16 %v4676
          %v5701 = vunpack.c.l.b16 %v4677
          %v5702 = vunpack.c.l.b16 %v4678
          %v5703 = vunpack.c.l.b16 %v4679
          %v5704 = vunpack.c.l.b16 %v4680
          %v5705 = vunpack.c.l.b16 %v4681
          %v5706 = vunpack.c.l.b16 %v4682
          %v5707 = vunpack.c.l.b16 %v4683
          %v5708 = vunpack.c.l.b16 %v4684
          %v5709 = vunpack.c.l.b16 %v4685
          %v5710 = vunpack.c.l.b16 %v4686
          %v5711 = vunpack.c.l.b16 %v4687
          %v5712 = vunpack.c.l.b16 %v4688
          %v5713 = vunpack.c.l.b16 %v4689
          %v5714 = vunpack.c.l.b16 %v4690
          %v5715 = vunpack.c.l.b16 %v4691
          %v5716 = vunpack.c.l.b16 %v4692
          %v5717 = vunpack.c.l.b16 %v4693
          %v5718 = vunpack.c.l.b16 %v4694
          %v5719 = vunpack.c.l.b16 %v4695
          %v5720 = vunpack.c.l.b16 %v4696
          %v5721 = vunpack.c.l.b16 %v4697
          %v5722 = vunpack.c.l.b16 %v4698
          %v5723 = vunpack.c.l.b16 %v4699
          %v5724 = vunpack.c.l.b16 %v4700
          %v5725 = vunpack.c.l.b16 %v4701
          %v5726 = vunpack.c.l.b16 %v4702
          %v5727 = vunpack.c.l.b16 %v4703
          %v5728 = vunpack.c.l.b16 %v4704
          %v5729 = vunpack.c.l.b16 %v4705
          %v5730 = vunpack.c.l.b16 %v4706
          %v5731 = vunpack.c.l.b16 %v4707
          %v5732 = vunpack.c.l.b16 %v4708
          %v5733 = vunpack.c.l.b16 %v4709
          %v5734 = vunpack.c.l.b16 %v4710
          %v5735 = vunpack.c.l.b16 %v4711
          %v5736 = vunpack.c.l.b16 %v4712
          %v5737 = vunpack.c.l.b16 %v4713
          %v5738 = vunpack.c.l.b16 %v4714
          %v5739 = vunpack.c.l.b16 %v4715
          %v5740 = vunpack.c.l.b16 %v4716
          %v5741 = vunpack.c.l.b16 %v4717
          %v5742 = vunpack.c.l.b16 %v4718
          %v5743 = vunpack.c.l.b16 %v4719
          %v5744 = vunpack.c.l.b16 %v4720
          %v5745 = vunpack.c.l.b16 %v4721
          %v5746 = vunpack.c.l.b16 %v4722
          %v5747 = vunpack.c.l.b16 %v4723
          %v5748 = vunpack.c.l.b16 %v4724
          %v5749 = vunpack.c.l.b16 %v4725
          %v5750 = vunpack.c.l.b16 %v4726
          %v5751 = vunpack.c.l.b16 %v4727
          %v5752 = vunpack.c.l.b16 %v4728
          %v5753 = vunpack.c.l.b16 %v4729
          %v5754 = vunpack.c.l.b16 %v4730
          %v5755 = vunpack.c.l.b16 %v4731
          %v5756 = vunpack.c.l.b16 %v4732
          %v5757 = vunpack.c.l.b16 %v4733
          %v5758 = vunpack.c.l.b16 %v4734
          %v5759 = vunpack.c.l.b16 %v4735
          %v5760 = vunpack.c.l.b16 %v4736
          %v5761 = vunpack.c.l.b16 %v4737
          %v5762 = vunpack.c.l.b16 %v4738
          %v5763 = vunpack.c.l.b16 %v4739
          %v5764 = vunpack.c.l.b16 %v4740
          %v5765 = vunpack.c.l.b16 %v4741
          %v5766 = vunpack.c.l.b16 %v4742
          %v5767 = vunpack.c.l.b16 %v4743
          %v5768 = vunpack.c.l.b16 %v4744
          %v5769 = vunpack.c.l.b16 %v4745
          %v5770 = vunpack.c.l.b16 %v4746
          %v5771 = vunpack.c.l.b16 %v4747
          %v5772 = vunpack.c.l.b16 %v4748
          %v5773 = vunpack.c.l.b16 %v4749
          %v5774 = vunpack.c.l.b16 %v4750
          %v5775 = vunpack.c.l.b16 %v4751
          %v5776 = vunpack.c.l.b16 %v4752
          %v5777 = vunpack.c.l.b16 %v4753
          %v5778 = vunpack.c.l.b16 %v4754
          %v5779 = vunpack.c.l.b16 %v4755
          %v5780 = vunpack.c.l.b16 %v4756
          %v5781 = vunpack.c.l.b16 %v4757
          %v5782 = vunpack.c.l.b16 %v4758
          %v5783 = vunpack.c.l.b16 %v4759
          %v5784 = vunpack.c.l.b16 %v4760
          %v5785 = vunpack.c.l.b16 %v4761
          %v5786 = vunpack.c.l.b16 %v4762
          %v5787 = vunpack.c.l.b16 %v4763
          %v5788 = vunpack.c.l.b16 %v4764
          %v5789 = vunpack.c.l.b16 %v4765
          %v5790 = vunpack.c.l.b16 %v4766
          %v5791 = vunpack.c.l.b16 %v4767
          %v5792 = vunpack.c.l.b16 %v4768
          %v5793 = vunpack.c.l.b16 %v4769
          %v5794 = vunpack.c.l.b16 %v4770
          %v5795 = vunpack.c.l.b16 %v4771
          %v5796 = vunpack.c.l.b16 %v4772
          %v5797 = vunpack.c.l.b16 %v4773
          %v5798 = vunpack.c.l.b16 %v4774
          %v5799 = vunpack.c.l.b16 %v4775
          %v5800 = vunpack.c.l.b16 %v4776
          %v5801 = vunpack.c.l.b16 %v4777
          %v5802 = vunpack.c.l.b16 %v4778
          %v5803 = vunpack.c.l.b16 %v4779
          %v5804 = vunpack.c.l.b16 %v4780
          %v5805 = vunpack.c.l.b16 %v4781
          %v5806 = vunpack.c.l.b16 %v4782
          %v5807 = vunpack.c.l.b16 %v4783
          %v5808 = vunpack.c.l.b16 %v4784
          %v5809 = vunpack.c.l.b16 %v4785
          %v5810 = vunpack.c.l.b16 %v4786
          %v5811 = vunpack.c.l.b16 %v4787
          %v5812 = vunpack.c.l.b16 %v4788
          %v5813 = vunpack.c.l.b16 %v4789
          %v5814 = vunpack.c.l.b16 %v4790
          %v5815 = vunpack.c.l.b16 %v4791
          %v5816 = vunpack.c.l.b16 %v4792
          %v5817 = vunpack.c.l.b16 %v4793
          %v5818 = vunpack.c.l.b16 %v4794
          %v5819 = vunpack.c.l.b16 %v4795
          %v5820 = vunpack.c.l.b16 %v4796
          %v5821 = vunpack.c.l.b16 %v4797
          %v5822 = vunpack.c.l.b16 %v4798
          %v5823 = vunpack.c.l.b16 %v4799
          %v5824 = vunpack.c.l.b16 %v4800
          %v5825 = vunpack.c.l.b16 %v4801
          %v5826 = vunpack.c.l.b16 %v4802
          %v5827 = vpack.c.b16 %v5316, %v5315
          %v5828 = vpack.c.b16 %v5318, %v5317
          %v5829 = vpack.c.b16 %v5320, %v5319
          %v5830 = vpack.c.b16 %v5322, %v5321
          %v5831 = vpack.c.b16 %v5324, %v5323
          %v5832 = vpack.c.b16 %v5326, %v5325
          %v5833 = vpack.c.b16 %v5328, %v5327
          %v5834 = vpack.c.b16 %v5330, %v5329
          %v5835 = vpack.c.b16 %v5332, %v5331
          %v5836 = vpack.c.b16 %v5334, %v5333
          %v5837 = vpack.c.b16 %v5336, %v5335
          %v5838 = vpack.c.b16 %v5338, %v5337
          %v5839 = vpack.c.b16 %v5340, %v5339
          %v5840 = vpack.c.b16 %v5342, %v5341
          %v5841 = vpack.c.b16 %v5344, %v5343
          %v5842 = vpack.c.b16 %v5346, %v5345
          %v5843 = vpack.c.b16 %v5348, %v5347
          %v5844 = vpack.c.b16 %v5350, %v5349
          %v5845 = vpack.c.b16 %v5352, %v5351
          %v5846 = vpack.c.b16 %v5354, %v5353
          %v5847 = vpack.c.b16 %v5356, %v5355
          %v5848 = vpack.c.b16 %v5358, %v5357
          %v5849 = vpack.c.b16 %v5360, %v5359
          %v5850 = vpack.c.b16 %v5362, %v5361
          %v5851 = vpack.c.b16 %v5364, %v5363
          %v5852 = vpack.c.b16 %v5366, %v5365
          %v5853 = vpack.c.b16 %v5368, %v5367
          %v5854 = vpack.c.b16 %v5370, %v5369
          %v5855 = vpack.c.b16 %v5372, %v5371
          %v5856 = vpack.c.b16 %v5374, %v5373
          %v5857 = vpack.c.b16 %v5376, %v5375
          %v5858 = vpack.c.b16 %v5378, %v5377
          %v5859 = vpack.c.b16 %v5380, %v5379
          %v5860 = vpack.c.b16 %v5382, %v5381
          %v5861 = vpack.c.b16 %v5384, %v5383
          %v5862 = vpack.c.b16 %v5386, %v5385
          %v5863 = vpack.c.b16 %v5388, %v5387
          %v5864 = vpack.c.b16 %v5390, %v5389
          %v5865 = vpack.c.b16 %v5392, %v5391
          %v5866 = vpack.c.b16 %v5394, %v5393
          %v5867 = vpack.c.b16 %v5396, %v5395
          %v5868 = vpack.c.b16 %v5398, %v5397
          %v5869 = vpack.c.b16 %v5400, %v5399
          %v5870 = vpack.c.b16 %v5402, %v5401
          %v5871 = vpack.c.b16 %v5404, %v5403
          %v5872 = vpack.c.b16 %v5406, %v5405
          %v5873 = vpack.c.b16 %v5408, %v5407
          %v5874 = vpack.c.b16 %v5410, %v5409
          %v5875 = vpack.c.b16 %v5412, %v5411
          %v5876 = vpack.c.b16 %v5414, %v5413
          %v5877 = vpack.c.b16 %v5416, %v5415
          %v5878 = vpack.c.b16 %v5418, %v5417
          %v5879 = vpack.c.b16 %v5420, %v5419
          %v5880 = vpack.c.b16 %v5422, %v5421
          %v5881 = vpack.c.b16 %v5424, %v5423
          %v5882 = vpack.c.b16 %v5426, %v5425
          %v5883 = vpack.c.b16 %v5428, %v5427
          %v5884 = vpack.c.b16 %v5430, %v5429
          %v5885 = vpack.c.b16 %v5432, %v5431
          %v5886 = vpack.c.b16 %v5434, %v5433
          %v5887 = vpack.c.b16 %v5436, %v5435
          %v5888 = vpack.c.b16 %v5438, %v5437
          %v5889 = vpack.c.b16 %v5440, %v5439
          %v5890 = vpack.c.b16 %v5442, %v5441
          %v5891 = vpack.c.b16 %v5444, %v5443
          %v5892 = vpack.c.b16 %v5446, %v5445
          %v5893 = vpack.c.b16 %v5448, %v5447
          %v5894 = vpack.c.b16 %v5450, %v5449
          %v5895 = vpack.c.b16 %v5452, %v5451
          %v5896 = vpack.c.b16 %v5454, %v5453
          %v5897 = vpack.c.b16 %v5456, %v5455
          %v5898 = vpack.c.b16 %v5458, %v5457
          %v5899 = vpack.c.b16 %v5460, %v5459
          %v5900 = vpack.c.b16 %v5462, %v5461
          %v5901 = vpack.c.b16 %v5464, %v5463
          %v5902 = vpack.c.b16 %v5466, %v5465
          %v5903 = vpack.c.b16 %v5468, %v5467
          %v5904 = vpack.c.b16 %v5470, %v5469
          %v5905 = vpack.c.b16 %v5472, %v5471
          %v5906 = vpack.c.b16 %v5474, %v5473
          %v5907 = vpack.c.b16 %v5476, %v5475
          %v5908 = vpack.c.b16 %v5478, %v5477
          %v5909 = vpack.c.b16 %v5480, %v5479
          %v5910 = vpack.c.b16 %v5482, %v5481
          %v5911 = vpack.c.b16 %v5484, %v5483
          %v5912 = vpack.c.b16 %v5486, %v5485
          %v5913 = vpack.c.b16 %v5488, %v5487
          %v5914 = vpack.c.b16 %v5490, %v5489
          %v5915 = vpack.c.b16 %v5492, %v5491
          %v5916 = vpack.c.b16 %v5494, %v5493
          %v5917 = vpack.c.b16 %v5496, %v5495
          %v5918 = vpack.c.b16 %v5498, %v5497
          %v5919 = vpack.c.b16 %v5500, %v5499
          %v5920 = vpack.c.b16 %v5502, %v5501
          %v5921 = vpack.c.b16 %v5504, %v5503
          %v5922 = vpack.c.b16 %v5506, %v5505
          %v5923 = vpack.c.b16 %v5508, %v5507
          %v5924 = vpack.c.b16 %v5510, %v5509
          %v5925 = vpack.c.b16 %v5512, %v5511
          %v5926 = vpack.c.b16 %v5514, %v5513
          %v5927 = vpack.c.b16 %v5516, %v5515
          %v5928 = vpack.c.b16 %v5518, %v5517
          %v5929 = vpack.c.b16 %v5520, %v5519
          %v5930 = vpack.c.b16 %v5522, %v5521
          %v5931 = vpack.c.b16 %v5524, %v5523
          %v5932 = vpack.c.b16 %v5526, %v5525
          %v5933 = vpack.c.b16 %v5528, %v5527
          %v5934 = vpack.c.b16 %v5530, %v5529
          %v5935 = vpack.c.b16 %v5532, %v5531
          %v5936 = vpack.c.b16 %v5534, %v5533
          %v5937 = vpack.c.b16 %v5536, %v5535
          %v5938 = vpack.c.b16 %v5538, %v5537
          %v5939 = vpack.c.b16 %v5540, %v5539
          %v5940 = vpack.c.b16 %v5542, %v5541
          %v5941 = vpack.c.b16 %v5544, %v5543
          %v5942 = vpack.c.b16 %v5546, %v5545
          %v5943 = vpack.c.b16 %v5548, %v5547
          %v5944 = vpack.c.b16 %v5550, %v5549
          %v5945 = vpack.c.b16 %v5552, %v5551
          %v5946 = vpack.c.b16 %v5554, %v5553
          %v5947 = vpack.c.b16 %v5556, %v5555
          %v5948 = vpack.c.b16 %v5558, %v5557
          %v5949 = vpack.c.b16 %v5560, %v5559
          %v5950 = vpack.c.b16 %v5562, %v5561
          %v5951 = vpack.c.b16 %v5564, %v5563
          %v5952 = vpack.c.b16 %v5566, %v5565
          %v5953 = vpack.c.b16 %v5568, %v5567
          %v5954 = vpack.c.b16 %v5570, %v5569
          %v5955 = vpack.c.b16 %v5572, %v5571
          %v5956 = vpack.c.b16 %v5574, %v5573
          %v5957 = vpack.c.b16 %v5576, %v5575
          %v5958 = vpack.c.b16 %v5578, %v5577
          %v5959 = vpack.c.b16 %v5580, %v5579
          %v5960 = vpack.c.b16 %v5582, %v5581
          %v5961 = vpack.c.b16 %v5584, %v5583
          %v5962 = vpack.c.b16 %v5586, %v5585
          %v5963 = vpack.c.b16 %v5588, %v5587
          %v5964 = vpack.c.b16 %v5590, %v5589
          %v5965 = vpack.c.b16 %v5592, %v5591
          %v5966 = vpack.c.b16 %v5594, %v5593
          %v5967 = vpack.c.b16 %v5596, %v5595
          %v5968 = vpack.c.b16 %v5598, %v5597
          %v5969 = vpack.c.b16 %v5600, %v5599
          %v5970 = vpack.c.b16 %v5602, %v5601
          %v5971 = vpack.c.b16 %v5604, %v5603
          %v5972 = vpack.c.b16 %v5606, %v5605
          %v5973 = vpack.c.b16 %v5608, %v5607
          %v5974 = vpack.c.b16 %v5610, %v5609
          %v5975 = vpack.c.b16 %v5612, %v5611
          %v5976 = vpack.c.b16 %v5614, %v5613
          %v5977 = vpack.c.b16 %v5616, %v5615
          %v5978 = vpack.c.b16 %v5618, %v5617
          %v5979 = vpack.c.b16 %v5620, %v5619
          %v5980 = vpack.c.b16 %v5622, %v5621
          %v5981 = vpack.c.b16 %v5624, %v5623
          %v5982 = vpack.c.b16 %v5626, %v5625
          %v5983 = vpack.c.b16 %v5628, %v5627
          %v5984 = vpack.c.b16 %v5630, %v5629
          %v5985 = vpack.c.b16 %v5632, %v5631
          %v5986 = vpack.c.b16 %v5634, %v5633
          %v5987 = vpack.c.b16 %v5636, %v5635
          %v5988 = vpack.c.b16 %v5638, %v5637
          %v5989 = vpack.c.b16 %v5640, %v5639
          %v5990 = vpack.c.b16 %v5642, %v5641
          %v5991 = vpack.c.b16 %v5644, %v5643
          %v5992 = vpack.c.b16 %v5646, %v5645
          %v5993 = vpack.c.b16 %v5648, %v5647
          %v5994 = vpack.c.b16 %v5650, %v5649
          %v5995 = vpack.c.b16 %v5652, %v5651
          %v5996 = vpack.c.b16 %v5654, %v5653
          %v5997 = vpack.c.b16 %v5656, %v5655
          %v5998 = vpack.c.b16 %v5658, %v5657
          %v5999 = vpack.c.b16 %v5660, %v5659
          %v6000 = vpack.c.b16 %v5662, %v5661
          %v6001 = vpack.c.b16 %v5664, %v5663
          %v6002 = vpack.c.b16 %v5666, %v5665
          %v6003 = vpack.c.b16 %v5668, %v5667
          %v6004 = vpack.c.b16 %v5670, %v5669
          %v6005 = vpack.c.b16 %v5672, %v5671
          %v6006 = vpack.c.b16 %v5674, %v5673
          %v6007 = vpack.c.b16 %v5676, %v5675
          %v6008 = vpack.c.b16 %v5678, %v5677
          %v6009 = vpack.c.b16 %v5680, %v5679
          %v6010 = vpack.c.b16 %v5682, %v5681
          %v6011 = vpack.c.b16 %v5684, %v5683
          %v6012 = vpack.c.b16 %v5686, %v5685
          %v6013 = vpack.c.b16 %v5688, %v5687
          %v6014 = vpack.c.b16 %v5690, %v5689
          %v6015 = vpack.c.b16 %v5692, %v5691
          %v6016 = vpack.c.b16 %v5694, %v5693
          %v6017 = vpack.c.b16 %v5696, %v5695
          %v6018 = vpack.c.b16 %v5698, %v5697
          %v6019 = vpack.c.b16 %v5700, %v5699
          %v6020 = vpack.c.b16 %v5702, %v5701
          %v6021 = vpack.c.b16 %v5704, %v5703
          %v6022 = vpack.c.b16 %v5706, %v5705
          %v6023 = vpack.c.b16 %v5708, %v5707
          %v6024 = vpack.c.b16 %v5710, %v5709
          %v6025 = vpack.c.b16 %v5712, %v5711
          %v6026 = vpack.c.b16 %v5714, %v5713
          %v6027 = vpack.c.b16 %v5716, %v5715
          %v6028 = vpack.c.b16 %v5718, %v5717
          %v6029 = vpack.c.b16 %v5720, %v5719
          %v6030 = vpack.c.b16 %v5722, %v5721
          %v6031 = vpack.c.b16 %v5724, %v5723
          %v6032 = vpack.c.b16 %v5726, %v5725
          %v6033 = vpack.c.b16 %v5728, %v5727
          %v6034 = vpack.c.b16 %v5730, %v5729
          %v6035 = vpack.c.b16 %v5732, %v5731
          %v6036 = vpack.c.b16 %v5734, %v5733
          %v6037 = vpack.c.b16 %v5736, %v5735
          %v6038 = vpack.c.b16 %v5738, %v5737
          %v6039 = vpack.c.b16 %v5740, %v5739
          %v6040 = vpack.c.b16 %v5742, %v5741
          %v6041 = vpack.c.b16 %v5744, %v5743
          %v6042 = vpack.c.b16 %v5746, %v5745
          %v6043 = vpack.c.b16 %v5748, %v5747
          %v6044 = vpack.c.b16 %v5750, %v5749
          %v6045 = vpack.c.b16 %v5752, %v5751
          %v6046 = vpack.c.b16 %v5754, %v5753
          %v6047 = vpack.c.b16 %v5756, %v5755
          %v6048 = vpack.c.b16 %v5758, %v5757
          %v6049 = vpack.c.b16 %v5760, %v5759
          %v6050 = vpack.c.b16 %v5762, %v5761
          %v6051 = vpack.c.b16 %v5764, %v5763
          %v6052 = vpack.c.b16 %v5766, %v5765
          %v6053 = vpack.c.b16 %v5768, %v5767
          %v6054 = vpack.c.b16 %v5770, %v5769
          %v6055 = vpack.c.b16 %v5772, %v5771
          %v6056 = vpack.c.b16 %v5774, %v5773
          %v6057 = vpack.c.b16 %v5776, %v5775
          %v6058 = vpack.c.b16 %v5778, %v5777
          %v6059 = vpack.c.b16 %v5780, %v5779
          %v6060 = vpack.c.b16 %v5782, %v5781
          %v6061 = vpack.c.b16 %v5784, %v5783
          %v6062 = vpack.c.b16 %v5786, %v5785
          %v6063 = vpack.c.b16 %v5788, %v5787
          %v6064 = vpack.c.b16 %v5790, %v5789
          %v6065 = vpack.c.b16 %v5792, %v5791
          %v6066 = vpack.c.b16 %v5794, %v5793
          %v6067 = vpack.c.b16 %v5796, %v5795
          %v6068 = vpack.c.b16 %v5798, %v5797
          %v6069 = vpack.c.b16 %v5800, %v5799
          %v6070 = vpack.c.b16 %v5802, %v5801
          %v6071 = vpack.c.b16 %v5804, %v5803
          %v6072 = vpack.c.b16 %v5806, %v5805
          %v6073 = vpack.c.b16 %v5808, %v5807
          %v6074 = vpack.c.b16 %v5810, %v5809
          %v6075 = vpack.c.b16 %v5812, %v5811
          %v6076 = vpack.c.b16 %v5814, %v5813
          %v6077 = vpack.c.b16 %v5816, %v5815
          %v6078 = vpack.c.b16 %v5818, %v5817
          %v6079 = vpack.c.b16 %v5820, %v5819
          %v6080 = vpack.c.b16 %v5822, %v5821
          %v6081 = vpack.c.b16 %v5824, %v5823
          %v6082 = vpack.c.b16 %v5826, %v5825
          %6339 = vmatprep.subr.bf16.mxu0 0
          %6340 = vmatpush1.bf16.msra.mxu0 %v5827
          %6341 = vmatprep.subr.bf16.mxu0 0
          %6342 = vmatpush1.bf16.msra.mxu0 %v5828
          %6343 = vmatprep.subr.bf16.mxu0 0
          %6344 = vmatpush1.bf16.msra.mxu0 %v5829
          %6345 = vmatprep.subr.bf16.mxu0 0
          %6346 = vmatpush1.bf16.msra.mxu0 %v5830
          %6347 = vmatprep.subr.bf16.mxu0 0
          %6348 = vmatpush1.bf16.msra.mxu0 %v5831
          %6349 = vmatprep.subr.bf16.mxu0 0
          %6350 = vmatpush1.bf16.msra.mxu0 %v5832
          %6351 = vmatprep.subr.bf16.mxu0 0
          %6352 = vmatpush1.bf16.msra.mxu0 %v5833
          %6353 = vmatprep.subr.bf16.mxu0 0
          %6354 = vmatpush1.bf16.msra.mxu0 %v5834
          %6355 = vmatprep.subr.bf16.mxu0 0
          %6356 = vmatpush1.bf16.msra.mxu0 %v5835
          %6357 = vmatprep.subr.bf16.mxu0 0
          %6358 = vmatpush1.bf16.msra.mxu0 %v5836
          %6359 = vmatprep.subr.bf16.mxu0 0
          %6360 = vmatpush1.bf16.msra.mxu0 %v5837
          %6361 = vmatprep.subr.bf16.mxu0 0
          %6362 = vmatpush1.bf16.msra.mxu0 %v5838
          %6363 = vmatprep.subr.bf16.mxu0 0
          %6364 = vmatpush1.bf16.msra.mxu0 %v5839
          %6365 = vmatprep.subr.bf16.mxu0 0
          %6366 = vmatpush1.bf16.msra.mxu0 %v5840
          %6367 = vmatprep.subr.bf16.mxu0 0
          %6368 = vmatpush1.bf16.msra.mxu0 %v5841
          %6369 = vmatprep.subr.bf16.mxu0 0
          %6370 = vmatpush1.bf16.msra.mxu0 %v5842
          %6371 = vmatprep.mubr.bf16.mxu0 %v4260
          %6372 = vmatmul.mubr.bf16.gmra.mrb[0].mxu0 %v4259
          %v6373 = vpop.f32.mrb[0].mxu0
          %v6374 = vadd.f32 0.0, %v6373
          %v6375 = vpop.f32.mrb[0].mxu0
          %v6376 = vpop.f32.mrb[0].mxu0
          %v6377 = vpop.f32.mrb[0].mxu0
          %6378 = vdwg.mxu0
          %6379 = vmatprep.subr.bf16.mxu0 0
          %6380 = vmatpush1.bf16.msra.mxu0 %v5843
          %6381 = vmatprep.subr.bf16.mxu0 0
          %6382 = vmatpush1.bf16.msra.mxu0 %v5844
          %6383 = vmatprep.subr.bf16.mxu0 0
          %6384 = vmatpush1.bf16.msra.mxu0 %v5845
          %6385 = vmatprep.subr.bf16.mxu0 0
          %6386 = vmatpush1.bf16.msra.mxu0 %v5846
          %6387 = vmatprep.subr.bf16.mxu0 0
          %6388 = vmatpush1.bf16.msra.mxu0 %v5847
          %6389 = vmatprep.subr.bf16.mxu0 0
          %6390 = vmatpush1.bf16.msra.mxu0 %v5848
          %6391 = vmatprep.subr.bf16.mxu0 0
          %6392 = vmatpush1.bf16.msra.mxu0 %v5849
          %6393 = vmatprep.subr.bf16.mxu0 0
          %6394 = vmatpush1.bf16.msra.mxu0 %v5850
          %6395 = vmatprep.subr.bf16.mxu0 0
          %6396 = vmatpush1.bf16.msra.mxu0 %v5851
          %6397 = vmatprep.subr.bf16.mxu0 0
          %6398 = vmatpush1.bf16.msra.mxu0 %v5852
          %6399 = vmatprep.subr.bf16.mxu0 0
          %6400 = vmatpush1.bf16.msra.mxu0 %v5853
          %6401 = vmatprep.subr.bf16.mxu0 0
          %6402 = vmatpush1.bf16.msra.mxu0 %v5854
          %6403 = vmatprep.subr.bf16.mxu0 0
          %6404 = vmatpush1.bf16.msra.mxu0 %v5855
          %6405 = vmatprep.subr.bf16.mxu0 0
          %6406 = vmatpush1.bf16.msra.mxu0 %v5856
          %6407 = vmatprep.subr.bf16.mxu0 0
          %6408 = vmatpush1.bf16.msra.mxu0 %v5857
          %6409 = vmatprep.subr.bf16.mxu0 0
          %6410 = vmatpush1.bf16.msra.mxu0 %v5858
          %6411 = vmatprep.mubr.bf16.mxu0 %v4262
          %6412 = vmatmul.mubr.bf16.gmra.mrb[0].mxu0 %v4261
          %v6413 = vpop.f32.mrb[0].mxu0
          %v6414 = vadd.f32 %v6374, %v6413
          %v6415 = vpop.f32.mrb[0].mxu0
          %v6416 = vpop.f32.mrb[0].mxu0
          %v6417 = vpop.f32.mrb[0].mxu0
          %6418 = vdwg.mxu0
          %6419 = vmatprep.subr.bf16.mxu0 0
          %6420 = vmatpush1.bf16.msra.mxu0 %v5859
          %6421 = vmatprep.subr.bf16.mxu0 0
          %6422 = vmatpush1.bf16.msra.mxu0 %v5860
          %6423 = vmatprep.subr.bf16.mxu0 0
          %6424 = vmatpush1.bf16.msra.mxu0 %v5861
          %6425 = vmatprep.subr.bf16.mxu0 0
          %6426 = vmatpush1.bf16.msra.mxu0 %v5862
          %6427 = vmatprep.subr.bf16.mxu0 0
          %6428 = vmatpush1.bf16.msra.mxu0 %v5863
          %6429 = vmatprep.subr.bf16.mxu0 0
          %6430 = vmatpush1.bf16.msra.mxu0 %v5864
          %6431 = vmatprep.subr.bf16.mxu0 0
          %6432 = vmatpush1.bf16.msra.mxu0 %v5865
          %6433 = vmatprep.subr.bf16.mxu0 0
          %6434 = vmatpush1.bf16.msra.mxu0 %v5866
          %6435 = vmatprep.subr.bf16.mxu0 0
          %6436 = vmatpush1.bf16.msra.mxu0 %v5867
          %6437 = vmatprep.subr.bf16.mxu0 0
          %6438 = vmatpush1.bf16.msra.mxu0 %v5868
          %6439 = vmatprep.subr.bf16.mxu0 0
          %6440 = vmatpush1.bf16.msra.mxu0 %v5869
          %6441 = vmatprep.subr.bf16.mxu0 0
          %6442 = vmatpush1.bf16.msra.mxu0 %v5870
          %6443 = vmatprep.subr.bf16.mxu0 0
          %6444 = vmatpush1.bf16.msra.mxu0 %v5871
          %6445 = vmatprep.subr.bf16.mxu0 0
          %6446 = vmatpush1.bf16.msra.mxu0 %v5872
          %6447 = vmatprep.subr.bf16.mxu0 0
          %6448 = vmatpush1.bf16.msra.mxu0 %v5873
          %6449 = vmatprep.subr.bf16.mxu0 0
          %6450 = vmatpush1.bf16.msra.mxu0 %v5874
          %6451 = vmatprep.mubr.bf16.mxu0 %v4264
          %6452 = vmatmul.mubr.bf16.gmra.mrb[0].mxu0 %v4263
          %v6453 = vpop.f32.mrb[0].mxu0
          %v6454 = vadd.f32 %v6414, %v6453
          %v6455 = vpop.f32.mrb[0].mxu0
          %v6456 = vpop.f32.mrb[0].mxu0
          %v6457 = vpop.f32.mrb[0].mxu0
          %6458 = vdwg.mxu0
          %6459 = vmatprep.subr.bf16.mxu0 0
          %6460 = vmatpush1.bf16.msra.mxu0 %v5875
          %6461 = vmatprep.subr.bf16.mxu0 0
          %6462 = vmatpush1.bf16.msra.mxu0 %v5876
          %6463 = vmatprep.subr.bf16.mxu0 0
          %6464 = vmatpush1.bf16.msra.mxu0 %v5877
          %6465 = vmatprep.subr.bf16.mxu0 0
          %6466 = vmatpush1.bf16.msra.mxu0 %v5878
          %6467 = vmatprep.subr.bf16.mxu0 0
          %6468 = vmatpush1.bf16.msra.mxu0 %v5879
          %6469 = vmatprep.subr.bf16.mxu0 0
          %6470 = vmatpush1.bf16.msra.mxu0 %v5880
          %6471 = vmatprep.subr.bf16.mxu0 0
          %6472 = vmatpush1.bf16.msra.mxu0 %v5881
          %6473 = vmatprep.subr.bf16.mxu0 0
          %6474 = vmatpush1.bf16.msra.mxu0 %v5882
          %6475 = vmatprep.subr.bf16.mxu0 0
          %6476 = vmatpush1.bf16.msra.mxu0 %v5883
          %6477 = vmatprep.subr.bf16.mxu0 0
          %6478 = vmatpush1.bf16.msra.mxu0 %v5884
          %6479 = vmatprep.subr.bf16.mxu0 0
          %6480 = vmatpush1.bf16.msra.mxu0 %v5885
          %6481 = vmatprep.subr.bf16.mxu0 0
          %6482 = vmatpush1.bf16.msra.mxu0 %v5886
          %6483 = vmatprep.subr.bf16.mxu0 0
          %6484 = vmatpush1.bf16.msra.mxu0 %v5887
          %6485 = vmatprep.subr.bf16.mxu0 0
          %6486 = vmatpush1.bf16.msra.mxu0 %v5888
          %6487 = vmatprep.subr.bf16.mxu0 0
          %6488 = vmatpush1.bf16.msra.mxu0 %v5889
          %6489 = vmatprep.subr.bf16.mxu0 0
          %6490 = vmatpush1.bf16.msra.mxu0 %v5890
          %6491 = vmatprep.mubr.bf16.mxu0 %v4266
          %6492 = vmatmul.mubr.bf16.gmra.mrb[0].mxu0 %v4265
          %v6493 = vpop.f32.mrb[0].mxu0
          %v6494 = vadd.f32 %v6454, %v6493
          %v6495 = vpop.f32.mrb[0].mxu0
          %v6496 = vpop.f32.mrb[0].mxu0
          %v6497 = vpop.f32.mrb[0].mxu0
          %6498 = vdwg.mxu0
          %6499 = vmatprep.subr.bf16.mxu0 0
          %6500 = vmatpush1.bf16.msra.mxu0 %v5891
          %6501 = vmatprep.subr.bf16.mxu0 0
          %6502 = vmatpush1.bf16.msra.mxu0 %v5892
          %6503 = vmatprep.subr.bf16.mxu0 0
          %6504 = vmatpush1.bf16.msra.mxu0 %v5893
          %6505 = vmatprep.subr.bf16.mxu0 0
          %6506 = vmatpush1.bf16.msra.mxu0 %v5894
          %6507 = vmatprep.subr.bf16.mxu0 0
          %6508 = vmatpush1.bf16.msra.mxu0 %v5895
          %6509 = vmatprep.subr.bf16.mxu0 0
          %6510 = vmatpush1.bf16.msra.mxu0 %v5896
          %6511 = vmatprep.subr.bf16.mxu0 0
          %6512 = vmatpush1.bf16.msra.mxu0 %v5897
          %6513 = vmatprep.subr.bf16.mxu0 0
          %6514 = vmatpush1.bf16.msra.mxu0 %v5898
          %6515 = vmatprep.subr.bf16.mxu0 0
          %6516 = vmatpush1.bf16.msra.mxu0 %v5899
          %6517 = vmatprep.subr.bf16.mxu0 0
          %6518 = vmatpush1.bf16.msra.mxu0 %v5900
          %6519 = vmatprep.subr.bf16.mxu0 0
          %6520 = vmatpush1.bf16.msra.mxu0 %v5901
          %6521 = vmatprep.subr.bf16.mxu0 0
          %6522 = vmatpush1.bf16.msra.mxu0 %v5902
          %6523 = vmatprep.subr.bf16.mxu0 0
          %6524 = vmatpush1.bf16.msra.mxu0 %v5903
          %6525 = vmatprep.subr.bf16.mxu0 0
          %6526 = vmatpush1.bf16.msra.mxu0 %v5904
          %6527 = vmatprep.subr.bf16.mxu0 0
          %6528 = vmatpush1.bf16.msra.mxu0 %v5905
          %6529 = vmatprep.subr.bf16.mxu0 0
          %6530 = vmatpush1.bf16.msra.mxu0 %v5906
          %6531 = vmatprep.mubr.bf16.mxu0 %v4268
          %6532 = vmatmul.mubr.bf16.gmra.mrb[0].mxu0 %v4267
          %v6533 = vpop.f32.mrb[0].mxu0
          %v6534 = vadd.f32 %v6494, %v6533
          %v6535 = vpop.f32.mrb[0].mxu0
          %v6536 = vpop.f32.mrb[0].mxu0
          %v6537 = vpop.f32.mrb[0].mxu0
          %6538 = vdwg.mxu0
          %6539 = vmatprep.subr.bf16.mxu0 0
          %6540 = vmatpush1.bf16.msra.mxu0 %v5907
          %6541 = vmatprep.subr.bf16.mxu0 0
          %6542 = vmatpush1.bf16.msra.mxu0 %v5908
          %6543 = vmatprep.subr.bf16.mxu0 0
          %6544 = vmatpush1.bf16.msra.mxu0 %v5909
          %6545 = vmatprep.subr.bf16.mxu0 0
          %6546 = vmatpush1.bf16.msra.mxu0 %v5910
          %6547 = vmatprep.subr.bf16.mxu0 0
          %6548 = vmatpush1.bf16.msra.mxu0 %v5911
          %6549 = vmatprep.subr.bf16.mxu0 0
          %6550 = vmatpush1.bf16.msra.mxu0 %v5912
          %6551 = vmatprep.subr.bf16.mxu0 0
          %6552 = vmatpush1.bf16.msra.mxu0 %v5913
          %6553 = vmatprep.subr.bf16.mxu0 0
          %6554 = vmatpush1.bf16.msra.mxu0 %v5914
          %6555 = vmatprep.subr.bf16.mxu0 0
          %6556 = vmatpush1.bf16.msra.mxu0 %v5915
          %6557 = vmatprep.subr.bf16.mxu0 0
          %6558 = vmatpush1.bf16.msra.mxu0 %v5916
          %6559 = vmatprep.subr.bf16.mxu0 0
          %6560 = vmatpush1.bf16.msra.mxu0 %v5917
          %6561 = vmatprep.subr.bf16.mxu0 0
          %6562 = vmatpush1.bf16.msra.mxu0 %v5918
          %6563 = vmatprep.subr.bf16.mxu0 0
          %6564 = vmatpush1.bf16.msra.mxu0 %v5919
          %6565 = vmatprep.subr.bf16.mxu0 0
          %6566 = vmatpush1.bf16.msra.mxu0 %v5920
          %6567 = vmatprep.subr.bf16.mxu0 0
          %6568 = vmatpush1.bf16.msra.mxu0 %v5921
          %6569 = vmatprep.subr.bf16.mxu0 0
          %6570 = vmatpush1.bf16.msra.mxu0 %v5922
          %6571 = vmatprep.mubr.bf16.mxu0 %v4270
          %6572 = vmatmul.mubr.bf16.gmra.mrb[0].mxu0 %v4269
          %v6573 = vpop.f32.mrb[0].mxu0
          %v6574 = vadd.f32 %v6534, %v6573
          %v6575 = vpop.f32.mrb[0].mxu0
          %v6576 = vpop.f32.mrb[0].mxu0
          %v6577 = vpop.f32.mrb[0].mxu0
          %6578 = vdwg.mxu0
          %6579 = vmatprep.subr.bf16.mxu0 0
          %6580 = vmatpush1.bf16.msra.mxu0 %v5923
          %6581 = vmatprep.subr.bf16.mxu0 0
          %6582 = vmatpush1.bf16.msra.mxu0 %v5924
          %6583 = vmatprep.subr.bf16.mxu0 0
          %6584 = vmatpush1.bf16.msra.mxu0 %v5925
          %6585 = vmatprep.subr.bf16.mxu0 0
          %6586 = vmatpush1.bf16.msra.mxu0 %v5926
          %6587 = vmatprep.subr.bf16.mxu0 0
          %6588 = vmatpush1.bf16.msra.mxu0 %v5927
          %6589 = vmatprep.subr.bf16.mxu0 0
          %6590 = vmatpush1.bf16.msra.mxu0 %v5928
          %6591 = vmatprep.subr.bf16.mxu0 0
          %6592 = vmatpush1.bf16.msra.mxu0 %v5929
          %6593 = vmatprep.subr.bf16.mxu0 0
          %6594 = vmatpush1.bf16.msra.mxu0 %v5930
          %6595 = vmatprep.subr.bf16.mxu0 0
          %6596 = vmatpush1.bf16.msra.mxu0 %v5931
          %6597 = vmatprep.subr.bf16.mxu0 0
          %6598 = vmatpush1.bf16.msra.mxu0 %v5932
          %6599 = vmatprep.subr.bf16.mxu0 0
          %6600 = vmatpush1.bf16.msra.mxu0 %v5933
          %6601 = vmatprep.subr.bf16.mxu0 0
          %6602 = vmatpush1.bf16.msra.mxu0 %v5934
          %6603 = vmatprep.subr.bf16.mxu0 0
          %6604 = vmatpush1.bf16.msra.mxu0 %v5935
          %6605 = vmatprep.subr.bf16.mxu0 0
          %6606 = vmatpush1.bf16.msra.mxu0 %v5936
          %6607 = vmatprep.subr.bf16.mxu0 0
          %6608 = vmatpush1.bf16.msra.mxu0 %v5937
          %6609 = vmatprep.subr.bf16.mxu0 0
          %6610 = vmatpush1.bf16.msra.mxu0 %v5938
          %6611 = vmatprep.mubr.bf16.mxu0 %v4272
          %6612 = vmatmul.mubr.bf16.gmra.mrb[0].mxu0 %v4271
          %v6613 = vpop.f32.mrb[0].mxu0
          %v6614 = vadd.f32 %v6574, %v6613
          %v6615 = vpop.f32.mrb[0].mxu0
          %v6616 = vpop.f32.mrb[0].mxu0
          %v6617 = vpop.f32.mrb[0].mxu0
          %6618 = vdwg.mxu0
          %6619 = vmatprep.subr.bf16.mxu0 0
          %6620 = vmatpush1.bf16.msra.mxu0 %v5939
          %6621 = vmatprep.subr.bf16.mxu0 0
          %6622 = vmatpush1.bf16.msra.mxu0 %v5940
          %6623 = vmatprep.subr.bf16.mxu0 0
          %6624 = vmatpush1.bf16.msra.mxu0 %v5941
          %6625 = vmatprep.subr.bf16.mxu0 0
          %6626 = vmatpush1.bf16.msra.mxu0 %v5942
          %6627 = vmatprep.subr.bf16.mxu0 0
          %6628 = vmatpush1.bf16.msra.mxu0 %v5943
          %6629 = vmatprep.subr.bf16.mxu0 0
          %6630 = vmatpush1.bf16.msra.mxu0 %v5944
          %6631 = vmatprep.subr.bf16.mxu0 0
          %6632 = vmatpush1.bf16.msra.mxu0 %v5945
          %6633 = vmatprep.subr.bf16.mxu0 0
          %6634 = vmatpush1.bf16.msra.mxu0 %v5946
          %6635 = vmatprep.subr.bf16.mxu0 0
          %6636 = vmatpush1.bf16.msra.mxu0 %v5947
          %6637 = vmatprep.subr.bf16.mxu0 0
          %6638 = vmatpush1.bf16.msra.mxu0 %v5948
          %6639 = vmatprep.subr.bf16.mxu0 0
          %6640 = vmatpush1.bf16.msra.mxu0 %v5949
          %6641 = vmatprep.subr.bf16.mxu0 0
          %6642 = vmatpush1.bf16.msra.mxu0 %v5950
          %6643 = vmatprep.subr.bf16.mxu0 0
          %6644 = vmatpush1.bf16.msra.mxu0 %v5951
          %6645 = vmatprep.subr.bf16.mxu0 0
          %6646 = vmatpush1.bf16.msra.mxu0 %v5952
          %6647 = vmatprep.subr.bf16.mxu0 0
          %6648 = vmatpush1.bf16.msra.mxu0 %v5953
          %6649 = vmatprep.subr.bf16.mxu0 0
          %6650 = vmatpush1.bf16.msra.mxu0 %v5954
          %6651 = vmatprep.mubr.bf16.mxu0 %v4274
          %6652 = vmatmul.mubr.bf16.gmra.mrb[0].mxu0 %v4273
          %v6653 = vpop.f32.mrb[0].mxu0
          %v6654 = vadd.f32 %v6614, %v6653
          %v6655 = vpop.f32.mrb[0].mxu0
          %v6656 = vpop.f32.mrb[0].mxu0
          %v6657 = vpop.f32.mrb[0].mxu0
          %6658 = vdwg.mxu0
          %6659 = vmatprep.subr.bf16.mxu0 0
          %6660 = vmatpush1.bf16.msra.mxu0 %v5955
          %6661 = vmatprep.subr.bf16.mxu0 0
          %6662 = vmatpush1.bf16.msra.mxu0 %v5956
          %6663 = vmatprep.subr.bf16.mxu0 0
          %6664 = vmatpush1.bf16.msra.mxu0 %v5957
          %6665 = vmatprep.subr.bf16.mxu0 0
          %6666 = vmatpush1.bf16.msra.mxu0 %v5958
          %6667 = vmatprep.subr.bf16.mxu0 0
          %6668 = vmatpush1.bf16.msra.mxu0 %v5959
          %6669 = vmatprep.subr.bf16.mxu0 0
          %6670 = vmatpush1.bf16.msra.mxu0 %v5960
          %6671 = vmatprep.subr.bf16.mxu0 0
          %6672 = vmatpush1.bf16.msra.mxu0 %v5961
          %6673 = vmatprep.subr.bf16.mxu0 0
          %6674 = vmatpush1.bf16.msra.mxu0 %v5962
          %6675 = vmatprep.subr.bf16.mxu0 0
          %6676 = vmatpush1.bf16.msra.mxu0 %v5963
          %6677 = vmatprep.subr.bf16.mxu0 0
          %6678 = vmatpush1.bf16.msra.mxu0 %v5964
          %6679 = vmatprep.subr.bf16.mxu0 0
          %6680 = vmatpush1.bf16.msra.mxu0 %v5965
          %6681 = vmatprep.subr.bf16.mxu0 0
          %6682 = vmatpush1.bf16.msra.mxu0 %v5966
          %6683 = vmatprep.subr.bf16.mxu0 0
          %6684 = vmatpush1.bf16.msra.mxu0 %v5967
          %6685 = vmatprep.subr.bf16.mxu0 0
          %6686 = vmatpush1.bf16.msra.mxu0 %v5968
          %6687 = vmatprep.subr.bf16.mxu0 0
          %6688 = vmatpush1.bf16.msra.mxu0 %v5969
          %6689 = vmatprep.subr.bf16.mxu0 0
          %6690 = vmatpush1.bf16.msra.mxu0 %v5970
          %6691 = vmatprep.mubr.bf16.mxu0 %v4276
          %6692 = vmatmul.mubr.bf16.gmra.mrb[0].mxu0 %v4275
          %v6693 = vpop.f32.mrb[0].mxu0
          %v6694 = vadd.f32 %v6654, %v6693
          %v6695 = vpop.f32.mrb[0].mxu0
          %v6696 = vpop.f32.mrb[0].mxu0
          %v6697 = vpop.f32.mrb[0].mxu0
          %6698 = vdwg.mxu0
          %6699 = vmatprep.subr.bf16.mxu0 0
          %6700 = vmatpush1.bf16.msra.mxu0 %v5971
          %6701 = vmatprep.subr.bf16.mxu0 0
          %6702 = vmatpush1.bf16.msra.mxu0 %v5972
          %6703 = vmatprep.subr.bf16.mxu0 0
          %6704 = vmatpush1.bf16.msra.mxu0 %v5973
          %6705 = vmatprep.subr.bf16.mxu0 0
          %6706 = vmatpush1.bf16.msra.mxu0 %v5974
          %6707 = vmatprep.subr.bf16.mxu0 0
          %6708 = vmatpush1.bf16.msra.mxu0 %v5975
          %6709 = vmatprep.subr.bf16.mxu0 0
          %6710 = vmatpush1.bf16.msra.mxu0 %v5976
          %6711 = vmatprep.subr.bf16.mxu0 0
          %6712 = vmatpush1.bf16.msra.mxu0 %v5977
          %6713 = vmatprep.subr.bf16.mxu0 0
          %6714 = vmatpush1.bf16.msra.mxu0 %v5978
          %6715 = vmatprep.subr.bf16.mxu0 0
          %6716 = vmatpush1.bf16.msra.mxu0 %v5979
          %6717 = vmatprep.subr.bf16.mxu0 0
          %6718 = vmatpush1.bf16.msra.mxu0 %v5980
          %6719 = vmatprep.subr.bf16.mxu0 0
          %6720 = vmatpush1.bf16.msra.mxu0 %v5981
          %6721 = vmatprep.subr.bf16.mxu0 0
          %6722 = vmatpush1.bf16.msra.mxu0 %v5982
          %6723 = vmatprep.subr.bf16.mxu0 0
          %6724 = vmatpush1.bf16.msra.mxu0 %v5983
          %6725 = vmatprep.subr.bf16.mxu0 0
          %6726 = vmatpush1.bf16.msra.mxu0 %v5984
          %6727 = vmatprep.subr.bf16.mxu0 0
          %6728 = vmatpush1.bf16.msra.mxu0 %v5985
          %6729 = vmatprep.subr.bf16.mxu0 0
          %6730 = vmatpush1.bf16.msra.mxu0 %v5986
          %6731 = vmatprep.mubr.bf16.mxu0 %v4278
          %6732 = vmatmul.mubr.bf16.gmra.mrb[0].mxu0 %v4277
          %v6733 = vpop.f32.mrb[0].mxu0
          %v6734 = vadd.f32 %v6694, %v6733
          %v6735 = vpop.f32.mrb[0].mxu0
          %v6736 = vpop.f32.mrb[0].mxu0
          %v6737 = vpop.f32.mrb[0].mxu0
          %6738 = vdwg.mxu0
          %6739 = vmatprep.subr.bf16.mxu0 0
          %6740 = vmatpush1.bf16.msra.mxu0 %v5987
          %6741 = vmatprep.subr.bf16.mxu0 0
          %6742 = vmatpush1.bf16.msra.mxu0 %v5988
          %6743 = vmatprep.subr.bf16.mxu0 0
          %6744 = vmatpush1.bf16.msra.mxu0 %v5989
          %6745 = vmatprep.subr.bf16.mxu0 0
          %6746 = vmatpush1.bf16.msra.mxu0 %v5990
          %6747 = vmatprep.subr.bf16.mxu0 0
          %6748 = vmatpush1.bf16.msra.mxu0 %v5991
          %6749 = vmatprep.subr.bf16.mxu0 0
          %6750 = vmatpush1.bf16.msra.mxu0 %v5992
          %6751 = vmatprep.subr.bf16.mxu0 0
          %6752 = vmatpush1.bf16.msra.mxu0 %v5993
          %6753 = vmatprep.subr.bf16.mxu0 0
          %6754 = vmatpush1.bf16.msra.mxu0 %v5994
          %6755 = vmatprep.subr.bf16.mxu0 0
          %6756 = vmatpush1.bf16.msra.mxu0 %v5995
          %6757 = vmatprep.subr.bf16.mxu0 0
          %6758 = vmatpush1.bf16.msra.mxu0 %v5996
          %6759 = vmatprep.subr.bf16.mxu0 0
          %6760 = vmatpush1.bf16.msra.mxu0 %v5997
          %6761 = vmatprep.subr.bf16.mxu0 0
          %6762 = vmatpush1.bf16.msra.mxu0 %v5998
          %6763 = vmatprep.subr.bf16.mxu0 0
          %6764 = vmatpush1.bf16.msra.mxu0 %v5999
          %6765 = vmatprep.subr.bf16.mxu0 0
          %6766 = vmatpush1.bf16.msra.mxu0 %v6000
          %6767 = vmatprep.subr.bf16.mxu0 0
          %6768 = vmatpush1.bf16.msra.mxu0 %v6001
          %6769 = vmatprep.subr.bf16.mxu0 0
          %6770 = vmatpush1.bf16.msra.mxu0 %v6002
          %6771 = vmatprep.mubr.bf16.mxu0 %v4280
          %6772 = vmatmul.mubr.bf16.gmra.mrb[0].mxu0 %v4279
          %v6773 = vpop.f32.mrb[0].mxu0
          %v6774 = vadd.f32 %v6734, %v6773
          %v6775 = vpop.f32.mrb[0].mxu0
          %v6776 = vpop.f32.mrb[0].mxu0
          %v6777 = vpop.f32.mrb[0].mxu0
          %6778 = vdwg.mxu0
          %6779 = vmatprep.subr.bf16.mxu0 0
          %6780 = vmatpush1.bf16.msra.mxu0 %v6003
          %6781 = vmatprep.subr.bf16.mxu0 0
          %6782 = vmatpush1.bf16.msra.mxu0 %v6004
          %6783 = vmatprep.subr.bf16.mxu0 0
          %6784 = vmatpush1.bf16.msra.mxu0 %v6005
          %6785 = vmatprep.subr.bf16.mxu0 0
          %6786 = vmatpush1.bf16.msra.mxu0 %v6006
          %6787 = vmatprep.subr.bf16.mxu0 0
          %6788 = vmatpush1.bf16.msra.mxu0 %v6007
          %6789 = vmatprep.subr.bf16.mxu0 0
          %6790 = vmatpush1.bf16.msra.mxu0 %v6008
          %6791 = vmatprep.subr.bf16.mxu0 0
          %6792 = vmatpush1.bf16.msra.mxu0 %v6009
          %6793 = vmatprep.subr.bf16.mxu0 0
          %6794 = vmatpush1.bf16.msra.mxu0 %v6010
          %6795 = vmatprep.subr.bf16.mxu0 0
          %6796 = vmatpush1.bf16.msra.mxu0 %v6011
          %6797 = vmatprep.subr.bf16.mxu0 0
          %6798 = vmatpush1.bf16.msra.mxu0 %v6012
          %6799 = vmatprep.subr.bf16.mxu0 0
          %6800 = vmatpush1.bf16.msra.mxu0 %v6013
          %6801 = vmatprep.subr.bf16.mxu0 0
          %6802 = vmatpush1.bf16.msra.mxu0 %v6014
          %6803 = vmatprep.subr.bf16.mxu0 0
          %6804 = vmatpush1.bf16.msra.mxu0 %v6015
          %6805 = vmatprep.subr.bf16.mxu0 0
          %6806 = vmatpush1.bf16.msra.mxu0 %v6016
          %6807 = vmatprep.subr.bf16.mxu0 0
          %6808 = vmatpush1.bf16.msra.mxu0 %v6017
          %6809 = vmatprep.subr.bf16.mxu0 0
          %6810 = vmatpush1.bf16.msra.mxu0 %v6018
          %6811 = vmatprep.mubr.bf16.mxu0 %v4282
          %6812 = vmatmul.mubr.bf16.gmra.mrb[0].mxu0 %v4281
          %v6813 = vpop.f32.mrb[0].mxu0
          %v6814 = vadd.f32 %v6774, %v6813
          %v6815 = vpop.f32.mrb[0].mxu0
          %v6816 = vpop.f32.mrb[0].mxu0
          %v6817 = vpop.f32.mrb[0].mxu0
          %6818 = vdwg.mxu0
          %6819 = vmatprep.subr.bf16.mxu0 0
          %6820 = vmatpush1.bf16.msra.mxu0 %v6019
          %6821 = vmatprep.subr.bf16.mxu0 0
          %6822 = vmatpush1.bf16.msra.mxu0 %v6020
          %6823 = vmatprep.subr.bf16.mxu0 0
          %6824 = vmatpush1.bf16.msra.mxu0 %v6021
          %6825 = vmatprep.subr.bf16.mxu0 0
          %6826 = vmatpush1.bf16.msra.mxu0 %v6022
          %6827 = vmatprep.subr.bf16.mxu0 0
          %6828 = vmatpush1.bf16.msra.mxu0 %v6023
          %6829 = vmatprep.subr.bf16.mxu0 0
          %6830 = vmatpush1.bf16.msra.mxu0 %v6024
          %6831 = vmatprep.subr.bf16.mxu0 0
          %6832 = vmatpush1.bf16.msra.mxu0 %v6025
          %6833 = vmatprep.subr.bf16.mxu0 0
          %6834 = vmatpush1.bf16.msra.mxu0 %v6026
          %6835 = vmatprep.subr.bf16.mxu0 0
          %6836 = vmatpush1.bf16.msra.mxu0 %v6027
          %6837 = vmatprep.subr.bf16.mxu0 0
          %6838 = vmatpush1.bf16.msra.mxu0 %v6028
          %6839 = vmatprep.subr.bf16.mxu0 0
          %6840 = vmatpush1.bf16.msra.mxu0 %v6029
          %6841 = vmatprep.subr.bf16.mxu0 0
          %6842 = vmatpush1.bf16.msra.mxu0 %v6030
          %6843 = vmatprep.subr.bf16.mxu0 0
          %6844 = vmatpush1.bf16.msra.mxu0 %v6031
          %6845 = vmatprep.subr.bf16.mxu0 0
          %6846 = vmatpush1.bf16.msra.mxu0 %v6032
          %6847 = vmatprep.subr.bf16.mxu0 0
          %6848 = vmatpush1.bf16.msra.mxu0 %v6033
          %6849 = vmatprep.subr.bf16.mxu0 0
          %6850 = vmatpush1.bf16.msra.mxu0 %v6034
          %6851 = vmatprep.mubr.bf16.mxu0 %v4284
          %6852 = vmatmul.mubr.bf16.gmra.mrb[0].mxu0 %v4283
          %v6853 = vpop.f32.mrb[0].mxu0
          %v6854 = vadd.f32 %v6814, %v6853
          %v6855 = vpop.f32.mrb[0].mxu0
          %v6856 = vpop.f32.mrb[0].mxu0
          %v6857 = vpop.f32.mrb[0].mxu0
          %6858 = vdwg.mxu0
          %6859 = vmatprep.subr.bf16.mxu0 0
          %6860 = vmatpush1.bf16.msra.mxu0 %v6035
          %6861 = vmatprep.subr.bf16.mxu0 0
          %6862 = vmatpush1.bf16.msra.mxu0 %v6036
          %6863 = vmatprep.subr.bf16.mxu0 0
          %6864 = vmatpush1.bf16.msra.mxu0 %v6037
          %6865 = vmatprep.subr.bf16.mxu0 0
          %6866 = vmatpush1.bf16.msra.mxu0 %v6038
          %6867 = vmatprep.subr.bf16.mxu0 0
          %6868 = vmatpush1.bf16.msra.mxu0 %v6039
          %6869 = vmatprep.subr.bf16.mxu0 0
          %6870 = vmatpush1.bf16.msra.mxu0 %v6040
          %6871 = vmatprep.subr.bf16.mxu0 0
          %6872 = vmatpush1.bf16.msra.mxu0 %v6041
          %6873 = vmatprep.subr.bf16.mxu0 0
          %6874 = vmatpush1.bf16.msra.mxu0 %v6042
          %6875 = vmatprep.subr.bf16.mxu0 0
          %6876 = vmatpush1.bf16.msra.mxu0 %v6043
          %6877 = vmatprep.subr.bf16.mxu0 0
          %6878 = vmatpush1.bf16.msra.mxu0 %v6044
          %6879 = vmatprep.subr.bf16.mxu0 0
          %6880 = vmatpush1.bf16.msra.mxu0 %v6045
          %6881 = vmatprep.subr.bf16.mxu0 0
          %6882 = vmatpush1.bf16.msra.mxu0 %v6046
          %6883 = vmatprep.subr.bf16.mxu0 0
          %6884 = vmatpush1.bf16.msra.mxu0 %v6047
          %6885 = vmatprep.subr.bf16.mxu0 0
          %6886 = vmatpush1.bf16.msra.mxu0 %v6048
          %6887 = vmatprep.subr.bf16.mxu0 0
          %6888 = vmatpush1.bf16.msra.mxu0 %v6049
          %6889 = vmatprep.subr.bf16.mxu0 0
          %6890 = vmatpush1.bf16.msra.mxu0 %v6050
          %6891 = vmatprep.mubr.bf16.mxu0 %v4286
          %6892 = vmatmul.mubr.bf16.gmra.mrb[0].mxu0 %v4285
          %v6893 = vpop.f32.mrb[0].mxu0
          %v6894 = vadd.f32 %v6854, %v6893
          %v6895 = vpop.f32.mrb[0].mxu0
          %v6896 = vpop.f32.mrb[0].mxu0
          %v6897 = vpop.f32.mrb[0].mxu0
          %6898 = vdwg.mxu0
          %6899 = vmatprep.subr.bf16.mxu0 0
          %6900 = vmatpush1.bf16.msra.mxu0 %v6051
          %6901 = vmatprep.subr.bf16.mxu0 0
          %6902 = vmatpush1.bf16.msra.mxu0 %v6052
          %6903 = vmatprep.subr.bf16.mxu0 0
          %6904 = vmatpush1.bf16.msra.mxu0 %v6053
          %6905 = vmatprep.subr.bf16.mxu0 0
          %6906 = vmatpush1.bf16.msra.mxu0 %v6054
          %6907 = vmatprep.subr.bf16.mxu0 0
          %6908 = vmatpush1.bf16.msra.mxu0 %v6055
          %6909 = vmatprep.subr.bf16.mxu0 0
          %6910 = vmatpush1.bf16.msra.mxu0 %v6056
          %6911 = vmatprep.subr.bf16.mxu0 0
          %6912 = vmatpush1.bf16.msra.mxu0 %v6057
          %6913 = vmatprep.subr.bf16.mxu0 0
          %6914 = vmatpush1.bf16.msra.mxu0 %v6058
          %6915 = vmatprep.subr.bf16.mxu0 0
          %6916 = vmatpush1.bf16.msra.mxu0 %v6059
          %6917 = vmatprep.subr.bf16.mxu0 0
          %6918 = vmatpush1.bf16.msra.mxu0 %v6060
          %6919 = vmatprep.subr.bf16.mxu0 0
          %6920 = vmatpush1.bf16.msra.mxu0 %v6061
          %6921 = vmatprep.subr.bf16.mxu0 0
          %6922 = vmatpush1.bf16.msra.mxu0 %v6062
          %6923 = vmatprep.subr.bf16.mxu0 0
          %6924 = vmatpush1.bf16.msra.mxu0 %v6063
          %6925 = vmatprep.subr.bf16.mxu0 0
          %6926 = vmatpush1.bf16.msra.mxu0 %v6064
          %6927 = vmatprep.subr.bf16.mxu0 0
          %6928 = vmatpush1.bf16.msra.mxu0 %v6065
          %6929 = vmatprep.subr.bf16.mxu0 0
          %6930 = vmatpush1.bf16.msra.mxu0 %v6066
          %6931 = vmatprep.mubr.bf16.mxu0 %v4288
          %6932 = vmatmul.mubr.bf16.gmra.mrb[0].mxu0 %v4287
          %v6933 = vpop.f32.mrb[0].mxu0
          %v6934 = vadd.f32 %v6894, %v6933
          %v6935 = vpop.f32.mrb[0].mxu0
          %v6936 = vpop.f32.mrb[0].mxu0
          %v6937 = vpop.f32.mrb[0].mxu0
          %6938 = vdwg.mxu0
          %6939 = vmatprep.subr.bf16.mxu0 0
          %6940 = vmatpush1.bf16.msra.mxu0 %v6067
          %6941 = vmatprep.subr.bf16.mxu0 0
          %6942 = vmatpush1.bf16.msra.mxu0 %v6068
          %6943 = vmatprep.subr.bf16.mxu0 0
          %6944 = vmatpush1.bf16.msra.mxu0 %v6069
          %6945 = vmatprep.subr.bf16.mxu0 0
          %6946 = vmatpush1.bf16.msra.mxu0 %v6070
          %6947 = vmatprep.subr.bf16.mxu0 0
          %6948 = vmatpush1.bf16.msra.mxu0 %v6071
          %6949 = vmatprep.subr.bf16.mxu0 0
          %6950 = vmatpush1.bf16.msra.mxu0 %v6072
          %6951 = vmatprep.subr.bf16.mxu0 0
          %6952 = vmatpush1.bf16.msra.mxu0 %v6073
          %6953 = vmatprep.subr.bf16.mxu0 0
          %6954 = vmatpush1.bf16.msra.mxu0 %v6074
          %6955 = vmatprep.subr.bf16.mxu0 0
          %6956 = vmatpush1.bf16.msra.mxu0 %v6075
          %6957 = vmatprep.subr.bf16.mxu0 0
          %6958 = vmatpush1.bf16.msra.mxu0 %v6076
          %6959 = vmatprep.subr.bf16.mxu0 0
          %6960 = vmatpush1.bf16.msra.mxu0 %v6077
          %6961 = vmatprep.subr.bf16.mxu0 0
          %6962 = vmatpush1.bf16.msra.mxu0 %v6078
          %6963 = vmatprep.subr.bf16.mxu0 0
          %6964 = vmatpush1.bf16.msra.mxu0 %v6079
          %6965 = vmatprep.subr.bf16.mxu0 0
          %6966 = vmatpush1.bf16.msra.mxu0 %v6080
          %6967 = vmatprep.subr.bf16.mxu0 0
          %6968 = vmatpush1.bf16.msra.mxu0 %v6081
          %6969 = vmatprep.subr.bf16.mxu0 0
          %6970 = vmatpush1.bf16.msra.mxu0 %v6082
          %6971 = vmatprep.mubr.bf16.mxu0 %v4290
          %6972 = vmatmul.mubr.bf16.gmra.mrb[0].mxu0 %v4289
          %v6973 = vpop.f32.mrb[0].mxu0
          %v6974 = vadd.f32 %v6934, %v6973
          %v6975 = vpop.f32.mrb[0].mxu0
          %v6976 = vpop.f32.mrb[0].mxu0
          %v6977 = vpop.f32.mrb[0].mxu0
          %6978 = vdwg.mxu0
          %v6979 = vld [vmem:[#allocation10] sm:$0x1]
          %v6980 = vadd.f32 %v6974, %v6979
          %v6981 = vsel %vm3977, %v6980, -inf
          %6982 = vmax.xlane.f32.xlu0 %v6981
          %v6983 = vpop.xlane.xlu0 %6982
          %v6984 = vsub.f32 %v6980, %v6983
          %v6985 = vmul.f32 %v6984, 1.442695
          %v6986 = vpow.pop %v6985
          %v6987 = vsel %vm3977, %v6986, 0.0
          %6988 = vadd.xlane.f32.xlu0 %v6987
          %v6989 = vpop.xlane.xlu0 %6988
          %v6990 = vrcp.pop %v6989
          %v6991 = vmul.f32 %v6986, %v6990
          %6992 = vst.msk [vmem:[#allocation13] sm:$0x1] %vm3977, %v6991
        $region76: #{value_network_forward.1} parent=47 // pred_fallthru
          _
        // Predicated region
        $region77: #{value_network_forward.1} parent=47 // pred_check
          %p6993 = pneg %p201
        $region78: #{value_network_forward.1} parent=47 // pred_check_branch
          %6995 = sbr.rel (%p6993) target = $region80
        $region79: #{value_network_forward.1} parent=47 // pred_region
          %s6997 = ssub.s32 16, 16
          %6998 = vsyncadd [#allocation7], %s6997
          %s7000 = sshll.u32 [#allocation13], 4
          %s7001 = int_to_ptr.vmem [resolvable:$true] %s7000
          %7003 = dma.vmem_to_hbm [thread:$0]  %s7001, 16, %s7, [#allocation7]
        $region80: #{value_network_forward.1} parent=47 // pred_fallthru
          _
        // Predicated region
        $region81: #{value_network_forward.1} parent=47 // pred_check
          %p7004 = pneg %p222
        $region82: #{value_network_forward.1} parent=47 // pred_check_branch
          %7006 = sbr.rel (%p7004) target = $region84
        $region83: #{value_network_forward.1} parent=47 // pred_region
          %s7008 = ssub.s32 16, 16
          %7009 = vsyncadd [#allocation15], %s7008
          %s7011 = sshll.u32 [#allocation14], 4
          %s7012 = int_to_ptr.vmem [resolvable:$true] %s7011
          %7014 = dma.vmem_to_hbm [thread:$0]  %s7012, 16, %s8, [#allocation15]
        $region84: #{value_network_forward.1} parent=47 // pred_fallthru
          _
        // Predicated region
        $region85: #{value_network_forward.1} parent=47 // pred_check
          %p7015 = pneg %p201
        $region86: #{value_network_forward.1} parent=47 // pred_check_branch
          %7017 = sbr.rel (%p7015) target = $region88
        $region87: #{value_network_forward.1} parent=47 // pred_region
          %7018 = dma.done [#allocation7], 16
        $region88: #{value_network_forward.1} parent=47 // pred_fallthru
          _
        // Predicated region
        $region89: #{value_network_forward.1} parent=47 // pred_check
          %p7019 = pneg %p222
        $region90: #{value_network_forward.1} parent=47 // pred_check_branch
          %7021 = sbr.rel (%p7019) target = $region92
        $region91: #{value_network_forward.1} parent=47 // pred_region
          %7022 = dma.done [#allocation15], 16
        $region92: #{value_network_forward.1} parent=47 // pred_fallthru
          _
      $region48: #{value_network_forward.1} parent=5 // pred_fallthru
        _
      %p7023 = scmp.le.s32.totalorder 2, %s26
      // Predicated region
      $region93: #{value_network_forward.1} parent=5 // pred_check
        %p7024 = pneg %p7023
      $region94: #{value_network_forward.1} parent=5 // pred_check_branch
        %7026 = sbr.rel (%p7024) target = $region96
      $region95: #{value_network_forward.1} parent=5 // pred_region
        %s7027 = ssub.s32 %s26, 2
      $region96: #{value_network_forward.1} parent=5 // pred_fallthru
        _
    $region6: #{value_network_forward.1} parent=1 // loop_footer
      %s30 = sadd.s32 1, %s26
    $region7: #{value_network_forward.1} parent=1 // loop_footer_branch
      %25 = sbr.rel target = $region3
    $region8: #{value_network_forward.1} parent=1 // loop_exit
      _
    %7028 = vsyncpa [#allocation6], 1
    %s7029 = scalar_lea.sflag [#allocation6], 1
    %7030 = vsyncpa %s7029, 1
    %7031 = vsyncpa [#allocation9], 1
    %s7032 = scalar_lea.sflag [#allocation9], 1
    %7033 = vsyncpa %s7032, 1
    %7034 = vsyncpa [#allocation12], 1
    %7035 = vsyncpa [#allocation7], 1
    %s7036 = scalar_lea.sflag [#allocation7], 1
    %7037 = vsyncpa %s7036, 1
    %7038 = vsyncpa [#allocation15], 1

</llo_original>
